<compile_context>
chip_gen: v7x
topology: tpu7x:2x2x1
jax: 0.10.0
libtpu: 0.0.40
codegen_flags: <defaults>
</compile_context>

<pallas_src>
import jax
import jax.numpy as jnp
from jax import lax
from jax.experimental import pallas as pl
from jax.experimental.pallas import tpu as pltpu


def _upsample_conv_kernel(x_ref, w_ref, b_ref, o_ref):
    # x_ref: (1, H+2, Wp, C)      original-resolution input (compute dtype) with a
    #                             1-px zero halo; resident across the row-strip axis
    # w_ref: (2, 2, 4*C, C)       pre-combined sub-pixel weights, one (4C, C) per phase
    # b_ref: (1, C)               f32 bias
    # o_ref: (1, 2, 2, TH, W, C)  output strip, phase-major (dy, dx)
    TH = o_ref.shape[3]
    W = o_ref.shape[4]
    C = o_ref.shape[5]
    t = pl.program_id(1)
    row0 = pl.multiple_of(t * TH, TH)

    # Hoisted bias broadcast (JAX does not CSE broadcast_in_dim; do it once per step).
    bias = jnp.broadcast_to(b_ref[...].astype(jnp.float32), (TH * W, C))

    # 9 unique shifted slabs (row shift 0..2 x col shift 0..2), computed once per grid
    # step; each phase's 4 taps reuse them (was 16 unaligned slices per step).
    slabs = [[x_ref[0, pl.ds(row0 + rs, TH), pl.ds(cs, W), :]
              for cs in range(3)] for rs in range(3)]

    for dy in range(2):
        for dx in range(2):
            # im2col: 4 taps of the 2x2 phase-(dy,dx) conv concatenated on the channel
            # (lane) axis -> a single K = 4C matmul on the MXU (f32 accumulation).
            taps = [slabs[dy + rh][dx + rw] for rh in range(2) for rw in range(2)]
            patches = jnp.concatenate(taps, axis=-1).reshape(TH * W, 4 * C)
            y = jnp.dot(patches, w_ref[dy, dx],
                        preferred_element_type=jnp.float32)       # (TH*W, C)
            y = y + bias
            o_ref[0, dy, dx] = y.reshape(TH, W, C).astype(o_ref.dtype)


def _pick_tile_rows(H, W, C, out_itemsize, tile_rows):
    if tile_rows is not None:
        return tile_rows if H % tile_rows == 0 else H
    divisors = [d for d in range(1, H + 1) if H % d == 0]
    # Smallest divisor giving M = TH*W >= 256 (fills the 256x256 MXU); else TH = H.
    cand = next((d for d in divisors if d * W >= 256), H)
    # Keep the double-buffered 4-phase output strip under ~8 MiB of VMEM.
    max_out_bytes = 8 * 1024 * 1024
    while cand > 1 and 2 * 4 * cand * W * C * out_itemsize > max_out_bytes:
        smaller = [d for d in divisors if d < cand]
        if not smaller:
            break
        cand = smaller[-1]
    return cand


def upsample_forward(x_nchw, w_oihw, bias, *, compute_dtype=jnp.bfloat16,
                     out_dtype=None, tile_rows=None, output_format="nchw"):
    """UpSample.forward: nearest 2x upsample + Conv2d(C, C, 3, padding=1).

    x_nchw: (B, C, H, W); w_oihw: (C, C, 3, 3) (PyTorch OIHW); bias: (C,).
    output_format: "nchw" (default, matches the PyTorch module), "nhwc", or
    "phase_major" ((B, 2, 2, H, W, C) — lets a fused consumer skip the two
    post-kernel HBM transpose passes).
    """
    B, C, H, W = x_nchw.shape
    out_dtype = compute_dtype if out_dtype is None else out_dtype

    # ---- layout glue at ORIGINAL resolution only; cast to compute dtype BEFORE the
    # pad / DMA (halves input HBM traffic + resident VMEM vs f32) ----
    x = jnp.transpose(x_nchw, (0, 2, 3, 1)).astype(compute_dtype)   # (B, H, W, C)
    Wp = ((W + 2 + 7) // 8) * 8                                     # 8-aligned sublanes
    x = jnp.pad(x, ((0, 0), (1, 1), (1, Wp - W - 1), (0, 0)))       # (B, H+2, Wp, C)

    # ---- sub-pixel weight combination ----
    # out[2i+dy, 2j+dx] = sum_{rh,rw} x_pad[i+dy+rh, j+dx+rw] @ Wph[dy,dx][rh,rw]
    w_hwio = jnp.transpose(w_oihw, (2, 3, 1, 0)).astype(jnp.float32)   # (3,3,Cin,Cout)
    comb = jnp.array([[[1.0, 0.0, 0.0], [0.0, 1.0, 1.0]],           # dy/dx = 0
                      [[1.0, 1.0, 0.0], [0.0, 0.0, 1.0]]],          # dy/dx = 1
                     jnp.float32)                                   # comb[phase, tap, k]
    w_phase = jnp.einsum('yhk,xwl,klio->yxhwio', comb, comb, w_hwio)   # (2,2,2,2,C,C)
    w_phase = w_phase.reshape(2, 2, 4 * C, C).astype(compute_dtype)
    b2 = bias.reshape(1, C).astype(jnp.float32)

    in_b = jnp.dtype(compute_dtype).itemsize
    out_b = jnp.dtype(out_dtype).itemsize
    TH = _pick_tile_rows(H, W, C, out_b, tile_rows)
    grid = (B, H // TH)

    def vmem_bytes(n_const_buf):
        img = (H + 2) * Wp * C * in_b
        wts = 16 * C * C * in_b
        bia = C * 4
        out_strip = 4 * TH * W * C * out_b
        return n_const_buf * (img + wts + bia) + 2 * out_strip

    def build(single_buffer_consts):
        pm = ({"pipeline_mode": pl.Buffered(1)} if single_buffer_consts else {})
        n_buf = 1 if single_buffer_consts else 2
        # VMEM budget from the actual block sizes (not a hard-coded 32 MB cap).
        limit = int(min(max(2 * vmem_bytes(n_buf) + (8 << 20), 32 << 20), 96 << 20))
        return pl.pallas_call(
            _upsample_conv_kernel,
            out_shape=jax.ShapeDtypeStruct((B, 2, 2, H, W, C), out_dtype),
            grid_spec=pltpu.PrefetchScalarGridSpec(
                num_scalar_prefetch=0,
                grid=grid,
                in_specs=[
                    pl.BlockSpec((1, H + 2, Wp, C), lambda b, t: (b, 0, 0, 0), **pm),
                    pl.BlockSpec((2, 2, 4 * C, C), lambda b, t: (0, 0, 0, 0), **pm),
                    pl.BlockSpec((1, C), lambda b, t: (0, 0), **pm),
                ],
                out_specs=pl.BlockSpec((1, 2, 2, TH, W, C),
                                       lambda b, t: (b, 0, 0, t, 0, 0)),
            ),
            compiler_params=pltpu.CompilerParams(
                dimension_semantics=("parallel", "parallel"),
                vmem_limit_bytes=limit),
        )

    try:
        # Single-buffer the grid-invariant operands (image / weights / bias): their
        # index_maps are constant across the row-strip axis, so a 2nd buffer is waste.
        out = build(True)(x, w_phase, b2)
    except Exception:
        # Fallback if this Pallas build does not accept pl.Buffered on pallas_call specs.
        out = build(False)(x, w_phase, b2)

    if output_format == "phase_major":
        return out                                   # (B, 2, 2, H, W, C)
    # (B, dy, dx, H, W, C) -> (B, H, dy, W, dx, C) -> (B, 2H, 2W, C)
    out = jnp.transpose(out, (0, 3, 1, 4, 2, 5)).reshape(B, 2 * H, 2 * W, C)
    if output_format == "nhwc":
        return out
    return jnp.transpose(out, (0, 3, 1, 2))          # NCHW, matches the PyTorch module


if __name__ == "__main__":
    key = jax.random.PRNGKey(0)
    kx, kw, kb = jax.random.split(key, 3)

    B, C, H, W = 2, 4, 16, 16
    x = jax.random.normal(kx, (B, C, H, W), jnp.float32)

    # Deterministic synthetic Conv2d(C, C, 3) parameters (PyTorch OIHW layout).
    fan_in = C * 3 * 3
    bound = 1.0 / (fan_in ** 0.5)
    w = jax.random.uniform(kw, (C, C, 3, 3), jnp.float32, -bound, bound)
    b = jax.random.uniform(kb, (C,), jnp.float32, -bound, bound)

    # Pure-JAX f32 reference (same math as the PyTorch module).
    x_nhwc = jnp.transpose(x, (0, 2, 3, 1))
    xu = jnp.repeat(jnp.repeat(x_nhwc, 2, axis=1), 2, axis=2)
    ref = lax.conv_general_dilated(
        xu, jnp.transpose(w, (2, 3, 1, 0)), (1, 1), "SAME",
        dimension_numbers=("NHWC", "HWIO", "NHWC")) + b
    ref = jnp.transpose(ref, (0, 3, 1, 2))

    # Tight check with f32 operands/output (verifies the sub-pixel math exactly).
    out_f32 = jax.block_until_ready(
        upsample_forward(x, w, b, compute_dtype=jnp.float32, out_dtype=jnp.float32))
    assert out_f32.shape == (B, C, 2 * H, 2 * W)
    assert jnp.allclose(out_f32, ref, rtol=1e-4, atol=1e-4)

    # Default perf path: bf16 input/operands/output, f32 MXU accumulation.
    out_bf16 = jax.block_until_ready(upsample_forward(x, w, b))
    assert out_bf16.shape == (B, C, 2 * H, 2 * W)
    assert jnp.allclose(out_bf16.astype(jnp.float32), ref, rtol=5e-2, atol=5e-2)

    print("KERNEL_OK")
</pallas_src>

<mosaic_0001>
module attributes {stable_mosaic.version = 11 : i64} {
  func.func @_upsample_conv_kernel(%arg0: i32, %arg1: i32, %arg2: memref<1x18x24x4xf32, #tpu.memory_space<vmem>>, %arg3: memref<2x2x16x4xf32, #tpu.memory_space<vmem>>, %arg4: memref<1x4xf32, #tpu.memory_space<vmem>>, %arg5: memref<1x2x2x16x16x4xf32, #tpu.memory_space<vmem>>) attributes {dimension_semantics = [#tpu.dimension_semantics<parallel>, #tpu.dimension_semantics<parallel>], iteration_bounds = array<i64: 2, 1>, scalar_prefetch = 0 : i64, scratch_operands = 0 : i64, tpu.core_type = #tpu.core_type<tc>, window_params = [{pipeline_mode = #tpu.pipeline_mode<synchronous>, transform_indices = @transform_0, window_bounds = array<i64: 1, 18, 24, 4>}, {pipeline_mode = #tpu.pipeline_mode<synchronous>, transform_indices = @transform_1, window_bounds = array<i64: 2, 2, 16, 4>}, {pipeline_mode = #tpu.pipeline_mode<synchronous>, transform_indices = @transform_2, window_bounds = array<i64: 1, 4>}, {transform_indices = @transform_3, window_bounds = array<i64: 1, 2, 2, 16, 16, 4>}]} {
    %c16_i32 = arith.constant 16 : i32
    %0 = arith.muli %arg1, %c16_i32 : i32
    %1 = tpu.assume_multiple %0, 16 : i32
    %c0 = arith.constant 0 : index
    %c0_0 = arith.constant 0 : index
    %2 = vector.load %arg4[%c0, %c0_0] : memref<1x4xf32, #tpu.memory_space<vmem>>, vector<1x4xf32>
    %3 = vector.shape_cast %2 : vector<1x4xf32> to vector<1x4xf32>
    %4 = vector.broadcast %3 : vector<1x4xf32> to vector<256x4xf32>
    %c0_i32 = arith.constant 0 : i32
    %5 = arith.addi %1, %c0_i32 : i32
    %c0_1 = arith.constant 0 : index
    %6 = arith.index_cast %5 : i32 to index
    %c0_2 = arith.constant 0 : index
    %c0_3 = arith.constant 0 : index
    %7 = vector.load %arg2[%c0_1, %6, %c0_2, %c0_3] : memref<1x18x24x4xf32, #tpu.memory_space<vmem>>, vector<1x16x16x4xf32>
    %8 = vector.shape_cast %7 : vector<1x16x16x4xf32> to vector<16x16x4xf32>
    %c0_i32_4 = arith.constant 0 : i32
    %9 = arith.addi %1, %c0_i32_4 : i32
    %c0_5 = arith.constant 0 : index
    %10 = arith.index_cast %9 : i32 to index
    %c1 = arith.constant 1 : index
    %c0_6 = arith.constant 0 : index
    %11 = vector.load %arg2[%c0_5, %10, %c1, %c0_6] : memref<1x18x24x4xf32, #tpu.memory_space<vmem>>, vector<1x16x16x4xf32>
    %12 = vector.shape_cast %11 : vector<1x16x16x4xf32> to vector<16x16x4xf32>
    %c0_i32_7 = arith.constant 0 : i32
    %13 = arith.addi %1, %c0_i32_7 : i32
    %c0_8 = arith.constant 0 : index
    %14 = arith.index_cast %13 : i32 to index
    %c2 = arith.constant 2 : index
    %c0_9 = arith.constant 0 : index
    %15 = vector.load %arg2[%c0_8, %14, %c2, %c0_9] : memref<1x18x24x4xf32, #tpu.memory_space<vmem>>, vector<1x16x16x4xf32>
    %16 = vector.shape_cast %15 : vector<1x16x16x4xf32> to vector<16x16x4xf32>
    %c1_i32 = arith.constant 1 : i32
    %17 = arith.addi %1, %c1_i32 : i32
    %c0_10 = arith.constant 0 : index
    %18 = arith.index_cast %17 : i32 to index
    %c0_11 = arith.constant 0 : index
    %c0_12 = arith.constant 0 : index
    %19 = vector.load %arg2[%c0_10, %18, %c0_11, %c0_12] : memref<1x18x24x4xf32, #tpu.memory_space<vmem>>, vector<1x16x16x4xf32>
    %20 = vector.shape_cast %19 : vector<1x16x16x4xf32> to vector<16x16x4xf32>
    %c1_i32_13 = arith.constant 1 : i32
    %21 = arith.addi %1, %c1_i32_13 : i32
    %c0_14 = arith.constant 0 : index
    %22 = arith.index_cast %21 : i32 to index
    %c1_15 = arith.constant 1 : index
    %c0_16 = arith.constant 0 : index
    %23 = vector.load %arg2[%c0_14, %22, %c1_15, %c0_16] : memref<1x18x24x4xf32, #tpu.memory_space<vmem>>, vector<1x16x16x4xf32>
    %24 = vector.shape_cast %23 : vector<1x16x16x4xf32> to vector<16x16x4xf32>
    %c1_i32_17 = arith.constant 1 : i32
    %25 = arith.addi %1, %c1_i32_17 : i32
    %c0_18 = arith.constant 0 : index
    %26 = arith.index_cast %25 : i32 to index
    %c2_19 = arith.constant 2 : index
    %c0_20 = arith.constant 0 : index
    %27 = vector.load %arg2[%c0_18, %26, %c2_19, %c0_20] : memref<1x18x24x4xf32, #tpu.memory_space<vmem>>, vector<1x16x16x4xf32>
    %28 = vector.shape_cast %27 : vector<1x16x16x4xf32> to vector<16x16x4xf32>
    %c2_i32 = arith.constant 2 : i32
    %29 = arith.addi %1, %c2_i32 : i32
    %c0_21 = arith.constant 0 : index
    %30 = arith.index_cast %29 : i32 to index
    %c0_22 = arith.constant 0 : index
    %c0_23 = arith.constant 0 : index
    %31 = vector.load %arg2[%c0_21, %30, %c0_22, %c0_23] : memref<1x18x24x4xf32, #tpu.memory_space<vmem>>, vector<1x16x16x4xf32>
    %32 = vector.shape_cast %31 : vector<1x16x16x4xf32> to vector<16x16x4xf32>
    %c2_i32_24 = arith.constant 2 : i32
    %33 = arith.addi %1, %c2_i32_24 : i32
    %c0_25 = arith.constant 0 : index
    %34 = arith.index_cast %33 : i32 to index
    %c1_26 = arith.constant 1 : index
    %c0_27 = arith.constant 0 : index
    %35 = vector.load %arg2[%c0_25, %34, %c1_26, %c0_27] : memref<1x18x24x4xf32, #tpu.memory_space<vmem>>, vector<1x16x16x4xf32>
    %36 = vector.shape_cast %35 : vector<1x16x16x4xf32> to vector<16x16x4xf32>
    %c2_i32_28 = arith.constant 2 : i32
    %37 = arith.addi %1, %c2_i32_28 : i32
    %c0_29 = arith.constant 0 : index
    %38 = arith.index_cast %37 : i32 to index
    %c2_30 = arith.constant 2 : index
    %c0_31 = arith.constant 0 : index
    %39 = vector.load %arg2[%c0_29, %38, %c2_30, %c0_31] : memref<1x18x24x4xf32, #tpu.memory_space<vmem>>, vector<1x16x16x4xf32>
    %40 = vector.shape_cast %39 : vector<1x16x16x4xf32> to vector<16x16x4xf32>
    %41 = tpu.concatenate %8, %12, %20, %24 in 2 : vector<16x16x4xf32>, vector<16x16x4xf32>, vector<16x16x4xf32>, vector<16x16x4xf32> -> vector<16x16x16xf32>
    %42 = vector.shape_cast %41 : vector<16x16x16xf32> to vector<256x16xf32>
    %c0_32 = arith.constant 0 : index
    %c0_33 = arith.constant 0 : index
    %c0_34 = arith.constant 0 : index
    %c0_35 = arith.constant 0 : index
    %43 = vector.load %arg3[%c0_32, %c0_33, %c0_34, %c0_35] : memref<2x2x16x4xf32, #tpu.memory_space<vmem>>, vector<1x1x16x4xf32>
    %44 = vector.shape_cast %43 : vector<1x1x16x4xf32> to vector<16x4xf32>
    %cst = arith.constant dense<0.000000e+00> : vector<256x4xf32>
    %45 = tpu.matmul %42, %44, %cst {dimension_numbers = #tpu.dot_dimension_numbers<[1], [0], [0], [1], [0, 0, 1, 1], [], []>} : vector<256x16xf32>, vector<16x4xf32>, vector<256x4xf32> -> vector<256x4xf32>
    %46 = arith.addf %45, %4 : vector<256x4xf32>
    %47 = vector.shape_cast %46 : vector<256x4xf32> to vector<16x16x4xf32>
    %c0_36 = arith.constant 0 : index
    %c0_37 = arith.constant 0 : index
    %c0_38 = arith.constant 0 : index
    %c0_39 = arith.constant 0 : index
    %c0_40 = arith.constant 0 : index
    %c0_41 = arith.constant 0 : index
    %48 = vector.load %arg5[%c0_36, %c0_37, %c0_38, %c0_39, %c0_40, %c0_41] : memref<1x2x2x16x16x4xf32, #tpu.memory_space<vmem>>, vector<1x1x1x16x16x4xf32>
    %49 = vector.shape_cast %48 : vector<1x1x1x16x16x4xf32> to vector<16x16x4xf32>
    %50 = vector.shape_cast %47 : vector<16x16x4xf32> to vector<1x1x1x16x16x4xf32>
    tpu.vector_store %arg5[%c0_36, %c0_37, %c0_38, %c0_39, %c0_40, %c0_41], %50 {strides = array<i32>} : memref<1x2x2x16x16x4xf32, #tpu.memory_space<vmem>>, vector<1x1x1x16x16x4xf32>,
    %51 = tpu.concatenate %12, %16, %24, %28 in 2 : vector<16x16x4xf32>, vector<16x16x4xf32>, vector<16x16x4xf32>, vector<16x16x4xf32> -> vector<16x16x16xf32>
    %52 = vector.shape_cast %51 : vector<16x16x16xf32> to vector<256x16xf32>
    %c0_42 = arith.constant 0 : index
    %c1_43 = arith.constant 1 : index
    %c0_44 = arith.constant 0 : index
    %c0_45 = arith.constant 0 : index
    %53 = vector.load %arg3[%c0_42, %c1_43, %c0_44, %c0_45] : memref<2x2x16x4xf32, #tpu.memory_space<vmem>>, vector<1x1x16x4xf32>
    %54 = vector.shape_cast %53 : vector<1x1x16x4xf32> to vector<16x4xf32>
    %cst_46 = arith.constant dense<0.000000e+00> : vector<256x4xf32>
    %55 = tpu.matmul %52, %54, %cst_46 {dimension_numbers = #tpu.dot_dimension_numbers<[1], [0], [0], [1], [0, 0, 1, 1], [], []>} : vector<256x16xf32>, vector<16x4xf32>, vector<256x4xf32> -> vector<256x4xf32>
    %56 = arith.addf %55, %4 : vector<256x4xf32>
    %57 = vector.shape_cast %56 : vector<256x4xf32> to vector<16x16x4xf32>
    %c0_47 = arith.constant 0 : index
    %c0_48 = arith.constant 0 : index
    %c1_49 = arith.constant 1 : index
    %c0_50 = arith.constant 0 : index
    %c0_51 = arith.constant 0 : index
    %c0_52 = arith.constant 0 : index
    %58 = vector.load %arg5[%c0_47, %c0_48, %c1_49, %c0_50, %c0_51, %c0_52] : memref<1x2x2x16x16x4xf32, #tpu.memory_space<vmem>>, vector<1x1x1x16x16x4xf32>
    %59 = vector.shape_cast %58 : vector<1x1x1x16x16x4xf32> to vector<16x16x4xf32>
    %60 = vector.shape_cast %57 : vector<16x16x4xf32> to vector<1x1x1x16x16x4xf32>
    tpu.vector_store %arg5[%c0_47, %c0_48, %c1_49, %c0_50, %c0_51, %c0_52], %60 {strides = array<i32>} : memref<1x2x2x16x16x4xf32, #tpu.memory_space<vmem>>, vector<1x1x1x16x16x4xf32>,
    %61 = tpu.concatenate %20, %24, %32, %36 in 2 : vector<16x16x4xf32>, vector<16x16x4xf32>, vector<16x16x4xf32>, vector<16x16x4xf32> -> vector<16x16x16xf32>
    %62 = vector.shape_cast %61 : vector<16x16x16xf32> to vector<256x16xf32>
    %c1_53 = arith.constant 1 : index
    %c0_54 = arith.constant 0 : index
    %c0_55 = arith.constant 0 : index
    %c0_56 = arith.constant 0 : index
    %63 = vector.load %arg3[%c1_53, %c0_54, %c0_55, %c0_56] : memref<2x2x16x4xf32, #tpu.memory_space<vmem>>, vector<1x1x16x4xf32>
    %64 = vector.shape_cast %63 : vector<1x1x16x4xf32> to vector<16x4xf32>
    %cst_57 = arith.constant dense<0.000000e+00> : vector<256x4xf32>
    %65 = tpu.matmul %62, %64, %cst_57 {dimension_numbers = #tpu.dot_dimension_numbers<[1], [0], [0], [1], [0, 0, 1, 1], [], []>} : vector<256x16xf32>, vector<16x4xf32>, vector<256x4xf32> -> vector<256x4xf32>
    %66 = arith.addf %65, %4 : vector<256x4xf32>
    %67 = vector.shape_cast %66 : vector<256x4xf32> to vector<16x16x4xf32>
    %c0_58 = arith.constant 0 : index
    %c1_59 = arith.constant 1 : index
    %c0_60 = arith.constant 0 : index
    %c0_61 = arith.constant 0 : index
    %c0_62 = arith.constant 0 : index
    %c0_63 = arith.constant 0 : index
    %68 = vector.load %arg5[%c0_58, %c1_59, %c0_60, %c0_61, %c0_62, %c0_63] : memref<1x2x2x16x16x4xf32, #tpu.memory_space<vmem>>, vector<1x1x1x16x16x4xf32>
    %69 = vector.shape_cast %68 : vector<1x1x1x16x16x4xf32> to vector<16x16x4xf32>
    %70 = vector.shape_cast %67 : vector<16x16x4xf32> to vector<1x1x1x16x16x4xf32>
    tpu.vector_store %arg5[%c0_58, %c1_59, %c0_60, %c0_61, %c0_62, %c0_63], %70 {strides = array<i32>} : memref<1x2x2x16x16x4xf32, #tpu.memory_space<vmem>>, vector<1x1x1x16x16x4xf32>,
    %71 = tpu.concatenate %24, %28, %36, %40 in 2 : vector<16x16x4xf32>, vector<16x16x4xf32>, vector<16x16x4xf32>, vector<16x16x4xf32> -> vector<16x16x16xf32>
    %72 = vector.shape_cast %71 : vector<16x16x16xf32> to vector<256x16xf32>
    %c1_64 = arith.constant 1 : index
    %c1_65 = arith.constant 1 : index
    %c0_66 = arith.constant 0 : index
    %c0_67 = arith.constant 0 : index
    %73 = vector.load %arg3[%c1_64, %c1_65, %c0_66, %c0_67] : memref<2x2x16x4xf32, #tpu.memory_space<vmem>>, vector<1x1x16x4xf32>
    %74 = vector.shape_cast %73 : vector<1x1x16x4xf32> to vector<16x4xf32>
    %cst_68 = arith.constant dense<0.000000e+00> : vector<256x4xf32>
    %75 = tpu.matmul %72, %74, %cst_68 {dimension_numbers = #tpu.dot_dimension_numbers<[1], [0], [0], [1], [0, 0, 1, 1], [], []>} : vector<256x16xf32>, vector<16x4xf32>, vector<256x4xf32> -> vector<256x4xf32>
    %76 = arith.addf %75, %4 : vector<256x4xf32>
    %77 = vector.shape_cast %76 : vector<256x4xf32> to vector<16x16x4xf32>
    %c0_69 = arith.constant 0 : index
    %c1_70 = arith.constant 1 : index
    %c1_71 = arith.constant 1 : index
    %c0_72 = arith.constant 0 : index
    %c0_73 = arith.constant 0 : index
    %c0_74 = arith.constant 0 : index
    %78 = vector.load %arg5[%c0_69, %c1_70, %c1_71, %c0_72, %c0_73, %c0_74] : memref<1x2x2x16x16x4xf32, #tpu.memory_space<vmem>>, vector<1x1x1x16x16x4xf32>
    %79 = vector.shape_cast %78 : vector<1x1x1x16x16x4xf32> to vector<16x16x4xf32>
    %80 = vector.shape_cast %77 : vector<16x16x4xf32> to vector<1x1x1x16x16x4xf32>
    tpu.vector_store %arg5[%c0_69, %c1_70, %c1_71, %c0_72, %c0_73, %c0_74], %80 {strides = array<i32>} : memref<1x2x2x16x16x4xf32, #tpu.memory_space<vmem>>, vector<1x1x1x16x16x4xf32>,
    return
  }
  func.func @transform_0(%arg0: i32, %arg1: i32) -> (i32, i32, i32, i32) {
    %c0_i32 = arith.constant 0 : i32
    %c0_i32_0 = arith.constant 0 : i32
    %c0_i32_1 = arith.constant 0 : i32
    %c0_i32_2 = arith.constant 0 : i32
    return %arg0, %c0_i32, %c0_i32_0, %c0_i32_1 : i32, i32, i32, i32
  }
  func.func @transform_1(%arg0: i32, %arg1: i32) -> (i32, i32, i32, i32) {
    %c0_i32 = arith.constant 0 : i32
    %c0_i32_0 = arith.constant 0 : i32
    %c0_i32_1 = arith.constant 0 : i32
    %c0_i32_2 = arith.constant 0 : i32
    %c0_i32_3 = arith.constant 0 : i32
    return %c0_i32, %c0_i32_0, %c0_i32_1, %c0_i32_2 : i32, i32, i32, i32
  }
  func.func @transform_2(%arg0: i32, %arg1: i32) -> (i32, i32) {
    %c0_i32 = arith.constant 0 : i32
    %c0_i32_0 = arith.constant 0 : i32
    %c0_i32_1 = arith.constant 0 : i32
    return %c0_i32, %c0_i32_0 : i32, i32
  }
  func.func @transform_3(%arg0: i32, %arg1: i32) -> (i32, i32, i32, i32, i32, i32) {
    %c0_i32 = arith.constant 0 : i32
    %c0_i32_0 = arith.constant 0 : i32
    %c0_i32_1 = arith.constant 0 : i32
    %c0_i32_2 = arith.constant 0 : i32
    %c0_i32_3 = arith.constant 0 : i32
    return %arg0, %c0_i32, %c0_i32_0, %arg1, %c0_i32_1, %c0_i32_2 : i32, i32, i32, i32, i32, i32
  }
}

module attributes {stable_mosaic.version = 11 : i64} {
  func.func @_upsample_conv_kernel(%arg0: i32, %arg1: i32, %arg2: memref<1x18x24x4xf32, #tpu.memory_space<vmem>>, %arg3: memref<2x2x16x4xf32, #tpu.memory_space<vmem>>, %arg4: memref<1x4xf32, #tpu.memory_space<vmem>>, %arg5: memref<1x2x2x16x16x4xf32, #tpu.memory_space<vmem>>) attributes {dimension_semantics = [#tpu.dimension_semantics<parallel>, #tpu.dimension_semantics<parallel>], iteration_bounds = array<i64: 2, 1>, scalar_prefetch = 0 : i64, scratch_operands = 0 : i64, tpu.core_type = #tpu.core_type<tc>, window_params = [{transform_indices = @transform_0, window_bounds = array<i64: 1, 18, 24, 4>}, {pipeline_mode = #tpu.pipeline_mode<synchronous>, transform_indices = @transform_1, window_bounds = array<i64: 2, 2, 16, 4>}, {pipeline_mode = #tpu.pipeline_mode<synchronous>, transform_indices = @transform_2, window_bounds = array<i64: 1, 4>}, {transform_indices = @transform_3, window_bounds = array<i64: 1, 2, 2, 16, 16, 4>}]} {
    %c16_i32 = arith.constant 16 : i32
    %0 = arith.muli %arg1, %c16_i32 : i32
    %1 = tpu.assume_multiple %0, 16 : i32
    %c0 = arith.constant 0 : index
    %c0_0 = arith.constant 0 : index
    %2 = vector.load %arg4[%c0, %c0_0] : memref<1x4xf32, #tpu.memory_space<vmem>>, vector<1x4xf32>
    %3 = vector.shape_cast %2 : vector<1x4xf32> to vector<1x4xf32>
    %4 = vector.broadcast %3 : vector<1x4xf32> to vector<256x4xf32>
    %c0_i32 = arith.constant 0 : i32
    %5 = arith.addi %1, %c0_i32 : i32
    %c0_1 = arith.constant 0 : index
    %6 = arith.index_cast %5 : i32 to index
    %c0_2 = arith.constant 0 : index
    %c0_3 = arith.constant 0 : index
    %7 = vector.load %arg2[%c0_1, %6, %c0_2, %c0_3] : memref<1x18x24x4xf32, #tpu.memory_space<vmem>>, vector<1x16x16x4xf32>
    %8 = vector.shape_cast %7 : vector<1x16x16x4xf32> to vector<16x16x4xf32>
    %c0_i32_4 = arith.constant 0 : i32
    %9 = arith.addi %1, %c0_i32_4 : i32
    %c0_5 = arith.constant 0 : index
    %10 = arith.index_cast %9 : i32 to index
    %c1 = arith.constant 1 : index
    %c0_6 = arith.constant 0 : index
    %11 = vector.load %arg2[%c0_5, %10, %c1, %c0_6] : memref<1x18x24x4xf32, #tpu.memory_space<vmem>>, vector<1x16x16x4xf32>
    %12 = vector.shape_cast %11 : vector<1x16x16x4xf32> to vector<16x16x4xf32>
    %c0_i32_7 = arith.constant 0 : i32
    %13 = arith.addi %1, %c0_i32_7 : i32
    %c0_8 = arith.constant 0 : index
    %14 = arith.index_cast %13 : i32 to index
    %c2 = arith.constant 2 : index
    %c0_9 = arith.constant 0 : index
    %15 = vector.load %arg2[%c0_8, %14, %c2, %c0_9] : memref<1x18x24x4xf32, #tpu.memory_space<vmem>>, vector<1x16x16x4xf32>
    %16 = vector.shape_cast %15 : vector<1x16x16x4xf32> to vector<16x16x4xf32>
    %c1_i32 = arith.constant 1 : i32
    %17 = arith.addi %1, %c1_i32 : i32
    %c0_10 = arith.constant 0 : index
    %18 = arith.index_cast %17 : i32 to index
    %c0_11 = arith.constant 0 : index
    %c0_12 = arith.constant 0 : index
    %19 = vector.load %arg2[%c0_10, %18, %c0_11, %c0_12] : memref<1x18x24x4xf32, #tpu.memory_space<vmem>>, vector<1x16x16x4xf32>
    %20 = vector.shape_cast %19 : vector<1x16x16x4xf32> to vector<16x16x4xf32>
    %c1_i32_13 = arith.constant 1 : i32
    %21 = arith.addi %1, %c1_i32_13 : i32
    %c0_14 = arith.constant 0 : index
    %22 = arith.index_cast %21 : i32 to index
    %c1_15 = arith.constant 1 : index
    %c0_16 = arith.constant 0 : index
    %23 = vector.load %arg2[%c0_14, %22, %c1_15, %c0_16] : memref<1x18x24x4xf32, #tpu.memory_space<vmem>>, vector<1x16x16x4xf32>
    %24 = vector.shape_cast %23 : vector<1x16x16x4xf32> to vector<16x16x4xf32>
    %c1_i32_17 = arith.constant 1 : i32
    %25 = arith.addi %1, %c1_i32_17 : i32
    %c0_18 = arith.constant 0 : index
    %26 = arith.index_cast %25 : i32 to index
    %c2_19 = arith.constant 2 : index
    %c0_20 = arith.constant 0 : index
    %27 = vector.load %arg2[%c0_18, %26, %c2_19, %c0_20] : memref<1x18x24x4xf32, #tpu.memory_space<vmem>>, vector<1x16x16x4xf32>
    %28 = vector.shape_cast %27 : vector<1x16x16x4xf32> to vector<16x16x4xf32>
    %c2_i32 = arith.constant 2 : i32
    %29 = arith.addi %1, %c2_i32 : i32
    %c0_21 = arith.constant 0 : index
    %30 = arith.index_cast %29 : i32 to index
    %c0_22 = arith.constant 0 : index
    %c0_23 = arith.constant 0 : index
    %31 = vector.load %arg2[%c0_21, %30, %c0_22, %c0_23] : memref<1x18x24x4xf32, #tpu.memory_space<vmem>>, vector<1x16x16x4xf32>
    %32 = vector.shape_cast %31 : vector<1x16x16x4xf32> to vector<16x16x4xf32>
    %c2_i32_24 = arith.constant 2 : i32
    %33 = arith.addi %1, %c2_i32_24 : i32
    %c0_25 = arith.constant 0 : index
    %34 = arith.index_cast %33 : i32 to index
    %c1_26 = arith.constant 1 : index
    %c0_27 = arith.constant 0 : index
    %35 = vector.load %arg2[%c0_25, %34, %c1_26, %c0_27] : memref<1x18x24x4xf32, #tpu.memory_space<vmem>>, vector<1x16x16x4xf32>
    %36 = vector.shape_cast %35 : vector<1x16x16x4xf32> to vector<16x16x4xf32>
    %c2_i32_28 = arith.constant 2 : i32
    %37 = arith.addi %1, %c2_i32_28 : i32
    %c0_29 = arith.constant 0 : index
    %38 = arith.index_cast %37 : i32 to index
    %c2_30 = arith.constant 2 : index
    %c0_31 = arith.constant 0 : index
    %39 = vector.load %arg2[%c0_29, %38, %c2_30, %c0_31] : memref<1x18x24x4xf32, #tpu.memory_space<vmem>>, vector<1x16x16x4xf32>
    %40 = vector.shape_cast %39 : vector<1x16x16x4xf32> to vector<16x16x4xf32>
    %41 = tpu.concatenate %8, %12, %20, %24 in 2 : vector<16x16x4xf32>, vector<16x16x4xf32>, vector<16x16x4xf32>, vector<16x16x4xf32> -> vector<16x16x16xf32>
    %42 = vector.shape_cast %41 : vector<16x16x16xf32> to vector<256x16xf32>
    %c0_32 = arith.constant 0 : index
    %c0_33 = arith.constant 0 : index
    %c0_34 = arith.constant 0 : index
    %c0_35 = arith.constant 0 : index
    %43 = vector.load %arg3[%c0_32, %c0_33, %c0_34, %c0_35] : memref<2x2x16x4xf32, #tpu.memory_space<vmem>>, vector<1x1x16x4xf32>
    %44 = vector.shape_cast %43 : vector<1x1x16x4xf32> to vector<16x4xf32>
    %cst = arith.constant dense<0.000000e+00> : vector<256x4xf32>
    %45 = tpu.matmul %42, %44, %cst {dimension_numbers = #tpu.dot_dimension_numbers<[1], [0], [0], [1], [0, 0, 1, 1], [], []>} : vector<256x16xf32>, vector<16x4xf32>, vector<256x4xf32> -> vector<256x4xf32>
    %46 = arith.addf %45, %4 : vector<256x4xf32>
    %47 = vector.shape_cast %46 : vector<256x4xf32> to vector<16x16x4xf32>
    %c0_36 = arith.constant 0 : index
    %c0_37 = arith.constant 0 : index
    %c0_38 = arith.constant 0 : index
    %c0_39 = arith.constant 0 : index
    %c0_40 = arith.constant 0 : index
    %c0_41 = arith.constant 0 : index
    %48 = vector.load %arg5[%c0_36, %c0_37, %c0_38, %c0_39, %c0_40, %c0_41] : memref<1x2x2x16x16x4xf32, #tpu.memory_space<vmem>>, vector<1x1x1x16x16x4xf32>
    %49 = vector.shape_cast %48 : vector<1x1x1x16x16x4xf32> to vector<16x16x4xf32>
    %50 = vector.shape_cast %47 : vector<16x16x4xf32> to vector<1x1x1x16x16x4xf32>
    tpu.vector_store %arg5[%c0_36, %c0_37, %c0_38, %c0_39, %c0_40, %c0_41], %50 {strides = array<i32>} : memref<1x2x2x16x16x4xf32, #tpu.memory_space<vmem>>, vector<1x1x1x16x16x4xf32>,
    %51 = tpu.concatenate %12, %16, %24, %28 in 2 : vector<16x16x4xf32>, vector<16x16x4xf32>, vector<16x16x4xf32>, vector<16x16x4xf32> -> vector<16x16x16xf32>
    %52 = vector.shape_cast %51 : vector<16x16x16xf32> to vector<256x16xf32>
    %c0_42 = arith.constant 0 : index
    %c1_43 = arith.constant 1 : index
    %c0_44 = arith.constant 0 : index
    %c0_45 = arith.constant 0 : index
    %53 = vector.load %arg3[%c0_42, %c1_43, %c0_44, %c0_45] : memref<2x2x16x4xf32, #tpu.memory_space<vmem>>, vector<1x1x16x4xf32>
    %54 = vector.shape_cast %53 : vector<1x1x16x4xf32> to vector<16x4xf32>
    %cst_46 = arith.constant dense<0.000000e+00> : vector<256x4xf32>
    %55 = tpu.matmul %52, %54, %cst_46 {dimension_numbers = #tpu.dot_dimension_numbers<[1], [0], [0], [1], [0, 0, 1, 1], [], []>} : vector<256x16xf32>, vector<16x4xf32>, vector<256x4xf32> -> vector<256x4xf32>
    %56 = arith.addf %55, %4 : vector<256x4xf32>
    %57 = vector.shape_cast %56 : vector<256x4xf32> to vector<16x16x4xf32>
    %c0_47 = arith.constant 0 : index
    %c0_48 = arith.constant 0 : index
    %c1_49 = arith.constant 1 : index
    %c0_50 = arith.constant 0 : index
    %c0_51 = arith.constant 0 : index
    %c0_52 = arith.constant 0 : index
    %58 = vector.load %arg5[%c0_47, %c0_48, %c1_49, %c0_50, %c0_51, %c0_52] : memref<1x2x2x16x16x4xf32, #tpu.memory_space<vmem>>, vector<1x1x1x16x16x4xf32>
    %59 = vector.shape_cast %58 : vector<1x1x1x16x16x4xf32> to vector<16x16x4xf32>
    %60 = vector.shape_cast %57 : vector<16x16x4xf32> to vector<1x1x1x16x16x4xf32>
    tpu.vector_store %arg5[%c0_47, %c0_48, %c1_49, %c0_50, %c0_51, %c0_52], %60 {strides = array<i32>} : memref<1x2x2x16x16x4xf32, #tpu.memory_space<vmem>>, vector<1x1x1x16x16x4xf32>,
    %61 = tpu.concatenate %20, %24, %32, %36 in 2 : vector<16x16x4xf32>, vector<16x16x4xf32>, vector<16x16x4xf32>, vector<16x16x4xf32> -> vector<16x16x16xf32>
    %62 = vector.shape_cast %61 : vector<16x16x16xf32> to vector<256x16xf32>
    %c1_53 = arith.constant 1 : index
    %c0_54 = arith.constant 0 : index
    %c0_55 = arith.constant 0 : index
    %c0_56 = arith.constant 0 : index
    %63 = vector.load %arg3[%c1_53, %c0_54, %c0_55, %c0_56] : memref<2x2x16x4xf32, #tpu.memory_space<vmem>>, vector<1x1x16x4xf32>
    %64 = vector.shape_cast %63 : vector<1x1x16x4xf32> to vector<16x4xf32>
    %cst_57 = arith.constant dense<0.000000e+00> : vector<256x4xf32>
    %65 = tpu.matmul %62, %64, %cst_57 {dimension_numbers = #tpu.dot_dimension_numbers<[1], [0], [0], [1], [0, 0, 1, 1], [], []>} : vector<256x16xf32>, vector<16x4xf32>, vector<256x4xf32> -> vector<256x4xf32>
    %66 = arith.addf %65, %4 : vector<256x4xf32>
    %67 = vector.shape_cast %66 : vector<256x4xf32> to vector<16x16x4xf32>
    %c0_58 = arith.constant 0 : index
    %c1_59 = arith.constant 1 : index
    %c0_60 = arith.constant 0 : index
    %c0_61 = arith.constant 0 : index
    %c0_62 = arith.constant 0 : index
    %c0_63 = arith.constant 0 : index
    %68 = vector.load %arg5[%c0_58, %c1_59, %c0_60, %c0_61, %c0_62, %c0_63] : memref<1x2x2x16x16x4xf32, #tpu.memory_space<vmem>>, vector<1x1x1x16x16x4xf32>
    %69 = vector.shape_cast %68 : vector<1x1x1x16x16x4xf32> to vector<16x16x4xf32>
    %70 = vector.shape_cast %67 : vector<16x16x4xf32> to vector<1x1x1x16x16x4xf32>
    tpu.vector_store %arg5[%c0_58, %c1_59, %c0_60, %c0_61, %c0_62, %c0_63], %70 {strides = array<i32>} : memref<1x2x2x16x16x4xf32, #tpu.memory_space<vmem>>, vector<1x1x1x16x16x4xf32>,
    %71 = tpu.concatenate %24, %28, %36, %40 in 2 : vector<16x16x4xf32>, vector<16x16x4xf32>, vector<16x16x4xf32>, vector<16x16x4xf32> -> vector<16x16x16xf32>
    %72 = vector.shape_cast %71 : vector<16x16x16xf32> to vector<256x16xf32>
    %c1_64 = arith.constant 1 : index
    %c1_65 = arith.constant 1 : index
    %c0_66 = arith.constant 0 : index
    %c0_67 = arith.constant 0 : index
    %73 = vector.load %arg3[%c1_64, %c1_65, %c0_66, %c0_67] : memref<2x2x16x4xf32, #tpu.memory_space<vmem>>, vector<1x1x16x4xf32>
    %74 = vector.shape_cast %73 : vector<1x1x16x4xf32> to vector<16x4xf32>
    %cst_68 = arith.constant dense<0.000000e+00> : vector<256x4xf32>
    %75 = tpu.matmul %72, %74, %cst_68 {dimension_numbers = #tpu.dot_dimension_numbers<[1], [0], [0], [1], [0, 0, 1, 1], [], []>} : vector<256x16xf32>, vector<16x4xf32>, vector<256x4xf32> -> vector<256x4xf32>
    %76 = arith.addf %75, %4 : vector<256x4xf32>
    %77 = vector.shape_cast %76 : vector<256x4xf32> to vector<16x16x4xf32>
    %c0_69 = arith.constant 0 : index
    %c1_70 = arith.constant 1 : index
    %c1_71 = arith.constant 1 : index
    %c0_72 = arith.constant 0 : index
    %c0_73 = arith.constant 0 : index
    %c0_74 = arith.constant 0 : index
    %78 = vector.load %arg5[%c0_69, %c1_70, %c1_71, %c0_72, %c0_73, %c0_74] : memref<1x2x2x16x16x4xf32, #tpu.memory_space<vmem>>, vector<1x1x1x16x16x4xf32>
    %79 = vector.shape_cast %78 : vector<1x1x1x16x16x4xf32> to vector<16x16x4xf32>
    %80 = vector.shape_cast %77 : vector<16x16x4xf32> to vector<1x1x1x16x16x4xf32>
    tpu.vector_store %arg5[%c0_69, %c1_70, %c1_71, %c0_72, %c0_73, %c0_74], %80 {strides = array<i32>} : memref<1x2x2x16x16x4xf32, #tpu.memory_space<vmem>>, vector<1x1x1x16x16x4xf32>,
    return
  }
  func.func @transform_0(%arg0: i32, %arg1: i32) -> (i32, i32, i32, i32) {
    %c0_i32 = arith.constant 0 : i32
    %c0_i32_0 = arith.constant 0 : i32
    %c0_i32_1 = arith.constant 0 : i32
    %c0_i32_2 = arith.constant 0 : i32
    return %arg0, %c0_i32, %c0_i32_0, %c0_i32_1 : i32, i32, i32, i32
  }
  func.func @transform_1(%arg0: i32, %arg1: i32) -> (i32, i32, i32, i32) {
    %c0_i32 = arith.constant 0 : i32
    %c0_i32_0 = arith.constant 0 : i32
    %c0_i32_1 = arith.constant 0 : i32
    %c0_i32_2 = arith.constant 0 : i32
    %c0_i32_3 = arith.constant 0 : i32
    return %c0_i32, %c0_i32_0, %c0_i32_1, %c0_i32_2 : i32, i32, i32, i32
  }
  func.func @transform_2(%arg0: i32, %arg1: i32) -> (i32, i32) {
    %c0_i32 = arith.constant 0 : i32
    %c0_i32_0 = arith.constant 0 : i32
    %c0_i32_1 = arith.constant 0 : i32
    return %c0_i32, %c0_i32_0 : i32, i32
  }
  func.func @transform_3(%arg0: i32, %arg1: i32) -> (i32, i32, i32, i32, i32, i32) {
    %c0_i32 = arith.constant 0 : i32
    %c0_i32_0 = arith.constant 0 : i32
    %c0_i32_1 = arith.constant 0 : i32
    %c0_i32_2 = arith.constant 0 : i32
    %c0_i32_3 = arith.constant 0 : i32
    return %arg0, %c0_i32, %c0_i32_0, %arg1, %c0_i32_1, %c0_i32_2 : i32, i32, i32, i32, i32, i32
  }
}

</mosaic_0001>

<llo_original>
// kernel: tpu_custom_call.1
$region0: #{tpu_custom_call.1}
  #allocation0 [shape = 'u32[]', space=smem, size = 0x4, offset = 0x4, fixed_abs, tag = 'smem constant byte address 0x4 - core index']
  #allocation1 [shape = 'u32[144,128]{1,0:T(1,128)}', space=vmem, size = 0x12000, scoped, tag = 'internal scratch']
  %s0 = inlined_call_operand.vmem [shape: f32[2,18,24,4], index: 0, kind: input, shape index: {}]
  %s1 = inlined_call_operand.vmem [shape: f32[2,2,16,4], index: 1, kind: input, shape index: {}]
  %s2 = inlined_call_operand.vmem [shape: f32[1,4], index: 2, kind: input, shape index: {}]
  %s3 = inlined_call_operand.vmem [shape: f32[2,2,2,16,16,4], index: 3, kind: output, shape index: {}]
  %s4 = sld [smem:[#allocation0]]
  $region45: #{tpu_custom_call.1} parent=0
    _
  %s6 = ssub.s32 1, %s4
  %s7 = scalar_select 0, %s6, %s4
  loop: start=0, step=1, limit=4
  $region2: #{tpu_custom_call.1} parent=0 // loop_pre_header
    _
  $region3: #{tpu_custom_call.1} parent=0 // loop_header
    %s9 = sphi 0, %s13
    %p10 = scmp.ge.s32.totalorder %s9, 4
    %s16 = sphi 0, %s28
    %s17 = sphi 0, %s24
    %s18 = sphi 0, %s16
    %s19 = sphi 0, %s17
    %s20 = sphi 0, %s18
    %s21 = sphi 0, %s19
    %s31 = sphi 0, %s33
    %s34 = sphi 0, %s31
    %s35 = sphi 0, %s34
    %s51 = sphi 0, %s35
    %s55 = sphi 0, %s55
    %s57 = sphi 0, %s55
    %s58 = sphi 0, %s57
    %s72 = sphi 0, %s58
    %s76 = sphi 0, %s76
    %s78 = sphi 0, %s76
    %s79 = sphi 0, %s78
    %s93 = sphi 0, %s79
    %s101 = sphi 0, %s103
    %s104 = sphi 0, %s101
    %s105 = sphi 0, %s104
    %s121 = sphi 0, %s105
  $region4: #{tpu_custom_call.1} parent=0 // loop_header_branch
    %12 = sbr.rel (%p10) target = $region8
  $region5: #{tpu_custom_call.1} parent=0 // loop_body
    %s14 = ssub.s32 %s9, 1
    %s15 = ssub.s32 %s9, 2
    %s22 = sadd.s32 1, %s17
    %p23 = scmp.ge.s32.totalorder %s22, 1
    %s24 = scalar_select %p23, 0, %s22
    %s25 = sadd.s32 1, %s16
    %s26 = scalar_select %p23, %s25, %s16
    %p27 = scmp.ge.s32.totalorder %s26, 2
    %s28 = scalar_select %p27, 0, %s26
    %s29 = ssub.s32 %s16, %s28
    %p30 = scmp.eq.s32.totalorder %s29, 0
    %s32 = sadd.s32 %s31, 1
    %s33 = scalar_select %p30, %s31, %s32
    %p36 = pneg %p30
    %p37 = scmp.eq.s32.totalorder %s9, 1
    %p38 = por %p36, %p37
    %p39 = scmp.ne.s32.totalorder %s31, %s34
    %p40 = scmp.eq.s32.totalorder %s9, 0
    %p41 = por %p39, %p40
    %p42 = scmp.ne.s32.totalorder %s31, %s34
    %p43 = scmp.eq.s32.totalorder %s14, 1
    %p44 = por %p42, %p43
    %p45 = scmp.ne.s32.totalorder %s34, %s35
    %p46 = scmp.eq.s32.totalorder %s14, 0
    %p47 = por %p45, %p46
    %p48 = scmp.ne.s32.totalorder %s34, %s35
    %p49 = scmp.eq.s32.totalorder %s15, 1
    %p50 = por %p48, %p49
    %p52 = scmp.ne.s32.totalorder %s35, %s51
    %p53 = scmp.eq.s32.totalorder %s15, 0
    %p54 = por %p52, %p53
    %s56 = sadd.s32 %s55, 1
    %p59 = scmp.eq.s32.totalorder %s9, 1
    %p60 = scmp.ne.s32.totalorder %s55, %s57
    %p61 = scmp.eq.s32.totalorder %s9, 0
    %p62 = por %p60, %p61
    %p63 = scmp.ne.s32.totalorder %s55, %s57
    %p64 = scmp.eq.s32.totalorder %s14, 1
    %p65 = por %p63, %p64
    %p66 = scmp.ne.s32.totalorder %s57, %s58
    %p67 = scmp.eq.s32.totalorder %s14, 0
    %p68 = por %p66, %p67
    %p69 = scmp.ne.s32.totalorder %s57, %s58
    %p70 = scmp.eq.s32.totalorder %s15, 1
    %p71 = por %p69, %p70
    %p73 = scmp.ne.s32.totalorder %s58, %s72
    %p74 = scmp.eq.s32.totalorder %s15, 0
    %p75 = por %p73, %p74
    %s77 = sadd.s32 %s76, 1
    %p80 = scmp.eq.s32.totalorder %s9, 1
    %p81 = scmp.ne.s32.totalorder %s76, %s78
    %p82 = scmp.eq.s32.totalorder %s9, 0
    %p83 = por %p81, %p82
    %p84 = scmp.ne.s32.totalorder %s76, %s78
    %p85 = scmp.eq.s32.totalorder %s14, 1
    %p86 = por %p84, %p85
    %p87 = scmp.ne.s32.totalorder %s78, %s79
    %p88 = scmp.eq.s32.totalorder %s14, 0
    %p89 = por %p87, %p88
    %p90 = scmp.ne.s32.totalorder %s78, %s79
    %p91 = scmp.eq.s32.totalorder %s15, 1
    %p92 = por %p90, %p91
    %p94 = scmp.ne.s32.totalorder %s79, %s93
    %p95 = scmp.eq.s32.totalorder %s15, 0
    %p96 = por %p94, %p95
    %s97 = ssub.s32 %s16, %s28
    %s98 = ssub.s32 %s17, %s24
    %s99 = sor.u32 %s97, %s98
    %p100 = scmp.eq.s32.totalorder %s99, 0
    %s102 = sadd.s32 %s101, 1
    %s103 = scalar_select %p100, %s101, %s102
    %p106 = pneg %p100
    %p107 = scmp.eq.s32.totalorder %s9, 1
    %p108 = por %p106, %p107
    %p109 = scmp.ne.s32.totalorder %s101, %s104
    %p110 = scmp.eq.s32.totalorder %s9, 0
    %p111 = por %p109, %p110
    %p112 = scmp.ne.s32.totalorder %s101, %s104
    %p113 = scmp.eq.s32.totalorder %s14, 1
    %p114 = por %p112, %p113
    %p115 = scmp.ne.s32.totalorder %s104, %s105
    %p116 = scmp.eq.s32.totalorder %s14, 0
    %p117 = por %p115, %p116
    %p118 = scmp.ne.s32.totalorder %s104, %s105
    %p119 = scmp.eq.s32.totalorder %s15, 1
    %p120 = por %p118, %p119
    %p122 = scmp.ne.s32.totalorder %s105, %s121
    %p123 = scmp.eq.s32.totalorder %s15, 0
    %p124 = por %p122, %p123
    %p125 = scmp.le.s32.totalorder 1, %s9
    %p126 = scmp.lt.s32.totalorder %s9, 3
    %p127 = pnand %p125, %p126
    %p128 = pneg %p127
    // Predicated region
    $region9: #{tpu_custom_call.1} parent=5 // pred_check
      _
    $region10: #{tpu_custom_call.1} parent=5 // pred_check_branch
      %130 = sbr.rel (%p127) target = $region12
    $region11: #{tpu_custom_call.1} parent=5 // pred_region
      %s131 = ssub.s32 %s9, 1
      // Predicated region
      $region13: #{tpu_custom_call.1} parent=11 // pred_check
        %p132 = pneg %p47
      $region14: #{tpu_custom_call.1} parent=11 // pred_check_branch
        %134 = sbr.rel (%p132) target = $region16
      $region15: #{tpu_custom_call.1} parent=11 // pred_region
        %p135 = scmp.lt.s32.totalorder %s18, 1
        %s136 = scalar_select %p135, %s18, 1
        %s137 = smul.addr %s136, 54
        %s138 = smul.addr %s137, 8
        %s139 = scalar_lea.vmem %s0, %s138
      $region16: #{tpu_custom_call.1} parent=11 // pred_fallthru
        _
      // Predicated region
      $region17: #{tpu_custom_call.1} parent=11 // pred_check
        %p140 = pneg %p68
      $region18: #{tpu_custom_call.1} parent=11 // pred_check_branch
        %142 = sbr.rel (%p140) target = $region20
      $region19: #{tpu_custom_call.1} parent=11 // pred_region
        _
      $region20: #{tpu_custom_call.1} parent=11 // pred_fallthru
        _
      // Predicated region
      $region21: #{tpu_custom_call.1} parent=11 // pred_check
        %p143 = pneg %p89
      $region22: #{tpu_custom_call.1} parent=11 // pred_check_branch
        %145 = sbr.rel (%p143) target = $region24
      $region23: #{tpu_custom_call.1} parent=11 // pred_region
        _
      $region24: #{tpu_custom_call.1} parent=11 // pred_fallthru
        _
    $region12: #{tpu_custom_call.1} parent=5 // pred_fallthru
      _
    %p146 = scmp.lt.s32.totalorder %s9, 2
    // Predicated region
    $region25: #{tpu_custom_call.1} parent=5 // pred_check
      %p147 = pneg %p146
    $region26: #{tpu_custom_call.1} parent=5 // pred_check_branch
      %149 = sbr.rel (%p147) target = $region28
    $region27: #{tpu_custom_call.1} parent=5 // pred_region
      _
    $region28: #{tpu_custom_call.1} parent=5 // pred_fallthru
      _
    %p150 = scmp.le.s32.totalorder 1, %s9
    %p151 = scmp.lt.s32.totalorder %s9, 3
    %p152 = pnand %p150, %p151
    %p153 = pneg %p152
    // Predicated region
    $region29: #{tpu_custom_call.1} parent=5 // pred_check
      _
    $region30: #{tpu_custom_call.1} parent=5 // pred_check_branch
      %155 = sbr.rel (%p152) target = $region32
    $region31: #{tpu_custom_call.1} parent=5 // pred_region
      %s156 = ssub.s32 %s9, 1
      %p157 = scmp.lt.s32.totalorder %s18, 1
      %s158 = scalar_select %p157, %s18, 1
      %s159 = smul.addr %s158, 54
      %s160 = smul.addr %s159, 8
      %s161 = scalar_lea.vmem %s0, %s160
      %p162 = pneg %p47
      %p163 = pneg %p44
      %p164 = pneg %p68
      %p165 = pneg %p65
      %p166 = pneg %p89
      %p167 = pneg %p86
      %p168 = pneg %p117
      %p169 = pneg %p114
      %s170 = smul.u32 16, %s19
      %p171 = scmp.lt.s32.totalorder %s18, 1
      %s172 = scalar_select %p171, %s18, 1
      %p173 = scmp.lt.s32.totalorder %s170, 15
      %s174 = scalar_select %p173, %s170, 15
      %s175 = smul.addr %s174, 2
      %s176 = smul.addr %s172, 128
      %s177 = sadd.s32 %s175, %s176
      %s178 = smul.addr %s177, 8
      %s179 = scalar_lea.vmem %s3, %s178
      %p180 = scmp.lt.s32.totalorder %s18, 1
      %s181 = scalar_select %p180, %s18, 1
      %s182 = smul.addr %s181, 54
      %s183 = smul.addr %s182, 8
      %s184 = scalar_lea.vmem %s0, %s183
      %s185 = smul.u32 16, %s19
      %p186 = scmp.lt.s32.totalorder %s18, 1
      %s187 = scalar_select %p186, %s18, 1
      %p188 = scmp.lt.s32.totalorder %s185, 15
      %s189 = scalar_select %p188, %s185, 15
      %s190 = smul.addr %s189, 2
      %s191 = smul.addr %s187, 128
      %s192 = sadd.s32 %s190, %s191
      %s193 = smul.addr %s192, 8
      %s194 = scalar_lea.vmem %s3, %s193
      %s195 = smul.u32 16, %s19
      %s196 = smul.u32 %s19, 16
      %v197 = vld [vmem:[%s2] sm:$0x1]
      %v199 = vlaneseq
      %v200 = vshrl.u32 %v199, 7
      %v201 = vsub.s32 0, %v200
      %v202 = vrot.slane %v197, %v201
      %s204 = smul.u32 %s196, 24
      %s205 = scalar_lea.vmem %s184, %s204
      %v206 = vld [vmem:[%s205] sm:$0xff]
      %v207 = vld [vmem:[%s205 + $0x8] sm:$0xff]
      %v208 = vld [vmem:[%s205 + $0x18] sm:$0xff]
      %v209 = vld [vmem:[%s205 + $0x20] sm:$0xff]
      %v210 = vld [vmem:[%s205 + $0x30] sm:$0xff]
      %v211 = vld [vmem:[%s205 + $0x38] sm:$0xff]
      %v212 = vld [vmem:[%s205 + $0x48] sm:$0xff]
      %v213 = vld [vmem:[%s205 + $0x50] sm:$0xff]
      %v214 = vld [vmem:[%s205 + $0x60] sm:$0xff]
      %v215 = vld [vmem:[%s205 + $0x68] sm:$0xff]
      %v216 = vld [vmem:[%s205 + $0x78] sm:$0xff]
      %v217 = vld [vmem:[%s205 + $0x80] sm:$0xff]
      %v218 = vld [vmem:[%s205 + $0x90] sm:$0xff]
      %v219 = vld [vmem:[%s205 + $0x98] sm:$0xff]
      %v220 = vld [vmem:[%s205 + $0xa8] sm:$0xff]
      %v221 = vld [vmem:[%s205 + $0xb0] sm:$0xff]
      %v222 = vld [vmem:[%s205 + $0xc0] sm:$0xff]
      %v223 = vld [vmem:[%s205 + $0xc8] sm:$0xff]
      %v224 = vld [vmem:[%s205 + $0xd8] sm:$0xff]
      %v225 = vld [vmem:[%s205 + $0xe0] sm:$0xff]
      %v226 = vld [vmem:[%s205 + $0xf0] sm:$0xff]
      %v227 = vld [vmem:[%s205 + $0xf8] sm:$0xff]
      %v228 = vld [vmem:[%s205 + $0x108] sm:$0xff]
      %v229 = vld [vmem:[%s205 + $0x110] sm:$0xff]
      %v230 = vld [vmem:[%s205 + $0x120] sm:$0xff]
      %v231 = vld [vmem:[%s205 + $0x128] sm:$0xff]
      %v232 = vld [vmem:[%s205 + $0x138] sm:$0xff]
      %v233 = vld [vmem:[%s205 + $0x140] sm:$0xff]
      %v234 = vld [vmem:[%s205 + $0x150] sm:$0xff]
      %v235 = vld [vmem:[%s205 + $0x158] sm:$0xff]
      %v236 = vld [vmem:[%s205 + $0x168] sm:$0xff]
      %v237 = vld [vmem:[%s205 + $0x170] sm:$0xff]
      %v238 = vld [vmem:[%s205 + $0x1] sm:$0xff]
      %v239 = vld [vmem:[%s205 + $0x9] sm:$0xff]
      %v240 = vld [vmem:[%s205 + $0x19] sm:$0xff]
      %v241 = vld [vmem:[%s205 + $0x21] sm:$0xff]
      %v242 = vld [vmem:[%s205 + $0x31] sm:$0xff]
      %v243 = vld [vmem:[%s205 + $0x39] sm:$0xff]
      %v244 = vld [vmem:[%s205 + $0x49] sm:$0xff]
      %v245 = vld [vmem:[%s205 + $0x51] sm:$0xff]
      %v246 = vld [vmem:[%s205 + $0x61] sm:$0xff]
      %v247 = vld [vmem:[%s205 + $0x69] sm:$0xff]
      %v248 = vld [vmem:[%s205 + $0x79] sm:$0xff]
      %v249 = vld [vmem:[%s205 + $0x81] sm:$0xff]
      %v250 = vld [vmem:[%s205 + $0x91] sm:$0xff]
      %v251 = vld [vmem:[%s205 + $0x99] sm:$0xff]
      %v252 = vld [vmem:[%s205 + $0xa9] sm:$0xff]
      %v253 = vld [vmem:[%s205 + $0xb1] sm:$0xff]
      %v254 = vld [vmem:[%s205 + $0xc1] sm:$0xff]
      %v255 = vld [vmem:[%s205 + $0xc9] sm:$0xff]
      %v256 = vld [vmem:[%s205 + $0xd9] sm:$0xff]
      %v257 = vld [vmem:[%s205 + $0xe1] sm:$0xff]
      %v258 = vld [vmem:[%s205 + $0xf1] sm:$0xff]
      %v259 = vld [vmem:[%s205 + $0xf9] sm:$0xff]
      %v260 = vld [vmem:[%s205 + $0x109] sm:$0xff]
      %v261 = vld [vmem:[%s205 + $0x111] sm:$0xff]
      %v262 = vld [vmem:[%s205 + $0x121] sm:$0xff]
      %v263 = vld [vmem:[%s205 + $0x129] sm:$0xff]
      %v264 = vld [vmem:[%s205 + $0x139] sm:$0xff]
      %v265 = vld [vmem:[%s205 + $0x141] sm:$0xff]
      %v266 = vld [vmem:[%s205 + $0x151] sm:$0xff]
      %v267 = vld [vmem:[%s205 + $0x159] sm:$0xff]
      %v268 = vld [vmem:[%s205 + $0x169] sm:$0xff]
      %v269 = vld [vmem:[%s205 + $0x171] sm:$0xff]
      %v270 = vld [vmem:[%s205 + $0x2] sm:$0xff]
      %v271 = vld [vmem:[%s205 + $0xa] sm:$0xff]
      %v272 = vld [vmem:[%s205 + $0x1a] sm:$0xff]
      %v273 = vld [vmem:[%s205 + $0x22] sm:$0xff]
      %v274 = vld [vmem:[%s205 + $0x32] sm:$0xff]
      %v275 = vld [vmem:[%s205 + $0x3a] sm:$0xff]
      %v276 = vld [vmem:[%s205 + $0x4a] sm:$0xff]
      %v277 = vld [vmem:[%s205 + $0x52] sm:$0xff]
      %v278 = vld [vmem:[%s205 + $0x62] sm:$0xff]
      %v279 = vld [vmem:[%s205 + $0x6a] sm:$0xff]
      %v280 = vld [vmem:[%s205 + $0x7a] sm:$0xff]
      %v281 = vld [vmem:[%s205 + $0x82] sm:$0xff]
      %v282 = vld [vmem:[%s205 + $0x92] sm:$0xff]
      %v283 = vld [vmem:[%s205 + $0x9a] sm:$0xff]
      %v284 = vld [vmem:[%s205 + $0xaa] sm:$0xff]
      %v285 = vld [vmem:[%s205 + $0xb2] sm:$0xff]
      %v286 = vld [vmem:[%s205 + $0xc2] sm:$0xff]
      %v287 = vld [vmem:[%s205 + $0xca] sm:$0xff]
      %v288 = vld [vmem:[%s205 + $0xda] sm:$0xff]
      %v289 = vld [vmem:[%s205 + $0xe2] sm:$0xff]
      %v290 = vld [vmem:[%s205 + $0xf2] sm:$0xff]
      %v291 = vld [vmem:[%s205 + $0xfa] sm:$0xff]
      %v292 = vld [vmem:[%s205 + $0x10a] sm:$0xff]
      %v293 = vld [vmem:[%s205 + $0x112] sm:$0xff]
      %v294 = vld [vmem:[%s205 + $0x122] sm:$0xff]
      %v295 = vld [vmem:[%s205 + $0x12a] sm:$0xff]
      %v296 = vld [vmem:[%s205 + $0x13a] sm:$0xff]
      %v297 = vld [vmem:[%s205 + $0x142] sm:$0xff]
      %v298 = vld [vmem:[%s205 + $0x152] sm:$0xff]
      %v299 = vld [vmem:[%s205 + $0x15a] sm:$0xff]
      %v300 = vld [vmem:[%s205 + $0x16a] sm:$0xff]
      %v301 = vld [vmem:[%s205 + $0x172] sm:$0xff]
      %s302 = sadd.s32 %s196, 1
      %s303 = smul.u32 %s302, 24
      %s304 = scalar_lea.vmem %s184, %s303
      %v305 = vld [vmem:[%s304] sm:$0xff]
      %v306 = vld [vmem:[%s304 + $0x8] sm:$0xff]
      %v307 = vld [vmem:[%s304 + $0x18] sm:$0xff]
      %v308 = vld [vmem:[%s304 + $0x20] sm:$0xff]
      %v309 = vld [vmem:[%s304 + $0x30] sm:$0xff]
      %v310 = vld [vmem:[%s304 + $0x38] sm:$0xff]
      %v311 = vld [vmem:[%s304 + $0x48] sm:$0xff]
      %v312 = vld [vmem:[%s304 + $0x50] sm:$0xff]
      %v313 = vld [vmem:[%s304 + $0x60] sm:$0xff]
      %v314 = vld [vmem:[%s304 + $0x68] sm:$0xff]
      %v315 = vld [vmem:[%s304 + $0x78] sm:$0xff]
      %v316 = vld [vmem:[%s304 + $0x80] sm:$0xff]
      %v317 = vld [vmem:[%s304 + $0x90] sm:$0xff]
      %v318 = vld [vmem:[%s304 + $0x98] sm:$0xff]
      %v319 = vld [vmem:[%s304 + $0xa8] sm:$0xff]
      %v320 = vld [vmem:[%s304 + $0xb0] sm:$0xff]
      %v321 = vld [vmem:[%s304 + $0xc0] sm:$0xff]
      %v322 = vld [vmem:[%s304 + $0xc8] sm:$0xff]
      %v323 = vld [vmem:[%s304 + $0xd8] sm:$0xff]
      %v324 = vld [vmem:[%s304 + $0xe0] sm:$0xff]
      %v325 = vld [vmem:[%s304 + $0xf0] sm:$0xff]
      %v326 = vld [vmem:[%s304 + $0xf8] sm:$0xff]
      %v327 = vld [vmem:[%s304 + $0x108] sm:$0xff]
      %v328 = vld [vmem:[%s304 + $0x110] sm:$0xff]
      %v329 = vld [vmem:[%s304 + $0x120] sm:$0xff]
      %v330 = vld [vmem:[%s304 + $0x128] sm:$0xff]
      %v331 = vld [vmem:[%s304 + $0x138] sm:$0xff]
      %v332 = vld [vmem:[%s304 + $0x140] sm:$0xff]
      %v333 = vld [vmem:[%s304 + $0x150] sm:$0xff]
      %v334 = vld [vmem:[%s304 + $0x158] sm:$0xff]
      %v335 = vld [vmem:[%s304 + $0x168] sm:$0xff]
      %v336 = vld [vmem:[%s304 + $0x170] sm:$0xff]
      %v337 = vld [vmem:[%s304 + $0x1] sm:$0xff]
      %v338 = vld [vmem:[%s304 + $0x9] sm:$0xff]
      %v339 = vld [vmem:[%s304 + $0x19] sm:$0xff]
      %v340 = vld [vmem:[%s304 + $0x21] sm:$0xff]
      %v341 = vld [vmem:[%s304 + $0x31] sm:$0xff]
      %v342 = vld [vmem:[%s304 + $0x39] sm:$0xff]
      %v343 = vld [vmem:[%s304 + $0x49] sm:$0xff]
      %v344 = vld [vmem:[%s304 + $0x51] sm:$0xff]
      %v345 = vld [vmem:[%s304 + $0x61] sm:$0xff]
      %v346 = vld [vmem:[%s304 + $0x69] sm:$0xff]
      %v347 = vld [vmem:[%s304 + $0x79] sm:$0xff]
      %v348 = vld [vmem:[%s304 + $0x81] sm:$0xff]
      %v349 = vld [vmem:[%s304 + $0x91] sm:$0xff]
      %v350 = vld [vmem:[%s304 + $0x99] sm:$0xff]
      %v351 = vld [vmem:[%s304 + $0xa9] sm:$0xff]
      %v352 = vld [vmem:[%s304 + $0xb1] sm:$0xff]
      %v353 = vld [vmem:[%s304 + $0xc1] sm:$0xff]
      %v354 = vld [vmem:[%s304 + $0xc9] sm:$0xff]
      %v355 = vld [vmem:[%s304 + $0xd9] sm:$0xff]
      %v356 = vld [vmem:[%s304 + $0xe1] sm:$0xff]
      %v357 = vld [vmem:[%s304 + $0xf1] sm:$0xff]
      %v358 = vld [vmem:[%s304 + $0xf9] sm:$0xff]
      %v359 = vld [vmem:[%s304 + $0x109] sm:$0xff]
      %v360 = vld [vmem:[%s304 + $0x111] sm:$0xff]
      %v361 = vld [vmem:[%s304 + $0x121] sm:$0xff]
      %v362 = vld [vmem:[%s304 + $0x129] sm:$0xff]
      %v363 = vld [vmem:[%s304 + $0x139] sm:$0xff]
      %v364 = vld [vmem:[%s304 + $0x141] sm:$0xff]
      %v365 = vld [vmem:[%s304 + $0x151] sm:$0xff]
      %v366 = vld [vmem:[%s304 + $0x159] sm:$0xff]
      %v367 = vld [vmem:[%s304 + $0x169] sm:$0xff]
      %v368 = vld [vmem:[%s304 + $0x171] sm:$0xff]
      %v369 = vld [vmem:[%s304 + $0x2] sm:$0xff]
      %v370 = vld [vmem:[%s304 + $0xa] sm:$0xff]
      %v371 = vld [vmem:[%s304 + $0x1a] sm:$0xff]
      %v372 = vld [vmem:[%s304 + $0x22] sm:$0xff]
      %v373 = vld [vmem:[%s304 + $0x32] sm:$0xff]
      %v374 = vld [vmem:[%s304 + $0x3a] sm:$0xff]
      %v375 = vld [vmem:[%s304 + $0x4a] sm:$0xff]
      %v376 = vld [vmem:[%s304 + $0x52] sm:$0xff]
      %v377 = vld [vmem:[%s304 + $0x62] sm:$0xff]
      %v378 = vld [vmem:[%s304 + $0x6a] sm:$0xff]
      %v379 = vld [vmem:[%s304 + $0x7a] sm:$0xff]
      %v380 = vld [vmem:[%s304 + $0x82] sm:$0xff]
      %v381 = vld [vmem:[%s304 + $0x92] sm:$0xff]
      %v382 = vld [vmem:[%s304 + $0x9a] sm:$0xff]
      %v383 = vld [vmem:[%s304 + $0xaa] sm:$0xff]
      %v384 = vld [vmem:[%s304 + $0xb2] sm:$0xff]
      %v385 = vld [vmem:[%s304 + $0xc2] sm:$0xff]
      %v386 = vld [vmem:[%s304 + $0xca] sm:$0xff]
      %v387 = vld [vmem:[%s304 + $0xda] sm:$0xff]
      %v388 = vld [vmem:[%s304 + $0xe2] sm:$0xff]
      %v389 = vld [vmem:[%s304 + $0xf2] sm:$0xff]
      %v390 = vld [vmem:[%s304 + $0xfa] sm:$0xff]
      %v391 = vld [vmem:[%s304 + $0x10a] sm:$0xff]
      %v392 = vld [vmem:[%s304 + $0x112] sm:$0xff]
      %v393 = vld [vmem:[%s304 + $0x122] sm:$0xff]
      %v394 = vld [vmem:[%s304 + $0x12a] sm:$0xff]
      %v395 = vld [vmem:[%s304 + $0x13a] sm:$0xff]
      %v396 = vld [vmem:[%s304 + $0x142] sm:$0xff]
      %v397 = vld [vmem:[%s304 + $0x152] sm:$0xff]
      %v398 = vld [vmem:[%s304 + $0x15a] sm:$0xff]
      %v399 = vld [vmem:[%s304 + $0x16a] sm:$0xff]
      %v400 = vld [vmem:[%s304 + $0x172] sm:$0xff]
      %s401 = sadd.s32 %s196, 2
      %s402 = smul.u32 %s401, 24
      %s403 = scalar_lea.vmem %s184, %s402
      %v404 = vld [vmem:[%s403] sm:$0xff]
      %v405 = vld [vmem:[%s403 + $0x8] sm:$0xff]
      %v406 = vld [vmem:[%s403 + $0x18] sm:$0xff]
      %v407 = vld [vmem:[%s403 + $0x20] sm:$0xff]
      %v408 = vld [vmem:[%s403 + $0x30] sm:$0xff]
      %v409 = vld [vmem:[%s403 + $0x38] sm:$0xff]
      %v410 = vld [vmem:[%s403 + $0x48] sm:$0xff]
      %v411 = vld [vmem:[%s403 + $0x50] sm:$0xff]
      %v412 = vld [vmem:[%s403 + $0x60] sm:$0xff]
      %v413 = vld [vmem:[%s403 + $0x68] sm:$0xff]
      %v414 = vld [vmem:[%s403 + $0x78] sm:$0xff]
      %v415 = vld [vmem:[%s403 + $0x80] sm:$0xff]
      %v416 = vld [vmem:[%s403 + $0x90] sm:$0xff]
      %v417 = vld [vmem:[%s403 + $0x98] sm:$0xff]
      %v418 = vld [vmem:[%s403 + $0xa8] sm:$0xff]
      %v419 = vld [vmem:[%s403 + $0xb0] sm:$0xff]
      %v420 = vld [vmem:[%s403 + $0xc0] sm:$0xff]
      %v421 = vld [vmem:[%s403 + $0xc8] sm:$0xff]
      %v422 = vld [vmem:[%s403 + $0xd8] sm:$0xff]
      %v423 = vld [vmem:[%s403 + $0xe0] sm:$0xff]
      %v424 = vld [vmem:[%s403 + $0xf0] sm:$0xff]
      %v425 = vld [vmem:[%s403 + $0xf8] sm:$0xff]
      %v426 = vld [vmem:[%s403 + $0x108] sm:$0xff]
      %v427 = vld [vmem:[%s403 + $0x110] sm:$0xff]
      %v428 = vld [vmem:[%s403 + $0x120] sm:$0xff]
      %v429 = vld [vmem:[%s403 + $0x128] sm:$0xff]
      %v430 = vld [vmem:[%s403 + $0x138] sm:$0xff]
      %v431 = vld [vmem:[%s403 + $0x140] sm:$0xff]
      %v432 = vld [vmem:[%s403 + $0x150] sm:$0xff]
      %v433 = vld [vmem:[%s403 + $0x158] sm:$0xff]
      %v434 = vld [vmem:[%s403 + $0x168] sm:$0xff]
      %v435 = vld [vmem:[%s403 + $0x170] sm:$0xff]
      %v436 = vld [vmem:[%s403 + $0x1] sm:$0xff]
      %v437 = vld [vmem:[%s403 + $0x9] sm:$0xff]
      %v438 = vld [vmem:[%s403 + $0x19] sm:$0xff]
      %v439 = vld [vmem:[%s403 + $0x21] sm:$0xff]
      %v440 = vld [vmem:[%s403 + $0x31] sm:$0xff]
      %v441 = vld [vmem:[%s403 + $0x39] sm:$0xff]
      %v442 = vld [vmem:[%s403 + $0x49] sm:$0xff]
      %v443 = vld [vmem:[%s403 + $0x51] sm:$0xff]
      %v444 = vld [vmem:[%s403 + $0x61] sm:$0xff]
      %v445 = vld [vmem:[%s403 + $0x69] sm:$0xff]
      %v446 = vld [vmem:[%s403 + $0x79] sm:$0xff]
      %v447 = vld [vmem:[%s403 + $0x81] sm:$0xff]
      %v448 = vld [vmem:[%s403 + $0x91] sm:$0xff]
      %v449 = vld [vmem:[%s403 + $0x99] sm:$0xff]
      %v450 = vld [vmem:[%s403 + $0xa9] sm:$0xff]
      %v451 = vld [vmem:[%s403 + $0xb1] sm:$0xff]
      %v452 = vld [vmem:[%s403 + $0xc1] sm:$0xff]
      %v453 = vld [vmem:[%s403 + $0xc9] sm:$0xff]
      %v454 = vld [vmem:[%s403 + $0xd9] sm:$0xff]
      %v455 = vld [vmem:[%s403 + $0xe1] sm:$0xff]
      %v456 = vld [vmem:[%s403 + $0xf1] sm:$0xff]
      %v457 = vld [vmem:[%s403 + $0xf9] sm:$0xff]
      %v458 = vld [vmem:[%s403 + $0x109] sm:$0xff]
      %v459 = vld [vmem:[%s403 + $0x111] sm:$0xff]
      %v460 = vld [vmem:[%s403 + $0x121] sm:$0xff]
      %v461 = vld [vmem:[%s403 + $0x129] sm:$0xff]
      %v462 = vld [vmem:[%s403 + $0x139] sm:$0xff]
      %v463 = vld [vmem:[%s403 + $0x141] sm:$0xff]
      %v464 = vld [vmem:[%s403 + $0x151] sm:$0xff]
      %v465 = vld [vmem:[%s403 + $0x159] sm:$0xff]
      %v466 = vld [vmem:[%s403 + $0x169] sm:$0xff]
      %v467 = vld [vmem:[%s403 + $0x171] sm:$0xff]
      %v468 = vld [vmem:[%s403 + $0x2] sm:$0xff]
      %v469 = vld [vmem:[%s403 + $0xa] sm:$0xff]
      %v470 = vld [vmem:[%s403 + $0x1a] sm:$0xff]
      %v471 = vld [vmem:[%s403 + $0x22] sm:$0xff]
      %v472 = vld [vmem:[%s403 + $0x32] sm:$0xff]
      %v473 = vld [vmem:[%s403 + $0x3a] sm:$0xff]
      %v474 = vld [vmem:[%s403 + $0x4a] sm:$0xff]
      %v475 = vld [vmem:[%s403 + $0x52] sm:$0xff]
      %v476 = vld [vmem:[%s403 + $0x62] sm:$0xff]
      %v477 = vld [vmem:[%s403 + $0x6a] sm:$0xff]
      %v478 = vld [vmem:[%s403 + $0x7a] sm:$0xff]
      %v479 = vld [vmem:[%s403 + $0x82] sm:$0xff]
      %v480 = vld [vmem:[%s403 + $0x92] sm:$0xff]
      %v481 = vld [vmem:[%s403 + $0x9a] sm:$0xff]
      %v482 = vld [vmem:[%s403 + $0xaa] sm:$0xff]
      %v483 = vld [vmem:[%s403 + $0xb2] sm:$0xff]
      %v484 = vld [vmem:[%s403 + $0xc2] sm:$0xff]
      %v485 = vld [vmem:[%s403 + $0xca] sm:$0xff]
      %v486 = vld [vmem:[%s403 + $0xda] sm:$0xff]
      %v487 = vld [vmem:[%s403 + $0xe2] sm:$0xff]
      %v488 = vld [vmem:[%s403 + $0xf2] sm:$0xff]
      %v489 = vld [vmem:[%s403 + $0xfa] sm:$0xff]
      %v490 = vld [vmem:[%s403 + $0x10a] sm:$0xff]
      %v491 = vld [vmem:[%s403 + $0x112] sm:$0xff]
      %v492 = vld [vmem:[%s403 + $0x122] sm:$0xff]
      %v493 = vld [vmem:[%s403 + $0x12a] sm:$0xff]
      %v494 = vld [vmem:[%s403 + $0x13a] sm:$0xff]
      %v495 = vld [vmem:[%s403 + $0x142] sm:$0xff]
      %v496 = vld [vmem:[%s403 + $0x152] sm:$0xff]
      %v497 = vld [vmem:[%s403 + $0x15a] sm:$0xff]
      %v498 = vld [vmem:[%s403 + $0x16a] sm:$0xff]
      %v499 = vld [vmem:[%s403 + $0x172] sm:$0xff]
      %532 = vrot.lane.b32.xlu0 %v238, 4
      %v533 = vpop.permute.xlu0 %532
      %534 = vrot.lane.b32.xlu0 %v239, 4
      %v535 = vpop.permute.xlu0 %534
      %536 = vrot.lane.b32.xlu0 %v240, 4
      %v537 = vpop.permute.xlu0 %536
      %538 = vrot.lane.b32.xlu0 %v241, 4
      %v539 = vpop.permute.xlu0 %538
      %540 = vrot.lane.b32.xlu0 %v242, 4
      %v541 = vpop.permute.xlu0 %540
      %542 = vrot.lane.b32.xlu0 %v243, 4
      %v543 = vpop.permute.xlu0 %542
      %544 = vrot.lane.b32.xlu0 %v244, 4
      %v545 = vpop.permute.xlu0 %544
      %546 = vrot.lane.b32.xlu0 %v245, 4
      %v547 = vpop.permute.xlu0 %546
      %548 = vrot.lane.b32.xlu0 %v246, 4
      %v549 = vpop.permute.xlu0 %548
      %550 = vrot.lane.b32.xlu0 %v247, 4
      %v551 = vpop.permute.xlu0 %550
      %552 = vrot.lane.b32.xlu0 %v248, 4
      %v553 = vpop.permute.xlu0 %552
      %554 = vrot.lane.b32.xlu0 %v249, 4
      %v555 = vpop.permute.xlu0 %554
      %556 = vrot.lane.b32.xlu0 %v250, 4
      %v557 = vpop.permute.xlu0 %556
      %558 = vrot.lane.b32.xlu0 %v251, 4
      %v559 = vpop.permute.xlu0 %558
      %560 = vrot.lane.b32.xlu0 %v252, 4
      %v561 = vpop.permute.xlu0 %560
      %562 = vrot.lane.b32.xlu0 %v253, 4
      %v563 = vpop.permute.xlu0 %562
      %564 = vrot.lane.b32.xlu0 %v254, 4
      %v565 = vpop.permute.xlu0 %564
      %566 = vrot.lane.b32.xlu0 %v255, 4
      %v567 = vpop.permute.xlu0 %566
      %568 = vrot.lane.b32.xlu0 %v256, 4
      %v569 = vpop.permute.xlu0 %568
      %570 = vrot.lane.b32.xlu0 %v257, 4
      %v571 = vpop.permute.xlu0 %570
      %572 = vrot.lane.b32.xlu0 %v258, 4
      %v573 = vpop.permute.xlu0 %572
      %574 = vrot.lane.b32.xlu0 %v259, 4
      %v575 = vpop.permute.xlu0 %574
      %576 = vrot.lane.b32.xlu0 %v260, 4
      %v577 = vpop.permute.xlu0 %576
      %578 = vrot.lane.b32.xlu0 %v261, 4
      %v579 = vpop.permute.xlu0 %578
      %580 = vrot.lane.b32.xlu0 %v262, 4
      %v581 = vpop.permute.xlu0 %580
      %582 = vrot.lane.b32.xlu0 %v263, 4
      %v583 = vpop.permute.xlu0 %582
      %584 = vrot.lane.b32.xlu0 %v264, 4
      %v585 = vpop.permute.xlu0 %584
      %586 = vrot.lane.b32.xlu0 %v265, 4
      %v587 = vpop.permute.xlu0 %586
      %588 = vrot.lane.b32.xlu0 %v266, 4
      %v589 = vpop.permute.xlu0 %588
      %590 = vrot.lane.b32.xlu0 %v267, 4
      %v591 = vpop.permute.xlu0 %590
      %592 = vrot.lane.b32.xlu0 %v268, 4
      %v593 = vpop.permute.xlu0 %592
      %594 = vrot.lane.b32.xlu0 %v269, 4
      %v595 = vpop.permute.xlu0 %594
      %660 = vrot.lane.b32.xlu0 %v305, 8
      %v661 = vpop.permute.xlu0 %660
      %662 = vrot.lane.b32.xlu0 %v306, 8
      %v663 = vpop.permute.xlu0 %662
      %664 = vrot.lane.b32.xlu0 %v307, 8
      %v665 = vpop.permute.xlu0 %664
      %666 = vrot.lane.b32.xlu0 %v308, 8
      %v667 = vpop.permute.xlu0 %666
      %668 = vrot.lane.b32.xlu0 %v309, 8
      %v669 = vpop.permute.xlu0 %668
      %670 = vrot.lane.b32.xlu0 %v310, 8
      %v671 = vpop.permute.xlu0 %670
      %672 = vrot.lane.b32.xlu0 %v311, 8
      %v673 = vpop.permute.xlu0 %672
      %674 = vrot.lane.b32.xlu0 %v312, 8
      %v675 = vpop.permute.xlu0 %674
      %676 = vrot.lane.b32.xlu0 %v313, 8
      %v677 = vpop.permute.xlu0 %676
      %678 = vrot.lane.b32.xlu0 %v314, 8
      %v679 = vpop.permute.xlu0 %678
      %680 = vrot.lane.b32.xlu0 %v315, 8
      %v681 = vpop.permute.xlu0 %680
      %682 = vrot.lane.b32.xlu0 %v316, 8
      %v683 = vpop.permute.xlu0 %682
      %684 = vrot.lane.b32.xlu0 %v317, 8
      %v685 = vpop.permute.xlu0 %684
      %686 = vrot.lane.b32.xlu0 %v318, 8
      %v687 = vpop.permute.xlu0 %686
      %688 = vrot.lane.b32.xlu0 %v319, 8
      %v689 = vpop.permute.xlu0 %688
      %690 = vrot.lane.b32.xlu0 %v320, 8
      %v691 = vpop.permute.xlu0 %690
      %692 = vrot.lane.b32.xlu0 %v321, 8
      %v693 = vpop.permute.xlu0 %692
      %694 = vrot.lane.b32.xlu0 %v322, 8
      %v695 = vpop.permute.xlu0 %694
      %696 = vrot.lane.b32.xlu0 %v323, 8
      %v697 = vpop.permute.xlu0 %696
      %698 = vrot.lane.b32.xlu0 %v324, 8
      %v699 = vpop.permute.xlu0 %698
      %700 = vrot.lane.b32.xlu0 %v325, 8
      %v701 = vpop.permute.xlu0 %700
      %702 = vrot.lane.b32.xlu0 %v326, 8
      %v703 = vpop.permute.xlu0 %702
      %704 = vrot.lane.b32.xlu0 %v327, 8
      %v705 = vpop.permute.xlu0 %704
      %706 = vrot.lane.b32.xlu0 %v328, 8
      %v707 = vpop.permute.xlu0 %706
      %708 = vrot.lane.b32.xlu0 %v329, 8
      %v709 = vpop.permute.xlu0 %708
      %710 = vrot.lane.b32.xlu0 %v330, 8
      %v711 = vpop.permute.xlu0 %710
      %712 = vrot.lane.b32.xlu0 %v331, 8
      %v713 = vpop.permute.xlu0 %712
      %714 = vrot.lane.b32.xlu0 %v332, 8
      %v715 = vpop.permute.xlu0 %714
      %716 = vrot.lane.b32.xlu0 %v333, 8
      %v717 = vpop.permute.xlu0 %716
      %718 = vrot.lane.b32.xlu0 %v334, 8
      %v719 = vpop.permute.xlu0 %718
      %720 = vrot.lane.b32.xlu0 %v335, 8
      %v721 = vpop.permute.xlu0 %720
      %722 = vrot.lane.b32.xlu0 %v336, 8
      %v723 = vpop.permute.xlu0 %722
      %788 = vrot.lane.b32.xlu0 %v337, 12
      %v789 = vpop.permute.xlu0 %788
      %790 = vrot.lane.b32.xlu0 %v338, 12
      %v791 = vpop.permute.xlu0 %790
      %792 = vrot.lane.b32.xlu0 %v339, 12
      %v793 = vpop.permute.xlu0 %792
      %794 = vrot.lane.b32.xlu0 %v340, 12
      %v795 = vpop.permute.xlu0 %794
      %796 = vrot.lane.b32.xlu0 %v341, 12
      %v797 = vpop.permute.xlu0 %796
      %798 = vrot.lane.b32.xlu0 %v342, 12
      %v799 = vpop.permute.xlu0 %798
      %800 = vrot.lane.b32.xlu0 %v343, 12
      %v801 = vpop.permute.xlu0 %800
      %802 = vrot.lane.b32.xlu0 %v344, 12
      %v803 = vpop.permute.xlu0 %802
      %804 = vrot.lane.b32.xlu0 %v345, 12
      %v805 = vpop.permute.xlu0 %804
      %806 = vrot.lane.b32.xlu0 %v346, 12
      %v807 = vpop.permute.xlu0 %806
      %808 = vrot.lane.b32.xlu0 %v347, 12
      %v809 = vpop.permute.xlu0 %808
      %810 = vrot.lane.b32.xlu0 %v348, 12
      %v811 = vpop.permute.xlu0 %810
      %812 = vrot.lane.b32.xlu0 %v349, 12
      %v813 = vpop.permute.xlu0 %812
      %814 = vrot.lane.b32.xlu0 %v350, 12
      %v815 = vpop.permute.xlu0 %814
      %816 = vrot.lane.b32.xlu0 %v351, 12
      %v817 = vpop.permute.xlu0 %816
      %818 = vrot.lane.b32.xlu0 %v352, 12
      %v819 = vpop.permute.xlu0 %818
      %820 = vrot.lane.b32.xlu0 %v353, 12
      %v821 = vpop.permute.xlu0 %820
      %822 = vrot.lane.b32.xlu0 %v354, 12
      %v823 = vpop.permute.xlu0 %822
      %824 = vrot.lane.b32.xlu0 %v355, 12
      %v825 = vpop.permute.xlu0 %824
      %826 = vrot.lane.b32.xlu0 %v356, 12
      %v827 = vpop.permute.xlu0 %826
      %828 = vrot.lane.b32.xlu0 %v357, 12
      %v829 = vpop.permute.xlu0 %828
      %830 = vrot.lane.b32.xlu0 %v358, 12
      %v831 = vpop.permute.xlu0 %830
      %832 = vrot.lane.b32.xlu0 %v359, 12
      %v833 = vpop.permute.xlu0 %832
      %834 = vrot.lane.b32.xlu0 %v360, 12
      %v835 = vpop.permute.xlu0 %834
      %836 = vrot.lane.b32.xlu0 %v361, 12
      %v837 = vpop.permute.xlu0 %836
      %838 = vrot.lane.b32.xlu0 %v362, 12
      %v839 = vpop.permute.xlu0 %838
      %840 = vrot.lane.b32.xlu0 %v363, 12
      %v841 = vpop.permute.xlu0 %840
      %842 = vrot.lane.b32.xlu0 %v364, 12
      %v843 = vpop.permute.xlu0 %842
      %844 = vrot.lane.b32.xlu0 %v365, 12
      %v845 = vpop.permute.xlu0 %844
      %846 = vrot.lane.b32.xlu0 %v366, 12
      %v847 = vpop.permute.xlu0 %846
      %848 = vrot.lane.b32.xlu0 %v367, 12
      %v849 = vpop.permute.xlu0 %848
      %850 = vrot.lane.b32.xlu0 %v368, 12
      %v851 = vpop.permute.xlu0 %850
      %vm884 = vcmask 31744
      %v885 = vsel %vm884, %v206, %v533
      %v886 = vsel %vm884, %v207, %v535
      %v887 = vsel %vm884, %v208, %v537
      %v888 = vsel %vm884, %v209, %v539
      %v889 = vsel %vm884, %v210, %v541
      %v890 = vsel %vm884, %v211, %v543
      %v891 = vsel %vm884, %v212, %v545
      %v892 = vsel %vm884, %v213, %v547
      %v893 = vsel %vm884, %v214, %v549
      %v894 = vsel %vm884, %v215, %v551
      %v895 = vsel %vm884, %v216, %v553
      %v896 = vsel %vm884, %v217, %v555
      %v897 = vsel %vm884, %v218, %v557
      %v898 = vsel %vm884, %v219, %v559
      %v899 = vsel %vm884, %v220, %v561
      %v900 = vsel %vm884, %v221, %v563
      %v901 = vsel %vm884, %v222, %v565
      %v902 = vsel %vm884, %v223, %v567
      %v903 = vsel %vm884, %v224, %v569
      %v904 = vsel %vm884, %v225, %v571
      %v905 = vsel %vm884, %v226, %v573
      %v906 = vsel %vm884, %v227, %v575
      %v907 = vsel %vm884, %v228, %v577
      %v908 = vsel %vm884, %v229, %v579
      %v909 = vsel %vm884, %v230, %v581
      %v910 = vsel %vm884, %v231, %v583
      %v911 = vsel %vm884, %v232, %v585
      %v912 = vsel %vm884, %v233, %v587
      %v913 = vsel %vm884, %v234, %v589
      %v914 = vsel %vm884, %v235, %v591
      %v915 = vsel %vm884, %v236, %v593
      %v916 = vsel %vm884, %v237, %v595
      %vm917 = vcmask 64512
      %v918 = vsel %vm917, %v885, %v661
      %v919 = vsel %vm917, %v886, %v663
      %v920 = vsel %vm917, %v887, %v665
      %v921 = vsel %vm917, %v888, %v667
      %v922 = vsel %vm917, %v889, %v669
      %v923 = vsel %vm917, %v890, %v671
      %v924 = vsel %vm917, %v891, %v673
      %v925 = vsel %vm917, %v892, %v675
      %v926 = vsel %vm917, %v893, %v677
      %v927 = vsel %vm917, %v894, %v679
      %v928 = vsel %vm917, %v895, %v681
      %v929 = vsel %vm917, %v896, %v683
      %v930 = vsel %vm917, %v897, %v685
      %v931 = vsel %vm917, %v898, %v687
      %v932 = vsel %vm917, %v899, %v689
      %v933 = vsel %vm917, %v900, %v691
      %v934 = vsel %vm917, %v901, %v693
      %v935 = vsel %vm917, %v902, %v695
      %v936 = vsel %vm917, %v903, %v697
      %v937 = vsel %vm917, %v904, %v699
      %v938 = vsel %vm917, %v905, %v701
      %v939 = vsel %vm917, %v906, %v703
      %v940 = vsel %vm917, %v907, %v705
      %v941 = vsel %vm917, %v908, %v707
      %v942 = vsel %vm917, %v909, %v709
      %v943 = vsel %vm917, %v910, %v711
      %v944 = vsel %vm917, %v911, %v713
      %v945 = vsel %vm917, %v912, %v715
      %v946 = vsel %vm917, %v913, %v717
      %v947 = vsel %vm917, %v914, %v719
      %v948 = vsel %vm917, %v915, %v721
      %v949 = vsel %vm917, %v916, %v723
      %vm950 = vcmask 97280
      %v951 = vsel %vm950, %v918, %v789
      %v952 = vsel %vm950, %v919, %v791
      %v953 = vsel %vm950, %v920, %v793
      %v954 = vsel %vm950, %v921, %v795
      %v955 = vsel %vm950, %v922, %v797
      %v956 = vsel %vm950, %v923, %v799
      %v957 = vsel %vm950, %v924, %v801
      %v958 = vsel %vm950, %v925, %v803
      %v959 = vsel %vm950, %v926, %v805
      %v960 = vsel %vm950, %v927, %v807
      %v961 = vsel %vm950, %v928, %v809
      %v962 = vsel %vm950, %v929, %v811
      %v963 = vsel %vm950, %v930, %v813
      %v964 = vsel %vm950, %v931, %v815
      %v965 = vsel %vm950, %v932, %v817
      %v966 = vsel %vm950, %v933, %v819
      %v967 = vsel %vm950, %v934, %v821
      %v968 = vsel %vm950, %v935, %v823
      %v969 = vsel %vm950, %v936, %v825
      %v970 = vsel %vm950, %v937, %v827
      %v971 = vsel %vm950, %v938, %v829
      %v972 = vsel %vm950, %v939, %v831
      %v973 = vsel %vm950, %v940, %v833
      %v974 = vsel %vm950, %v941, %v835
      %v975 = vsel %vm950, %v942, %v837
      %v976 = vsel %vm950, %v943, %v839
      %v977 = vsel %vm950, %v944, %v841
      %v978 = vsel %vm950, %v945, %v843
      %v979 = vsel %vm950, %v946, %v845
      %v980 = vsel %vm950, %v947, %v847
      %v981 = vsel %vm950, %v948, %v849
      %v982 = vsel %vm950, %v949, %v851
      %v983 = vld [vmem:[%s1] sm:$0xff]
      %v984 = vld [vmem:[%s1 + $0x8] sm:$0xff]
      %vm985 = vcmask 130048
      %v987 = vsel %vm985, %v951, 0
      %v990 = vsel %vm985, %v952, 0
      %v993 = vsel %vm985, %v953, 0
      %v996 = vsel %vm985, %v954, 0
      %v999 = vsel %vm985, %v955, 0
      %v1002 = vsel %vm985, %v956, 0
      %v1005 = vsel %vm985, %v957, 0
      %v1008 = vsel %vm985, %v958, 0
      %v1011 = vsel %vm985, %v959, 0
      %v1014 = vsel %vm985, %v960, 0
      %v1017 = vsel %vm985, %v961, 0
      %v1020 = vsel %vm985, %v962, 0
      %v1023 = vsel %vm985, %v963, 0
      %v1026 = vsel %vm985, %v964, 0
      %v1029 = vsel %vm985, %v965, 0
      %v1032 = vsel %vm985, %v966, 0
      %v1035 = vsel %vm985, %v967, 0
      %v1038 = vsel %vm985, %v968, 0
      %v1041 = vsel %vm985, %v969, 0
      %v1044 = vsel %vm985, %v970, 0
      %v1047 = vsel %vm985, %v971, 0
      %v1050 = vsel %vm985, %v972, 0
      %v1053 = vsel %vm985, %v973, 0
      %v1056 = vsel %vm985, %v974, 0
      %v1059 = vsel %vm985, %v975, 0
      %v1062 = vsel %vm985, %v976, 0
      %v1065 = vsel %vm985, %v977, 0
      %v1068 = vsel %vm985, %v978, 0
      %v1071 = vsel %vm985, %v979, 0
      %v1074 = vsel %vm985, %v980, 0
      %v1077 = vsel %vm985, %v981, 0
      %v1080 = vsel %vm985, %v982, 0
      %1082 = vmatprep.subr.mxu0 0.0
      %1083 = vmatpush1.msra.mxu0 %v983
      %1084 = vmatprep.subr.mxu0 0.0
      %1085 = vmatpush1.msra.mxu0 %v984
      %1086 = vmatprep.subr.mxu0 0.0
      %1087 = vmatpush1.msra.mxu0 0.0
      %1088 = vmatprep.subr.mxu0 0.0
      %1089 = vmatpush1.msra.mxu0 0.0
      %1090 = vmatprep.subr.mxu0 0.0
      %1091 = vmatpush1.msra.mxu0 0.0
      %1092 = vmatprep.subr.mxu0 0.0
      %1093 = vmatpush1.msra.mxu0 0.0
      %1094 = vmatprep.subr.mxu0 0.0
      %1095 = vmatpush1.msra.mxu0 0.0
      %1096 = vmatprep.subr.mxu0 0.0
      %1097 = vmatpush1.msra.mxu0 0.0
      %1098 = vmatprep.subr.mxu0 0.0
      %1099 = vmatpush1.msra.mxu0 0.0
      %1100 = vmatprep.subr.mxu0 0.0
      %1101 = vmatpush1.msra.mxu0 0.0
      %1102 = vmatprep.subr.mxu0 0.0
      %1103 = vmatpush1.msra.mxu0 0.0
      %1104 = vmatprep.subr.mxu0 0.0
      %1105 = vmatpush1.msra.mxu0 0.0
      %1106 = vmatprep.subr.mxu0 0.0
      %1107 = vmatpush1.msra.mxu0 0.0
      %1108 = vmatprep.subr.mxu0 0.0
      %1109 = vmatpush1.msra.mxu0 0.0
      %1110 = vmatprep.subr.mxu0 0.0
      %1111 = vmatpush1.msra.mxu0 0.0
      %1112 = vmatprep.subr.mxu0 0.0
      %1113 = vmatpush1.msra.mxu0 0.0
      %1114 = vmatprep.subr.mxu0 0.0
      %1115 = vmatpush1.msra.mxu0 0.0
      %1116 = vmatprep.subr.mxu0 0.0
      %1117 = vmatpush1.msra.mxu0 0.0
      %1118 = vmatprep.subr.mxu0 0.0
      %1119 = vmatpush1.msra.mxu0 0.0
      %1120 = vmatprep.subr.mxu0 0.0
      %1121 = vmatpush1.msra.mxu0 0.0
      %1122 = vmatprep.subr.mxu0 0.0
      %1123 = vmatpush1.msra.mxu0 0.0
      %1124 = vmatprep.subr.mxu0 0.0
      %1125 = vmatpush1.msra.mxu0 0.0
      %1126 = vmatprep.subr.mxu0 0.0
      %1127 = vmatpush1.msra.mxu0 0.0
      %1128 = vmatprep.subr.mxu0 0.0
      %1129 = vmatpush1.msra.mxu0 0.0
      %1130 = vmatprep.subr.mxu0 0.0
      %1131 = vmatpush1.msra.mxu0 0.0
      %1132 = vmatprep.subr.mxu0 0.0
      %1133 = vmatpush1.msra.mxu0 0.0
      %1134 = vmatprep.subr.mxu0 0.0
      %1135 = vmatpush1.msra.mxu0 0.0
      %1136 = vmatprep.subr.mxu0 0.0
      %1137 = vmatpush1.msra.mxu0 0.0
      %1138 = vmatprep.subr.mxu0 0.0
      %1139 = vmatpush1.msra.mxu0 0.0
      %1140 = vmatprep.subr.mxu0 0.0
      %1141 = vmatpush1.msra.mxu0 0.0
      %1142 = vmatprep.subr.mxu0 0.0
      %1143 = vmatpush1.msra.mxu0 0.0
      %1144 = vmatprep.subr.mxu0 0.0
      %1145 = vmatpush1.msra.mxu0 0.0
      %1146 = vmatprep.mubr.f32.mxu0 0.0
      %1147 = vmatmul.mubr.f32.gmra.mrb[0].mxu0 %v987
      %v1148 = vpop.f32.mrb[0].mxu0
      %v1149 = vadd.f32 %v202, %v1148
      %v1150 = vpop.f32.mrb[0].mxu0
      %1151 = vmatprep.mubr.f32.mxu0 0.0
      %1152 = vmatmul.mubr.f32.gmra.mrb[0].mxu0 %v990
      %v1153 = vpop.f32.mrb[0].mxu0
      %v1154 = vadd.f32 %v202, %v1153
      %v1155 = vpop.f32.mrb[0].mxu0
      %1156 = vmatprep.mubr.f32.mxu0 0.0
      %1157 = vmatmul.mubr.f32.gmra.mrb[0].mxu0 %v993
      %v1158 = vpop.f32.mrb[0].mxu0
      %v1159 = vadd.f32 %v202, %v1158
      %v1160 = vpop.f32.mrb[0].mxu0
      %1161 = vmatprep.mubr.f32.mxu0 0.0
      %1162 = vmatmul.mubr.f32.gmra.mrb[0].mxu0 %v996
      %v1163 = vpop.f32.mrb[0].mxu0
      %v1164 = vadd.f32 %v202, %v1163
      %v1165 = vpop.f32.mrb[0].mxu0
      %1166 = vmatprep.mubr.f32.mxu0 0.0
      %1167 = vmatmul.mubr.f32.gmra.mrb[0].mxu0 %v999
      %v1168 = vpop.f32.mrb[0].mxu0
      %v1169 = vadd.f32 %v202, %v1168
      %v1170 = vpop.f32.mrb[0].mxu0
      %1171 = vmatprep.mubr.f32.mxu0 0.0
      %1172 = vmatmul.mubr.f32.gmra.mrb[0].mxu0 %v1002
      %v1173 = vpop.f32.mrb[0].mxu0
      %v1174 = vadd.f32 %v202, %v1173
      %v1175 = vpop.f32.mrb[0].mxu0
      %1176 = vmatprep.mubr.f32.mxu0 0.0
      %1177 = vmatmul.mubr.f32.gmra.mrb[0].mxu0 %v1005
      %v1178 = vpop.f32.mrb[0].mxu0
      %v1179 = vadd.f32 %v202, %v1178
      %v1180 = vpop.f32.mrb[0].mxu0
      %1181 = vmatprep.mubr.f32.mxu0 0.0
      %1182 = vmatmul.mubr.f32.gmra.mrb[0].mxu0 %v1008
      %v1183 = vpop.f32.mrb[0].mxu0
      %v1184 = vadd.f32 %v202, %v1183
      %v1185 = vpop.f32.mrb[0].mxu0
      %1186 = vmatprep.mubr.f32.mxu0 0.0
      %1187 = vmatmul.mubr.f32.gmra.mrb[0].mxu0 %v1011
      %v1188 = vpop.f32.mrb[0].mxu0
      %v1189 = vadd.f32 %v202, %v1188
      %v1190 = vpop.f32.mrb[0].mxu0
      %1191 = vmatprep.mubr.f32.mxu0 0.0
      %1192 = vmatmul.mubr.f32.gmra.mrb[0].mxu0 %v1014
      %v1193 = vpop.f32.mrb[0].mxu0
      %v1194 = vadd.f32 %v202, %v1193
      %v1195 = vpop.f32.mrb[0].mxu0
      %1196 = vmatprep.mubr.f32.mxu0 0.0
      %1197 = vmatmul.mubr.f32.gmra.mrb[0].mxu0 %v1017
      %v1198 = vpop.f32.mrb[0].mxu0
      %v1199 = vadd.f32 %v202, %v1198
      %v1200 = vpop.f32.mrb[0].mxu0
      %1201 = vmatprep.mubr.f32.mxu0 0.0
      %1202 = vmatmul.mubr.f32.gmra.mrb[0].mxu0 %v1020
      %v1203 = vpop.f32.mrb[0].mxu0
      %v1204 = vadd.f32 %v202, %v1203
      %v1205 = vpop.f32.mrb[0].mxu0
      %1206 = vmatprep.mubr.f32.mxu0 0.0
      %1207 = vmatmul.mubr.f32.gmra.mrb[0].mxu0 %v1023
      %v1208 = vpop.f32.mrb[0].mxu0
      %v1209 = vadd.f32 %v202, %v1208
      %v1210 = vpop.f32.mrb[0].mxu0
      %1211 = vmatprep.mubr.f32.mxu0 0.0
      %1212 = vmatmul.mubr.f32.gmra.mrb[0].mxu0 %v1026
      %v1213 = vpop.f32.mrb[0].mxu0
      %v1214 = vadd.f32 %v202, %v1213
      %v1215 = vpop.f32.mrb[0].mxu0
      %1216 = vmatprep.mubr.f32.mxu0 0.0
      %1217 = vmatmul.mubr.f32.gmra.mrb[0].mxu0 %v1029
      %v1218 = vpop.f32.mrb[0].mxu0
      %v1219 = vadd.f32 %v202, %v1218
      %v1220 = vpop.f32.mrb[0].mxu0
      %1221 = vmatprep.mubr.f32.mxu0 0.0
      %1222 = vmatmul.mubr.f32.gmra.mrb[0].mxu0 %v1032
      %v1223 = vpop.f32.mrb[0].mxu0
      %v1224 = vadd.f32 %v202, %v1223
      %v1225 = vpop.f32.mrb[0].mxu0
      %1226 = vmatprep.mubr.f32.mxu0 0.0
      %1227 = vmatmul.mubr.f32.gmra.mrb[0].mxu0 %v1035
      %v1228 = vpop.f32.mrb[0].mxu0
      %v1229 = vadd.f32 %v202, %v1228
      %v1230 = vpop.f32.mrb[0].mxu0
      %1231 = vmatprep.mubr.f32.mxu0 0.0
      %1232 = vmatmul.mubr.f32.gmra.mrb[0].mxu0 %v1038
      %v1233 = vpop.f32.mrb[0].mxu0
      %v1234 = vadd.f32 %v202, %v1233
      %v1235 = vpop.f32.mrb[0].mxu0
      %1236 = vmatprep.mubr.f32.mxu0 0.0
      %1237 = vmatmul.mubr.f32.gmra.mrb[0].mxu0 %v1041
      %v1238 = vpop.f32.mrb[0].mxu0
      %v1239 = vadd.f32 %v202, %v1238
      %v1240 = vpop.f32.mrb[0].mxu0
      %1241 = vmatprep.mubr.f32.mxu0 0.0
      %1242 = vmatmul.mubr.f32.gmra.mrb[0].mxu0 %v1044
      %v1243 = vpop.f32.mrb[0].mxu0
      %v1244 = vadd.f32 %v202, %v1243
      %v1245 = vpop.f32.mrb[0].mxu0
      %1246 = vmatprep.mubr.f32.mxu0 0.0
      %1247 = vmatmul.mubr.f32.gmra.mrb[0].mxu0 %v1047
      %v1248 = vpop.f32.mrb[0].mxu0
      %v1249 = vadd.f32 %v202, %v1248
      %v1250 = vpop.f32.mrb[0].mxu0
      %1251 = vmatprep.mubr.f32.mxu0 0.0
      %1252 = vmatmul.mubr.f32.gmra.mrb[0].mxu0 %v1050
      %v1253 = vpop.f32.mrb[0].mxu0
      %v1254 = vadd.f32 %v202, %v1253
      %v1255 = vpop.f32.mrb[0].mxu0
      %1256 = vmatprep.mubr.f32.mxu0 0.0
      %1257 = vmatmul.mubr.f32.gmra.mrb[0].mxu0 %v1053
      %v1258 = vpop.f32.mrb[0].mxu0
      %v1259 = vadd.f32 %v202, %v1258
      %v1260 = vpop.f32.mrb[0].mxu0
      %1261 = vmatprep.mubr.f32.mxu0 0.0
      %1262 = vmatmul.mubr.f32.gmra.mrb[0].mxu0 %v1056
      %v1263 = vpop.f32.mrb[0].mxu0
      %v1264 = vadd.f32 %v202, %v1263
      %v1265 = vpop.f32.mrb[0].mxu0
      %1266 = vmatprep.mubr.f32.mxu0 0.0
      %1267 = vmatmul.mubr.f32.gmra.mrb[0].mxu0 %v1059
      %v1268 = vpop.f32.mrb[0].mxu0
      %v1269 = vadd.f32 %v202, %v1268
      %v1270 = vpop.f32.mrb[0].mxu0
      %1271 = vmatprep.mubr.f32.mxu0 0.0
      %1272 = vmatmul.mubr.f32.gmra.mrb[0].mxu0 %v1062
      %v1273 = vpop.f32.mrb[0].mxu0
      %v1274 = vadd.f32 %v202, %v1273
      %v1275 = vpop.f32.mrb[0].mxu0
      %1276 = vmatprep.mubr.f32.mxu0 0.0
      %1277 = vmatmul.mubr.f32.gmra.mrb[0].mxu0 %v1065
      %v1278 = vpop.f32.mrb[0].mxu0
      %v1279 = vadd.f32 %v202, %v1278
      %v1280 = vpop.f32.mrb[0].mxu0
      %1281 = vmatprep.mubr.f32.mxu0 0.0
      %1282 = vmatmul.mubr.f32.gmra.mrb[0].mxu0 %v1068
      %v1283 = vpop.f32.mrb[0].mxu0
      %v1284 = vadd.f32 %v202, %v1283
      %v1285 = vpop.f32.mrb[0].mxu0
      %1286 = vmatprep.mubr.f32.mxu0 0.0
      %1287 = vmatmul.mubr.f32.gmra.mrb[0].mxu0 %v1071
      %v1288 = vpop.f32.mrb[0].mxu0
      %v1289 = vadd.f32 %v202, %v1288
      %v1290 = vpop.f32.mrb[0].mxu0
      %1291 = vmatprep.mubr.f32.mxu0 0.0
      %1292 = vmatmul.mubr.f32.gmra.mrb[0].mxu0 %v1074
      %v1293 = vpop.f32.mrb[0].mxu0
      %v1294 = vadd.f32 %v202, %v1293
      %v1295 = vpop.f32.mrb[0].mxu0
      %1296 = vmatprep.mubr.f32.mxu0 0.0
      %1297 = vmatmul.mubr.f32.gmra.mrb[0].mxu0 %v1077
      %v1298 = vpop.f32.mrb[0].mxu0
      %v1299 = vadd.f32 %v202, %v1298
      %v1300 = vpop.f32.mrb[0].mxu0
      %1301 = vmatprep.mubr.f32.mxu0 0.0
      %1302 = vmatmul.mubr.f32.gmra.mrb[0].mxu0 %v1080
      %v1303 = vpop.f32.mrb[0].mxu0
      %v1304 = vadd.f32 %v202, %v1303
      %v1305 = vpop.f32.mrb[0].mxu0
      %1306 = vdwg.mxu0
      %1307 = vst.msk [vmem:[%s194] sm:$0xff] %vm884, %v1149
      %1308 = vst.msk [vmem:[%s194 + $0x8] sm:$0xff] %vm884, %v1154
      %1309 = vst.msk [vmem:[%s194 + $0x10] sm:$0xff] %vm884, %v1159
      %1310 = vst.msk [vmem:[%s194 + $0x18] sm:$0xff] %vm884, %v1164
      %1311 = vst.msk [vmem:[%s194 + $0x20] sm:$0xff] %vm884, %v1169
      %1312 = vst.msk [vmem:[%s194 + $0x28] sm:$0xff] %vm884, %v1174
      %1313 = vst.msk [vmem:[%s194 + $0x30] sm:$0xff] %vm884, %v1179
      %1314 = vst.msk [vmem:[%s194 + $0x38] sm:$0xff] %vm884, %v1184
      %1315 = vst.msk [vmem:[%s194 + $0x40] sm:$0xff] %vm884, %v1189
      %1316 = vst.msk [vmem:[%s194 + $0x48] sm:$0xff] %vm884, %v1194
      %1317 = vst.msk [vmem:[%s194 + $0x50] sm:$0xff] %vm884, %v1199
      %1318 = vst.msk [vmem:[%s194 + $0x58] sm:$0xff] %vm884, %v1204
      %1319 = vst.msk [vmem:[%s194 + $0x60] sm:$0xff] %vm884, %v1209
      %1320 = vst.msk [vmem:[%s194 + $0x68] sm:$0xff] %vm884, %v1214
      %1321 = vst.msk [vmem:[%s194 + $0x70] sm:$0xff] %vm884, %v1219
      %1322 = vst.msk [vmem:[%s194 + $0x78] sm:$0xff] %vm884, %v1224
      %1323 = vst.msk [vmem:[%s194 + $0x80] sm:$0xff] %vm884, %v1229
      %1324 = vst.msk [vmem:[%s194 + $0x88] sm:$0xff] %vm884, %v1234
      %1325 = vst.msk [vmem:[%s194 + $0x90] sm:$0xff] %vm884, %v1239
      %1326 = vst.msk [vmem:[%s194 + $0x98] sm:$0xff] %vm884, %v1244
      %1327 = vst.msk [vmem:[%s194 + $0xa0] sm:$0xff] %vm884, %v1249
      %1328 = vst.msk [vmem:[%s194 + $0xa8] sm:$0xff] %vm884, %v1254
      %1329 = vst.msk [vmem:[%s194 + $0xb0] sm:$0xff] %vm884, %v1259
      %1330 = vst.msk [vmem:[%s194 + $0xb8] sm:$0xff] %vm884, %v1264
      %1331 = vst.msk [vmem:[%s194 + $0xc0] sm:$0xff] %vm884, %v1269
      %1332 = vst.msk [vmem:[%s194 + $0xc8] sm:$0xff] %vm884, %v1274
      %1333 = vst.msk [vmem:[%s194 + $0xd0] sm:$0xff] %vm884, %v1279
      %1334 = vst.msk [vmem:[%s194 + $0xd8] sm:$0xff] %vm884, %v1284
      %1335 = vst.msk [vmem:[%s194 + $0xe0] sm:$0xff] %vm884, %v1289
      %1336 = vst.msk [vmem:[%s194 + $0xe8] sm:$0xff] %vm884, %v1294
      %1337 = vst.msk [vmem:[%s194 + $0xf0] sm:$0xff] %vm884, %v1299
      %1338 = vst.msk [vmem:[%s194 + $0xf8] sm:$0xff] %vm884, %v1304
      %1371 = vrot.lane.b32.xlu0 %v270, 4
      %v1372 = vpop.permute.xlu0 %1371
      %1373 = vrot.lane.b32.xlu0 %v271, 4
      %v1374 = vpop.permute.xlu0 %1373
      %1375 = vrot.lane.b32.xlu0 %v272, 4
      %v1376 = vpop.permute.xlu0 %1375
      %1377 = vrot.lane.b32.xlu0 %v273, 4
      %v1378 = vpop.permute.xlu0 %1377
      %1379 = vrot.lane.b32.xlu0 %v274, 4
      %v1380 = vpop.permute.xlu0 %1379
      %1381 = vrot.lane.b32.xlu0 %v275, 4
      %v1382 = vpop.permute.xlu0 %1381
      %1383 = vrot.lane.b32.xlu0 %v276, 4
      %v1384 = vpop.permute.xlu0 %1383
      %1385 = vrot.lane.b32.xlu0 %v277, 4
      %v1386 = vpop.permute.xlu0 %1385
      %1387 = vrot.lane.b32.xlu0 %v278, 4
      %v1388 = vpop.permute.xlu0 %1387
      %1389 = vrot.lane.b32.xlu0 %v279, 4
      %v1390 = vpop.permute.xlu0 %1389
      %1391 = vrot.lane.b32.xlu0 %v280, 4
      %v1392 = vpop.permute.xlu0 %1391
      %1393 = vrot.lane.b32.xlu0 %v281, 4
      %v1394 = vpop.permute.xlu0 %1393
      %1395 = vrot.lane.b32.xlu0 %v282, 4
      %v1396 = vpop.permute.xlu0 %1395
      %1397 = vrot.lane.b32.xlu0 %v283, 4
      %v1398 = vpop.permute.xlu0 %1397
      %1399 = vrot.lane.b32.xlu0 %v284, 4
      %v1400 = vpop.permute.xlu0 %1399
      %1401 = vrot.lane.b32.xlu0 %v285, 4
      %v1402 = vpop.permute.xlu0 %1401
      %1403 = vrot.lane.b32.xlu0 %v286, 4
      %v1404 = vpop.permute.xlu0 %1403
      %1405 = vrot.lane.b32.xlu0 %v287, 4
      %v1406 = vpop.permute.xlu0 %1405
      %1407 = vrot.lane.b32.xlu0 %v288, 4
      %v1408 = vpop.permute.xlu0 %1407
      %1409 = vrot.lane.b32.xlu0 %v289, 4
      %v1410 = vpop.permute.xlu0 %1409
      %1411 = vrot.lane.b32.xlu0 %v290, 4
      %v1412 = vpop.permute.xlu0 %1411
      %1413 = vrot.lane.b32.xlu0 %v291, 4
      %v1414 = vpop.permute.xlu0 %1413
      %1415 = vrot.lane.b32.xlu0 %v292, 4
      %v1416 = vpop.permute.xlu0 %1415
      %1417 = vrot.lane.b32.xlu0 %v293, 4
      %v1418 = vpop.permute.xlu0 %1417
      %1419 = vrot.lane.b32.xlu0 %v294, 4
      %v1420 = vpop.permute.xlu0 %1419
      %1421 = vrot.lane.b32.xlu0 %v295, 4
      %v1422 = vpop.permute.xlu0 %1421
      %1423 = vrot.lane.b32.xlu0 %v296, 4
      %v1424 = vpop.permute.xlu0 %1423
      %1425 = vrot.lane.b32.xlu0 %v297, 4
      %v1426 = vpop.permute.xlu0 %1425
      %1427 = vrot.lane.b32.xlu0 %v298, 4
      %v1428 = vpop.permute.xlu0 %1427
      %1429 = vrot.lane.b32.xlu0 %v299, 4
      %v1430 = vpop.permute.xlu0 %1429
      %1431 = vrot.lane.b32.xlu0 %v300, 4
      %v1432 = vpop.permute.xlu0 %1431
      %1433 = vrot.lane.b32.xlu0 %v301, 4
      %v1434 = vpop.permute.xlu0 %1433
      %1467 = vrot.lane.b32.xlu0 %v337, 8
      %v1468 = vpop.permute.xlu0 %1467
      %1469 = vrot.lane.b32.xlu0 %v338, 8
      %v1470 = vpop.permute.xlu0 %1469
      %1471 = vrot.lane.b32.xlu0 %v339, 8
      %v1472 = vpop.permute.xlu0 %1471
      %1473 = vrot.lane.b32.xlu0 %v340, 8
      %v1474 = vpop.permute.xlu0 %1473
      %1475 = vrot.lane.b32.xlu0 %v341, 8
      %v1476 = vpop.permute.xlu0 %1475
      %1477 = vrot.lane.b32.xlu0 %v342, 8
      %v1478 = vpop.permute.xlu0 %1477
      %1479 = vrot.lane.b32.xlu0 %v343, 8
      %v1480 = vpop.permute.xlu0 %1479
      %1481 = vrot.lane.b32.xlu0 %v344, 8
      %v1482 = vpop.permute.xlu0 %1481
      %1483 = vrot.lane.b32.xlu0 %v345, 8
      %v1484 = vpop.permute.xlu0 %1483
      %1485 = vrot.lane.b32.xlu0 %v346, 8
      %v1486 = vpop.permute.xlu0 %1485
      %1487 = vrot.lane.b32.xlu0 %v347, 8
      %v1488 = vpop.permute.xlu0 %1487
      %1489 = vrot.lane.b32.xlu0 %v348, 8
      %v1490 = vpop.permute.xlu0 %1489
      %1491 = vrot.lane.b32.xlu0 %v349, 8
      %v1492 = vpop.permute.xlu0 %1491
      %1493 = vrot.lane.b32.xlu0 %v350, 8
      %v1494 = vpop.permute.xlu0 %1493
      %1495 = vrot.lane.b32.xlu0 %v351, 8
      %v1496 = vpop.permute.xlu0 %1495
      %1497 = vrot.lane.b32.xlu0 %v352, 8
      %v1498 = vpop.permute.xlu0 %1497
      %1499 = vrot.lane.b32.xlu0 %v353, 8
      %v1500 = vpop.permute.xlu0 %1499
      %1501 = vrot.lane.b32.xlu0 %v354, 8
      %v1502 = vpop.permute.xlu0 %1501
      %1503 = vrot.lane.b32.xlu0 %v355, 8
      %v1504 = vpop.permute.xlu0 %1503
      %1505 = vrot.lane.b32.xlu0 %v356, 8
      %v1506 = vpop.permute.xlu0 %1505
      %1507 = vrot.lane.b32.xlu0 %v357, 8
      %v1508 = vpop.permute.xlu0 %1507
      %1509 = vrot.lane.b32.xlu0 %v358, 8
      %v1510 = vpop.permute.xlu0 %1509
      %1511 = vrot.lane.b32.xlu0 %v359, 8
      %v1512 = vpop.permute.xlu0 %1511
      %1513 = vrot.lane.b32.xlu0 %v360, 8
      %v1514 = vpop.permute.xlu0 %1513
      %1515 = vrot.lane.b32.xlu0 %v361, 8
      %v1516 = vpop.permute.xlu0 %1515
      %1517 = vrot.lane.b32.xlu0 %v362, 8
      %v1518 = vpop.permute.xlu0 %1517
      %1519 = vrot.lane.b32.xlu0 %v363, 8
      %v1520 = vpop.permute.xlu0 %1519
      %1521 = vrot.lane.b32.xlu0 %v364, 8
      %v1522 = vpop.permute.xlu0 %1521
      %1523 = vrot.lane.b32.xlu0 %v365, 8
      %v1524 = vpop.permute.xlu0 %1523
      %1525 = vrot.lane.b32.xlu0 %v366, 8
      %v1526 = vpop.permute.xlu0 %1525
      %1527 = vrot.lane.b32.xlu0 %v367, 8
      %v1528 = vpop.permute.xlu0 %1527
      %1529 = vrot.lane.b32.xlu0 %v368, 8
      %v1530 = vpop.permute.xlu0 %1529
      %1595 = vrot.lane.b32.xlu0 %v369, 12
      %v1596 = vpop.permute.xlu0 %1595
      %1597 = vrot.lane.b32.xlu0 %v370, 12
      %v1598 = vpop.permute.xlu0 %1597
      %1599 = vrot.lane.b32.xlu0 %v371, 12
      %v1600 = vpop.permute.xlu0 %1599
      %1601 = vrot.lane.b32.xlu0 %v372, 12
      %v1602 = vpop.permute.xlu0 %1601
      %1603 = vrot.lane.b32.xlu0 %v373, 12
      %v1604 = vpop.permute.xlu0 %1603
      %1605 = vrot.lane.b32.xlu0 %v374, 12
      %v1606 = vpop.permute.xlu0 %1605
      %1607 = vrot.lane.b32.xlu0 %v375, 12
      %v1608 = vpop.permute.xlu0 %1607
      %1609 = vrot.lane.b32.xlu0 %v376, 12
      %v1610 = vpop.permute.xlu0 %1609
      %1611 = vrot.lane.b32.xlu0 %v377, 12
      %v1612 = vpop.permute.xlu0 %1611
      %1613 = vrot.lane.b32.xlu0 %v378, 12
      %v1614 = vpop.permute.xlu0 %1613
      %1615 = vrot.lane.b32.xlu0 %v379, 12
      %v1616 = vpop.permute.xlu0 %1615
      %1617 = vrot.lane.b32.xlu0 %v380, 12
      %v1618 = vpop.permute.xlu0 %1617
      %1619 = vrot.lane.b32.xlu0 %v381, 12
      %v1620 = vpop.permute.xlu0 %1619
      %1621 = vrot.lane.b32.xlu0 %v382, 12
      %v1622 = vpop.permute.xlu0 %1621
      %1623 = vrot.lane.b32.xlu0 %v383, 12
      %v1624 = vpop.permute.xlu0 %1623
      %1625 = vrot.lane.b32.xlu0 %v384, 12
      %v1626 = vpop.permute.xlu0 %1625
      %1627 = vrot.lane.b32.xlu0 %v385, 12
      %v1628 = vpop.permute.xlu0 %1627
      %1629 = vrot.lane.b32.xlu0 %v386, 12
      %v1630 = vpop.permute.xlu0 %1629
      %1631 = vrot.lane.b32.xlu0 %v387, 12
      %v1632 = vpop.permute.xlu0 %1631
      %1633 = vrot.lane.b32.xlu0 %v388, 12
      %v1634 = vpop.permute.xlu0 %1633
      %1635 = vrot.lane.b32.xlu0 %v389, 12
      %v1636 = vpop.permute.xlu0 %1635
      %1637 = vrot.lane.b32.xlu0 %v390, 12
      %v1638 = vpop.permute.xlu0 %1637
      %1639 = vrot.lane.b32.xlu0 %v391, 12
      %v1640 = vpop.permute.xlu0 %1639
      %1641 = vrot.lane.b32.xlu0 %v392, 12
      %v1642 = vpop.permute.xlu0 %1641
      %1643 = vrot.lane.b32.xlu0 %v393, 12
      %v1644 = vpop.permute.xlu0 %1643
      %1645 = vrot.lane.b32.xlu0 %v394, 12
      %v1646 = vpop.permute.xlu0 %1645
      %1647 = vrot.lane.b32.xlu0 %v395, 12
      %v1648 = vpop.permute.xlu0 %1647
      %1649 = vrot.lane.b32.xlu0 %v396, 12
      %v1650 = vpop.permute.xlu0 %1649
      %1651 = vrot.lane.b32.xlu0 %v397, 12
      %v1652 = vpop.permute.xlu0 %1651
      %1653 = vrot.lane.b32.xlu0 %v398, 12
      %v1654 = vpop.permute.xlu0 %1653
      %1655 = vrot.lane.b32.xlu0 %v399, 12
      %v1656 = vpop.permute.xlu0 %1655
      %1657 = vrot.lane.b32.xlu0 %v400, 12
      %v1658 = vpop.permute.xlu0 %1657
      %v1691 = vsel %vm884, %v238, %v1372
      %v1692 = vsel %vm884, %v239, %v1374
      %v1693 = vsel %vm884, %v240, %v1376
      %v1694 = vsel %vm884, %v241, %v1378
      %v1695 = vsel %vm884, %v242, %v1380
      %v1696 = vsel %vm884, %v243, %v1382
      %v1697 = vsel %vm884, %v244, %v1384
      %v1698 = vsel %vm884, %v245, %v1386
      %v1699 = vsel %vm884, %v246, %v1388
      %v1700 = vsel %vm884, %v247, %v1390
      %v1701 = vsel %vm884, %v248, %v1392
      %v1702 = vsel %vm884, %v249, %v1394
      %v1703 = vsel %vm884, %v250, %v1396
      %v1704 = vsel %vm884, %v251, %v1398
      %v1705 = vsel %vm884, %v252, %v1400
      %v1706 = vsel %vm884, %v253, %v1402
      %v1707 = vsel %vm884, %v254, %v1404
      %v1708 = vsel %vm884, %v255, %v1406
      %v1709 = vsel %vm884, %v256, %v1408
      %v1710 = vsel %vm884, %v257, %v1410
      %v1711 = vsel %vm884, %v258, %v1412
      %v1712 = vsel %vm884, %v259, %v1414
      %v1713 = vsel %vm884, %v260, %v1416
      %v1714 = vsel %vm884, %v261, %v1418
      %v1715 = vsel %vm884, %v262, %v1420
      %v1716 = vsel %vm884, %v263, %v1422
      %v1717 = vsel %vm884, %v264, %v1424
      %v1718 = vsel %vm884, %v265, %v1426
      %v1719 = vsel %vm884, %v266, %v1428
      %v1720 = vsel %vm884, %v267, %v1430
      %v1721 = vsel %vm884, %v268, %v1432
      %v1722 = vsel %vm884, %v269, %v1434
      %v1723 = vsel %vm917, %v1691, %v1468
      %v1724 = vsel %vm917, %v1692, %v1470
      %v1725 = vsel %vm917, %v1693, %v1472
      %v1726 = vsel %vm917, %v1694, %v1474
      %v1727 = vsel %vm917, %v1695, %v1476
      %v1728 = vsel %vm917, %v1696, %v1478
      %v1729 = vsel %vm917, %v1697, %v1480
      %v1730 = vsel %vm917, %v1698, %v1482
      %v1731 = vsel %vm917, %v1699, %v1484
      %v1732 = vsel %vm917, %v1700, %v1486
      %v1733 = vsel %vm917, %v1701, %v1488
      %v1734 = vsel %vm917, %v1702, %v1490
      %v1735 = vsel %vm917, %v1703, %v1492
      %v1736 = vsel %vm917, %v1704, %v1494
      %v1737 = vsel %vm917, %v1705, %v1496
      %v1738 = vsel %vm917, %v1706, %v1498
      %v1739 = vsel %vm917, %v1707, %v1500
      %v1740 = vsel %vm917, %v1708, %v1502
      %v1741 = vsel %vm917, %v1709, %v1504
      %v1742 = vsel %vm917, %v1710, %v1506
      %v1743 = vsel %vm917, %v1711, %v1508
      %v1744 = vsel %vm917, %v1712, %v1510
      %v1745 = vsel %vm917, %v1713, %v1512
      %v1746 = vsel %vm917, %v1714, %v1514
      %v1747 = vsel %vm917, %v1715, %v1516
      %v1748 = vsel %vm917, %v1716, %v1518
      %v1749 = vsel %vm917, %v1717, %v1520
      %v1750 = vsel %vm917, %v1718, %v1522
      %v1751 = vsel %vm917, %v1719, %v1524
      %v1752 = vsel %vm917, %v1720, %v1526
      %v1753 = vsel %vm917, %v1721, %v1528
      %v1754 = vsel %vm917, %v1722, %v1530
      %v1755 = vsel %vm950, %v1723, %v1596
      %v1756 = vsel %vm950, %v1724, %v1598
      %v1757 = vsel %vm950, %v1725, %v1600
      %v1758 = vsel %vm950, %v1726, %v1602
      %v1759 = vsel %vm950, %v1727, %v1604
      %v1760 = vsel %vm950, %v1728, %v1606
      %v1761 = vsel %vm950, %v1729, %v1608
      %v1762 = vsel %vm950, %v1730, %v1610
      %v1763 = vsel %vm950, %v1731, %v1612
      %v1764 = vsel %vm950, %v1732, %v1614
      %v1765 = vsel %vm950, %v1733, %v1616
      %v1766 = vsel %vm950, %v1734, %v1618
      %v1767 = vsel %vm950, %v1735, %v1620
      %v1768 = vsel %vm950, %v1736, %v1622
      %v1769 = vsel %vm950, %v1737, %v1624
      %v1770 = vsel %vm950, %v1738, %v1626
      %v1771 = vsel %vm950, %v1739, %v1628
      %v1772 = vsel %vm950, %v1740, %v1630
      %v1773 = vsel %vm950, %v1741, %v1632
      %v1774 = vsel %vm950, %v1742, %v1634
      %v1775 = vsel %vm950, %v1743, %v1636
      %v1776 = vsel %vm950, %v1744, %v1638
      %v1777 = vsel %vm950, %v1745, %v1640
      %v1778 = vsel %vm950, %v1746, %v1642
      %v1779 = vsel %vm950, %v1747, %v1644
      %v1780 = vsel %vm950, %v1748, %v1646
      %v1781 = vsel %vm950, %v1749, %v1648
      %v1782 = vsel %vm950, %v1750, %v1650
      %v1783 = vsel %vm950, %v1751, %v1652
      %v1784 = vsel %vm950, %v1752, %v1654
      %v1785 = vsel %vm950, %v1753, %v1656
      %v1786 = vsel %vm950, %v1754, %v1658
      %s1787 = scalar_lea.vmem %s1, 16
      %v1788 = vld [vmem:[%s1787] sm:$0xff]
      %v1789 = vld [vmem:[%s1787 + $0x8] sm:$0xff]
      %v1791 = vsel %vm985, %v1755, 0
      %v1794 = vsel %vm985, %v1756, 0
      %v1797 = vsel %vm985, %v1757, 0
      %v1800 = vsel %vm985, %v1758, 0
      %v1803 = vsel %vm985, %v1759, 0
      %v1806 = vsel %vm985, %v1760, 0
      %v1809 = vsel %vm985, %v1761, 0
      %v1812 = vsel %vm985, %v1762, 0
      %v1815 = vsel %vm985, %v1763, 0
      %v1818 = vsel %vm985, %v1764, 0
      %v1821 = vsel %vm985, %v1765, 0
      %v1824 = vsel %vm985, %v1766, 0
      %v1827 = vsel %vm985, %v1767, 0
      %v1830 = vsel %vm985, %v1768, 0
      %v1833 = vsel %vm985, %v1769, 0
      %v1836 = vsel %vm985, %v1770, 0
      %v1839 = vsel %vm985, %v1771, 0
      %v1842 = vsel %vm985, %v1772, 0
      %v1845 = vsel %vm985, %v1773, 0
      %v1848 = vsel %vm985, %v1774, 0
      %v1851 = vsel %vm985, %v1775, 0
      %v1854 = vsel %vm985, %v1776, 0
      %v1857 = vsel %vm985, %v1777, 0
      %v1860 = vsel %vm985, %v1778, 0
      %v1863 = vsel %vm985, %v1779, 0
      %v1866 = vsel %vm985, %v1780, 0
      %v1869 = vsel %vm985, %v1781, 0
      %v1872 = vsel %vm985, %v1782, 0
      %v1875 = vsel %vm985, %v1783, 0
      %v1878 = vsel %vm985, %v1784, 0
      %v1881 = vsel %vm985, %v1785, 0
      %v1884 = vsel %vm985, %v1786, 0
      %1886 = vmatprep.subr.mxu0 0.0
      %1887 = vmatpush1.msra.mxu0 %v1788
      %1888 = vmatprep.subr.mxu0 0.0
      %1889 = vmatpush1.msra.mxu0 %v1789
      %1890 = vmatprep.subr.mxu0 0.0
      %1891 = vmatpush1.msra.mxu0 0.0
      %1892 = vmatprep.subr.mxu0 0.0
      %1893 = vmatpush1.msra.mxu0 0.0
      %1894 = vmatprep.subr.mxu0 0.0
      %1895 = vmatpush1.msra.mxu0 0.0
      %1896 = vmatprep.subr.mxu0 0.0
      %1897 = vmatpush1.msra.mxu0 0.0
      %1898 = vmatprep.subr.mxu0 0.0
      %1899 = vmatpush1.msra.mxu0 0.0
      %1900 = vmatprep.subr.mxu0 0.0
      %1901 = vmatpush1.msra.mxu0 0.0
      %1902 = vmatprep.subr.mxu0 0.0
      %1903 = vmatpush1.msra.mxu0 0.0
      %1904 = vmatprep.subr.mxu0 0.0
      %1905 = vmatpush1.msra.mxu0 0.0
      %1906 = vmatprep.subr.mxu0 0.0
      %1907 = vmatpush1.msra.mxu0 0.0
      %1908 = vmatprep.subr.mxu0 0.0
      %1909 = vmatpush1.msra.mxu0 0.0
      %1910 = vmatprep.subr.mxu0 0.0
      %1911 = vmatpush1.msra.mxu0 0.0
      %1912 = vmatprep.subr.mxu0 0.0
      %1913 = vmatpush1.msra.mxu0 0.0
      %1914 = vmatprep.subr.mxu0 0.0
      %1915 = vmatpush1.msra.mxu0 0.0
      %1916 = vmatprep.subr.mxu0 0.0
      %1917 = vmatpush1.msra.mxu0 0.0
      %1918 = vmatprep.subr.mxu0 0.0
      %1919 = vmatpush1.msra.mxu0 0.0
      %1920 = vmatprep.subr.mxu0 0.0
      %1921 = vmatpush1.msra.mxu0 0.0
      %1922 = vmatprep.subr.mxu0 0.0
      %1923 = vmatpush1.msra.mxu0 0.0
      %1924 = vmatprep.subr.mxu0 0.0
      %1925 = vmatpush1.msra.mxu0 0.0
      %1926 = vmatprep.subr.mxu0 0.0
      %1927 = vmatpush1.msra.mxu0 0.0
      %1928 = vmatprep.subr.mxu0 0.0
      %1929 = vmatpush1.msra.mxu0 0.0
      %1930 = vmatprep.subr.mxu0 0.0
      %1931 = vmatpush1.msra.mxu0 0.0
      %1932 = vmatprep.subr.mxu0 0.0
      %1933 = vmatpush1.msra.mxu0 0.0
      %1934 = vmatprep.subr.mxu0 0.0
      %1935 = vmatpush1.msra.mxu0 0.0
      %1936 = vmatprep.subr.mxu0 0.0
      %1937 = vmatpush1.msra.mxu0 0.0
      %1938 = vmatprep.subr.mxu0 0.0
      %1939 = vmatpush1.msra.mxu0 0.0
      %1940 = vmatprep.subr.mxu0 0.0
      %1941 = vmatpush1.msra.mxu0 0.0
      %1942 = vmatprep.subr.mxu0 0.0
      %1943 = vmatpush1.msra.mxu0 0.0
      %1944 = vmatprep.subr.mxu0 0.0
      %1945 = vmatpush1.msra.mxu0 0.0
      %1946 = vmatprep.subr.mxu0 0.0
      %1947 = vmatpush1.msra.mxu0 0.0
      %1948 = vmatprep.subr.mxu0 0.0
      %1949 = vmatpush1.msra.mxu0 0.0
      %1950 = vmatprep.mubr.f32.mxu0 0.0
      %1951 = vmatmul.mubr.f32.gmra.mrb[0].mxu0 %v1791
      %v1952 = vpop.f32.mrb[0].mxu0
      %v1953 = vadd.f32 %v202, %v1952
      %v1954 = vpop.f32.mrb[0].mxu0
      %1955 = vmatprep.mubr.f32.mxu0 0.0
      %1956 = vmatmul.mubr.f32.gmra.mrb[0].mxu0 %v1794
      %v1957 = vpop.f32.mrb[0].mxu0
      %v1958 = vadd.f32 %v202, %v1957
      %v1959 = vpop.f32.mrb[0].mxu0
      %1960 = vmatprep.mubr.f32.mxu0 0.0
      %1961 = vmatmul.mubr.f32.gmra.mrb[0].mxu0 %v1797
      %v1962 = vpop.f32.mrb[0].mxu0
      %v1963 = vadd.f32 %v202, %v1962
      %v1964 = vpop.f32.mrb[0].mxu0
      %1965 = vmatprep.mubr.f32.mxu0 0.0
      %1966 = vmatmul.mubr.f32.gmra.mrb[0].mxu0 %v1800
      %v1967 = vpop.f32.mrb[0].mxu0
      %v1968 = vadd.f32 %v202, %v1967
      %v1969 = vpop.f32.mrb[0].mxu0
      %1970 = vmatprep.mubr.f32.mxu0 0.0
      %1971 = vmatmul.mubr.f32.gmra.mrb[0].mxu0 %v1803
      %v1972 = vpop.f32.mrb[0].mxu0
      %v1973 = vadd.f32 %v202, %v1972
      %v1974 = vpop.f32.mrb[0].mxu0
      %1975 = vmatprep.mubr.f32.mxu0 0.0
      %1976 = vmatmul.mubr.f32.gmra.mrb[0].mxu0 %v1806
      %v1977 = vpop.f32.mrb[0].mxu0
      %v1978 = vadd.f32 %v202, %v1977
      %v1979 = vpop.f32.mrb[0].mxu0
      %1980 = vmatprep.mubr.f32.mxu0 0.0
      %1981 = vmatmul.mubr.f32.gmra.mrb[0].mxu0 %v1809
      %v1982 = vpop.f32.mrb[0].mxu0
      %v1983 = vadd.f32 %v202, %v1982
      %v1984 = vpop.f32.mrb[0].mxu0
      %1985 = vmatprep.mubr.f32.mxu0 0.0
      %1986 = vmatmul.mubr.f32.gmra.mrb[0].mxu0 %v1812
      %v1987 = vpop.f32.mrb[0].mxu0
      %v1988 = vadd.f32 %v202, %v1987
      %v1989 = vpop.f32.mrb[0].mxu0
      %1990 = vmatprep.mubr.f32.mxu0 0.0
      %1991 = vmatmul.mubr.f32.gmra.mrb[0].mxu0 %v1815
      %v1992 = vpop.f32.mrb[0].mxu0
      %v1993 = vadd.f32 %v202, %v1992
      %v1994 = vpop.f32.mrb[0].mxu0
      %1995 = vmatprep.mubr.f32.mxu0 0.0
      %1996 = vmatmul.mubr.f32.gmra.mrb[0].mxu0 %v1818
      %v1997 = vpop.f32.mrb[0].mxu0
      %v1998 = vadd.f32 %v202, %v1997
      %v1999 = vpop.f32.mrb[0].mxu0
      %2000 = vmatprep.mubr.f32.mxu0 0.0
      %2001 = vmatmul.mubr.f32.gmra.mrb[0].mxu0 %v1821
      %v2002 = vpop.f32.mrb[0].mxu0
      %v2003 = vadd.f32 %v202, %v2002
      %v2004 = vpop.f32.mrb[0].mxu0
      %2005 = vmatprep.mubr.f32.mxu0 0.0
      %2006 = vmatmul.mubr.f32.gmra.mrb[0].mxu0 %v1824
      %v2007 = vpop.f32.mrb[0].mxu0
      %v2008 = vadd.f32 %v202, %v2007
      %v2009 = vpop.f32.mrb[0].mxu0
      %2010 = vmatprep.mubr.f32.mxu0 0.0
      %2011 = vmatmul.mubr.f32.gmra.mrb[0].mxu0 %v1827
      %v2012 = vpop.f32.mrb[0].mxu0
      %v2013 = vadd.f32 %v202, %v2012
      %v2014 = vpop.f32.mrb[0].mxu0
      %2015 = vmatprep.mubr.f32.mxu0 0.0
      %2016 = vmatmul.mubr.f32.gmra.mrb[0].mxu0 %v1830
      %v2017 = vpop.f32.mrb[0].mxu0
      %v2018 = vadd.f32 %v202, %v2017
      %v2019 = vpop.f32.mrb[0].mxu0
      %2020 = vmatprep.mubr.f32.mxu0 0.0
      %2021 = vmatmul.mubr.f32.gmra.mrb[0].mxu0 %v1833
      %v2022 = vpop.f32.mrb[0].mxu0
      %v2023 = vadd.f32 %v202, %v2022
      %v2024 = vpop.f32.mrb[0].mxu0
      %2025 = vmatprep.mubr.f32.mxu0 0.0
      %2026 = vmatmul.mubr.f32.gmra.mrb[0].mxu0 %v1836
      %v2027 = vpop.f32.mrb[0].mxu0
      %v2028 = vadd.f32 %v202, %v2027
      %v2029 = vpop.f32.mrb[0].mxu0
      %2030 = vmatprep.mubr.f32.mxu0 0.0
      %2031 = vmatmul.mubr.f32.gmra.mrb[0].mxu0 %v1839
      %v2032 = vpop.f32.mrb[0].mxu0
      %v2033 = vadd.f32 %v202, %v2032
      %v2034 = vpop.f32.mrb[0].mxu0
      %2035 = vmatprep.mubr.f32.mxu0 0.0
      %2036 = vmatmul.mubr.f32.gmra.mrb[0].mxu0 %v1842
      %v2037 = vpop.f32.mrb[0].mxu0
      %v2038 = vadd.f32 %v202, %v2037
      %v2039 = vpop.f32.mrb[0].mxu0
      %2040 = vmatprep.mubr.f32.mxu0 0.0
      %2041 = vmatmul.mubr.f32.gmra.mrb[0].mxu0 %v1845
      %v2042 = vpop.f32.mrb[0].mxu0
      %v2043 = vadd.f32 %v202, %v2042
      %v2044 = vpop.f32.mrb[0].mxu0
      %2045 = vmatprep.mubr.f32.mxu0 0.0
      %2046 = vmatmul.mubr.f32.gmra.mrb[0].mxu0 %v1848
      %v2047 = vpop.f32.mrb[0].mxu0
      %v2048 = vadd.f32 %v202, %v2047
      %v2049 = vpop.f32.mrb[0].mxu0
      %2050 = vmatprep.mubr.f32.mxu0 0.0
      %2051 = vmatmul.mubr.f32.gmra.mrb[0].mxu0 %v1851
      %v2052 = vpop.f32.mrb[0].mxu0
      %v2053 = vadd.f32 %v202, %v2052
      %v2054 = vpop.f32.mrb[0].mxu0
      %2055 = vmatprep.mubr.f32.mxu0 0.0
      %2056 = vmatmul.mubr.f32.gmra.mrb[0].mxu0 %v1854
      %v2057 = vpop.f32.mrb[0].mxu0
      %v2058 = vadd.f32 %v202, %v2057
      %v2059 = vpop.f32.mrb[0].mxu0
      %2060 = vmatprep.mubr.f32.mxu0 0.0
      %2061 = vmatmul.mubr.f32.gmra.mrb[0].mxu0 %v1857
      %v2062 = vpop.f32.mrb[0].mxu0
      %v2063 = vadd.f32 %v202, %v2062
      %v2064 = vpop.f32.mrb[0].mxu0
      %2065 = vmatprep.mubr.f32.mxu0 0.0
      %2066 = vmatmul.mubr.f32.gmra.mrb[0].mxu0 %v1860
      %v2067 = vpop.f32.mrb[0].mxu0
      %v2068 = vadd.f32 %v202, %v2067
      %v2069 = vpop.f32.mrb[0].mxu0
      %2070 = vmatprep.mubr.f32.mxu0 0.0
      %2071 = vmatmul.mubr.f32.gmra.mrb[0].mxu0 %v1863
      %v2072 = vpop.f32.mrb[0].mxu0
      %v2073 = vadd.f32 %v202, %v2072
      %v2074 = vpop.f32.mrb[0].mxu0
      %2075 = vmatprep.mubr.f32.mxu0 0.0
      %2076 = vmatmul.mubr.f32.gmra.mrb[0].mxu0 %v1866
      %v2077 = vpop.f32.mrb[0].mxu0
      %v2078 = vadd.f32 %v202, %v2077
      %v2079 = vpop.f32.mrb[0].mxu0
      %2080 = vmatprep.mubr.f32.mxu0 0.0
      %2081 = vmatmul.mubr.f32.gmra.mrb[0].mxu0 %v1869
      %v2082 = vpop.f32.mrb[0].mxu0
      %v2083 = vadd.f32 %v202, %v2082
      %v2084 = vpop.f32.mrb[0].mxu0
      %2085 = vmatprep.mubr.f32.mxu0 0.0
      %2086 = vmatmul.mubr.f32.gmra.mrb[0].mxu0 %v1872
      %v2087 = vpop.f32.mrb[0].mxu0
      %v2088 = vadd.f32 %v202, %v2087
      %v2089 = vpop.f32.mrb[0].mxu0
      %2090 = vmatprep.mubr.f32.mxu0 0.0
      %2091 = vmatmul.mubr.f32.gmra.mrb[0].mxu0 %v1875
      %v2092 = vpop.f32.mrb[0].mxu0
      %v2093 = vadd.f32 %v202, %v2092
      %v2094 = vpop.f32.mrb[0].mxu0
      %2095 = vmatprep.mubr.f32.mxu0 0.0
      %2096 = vmatmul.mubr.f32.gmra.mrb[0].mxu0 %v1878
      %v2097 = vpop.f32.mrb[0].mxu0
      %v2098 = vadd.f32 %v202, %v2097
      %v2099 = vpop.f32.mrb[0].mxu0
      %2100 = vmatprep.mubr.f32.mxu0 0.0
      %2101 = vmatmul.mubr.f32.gmra.mrb[0].mxu0 %v1881
      %v2102 = vpop.f32.mrb[0].mxu0
      %v2103 = vadd.f32 %v202, %v2102
      %v2104 = vpop.f32.mrb[0].mxu0
      %2105 = vmatprep.mubr.f32.mxu0 0.0
      %2106 = vmatmul.mubr.f32.gmra.mrb[0].mxu0 %v1884
      %v2107 = vpop.f32.mrb[0].mxu0
      %v2108 = vadd.f32 %v202, %v2107
      %v2109 = vpop.f32.mrb[0].mxu0
      %2110 = vdwg.mxu0
      %s2111 = scalar_lea.vmem %s194, 256
      %2112 = vst.msk [vmem:[%s2111] sm:$0xff] %vm884, %v1953
      %2113 = vst.msk [vmem:[%s2111 + $0x8] sm:$0xff] %vm884, %v1958
      %2114 = vst.msk [vmem:[%s2111 + $0x10] sm:$0xff] %vm884, %v1963
      %2115 = vst.msk [vmem:[%s2111 + $0x18] sm:$0xff] %vm884, %v1968
      %2116 = vst.msk [vmem:[%s2111 + $0x20] sm:$0xff] %vm884, %v1973
      %2117 = vst.msk [vmem:[%s2111 + $0x28] sm:$0xff] %vm884, %v1978
      %2118 = vst.msk [vmem:[%s2111 + $0x30] sm:$0xff] %vm884, %v1983
      %2119 = vst.msk [vmem:[%s2111 + $0x38] sm:$0xff] %vm884, %v1988
      %2120 = vst.msk [vmem:[%s2111 + $0x40] sm:$0xff] %vm884, %v1993
      %2121 = vst.msk [vmem:[%s2111 + $0x48] sm:$0xff] %vm884, %v1998
      %2122 = vst.msk [vmem:[%s2111 + $0x50] sm:$0xff] %vm884, %v2003
      %2123 = vst.msk [vmem:[%s2111 + $0x58] sm:$0xff] %vm884, %v2008
      %2124 = vst.msk [vmem:[%s2111 + $0x60] sm:$0xff] %vm884, %v2013
      %2125 = vst.msk [vmem:[%s2111 + $0x68] sm:$0xff] %vm884, %v2018
      %2126 = vst.msk [vmem:[%s2111 + $0x70] sm:$0xff] %vm884, %v2023
      %2127 = vst.msk [vmem:[%s2111 + $0x78] sm:$0xff] %vm884, %v2028
      %2128 = vst.msk [vmem:[%s2111 + $0x80] sm:$0xff] %vm884, %v2033
      %2129 = vst.msk [vmem:[%s2111 + $0x88] sm:$0xff] %vm884, %v2038
      %2130 = vst.msk [vmem:[%s2111 + $0x90] sm:$0xff] %vm884, %v2043
      %2131 = vst.msk [vmem:[%s2111 + $0x98] sm:$0xff] %vm884, %v2048
      %2132 = vst.msk [vmem:[%s2111 + $0xa0] sm:$0xff] %vm884, %v2053
      %2133 = vst.msk [vmem:[%s2111 + $0xa8] sm:$0xff] %vm884, %v2058
      %2134 = vst.msk [vmem:[%s2111 + $0xb0] sm:$0xff] %vm884, %v2063
      %2135 = vst.msk [vmem:[%s2111 + $0xb8] sm:$0xff] %vm884, %v2068
      %2136 = vst.msk [vmem:[%s2111 + $0xc0] sm:$0xff] %vm884, %v2073
      %2137 = vst.msk [vmem:[%s2111 + $0xc8] sm:$0xff] %vm884, %v2078
      %2138 = vst.msk [vmem:[%s2111 + $0xd0] sm:$0xff] %vm884, %v2083
      %2139 = vst.msk [vmem:[%s2111 + $0xd8] sm:$0xff] %vm884, %v2088
      %2140 = vst.msk [vmem:[%s2111 + $0xe0] sm:$0xff] %vm884, %v2093
      %2141 = vst.msk [vmem:[%s2111 + $0xe8] sm:$0xff] %vm884, %v2098
      %2142 = vst.msk [vmem:[%s2111 + $0xf0] sm:$0xff] %vm884, %v2103
      %2143 = vst.msk [vmem:[%s2111 + $0xf8] sm:$0xff] %vm884, %v2108
      %2144 = vrot.lane.b32.xlu0 %v337, 4
      %v2145 = vpop.permute.xlu0 %2144
      %2146 = vrot.lane.b32.xlu0 %v338, 4
      %v2147 = vpop.permute.xlu0 %2146
      %2148 = vrot.lane.b32.xlu0 %v339, 4
      %v2149 = vpop.permute.xlu0 %2148
      %2150 = vrot.lane.b32.xlu0 %v340, 4
      %v2151 = vpop.permute.xlu0 %2150
      %2152 = vrot.lane.b32.xlu0 %v341, 4
      %v2153 = vpop.permute.xlu0 %2152
      %2154 = vrot.lane.b32.xlu0 %v342, 4
      %v2155 = vpop.permute.xlu0 %2154
      %2156 = vrot.lane.b32.xlu0 %v343, 4
      %v2157 = vpop.permute.xlu0 %2156
      %2158 = vrot.lane.b32.xlu0 %v344, 4
      %v2159 = vpop.permute.xlu0 %2158
      %2160 = vrot.lane.b32.xlu0 %v345, 4
      %v2161 = vpop.permute.xlu0 %2160
      %2162 = vrot.lane.b32.xlu0 %v346, 4
      %v2163 = vpop.permute.xlu0 %2162
      %2164 = vrot.lane.b32.xlu0 %v347, 4
      %v2165 = vpop.permute.xlu0 %2164
      %2166 = vrot.lane.b32.xlu0 %v348, 4
      %v2167 = vpop.permute.xlu0 %2166
      %2168 = vrot.lane.b32.xlu0 %v349, 4
      %v2169 = vpop.permute.xlu0 %2168
      %2170 = vrot.lane.b32.xlu0 %v350, 4
      %v2171 = vpop.permute.xlu0 %2170
      %2172 = vrot.lane.b32.xlu0 %v351, 4
      %v2173 = vpop.permute.xlu0 %2172
      %2174 = vrot.lane.b32.xlu0 %v352, 4
      %v2175 = vpop.permute.xlu0 %2174
      %2176 = vrot.lane.b32.xlu0 %v353, 4
      %v2177 = vpop.permute.xlu0 %2176
      %2178 = vrot.lane.b32.xlu0 %v354, 4
      %v2179 = vpop.permute.xlu0 %2178
      %2180 = vrot.lane.b32.xlu0 %v355, 4
      %v2181 = vpop.permute.xlu0 %2180
      %2182 = vrot.lane.b32.xlu0 %v356, 4
      %v2183 = vpop.permute.xlu0 %2182
      %2184 = vrot.lane.b32.xlu0 %v357, 4
      %v2185 = vpop.permute.xlu0 %2184
      %2186 = vrot.lane.b32.xlu0 %v358, 4
      %v2187 = vpop.permute.xlu0 %2186
      %2188 = vrot.lane.b32.xlu0 %v359, 4
      %v2189 = vpop.permute.xlu0 %2188
      %2190 = vrot.lane.b32.xlu0 %v360, 4
      %v2191 = vpop.permute.xlu0 %2190
      %2192 = vrot.lane.b32.xlu0 %v361, 4
      %v2193 = vpop.permute.xlu0 %2192
      %2194 = vrot.lane.b32.xlu0 %v362, 4
      %v2195 = vpop.permute.xlu0 %2194
      %2196 = vrot.lane.b32.xlu0 %v363, 4
      %v2197 = vpop.permute.xlu0 %2196
      %2198 = vrot.lane.b32.xlu0 %v364, 4
      %v2199 = vpop.permute.xlu0 %2198
      %2200 = vrot.lane.b32.xlu0 %v365, 4
      %v2201 = vpop.permute.xlu0 %2200
      %2202 = vrot.lane.b32.xlu0 %v366, 4
      %v2203 = vpop.permute.xlu0 %2202
      %2204 = vrot.lane.b32.xlu0 %v367, 4
      %v2205 = vpop.permute.xlu0 %2204
      %2206 = vrot.lane.b32.xlu0 %v368, 4
      %v2207 = vpop.permute.xlu0 %2206
      %2272 = vrot.lane.b32.xlu0 %v404, 8
      %v2273 = vpop.permute.xlu0 %2272
      %2274 = vrot.lane.b32.xlu0 %v405, 8
      %v2275 = vpop.permute.xlu0 %2274
      %2276 = vrot.lane.b32.xlu0 %v406, 8
      %v2277 = vpop.permute.xlu0 %2276
      %2278 = vrot.lane.b32.xlu0 %v407, 8
      %v2279 = vpop.permute.xlu0 %2278
      %2280 = vrot.lane.b32.xlu0 %v408, 8
      %v2281 = vpop.permute.xlu0 %2280
      %2282 = vrot.lane.b32.xlu0 %v409, 8
      %v2283 = vpop.permute.xlu0 %2282
      %2284 = vrot.lane.b32.xlu0 %v410, 8
      %v2285 = vpop.permute.xlu0 %2284
      %2286 = vrot.lane.b32.xlu0 %v411, 8
      %v2287 = vpop.permute.xlu0 %2286
      %2288 = vrot.lane.b32.xlu0 %v412, 8
      %v2289 = vpop.permute.xlu0 %2288
      %2290 = vrot.lane.b32.xlu0 %v413, 8
      %v2291 = vpop.permute.xlu0 %2290
      %2292 = vrot.lane.b32.xlu0 %v414, 8
      %v2293 = vpop.permute.xlu0 %2292
      %2294 = vrot.lane.b32.xlu0 %v415, 8
      %v2295 = vpop.permute.xlu0 %2294
      %2296 = vrot.lane.b32.xlu0 %v416, 8
      %v2297 = vpop.permute.xlu0 %2296
      %2298 = vrot.lane.b32.xlu0 %v417, 8
      %v2299 = vpop.permute.xlu0 %2298
      %2300 = vrot.lane.b32.xlu0 %v418, 8
      %v2301 = vpop.permute.xlu0 %2300
      %2302 = vrot.lane.b32.xlu0 %v419, 8
      %v2303 = vpop.permute.xlu0 %2302
      %2304 = vrot.lane.b32.xlu0 %v420, 8
      %v2305 = vpop.permute.xlu0 %2304
      %2306 = vrot.lane.b32.xlu0 %v421, 8
      %v2307 = vpop.permute.xlu0 %2306
      %2308 = vrot.lane.b32.xlu0 %v422, 8
      %v2309 = vpop.permute.xlu0 %2308
      %2310 = vrot.lane.b32.xlu0 %v423, 8
      %v2311 = vpop.permute.xlu0 %2310
      %2312 = vrot.lane.b32.xlu0 %v424, 8
      %v2313 = vpop.permute.xlu0 %2312
      %2314 = vrot.lane.b32.xlu0 %v425, 8
      %v2315 = vpop.permute.xlu0 %2314
      %2316 = vrot.lane.b32.xlu0 %v426, 8
      %v2317 = vpop.permute.xlu0 %2316
      %2318 = vrot.lane.b32.xlu0 %v427, 8
      %v2319 = vpop.permute.xlu0 %2318
      %2320 = vrot.lane.b32.xlu0 %v428, 8
      %v2321 = vpop.permute.xlu0 %2320
      %2322 = vrot.lane.b32.xlu0 %v429, 8
      %v2323 = vpop.permute.xlu0 %2322
      %2324 = vrot.lane.b32.xlu0 %v430, 8
      %v2325 = vpop.permute.xlu0 %2324
      %2326 = vrot.lane.b32.xlu0 %v431, 8
      %v2327 = vpop.permute.xlu0 %2326
      %2328 = vrot.lane.b32.xlu0 %v432, 8
      %v2329 = vpop.permute.xlu0 %2328
      %2330 = vrot.lane.b32.xlu0 %v433, 8
      %v2331 = vpop.permute.xlu0 %2330
      %2332 = vrot.lane.b32.xlu0 %v434, 8
      %v2333 = vpop.permute.xlu0 %2332
      %2334 = vrot.lane.b32.xlu0 %v435, 8
      %v2335 = vpop.permute.xlu0 %2334
      %2400 = vrot.lane.b32.xlu0 %v436, 12
      %v2401 = vpop.permute.xlu0 %2400
      %2402 = vrot.lane.b32.xlu0 %v437, 12
      %v2403 = vpop.permute.xlu0 %2402
      %2404 = vrot.lane.b32.xlu0 %v438, 12
      %v2405 = vpop.permute.xlu0 %2404
      %2406 = vrot.lane.b32.xlu0 %v439, 12
      %v2407 = vpop.permute.xlu0 %2406
      %2408 = vrot.lane.b32.xlu0 %v440, 12
      %v2409 = vpop.permute.xlu0 %2408
      %2410 = vrot.lane.b32.xlu0 %v441, 12
      %v2411 = vpop.permute.xlu0 %2410
      %2412 = vrot.lane.b32.xlu0 %v442, 12
      %v2413 = vpop.permute.xlu0 %2412
      %2414 = vrot.lane.b32.xlu0 %v443, 12
      %v2415 = vpop.permute.xlu0 %2414
      %2416 = vrot.lane.b32.xlu0 %v444, 12
      %v2417 = vpop.permute.xlu0 %2416
      %2418 = vrot.lane.b32.xlu0 %v445, 12
      %v2419 = vpop.permute.xlu0 %2418
      %2420 = vrot.lane.b32.xlu0 %v446, 12
      %v2421 = vpop.permute.xlu0 %2420
      %2422 = vrot.lane.b32.xlu0 %v447, 12
      %v2423 = vpop.permute.xlu0 %2422
      %2424 = vrot.lane.b32.xlu0 %v448, 12
      %v2425 = vpop.permute.xlu0 %2424
      %2426 = vrot.lane.b32.xlu0 %v449, 12
      %v2427 = vpop.permute.xlu0 %2426
      %2428 = vrot.lane.b32.xlu0 %v450, 12
      %v2429 = vpop.permute.xlu0 %2428
      %2430 = vrot.lane.b32.xlu0 %v451, 12
      %v2431 = vpop.permute.xlu0 %2430
      %2432 = vrot.lane.b32.xlu0 %v452, 12
      %v2433 = vpop.permute.xlu0 %2432
      %2434 = vrot.lane.b32.xlu0 %v453, 12
      %v2435 = vpop.permute.xlu0 %2434
      %2436 = vrot.lane.b32.xlu0 %v454, 12
      %v2437 = vpop.permute.xlu0 %2436
      %2438 = vrot.lane.b32.xlu0 %v455, 12
      %v2439 = vpop.permute.xlu0 %2438
      %2440 = vrot.lane.b32.xlu0 %v456, 12
      %v2441 = vpop.permute.xlu0 %2440
      %2442 = vrot.lane.b32.xlu0 %v457, 12
      %v2443 = vpop.permute.xlu0 %2442
      %2444 = vrot.lane.b32.xlu0 %v458, 12
      %v2445 = vpop.permute.xlu0 %2444
      %2446 = vrot.lane.b32.xlu0 %v459, 12
      %v2447 = vpop.permute.xlu0 %2446
      %2448 = vrot.lane.b32.xlu0 %v460, 12
      %v2449 = vpop.permute.xlu0 %2448
      %2450 = vrot.lane.b32.xlu0 %v461, 12
      %v2451 = vpop.permute.xlu0 %2450
      %2452 = vrot.lane.b32.xlu0 %v462, 12
      %v2453 = vpop.permute.xlu0 %2452
      %2454 = vrot.lane.b32.xlu0 %v463, 12
      %v2455 = vpop.permute.xlu0 %2454
      %2456 = vrot.lane.b32.xlu0 %v464, 12
      %v2457 = vpop.permute.xlu0 %2456
      %2458 = vrot.lane.b32.xlu0 %v465, 12
      %v2459 = vpop.permute.xlu0 %2458
      %2460 = vrot.lane.b32.xlu0 %v466, 12
      %v2461 = vpop.permute.xlu0 %2460
      %2462 = vrot.lane.b32.xlu0 %v467, 12
      %v2463 = vpop.permute.xlu0 %2462
      %v2496 = vsel %vm884, %v305, %v2145
      %v2497 = vsel %vm884, %v306, %v2147
      %v2498 = vsel %vm884, %v307, %v2149
      %v2499 = vsel %vm884, %v308, %v2151
      %v2500 = vsel %vm884, %v309, %v2153
      %v2501 = vsel %vm884, %v310, %v2155
      %v2502 = vsel %vm884, %v311, %v2157
      %v2503 = vsel %vm884, %v312, %v2159
      %v2504 = vsel %vm884, %v313, %v2161
      %v2505 = vsel %vm884, %v314, %v2163
      %v2506 = vsel %vm884, %v315, %v2165
      %v2507 = vsel %vm884, %v316, %v2167
      %v2508 = vsel %vm884, %v317, %v2169
      %v2509 = vsel %vm884, %v318, %v2171
      %v2510 = vsel %vm884, %v319, %v2173
      %v2511 = vsel %vm884, %v320, %v2175
      %v2512 = vsel %vm884, %v321, %v2177
      %v2513 = vsel %vm884, %v322, %v2179
      %v2514 = vsel %vm884, %v323, %v2181
      %v2515 = vsel %vm884, %v324, %v2183
      %v2516 = vsel %vm884, %v325, %v2185
      %v2517 = vsel %vm884, %v326, %v2187
      %v2518 = vsel %vm884, %v327, %v2189
      %v2519 = vsel %vm884, %v328, %v2191
      %v2520 = vsel %vm884, %v329, %v2193
      %v2521 = vsel %vm884, %v330, %v2195
      %v2522 = vsel %vm884, %v331, %v2197
      %v2523 = vsel %vm884, %v332, %v2199
      %v2524 = vsel %vm884, %v333, %v2201
      %v2525 = vsel %vm884, %v334, %v2203
      %v2526 = vsel %vm884, %v335, %v2205
      %v2527 = vsel %vm884, %v336, %v2207
      %v2528 = vsel %vm917, %v2496, %v2273
      %v2529 = vsel %vm917, %v2497, %v2275
      %v2530 = vsel %vm917, %v2498, %v2277
      %v2531 = vsel %vm917, %v2499, %v2279
      %v2532 = vsel %vm917, %v2500, %v2281
      %v2533 = vsel %vm917, %v2501, %v2283
      %v2534 = vsel %vm917, %v2502, %v2285
      %v2535 = vsel %vm917, %v2503, %v2287
      %v2536 = vsel %vm917, %v2504, %v2289
      %v2537 = vsel %vm917, %v2505, %v2291
      %v2538 = vsel %vm917, %v2506, %v2293
      %v2539 = vsel %vm917, %v2507, %v2295
      %v2540 = vsel %vm917, %v2508, %v2297
      %v2541 = vsel %vm917, %v2509, %v2299
      %v2542 = vsel %vm917, %v2510, %v2301
      %v2543 = vsel %vm917, %v2511, %v2303
      %v2544 = vsel %vm917, %v2512, %v2305
      %v2545 = vsel %vm917, %v2513, %v2307
      %v2546 = vsel %vm917, %v2514, %v2309
      %v2547 = vsel %vm917, %v2515, %v2311
      %v2548 = vsel %vm917, %v2516, %v2313
      %v2549 = vsel %vm917, %v2517, %v2315
      %v2550 = vsel %vm917, %v2518, %v2317
      %v2551 = vsel %vm917, %v2519, %v2319
      %v2552 = vsel %vm917, %v2520, %v2321
      %v2553 = vsel %vm917, %v2521, %v2323
      %v2554 = vsel %vm917, %v2522, %v2325
      %v2555 = vsel %vm917, %v2523, %v2327
      %v2556 = vsel %vm917, %v2524, %v2329
      %v2557 = vsel %vm917, %v2525, %v2331
      %v2558 = vsel %vm917, %v2526, %v2333
      %v2559 = vsel %vm917, %v2527, %v2335
      %v2560 = vsel %vm950, %v2528, %v2401
      %v2561 = vsel %vm950, %v2529, %v2403
      %v2562 = vsel %vm950, %v2530, %v2405
      %v2563 = vsel %vm950, %v2531, %v2407
      %v2564 = vsel %vm950, %v2532, %v2409
      %v2565 = vsel %vm950, %v2533, %v2411
      %v2566 = vsel %vm950, %v2534, %v2413
      %v2567 = vsel %vm950, %v2535, %v2415
      %v2568 = vsel %vm950, %v2536, %v2417
      %v2569 = vsel %vm950, %v2537, %v2419
      %v2570 = vsel %vm950, %v2538, %v2421
      %v2571 = vsel %vm950, %v2539, %v2423
      %v2572 = vsel %vm950, %v2540, %v2425
      %v2573 = vsel %vm950, %v2541, %v2427
      %v2574 = vsel %vm950, %v2542, %v2429
      %v2575 = vsel %vm950, %v2543, %v2431
      %v2576 = vsel %vm950, %v2544, %v2433
      %v2577 = vsel %vm950, %v2545, %v2435
      %v2578 = vsel %vm950, %v2546, %v2437
      %v2579 = vsel %vm950, %v2547, %v2439
      %v2580 = vsel %vm950, %v2548, %v2441
      %v2581 = vsel %vm950, %v2549, %v2443
      %v2582 = vsel %vm950, %v2550, %v2445
      %v2583 = vsel %vm950, %v2551, %v2447
      %v2584 = vsel %vm950, %v2552, %v2449
      %v2585 = vsel %vm950, %v2553, %v2451
      %v2586 = vsel %vm950, %v2554, %v2453
      %v2587 = vsel %vm950, %v2555, %v2455
      %v2588 = vsel %vm950, %v2556, %v2457
      %v2589 = vsel %vm950, %v2557, %v2459
      %v2590 = vsel %vm950, %v2558, %v2461
      %v2591 = vsel %vm950, %v2559, %v2463
      %s2592 = scalar_lea.vmem %s1, 32
      %v2593 = vld [vmem:[%s2592] sm:$0xff]
      %v2594 = vld [vmem:[%s2592 + $0x8] sm:$0xff]
      %v2596 = vsel %vm985, %v2560, 0
      %v2599 = vsel %vm985, %v2561, 0
      %v2602 = vsel %vm985, %v2562, 0
      %v2605 = vsel %vm985, %v2563, 0
      %v2608 = vsel %vm985, %v2564, 0
      %v2611 = vsel %vm985, %v2565, 0
      %v2614 = vsel %vm985, %v2566, 0
      %v2617 = vsel %vm985, %v2567, 0
      %v2620 = vsel %vm985, %v2568, 0
      %v2623 = vsel %vm985, %v2569, 0
      %v2626 = vsel %vm985, %v2570, 0
      %v2629 = vsel %vm985, %v2571, 0
      %v2632 = vsel %vm985, %v2572, 0
      %v2635 = vsel %vm985, %v2573, 0
      %v2638 = vsel %vm985, %v2574, 0
      %v2641 = vsel %vm985, %v2575, 0
      %v2644 = vsel %vm985, %v2576, 0
      %v2647 = vsel %vm985, %v2577, 0
      %v2650 = vsel %vm985, %v2578, 0
      %v2653 = vsel %vm985, %v2579, 0
      %v2656 = vsel %vm985, %v2580, 0
      %v2659 = vsel %vm985, %v2581, 0
      %v2662 = vsel %vm985, %v2582, 0
      %v2665 = vsel %vm985, %v2583, 0
      %v2668 = vsel %vm985, %v2584, 0
      %v2671 = vsel %vm985, %v2585, 0
      %v2674 = vsel %vm985, %v2586, 0
      %v2677 = vsel %vm985, %v2587, 0
      %v2680 = vsel %vm985, %v2588, 0
      %v2683 = vsel %vm985, %v2589, 0
      %v2686 = vsel %vm985, %v2590, 0
      %v2689 = vsel %vm985, %v2591, 0
      %2691 = vmatprep.subr.mxu0 0.0
      %2692 = vmatpush1.msra.mxu0 %v2593
      %2693 = vmatprep.subr.mxu0 0.0
      %2694 = vmatpush1.msra.mxu0 %v2594
      %2695 = vmatprep.subr.mxu0 0.0
      %2696 = vmatpush1.msra.mxu0 0.0
      %2697 = vmatprep.subr.mxu0 0.0
      %2698 = vmatpush1.msra.mxu0 0.0
      %2699 = vmatprep.subr.mxu0 0.0
      %2700 = vmatpush1.msra.mxu0 0.0
      %2701 = vmatprep.subr.mxu0 0.0
      %2702 = vmatpush1.msra.mxu0 0.0
      %2703 = vmatprep.subr.mxu0 0.0
      %2704 = vmatpush1.msra.mxu0 0.0
      %2705 = vmatprep.subr.mxu0 0.0
      %2706 = vmatpush1.msra.mxu0 0.0
      %2707 = vmatprep.subr.mxu0 0.0
      %2708 = vmatpush1.msra.mxu0 0.0
      %2709 = vmatprep.subr.mxu0 0.0
      %2710 = vmatpush1.msra.mxu0 0.0
      %2711 = vmatprep.subr.mxu0 0.0
      %2712 = vmatpush1.msra.mxu0 0.0
      %2713 = vmatprep.subr.mxu0 0.0
      %2714 = vmatpush1.msra.mxu0 0.0
      %2715 = vmatprep.subr.mxu0 0.0
      %2716 = vmatpush1.msra.mxu0 0.0
      %2717 = vmatprep.subr.mxu0 0.0
      %2718 = vmatpush1.msra.mxu0 0.0
      %2719 = vmatprep.subr.mxu0 0.0
      %2720 = vmatpush1.msra.mxu0 0.0
      %2721 = vmatprep.subr.mxu0 0.0
      %2722 = vmatpush1.msra.mxu0 0.0
      %2723 = vmatprep.subr.mxu0 0.0
      %2724 = vmatpush1.msra.mxu0 0.0
      %2725 = vmatprep.subr.mxu0 0.0
      %2726 = vmatpush1.msra.mxu0 0.0
      %2727 = vmatprep.subr.mxu0 0.0
      %2728 = vmatpush1.msra.mxu0 0.0
      %2729 = vmatprep.subr.mxu0 0.0
      %2730 = vmatpush1.msra.mxu0 0.0
      %2731 = vmatprep.subr.mxu0 0.0
      %2732 = vmatpush1.msra.mxu0 0.0
      %2733 = vmatprep.subr.mxu0 0.0
      %2734 = vmatpush1.msra.mxu0 0.0
      %2735 = vmatprep.subr.mxu0 0.0
      %2736 = vmatpush1.msra.mxu0 0.0
      %2737 = vmatprep.subr.mxu0 0.0
      %2738 = vmatpush1.msra.mxu0 0.0
      %2739 = vmatprep.subr.mxu0 0.0
      %2740 = vmatpush1.msra.mxu0 0.0
      %2741 = vmatprep.subr.mxu0 0.0
      %2742 = vmatpush1.msra.mxu0 0.0
      %2743 = vmatprep.subr.mxu0 0.0
      %2744 = vmatpush1.msra.mxu0 0.0
      %2745 = vmatprep.subr.mxu0 0.0
      %2746 = vmatpush1.msra.mxu0 0.0
      %2747 = vmatprep.subr.mxu0 0.0
      %2748 = vmatpush1.msra.mxu0 0.0
      %2749 = vmatprep.subr.mxu0 0.0
      %2750 = vmatpush1.msra.mxu0 0.0
      %2751 = vmatprep.subr.mxu0 0.0
      %2752 = vmatpush1.msra.mxu0 0.0
      %2753 = vmatprep.subr.mxu0 0.0
      %2754 = vmatpush1.msra.mxu0 0.0
      %2755 = vmatprep.mubr.f32.mxu0 0.0
      %2756 = vmatmul.mubr.f32.gmra.mrb[0].mxu0 %v2596
      %v2757 = vpop.f32.mrb[0].mxu0
      %v2758 = vadd.f32 %v202, %v2757
      %v2759 = vpop.f32.mrb[0].mxu0
      %2760 = vmatprep.mubr.f32.mxu0 0.0
      %2761 = vmatmul.mubr.f32.gmra.mrb[0].mxu0 %v2599
      %v2762 = vpop.f32.mrb[0].mxu0
      %v2763 = vadd.f32 %v202, %v2762
      %v2764 = vpop.f32.mrb[0].mxu0
      %2765 = vmatprep.mubr.f32.mxu0 0.0
      %2766 = vmatmul.mubr.f32.gmra.mrb[0].mxu0 %v2602
      %v2767 = vpop.f32.mrb[0].mxu0
      %v2768 = vadd.f32 %v202, %v2767
      %v2769 = vpop.f32.mrb[0].mxu0
      %2770 = vmatprep.mubr.f32.mxu0 0.0
      %2771 = vmatmul.mubr.f32.gmra.mrb[0].mxu0 %v2605
      %v2772 = vpop.f32.mrb[0].mxu0
      %v2773 = vadd.f32 %v202, %v2772
      %v2774 = vpop.f32.mrb[0].mxu0
      %2775 = vmatprep.mubr.f32.mxu0 0.0
      %2776 = vmatmul.mubr.f32.gmra.mrb[0].mxu0 %v2608
      %v2777 = vpop.f32.mrb[0].mxu0
      %v2778 = vadd.f32 %v202, %v2777
      %v2779 = vpop.f32.mrb[0].mxu0
      %2780 = vmatprep.mubr.f32.mxu0 0.0
      %2781 = vmatmul.mubr.f32.gmra.mrb[0].mxu0 %v2611
      %v2782 = vpop.f32.mrb[0].mxu0
      %v2783 = vadd.f32 %v202, %v2782
      %v2784 = vpop.f32.mrb[0].mxu0
      %2785 = vmatprep.mubr.f32.mxu0 0.0
      %2786 = vmatmul.mubr.f32.gmra.mrb[0].mxu0 %v2614
      %v2787 = vpop.f32.mrb[0].mxu0
      %v2788 = vadd.f32 %v202, %v2787
      %v2789 = vpop.f32.mrb[0].mxu0
      %2790 = vmatprep.mubr.f32.mxu0 0.0
      %2791 = vmatmul.mubr.f32.gmra.mrb[0].mxu0 %v2617
      %v2792 = vpop.f32.mrb[0].mxu0
      %v2793 = vadd.f32 %v202, %v2792
      %v2794 = vpop.f32.mrb[0].mxu0
      %2795 = vmatprep.mubr.f32.mxu0 0.0
      %2796 = vmatmul.mubr.f32.gmra.mrb[0].mxu0 %v2620
      %v2797 = vpop.f32.mrb[0].mxu0
      %v2798 = vadd.f32 %v202, %v2797
      %v2799 = vpop.f32.mrb[0].mxu0
      %2800 = vmatprep.mubr.f32.mxu0 0.0
      %2801 = vmatmul.mubr.f32.gmra.mrb[0].mxu0 %v2623
      %v2802 = vpop.f32.mrb[0].mxu0
      %v2803 = vadd.f32 %v202, %v2802
      %v2804 = vpop.f32.mrb[0].mxu0
      %2805 = vmatprep.mubr.f32.mxu0 0.0
      %2806 = vmatmul.mubr.f32.gmra.mrb[0].mxu0 %v2626
      %v2807 = vpop.f32.mrb[0].mxu0
      %v2808 = vadd.f32 %v202, %v2807
      %v2809 = vpop.f32.mrb[0].mxu0
      %2810 = vmatprep.mubr.f32.mxu0 0.0
      %2811 = vmatmul.mubr.f32.gmra.mrb[0].mxu0 %v2629
      %v2812 = vpop.f32.mrb[0].mxu0
      %v2813 = vadd.f32 %v202, %v2812
      %v2814 = vpop.f32.mrb[0].mxu0
      %2815 = vmatprep.mubr.f32.mxu0 0.0
      %2816 = vmatmul.mubr.f32.gmra.mrb[0].mxu0 %v2632
      %v2817 = vpop.f32.mrb[0].mxu0
      %v2818 = vadd.f32 %v202, %v2817
      %v2819 = vpop.f32.mrb[0].mxu0
      %2820 = vmatprep.mubr.f32.mxu0 0.0
      %2821 = vmatmul.mubr.f32.gmra.mrb[0].mxu0 %v2635
      %v2822 = vpop.f32.mrb[0].mxu0
      %v2823 = vadd.f32 %v202, %v2822
      %v2824 = vpop.f32.mrb[0].mxu0
      %2825 = vmatprep.mubr.f32.mxu0 0.0
      %2826 = vmatmul.mubr.f32.gmra.mrb[0].mxu0 %v2638
      %v2827 = vpop.f32.mrb[0].mxu0
      %v2828 = vadd.f32 %v202, %v2827
      %v2829 = vpop.f32.mrb[0].mxu0
      %2830 = vmatprep.mubr.f32.mxu0 0.0
      %2831 = vmatmul.mubr.f32.gmra.mrb[0].mxu0 %v2641
      %v2832 = vpop.f32.mrb[0].mxu0
      %v2833 = vadd.f32 %v202, %v2832
      %v2834 = vpop.f32.mrb[0].mxu0
      %2835 = vmatprep.mubr.f32.mxu0 0.0
      %2836 = vmatmul.mubr.f32.gmra.mrb[0].mxu0 %v2644
      %v2837 = vpop.f32.mrb[0].mxu0
      %v2838 = vadd.f32 %v202, %v2837
      %v2839 = vpop.f32.mrb[0].mxu0
      %2840 = vmatprep.mubr.f32.mxu0 0.0
      %2841 = vmatmul.mubr.f32.gmra.mrb[0].mxu0 %v2647
      %v2842 = vpop.f32.mrb[0].mxu0
      %v2843 = vadd.f32 %v202, %v2842
      %v2844 = vpop.f32.mrb[0].mxu0
      %2845 = vmatprep.mubr.f32.mxu0 0.0
      %2846 = vmatmul.mubr.f32.gmra.mrb[0].mxu0 %v2650
      %v2847 = vpop.f32.mrb[0].mxu0
      %v2848 = vadd.f32 %v202, %v2847
      %v2849 = vpop.f32.mrb[0].mxu0
      %2850 = vmatprep.mubr.f32.mxu0 0.0
      %2851 = vmatmul.mubr.f32.gmra.mrb[0].mxu0 %v2653
      %v2852 = vpop.f32.mrb[0].mxu0
      %v2853 = vadd.f32 %v202, %v2852
      %v2854 = vpop.f32.mrb[0].mxu0
      %2855 = vmatprep.mubr.f32.mxu0 0.0
      %2856 = vmatmul.mubr.f32.gmra.mrb[0].mxu0 %v2656
      %v2857 = vpop.f32.mrb[0].mxu0
      %v2858 = vadd.f32 %v202, %v2857
      %v2859 = vpop.f32.mrb[0].mxu0
      %2860 = vmatprep.mubr.f32.mxu0 0.0
      %2861 = vmatmul.mubr.f32.gmra.mrb[0].mxu0 %v2659
      %v2862 = vpop.f32.mrb[0].mxu0
      %v2863 = vadd.f32 %v202, %v2862
      %v2864 = vpop.f32.mrb[0].mxu0
      %2865 = vmatprep.mubr.f32.mxu0 0.0
      %2866 = vmatmul.mubr.f32.gmra.mrb[0].mxu0 %v2662
      %v2867 = vpop.f32.mrb[0].mxu0
      %v2868 = vadd.f32 %v202, %v2867
      %v2869 = vpop.f32.mrb[0].mxu0
      %2870 = vmatprep.mubr.f32.mxu0 0.0
      %2871 = vmatmul.mubr.f32.gmra.mrb[0].mxu0 %v2665
      %v2872 = vpop.f32.mrb[0].mxu0
      %v2873 = vadd.f32 %v202, %v2872
      %v2874 = vpop.f32.mrb[0].mxu0
      %2875 = vmatprep.mubr.f32.mxu0 0.0
      %2876 = vmatmul.mubr.f32.gmra.mrb[0].mxu0 %v2668
      %v2877 = vpop.f32.mrb[0].mxu0
      %v2878 = vadd.f32 %v202, %v2877
      %v2879 = vpop.f32.mrb[0].mxu0
      %2880 = vmatprep.mubr.f32.mxu0 0.0
      %2881 = vmatmul.mubr.f32.gmra.mrb[0].mxu0 %v2671
      %v2882 = vpop.f32.mrb[0].mxu0
      %v2883 = vadd.f32 %v202, %v2882
      %v2884 = vpop.f32.mrb[0].mxu0
      %2885 = vmatprep.mubr.f32.mxu0 0.0
      %2886 = vmatmul.mubr.f32.gmra.mrb[0].mxu0 %v2674
      %v2887 = vpop.f32.mrb[0].mxu0
      %v2888 = vadd.f32 %v202, %v2887
      %v2889 = vpop.f32.mrb[0].mxu0
      %2890 = vmatprep.mubr.f32.mxu0 0.0
      %2891 = vmatmul.mubr.f32.gmra.mrb[0].mxu0 %v2677
      %v2892 = vpop.f32.mrb[0].mxu0
      %v2893 = vadd.f32 %v202, %v2892
      %v2894 = vpop.f32.mrb[0].mxu0
      %2895 = vmatprep.mubr.f32.mxu0 0.0
      %2896 = vmatmul.mubr.f32.gmra.mrb[0].mxu0 %v2680
      %v2897 = vpop.f32.mrb[0].mxu0
      %v2898 = vadd.f32 %v202, %v2897
      %v2899 = vpop.f32.mrb[0].mxu0
      %2900 = vmatprep.mubr.f32.mxu0 0.0
      %2901 = vmatmul.mubr.f32.gmra.mrb[0].mxu0 %v2683
      %v2902 = vpop.f32.mrb[0].mxu0
      %v2903 = vadd.f32 %v202, %v2902
      %v2904 = vpop.f32.mrb[0].mxu0
      %2905 = vmatprep.mubr.f32.mxu0 0.0
      %2906 = vmatmul.mubr.f32.gmra.mrb[0].mxu0 %v2686
      %v2907 = vpop.f32.mrb[0].mxu0
      %v2908 = vadd.f32 %v202, %v2907
      %v2909 = vpop.f32.mrb[0].mxu0
      %2910 = vmatprep.mubr.f32.mxu0 0.0
      %2911 = vmatmul.mubr.f32.gmra.mrb[0].mxu0 %v2689
      %v2912 = vpop.f32.mrb[0].mxu0
      %v2913 = vadd.f32 %v202, %v2912
      %v2914 = vpop.f32.mrb[0].mxu0
      %2915 = vdwg.mxu0
      %s2916 = scalar_lea.vmem %s194, 512
      %2917 = vst.msk [vmem:[%s2916] sm:$0xff] %vm884, %v2758
      %2918 = vst.msk [vmem:[%s2916 + $0x8] sm:$0xff] %vm884, %v2763
      %2919 = vst.msk [vmem:[%s2916 + $0x10] sm:$0xff] %vm884, %v2768
      %2920 = vst.msk [vmem:[%s2916 + $0x18] sm:$0xff] %vm884, %v2773
      %2921 = vst.msk [vmem:[%s2916 + $0x20] sm:$0xff] %vm884, %v2778
      %2922 = vst.msk [vmem:[%s2916 + $0x28] sm:$0xff] %vm884, %v2783
      %2923 = vst.msk [vmem:[%s2916 + $0x30] sm:$0xff] %vm884, %v2788
      %2924 = vst.msk [vmem:[%s2916 + $0x38] sm:$0xff] %vm884, %v2793
      %2925 = vst.msk [vmem:[%s2916 + $0x40] sm:$0xff] %vm884, %v2798
      %2926 = vst.msk [vmem:[%s2916 + $0x48] sm:$0xff] %vm884, %v2803
      %2927 = vst.msk [vmem:[%s2916 + $0x50] sm:$0xff] %vm884, %v2808
      %2928 = vst.msk [vmem:[%s2916 + $0x58] sm:$0xff] %vm884, %v2813
      %2929 = vst.msk [vmem:[%s2916 + $0x60] sm:$0xff] %vm884, %v2818
      %2930 = vst.msk [vmem:[%s2916 + $0x68] sm:$0xff] %vm884, %v2823
      %2931 = vst.msk [vmem:[%s2916 + $0x70] sm:$0xff] %vm884, %v2828
      %2932 = vst.msk [vmem:[%s2916 + $0x78] sm:$0xff] %vm884, %v2833
      %2933 = vst.msk [vmem:[%s2916 + $0x80] sm:$0xff] %vm884, %v2838
      %2934 = vst.msk [vmem:[%s2916 + $0x88] sm:$0xff] %vm884, %v2843
      %2935 = vst.msk [vmem:[%s2916 + $0x90] sm:$0xff] %vm884, %v2848
      %2936 = vst.msk [vmem:[%s2916 + $0x98] sm:$0xff] %vm884, %v2853
      %2937 = vst.msk [vmem:[%s2916 + $0xa0] sm:$0xff] %vm884, %v2858
      %2938 = vst.msk [vmem:[%s2916 + $0xa8] sm:$0xff] %vm884, %v2863
      %2939 = vst.msk [vmem:[%s2916 + $0xb0] sm:$0xff] %vm884, %v2868
      %2940 = vst.msk [vmem:[%s2916 + $0xb8] sm:$0xff] %vm884, %v2873
      %2941 = vst.msk [vmem:[%s2916 + $0xc0] sm:$0xff] %vm884, %v2878
      %2942 = vst.msk [vmem:[%s2916 + $0xc8] sm:$0xff] %vm884, %v2883
      %2943 = vst.msk [vmem:[%s2916 + $0xd0] sm:$0xff] %vm884, %v2888
      %2944 = vst.msk [vmem:[%s2916 + $0xd8] sm:$0xff] %vm884, %v2893
      %2945 = vst.msk [vmem:[%s2916 + $0xe0] sm:$0xff] %vm884, %v2898
      %2946 = vst.msk [vmem:[%s2916 + $0xe8] sm:$0xff] %vm884, %v2903
      %2947 = vst.msk [vmem:[%s2916 + $0xf0] sm:$0xff] %vm884, %v2908
      %2948 = vst.msk [vmem:[%s2916 + $0xf8] sm:$0xff] %vm884, %v2913
      %2949 = vrot.lane.b32.xlu0 %v369, 4
      %v2950 = vpop.permute.xlu0 %2949
      %2951 = vrot.lane.b32.xlu0 %v370, 4
      %v2952 = vpop.permute.xlu0 %2951
      %2953 = vrot.lane.b32.xlu0 %v371, 4
      %v2954 = vpop.permute.xlu0 %2953
      %2955 = vrot.lane.b32.xlu0 %v372, 4
      %v2956 = vpop.permute.xlu0 %2955
      %2957 = vrot.lane.b32.xlu0 %v373, 4
      %v2958 = vpop.permute.xlu0 %2957
      %2959 = vrot.lane.b32.xlu0 %v374, 4
      %v2960 = vpop.permute.xlu0 %2959
      %2961 = vrot.lane.b32.xlu0 %v375, 4
      %v2962 = vpop.permute.xlu0 %2961
      %2963 = vrot.lane.b32.xlu0 %v376, 4
      %v2964 = vpop.permute.xlu0 %2963
      %2965 = vrot.lane.b32.xlu0 %v377, 4
      %v2966 = vpop.permute.xlu0 %2965
      %2967 = vrot.lane.b32.xlu0 %v378, 4
      %v2968 = vpop.permute.xlu0 %2967
      %2969 = vrot.lane.b32.xlu0 %v379, 4
      %v2970 = vpop.permute.xlu0 %2969
      %2971 = vrot.lane.b32.xlu0 %v380, 4
      %v2972 = vpop.permute.xlu0 %2971
      %2973 = vrot.lane.b32.xlu0 %v381, 4
      %v2974 = vpop.permute.xlu0 %2973
      %2975 = vrot.lane.b32.xlu0 %v382, 4
      %v2976 = vpop.permute.xlu0 %2975
      %2977 = vrot.lane.b32.xlu0 %v383, 4
      %v2978 = vpop.permute.xlu0 %2977
      %2979 = vrot.lane.b32.xlu0 %v384, 4
      %v2980 = vpop.permute.xlu0 %2979
      %2981 = vrot.lane.b32.xlu0 %v385, 4
      %v2982 = vpop.permute.xlu0 %2981
      %2983 = vrot.lane.b32.xlu0 %v386, 4
      %v2984 = vpop.permute.xlu0 %2983
      %2985 = vrot.lane.b32.xlu0 %v387, 4
      %v2986 = vpop.permute.xlu0 %2985
      %2987 = vrot.lane.b32.xlu0 %v388, 4
      %v2988 = vpop.permute.xlu0 %2987
      %2989 = vrot.lane.b32.xlu0 %v389, 4
      %v2990 = vpop.permute.xlu0 %2989
      %2991 = vrot.lane.b32.xlu0 %v390, 4
      %v2992 = vpop.permute.xlu0 %2991
      %2993 = vrot.lane.b32.xlu0 %v391, 4
      %v2994 = vpop.permute.xlu0 %2993
      %2995 = vrot.lane.b32.xlu0 %v392, 4
      %v2996 = vpop.permute.xlu0 %2995
      %2997 = vrot.lane.b32.xlu0 %v393, 4
      %v2998 = vpop.permute.xlu0 %2997
      %2999 = vrot.lane.b32.xlu0 %v394, 4
      %v3000 = vpop.permute.xlu0 %2999
      %3001 = vrot.lane.b32.xlu0 %v395, 4
      %v3002 = vpop.permute.xlu0 %3001
      %3003 = vrot.lane.b32.xlu0 %v396, 4
      %v3004 = vpop.permute.xlu0 %3003
      %3005 = vrot.lane.b32.xlu0 %v397, 4
      %v3006 = vpop.permute.xlu0 %3005
      %3007 = vrot.lane.b32.xlu0 %v398, 4
      %v3008 = vpop.permute.xlu0 %3007
      %3009 = vrot.lane.b32.xlu0 %v399, 4
      %v3010 = vpop.permute.xlu0 %3009
      %3011 = vrot.lane.b32.xlu0 %v400, 4
      %v3012 = vpop.permute.xlu0 %3011
      %3045 = vrot.lane.b32.xlu0 %v436, 8
      %v3046 = vpop.permute.xlu0 %3045
      %3047 = vrot.lane.b32.xlu0 %v437, 8
      %v3048 = vpop.permute.xlu0 %3047
      %3049 = vrot.lane.b32.xlu0 %v438, 8
      %v3050 = vpop.permute.xlu0 %3049
      %3051 = vrot.lane.b32.xlu0 %v439, 8
      %v3052 = vpop.permute.xlu0 %3051
      %3053 = vrot.lane.b32.xlu0 %v440, 8
      %v3054 = vpop.permute.xlu0 %3053
      %3055 = vrot.lane.b32.xlu0 %v441, 8
      %v3056 = vpop.permute.xlu0 %3055
      %3057 = vrot.lane.b32.xlu0 %v442, 8
      %v3058 = vpop.permute.xlu0 %3057
      %3059 = vrot.lane.b32.xlu0 %v443, 8
      %v3060 = vpop.permute.xlu0 %3059
      %3061 = vrot.lane.b32.xlu0 %v444, 8
      %v3062 = vpop.permute.xlu0 %3061
      %3063 = vrot.lane.b32.xlu0 %v445, 8
      %v3064 = vpop.permute.xlu0 %3063
      %3065 = vrot.lane.b32.xlu0 %v446, 8
      %v3066 = vpop.permute.xlu0 %3065
      %3067 = vrot.lane.b32.xlu0 %v447, 8
      %v3068 = vpop.permute.xlu0 %3067
      %3069 = vrot.lane.b32.xlu0 %v448, 8
      %v3070 = vpop.permute.xlu0 %3069
      %3071 = vrot.lane.b32.xlu0 %v449, 8
      %v3072 = vpop.permute.xlu0 %3071
      %3073 = vrot.lane.b32.xlu0 %v450, 8
      %v3074 = vpop.permute.xlu0 %3073
      %3075 = vrot.lane.b32.xlu0 %v451, 8
      %v3076 = vpop.permute.xlu0 %3075
      %3077 = vrot.lane.b32.xlu0 %v452, 8
      %v3078 = vpop.permute.xlu0 %3077
      %3079 = vrot.lane.b32.xlu0 %v453, 8
      %v3080 = vpop.permute.xlu0 %3079
      %3081 = vrot.lane.b32.xlu0 %v454, 8
      %v3082 = vpop.permute.xlu0 %3081
      %3083 = vrot.lane.b32.xlu0 %v455, 8
      %v3084 = vpop.permute.xlu0 %3083
      %3085 = vrot.lane.b32.xlu0 %v456, 8
      %v3086 = vpop.permute.xlu0 %3085
      %3087 = vrot.lane.b32.xlu0 %v457, 8
      %v3088 = vpop.permute.xlu0 %3087
      %3089 = vrot.lane.b32.xlu0 %v458, 8
      %v3090 = vpop.permute.xlu0 %3089
      %3091 = vrot.lane.b32.xlu0 %v459, 8
      %v3092 = vpop.permute.xlu0 %3091
      %3093 = vrot.lane.b32.xlu0 %v460, 8
      %v3094 = vpop.permute.xlu0 %3093
      %3095 = vrot.lane.b32.xlu0 %v461, 8
      %v3096 = vpop.permute.xlu0 %3095
      %3097 = vrot.lane.b32.xlu0 %v462, 8
      %v3098 = vpop.permute.xlu0 %3097
      %3099 = vrot.lane.b32.xlu0 %v463, 8
      %v3100 = vpop.permute.xlu0 %3099
      %3101 = vrot.lane.b32.xlu0 %v464, 8
      %v3102 = vpop.permute.xlu0 %3101
      %3103 = vrot.lane.b32.xlu0 %v465, 8
      %v3104 = vpop.permute.xlu0 %3103
      %3105 = vrot.lane.b32.xlu0 %v466, 8
      %v3106 = vpop.permute.xlu0 %3105
      %3107 = vrot.lane.b32.xlu0 %v467, 8
      %v3108 = vpop.permute.xlu0 %3107
      %3173 = vrot.lane.b32.xlu0 %v468, 12
      %v3174 = vpop.permute.xlu0 %3173
      %3175 = vrot.lane.b32.xlu0 %v469, 12
      %v3176 = vpop.permute.xlu0 %3175
      %3177 = vrot.lane.b32.xlu0 %v470, 12
      %v3178 = vpop.permute.xlu0 %3177
      %3179 = vrot.lane.b32.xlu0 %v471, 12
      %v3180 = vpop.permute.xlu0 %3179
      %3181 = vrot.lane.b32.xlu0 %v472, 12
      %v3182 = vpop.permute.xlu0 %3181
      %3183 = vrot.lane.b32.xlu0 %v473, 12
      %v3184 = vpop.permute.xlu0 %3183
      %3185 = vrot.lane.b32.xlu0 %v474, 12
      %v3186 = vpop.permute.xlu0 %3185
      %3187 = vrot.lane.b32.xlu0 %v475, 12
      %v3188 = vpop.permute.xlu0 %3187
      %3189 = vrot.lane.b32.xlu0 %v476, 12
      %v3190 = vpop.permute.xlu0 %3189
      %3191 = vrot.lane.b32.xlu0 %v477, 12
      %v3192 = vpop.permute.xlu0 %3191
      %3193 = vrot.lane.b32.xlu0 %v478, 12
      %v3194 = vpop.permute.xlu0 %3193
      %3195 = vrot.lane.b32.xlu0 %v479, 12
      %v3196 = vpop.permute.xlu0 %3195
      %3197 = vrot.lane.b32.xlu0 %v480, 12
      %v3198 = vpop.permute.xlu0 %3197
      %3199 = vrot.lane.b32.xlu0 %v481, 12
      %v3200 = vpop.permute.xlu0 %3199
      %3201 = vrot.lane.b32.xlu0 %v482, 12
      %v3202 = vpop.permute.xlu0 %3201
      %3203 = vrot.lane.b32.xlu0 %v483, 12
      %v3204 = vpop.permute.xlu0 %3203
      %3205 = vrot.lane.b32.xlu0 %v484, 12
      %v3206 = vpop.permute.xlu0 %3205
      %3207 = vrot.lane.b32.xlu0 %v485, 12
      %v3208 = vpop.permute.xlu0 %3207
      %3209 = vrot.lane.b32.xlu0 %v486, 12
      %v3210 = vpop.permute.xlu0 %3209
      %3211 = vrot.lane.b32.xlu0 %v487, 12
      %v3212 = vpop.permute.xlu0 %3211
      %3213 = vrot.lane.b32.xlu0 %v488, 12
      %v3214 = vpop.permute.xlu0 %3213
      %3215 = vrot.lane.b32.xlu0 %v489, 12
      %v3216 = vpop.permute.xlu0 %3215
      %3217 = vrot.lane.b32.xlu0 %v490, 12
      %v3218 = vpop.permute.xlu0 %3217
      %3219 = vrot.lane.b32.xlu0 %v491, 12
      %v3220 = vpop.permute.xlu0 %3219
      %3221 = vrot.lane.b32.xlu0 %v492, 12
      %v3222 = vpop.permute.xlu0 %3221
      %3223 = vrot.lane.b32.xlu0 %v493, 12
      %v3224 = vpop.permute.xlu0 %3223
      %3225 = vrot.lane.b32.xlu0 %v494, 12
      %v3226 = vpop.permute.xlu0 %3225
      %3227 = vrot.lane.b32.xlu0 %v495, 12
      %v3228 = vpop.permute.xlu0 %3227
      %3229 = vrot.lane.b32.xlu0 %v496, 12
      %v3230 = vpop.permute.xlu0 %3229
      %3231 = vrot.lane.b32.xlu0 %v497, 12
      %v3232 = vpop.permute.xlu0 %3231
      %3233 = vrot.lane.b32.xlu0 %v498, 12
      %v3234 = vpop.permute.xlu0 %3233
      %3235 = vrot.lane.b32.xlu0 %v499, 12
      %v3236 = vpop.permute.xlu0 %3235
      %v3269 = vsel %vm884, %v337, %v2950
      %v3270 = vsel %vm884, %v338, %v2952
      %v3271 = vsel %vm884, %v339, %v2954
      %v3272 = vsel %vm884, %v340, %v2956
      %v3273 = vsel %vm884, %v341, %v2958
      %v3274 = vsel %vm884, %v342, %v2960
      %v3275 = vsel %vm884, %v343, %v2962
      %v3276 = vsel %vm884, %v344, %v2964
      %v3277 = vsel %vm884, %v345, %v2966
      %v3278 = vsel %vm884, %v346, %v2968
      %v3279 = vsel %vm884, %v347, %v2970
      %v3280 = vsel %vm884, %v348, %v2972
      %v3281 = vsel %vm884, %v349, %v2974
      %v3282 = vsel %vm884, %v350, %v2976
      %v3283 = vsel %vm884, %v351, %v2978
      %v3284 = vsel %vm884, %v352, %v2980
      %v3285 = vsel %vm884, %v353, %v2982
      %v3286 = vsel %vm884, %v354, %v2984
      %v3287 = vsel %vm884, %v355, %v2986
      %v3288 = vsel %vm884, %v356, %v2988
      %v3289 = vsel %vm884, %v357, %v2990
      %v3290 = vsel %vm884, %v358, %v2992
      %v3291 = vsel %vm884, %v359, %v2994
      %v3292 = vsel %vm884, %v360, %v2996
      %v3293 = vsel %vm884, %v361, %v2998
      %v3294 = vsel %vm884, %v362, %v3000
      %v3295 = vsel %vm884, %v363, %v3002
      %v3296 = vsel %vm884, %v364, %v3004
      %v3297 = vsel %vm884, %v365, %v3006
      %v3298 = vsel %vm884, %v366, %v3008
      %v3299 = vsel %vm884, %v367, %v3010
      %v3300 = vsel %vm884, %v368, %v3012
      %v3301 = vsel %vm917, %v3269, %v3046
      %v3302 = vsel %vm917, %v3270, %v3048
      %v3303 = vsel %vm917, %v3271, %v3050
      %v3304 = vsel %vm917, %v3272, %v3052
      %v3305 = vsel %vm917, %v3273, %v3054
      %v3306 = vsel %vm917, %v3274, %v3056
      %v3307 = vsel %vm917, %v3275, %v3058
      %v3308 = vsel %vm917, %v3276, %v3060
      %v3309 = vsel %vm917, %v3277, %v3062
      %v3310 = vsel %vm917, %v3278, %v3064
      %v3311 = vsel %vm917, %v3279, %v3066
      %v3312 = vsel %vm917, %v3280, %v3068
      %v3313 = vsel %vm917, %v3281, %v3070
      %v3314 = vsel %vm917, %v3282, %v3072
      %v3315 = vsel %vm917, %v3283, %v3074
      %v3316 = vsel %vm917, %v3284, %v3076
      %v3317 = vsel %vm917, %v3285, %v3078
      %v3318 = vsel %vm917, %v3286, %v3080
      %v3319 = vsel %vm917, %v3287, %v3082
      %v3320 = vsel %vm917, %v3288, %v3084
      %v3321 = vsel %vm917, %v3289, %v3086
      %v3322 = vsel %vm917, %v3290, %v3088
      %v3323 = vsel %vm917, %v3291, %v3090
      %v3324 = vsel %vm917, %v3292, %v3092
      %v3325 = vsel %vm917, %v3293, %v3094
      %v3326 = vsel %vm917, %v3294, %v3096
      %v3327 = vsel %vm917, %v3295, %v3098
      %v3328 = vsel %vm917, %v3296, %v3100
      %v3329 = vsel %vm917, %v3297, %v3102
      %v3330 = vsel %vm917, %v3298, %v3104
      %v3331 = vsel %vm917, %v3299, %v3106
      %v3332 = vsel %vm917, %v3300, %v3108
      %v3333 = vsel %vm950, %v3301, %v3174
      %v3334 = vsel %vm950, %v3302, %v3176
      %v3335 = vsel %vm950, %v3303, %v3178
      %v3336 = vsel %vm950, %v3304, %v3180
      %v3337 = vsel %vm950, %v3305, %v3182
      %v3338 = vsel %vm950, %v3306, %v3184
      %v3339 = vsel %vm950, %v3307, %v3186
      %v3340 = vsel %vm950, %v3308, %v3188
      %v3341 = vsel %vm950, %v3309, %v3190
      %v3342 = vsel %vm950, %v3310, %v3192
      %v3343 = vsel %vm950, %v3311, %v3194
      %v3344 = vsel %vm950, %v3312, %v3196
      %v3345 = vsel %vm950, %v3313, %v3198
      %v3346 = vsel %vm950, %v3314, %v3200
      %v3347 = vsel %vm950, %v3315, %v3202
      %v3348 = vsel %vm950, %v3316, %v3204
      %v3349 = vsel %vm950, %v3317, %v3206
      %v3350 = vsel %vm950, %v3318, %v3208
      %v3351 = vsel %vm950, %v3319, %v3210
      %v3352 = vsel %vm950, %v3320, %v3212
      %v3353 = vsel %vm950, %v3321, %v3214
      %v3354 = vsel %vm950, %v3322, %v3216
      %v3355 = vsel %vm950, %v3323, %v3218
      %v3356 = vsel %vm950, %v3324, %v3220
      %v3357 = vsel %vm950, %v3325, %v3222
      %v3358 = vsel %vm950, %v3326, %v3224
      %v3359 = vsel %vm950, %v3327, %v3226
      %v3360 = vsel %vm950, %v3328, %v3228
      %v3361 = vsel %vm950, %v3329, %v3230
      %v3362 = vsel %vm950, %v3330, %v3232
      %v3363 = vsel %vm950, %v3331, %v3234
      %v3364 = vsel %vm950, %v3332, %v3236
      %s3365 = scalar_lea.vmem %s1, 48
      %v3366 = vld [vmem:[%s3365] sm:$0xff]
      %v3367 = vld [vmem:[%s3365 + $0x8] sm:$0xff]
      %v3369 = vsel %vm985, %v3333, 0
      %v3372 = vsel %vm985, %v3334, 0
      %v3375 = vsel %vm985, %v3335, 0
      %v3378 = vsel %vm985, %v3336, 0
      %v3381 = vsel %vm985, %v3337, 0
      %v3384 = vsel %vm985, %v3338, 0
      %v3387 = vsel %vm985, %v3339, 0
      %v3390 = vsel %vm985, %v3340, 0
      %v3393 = vsel %vm985, %v3341, 0
      %v3396 = vsel %vm985, %v3342, 0
      %v3399 = vsel %vm985, %v3343, 0
      %v3402 = vsel %vm985, %v3344, 0
      %v3405 = vsel %vm985, %v3345, 0
      %v3408 = vsel %vm985, %v3346, 0
      %v3411 = vsel %vm985, %v3347, 0
      %v3414 = vsel %vm985, %v3348, 0
      %v3417 = vsel %vm985, %v3349, 0
      %v3420 = vsel %vm985, %v3350, 0
      %v3423 = vsel %vm985, %v3351, 0
      %v3426 = vsel %vm985, %v3352, 0
      %v3429 = vsel %vm985, %v3353, 0
      %v3432 = vsel %vm985, %v3354, 0
      %v3435 = vsel %vm985, %v3355, 0
      %v3438 = vsel %vm985, %v3356, 0
      %v3441 = vsel %vm985, %v3357, 0
      %v3444 = vsel %vm985, %v3358, 0
      %v3447 = vsel %vm985, %v3359, 0
      %v3450 = vsel %vm985, %v3360, 0
      %v3453 = vsel %vm985, %v3361, 0
      %v3456 = vsel %vm985, %v3362, 0
      %v3459 = vsel %vm985, %v3363, 0
      %v3462 = vsel %vm985, %v3364, 0
      %3464 = vmatprep.subr.mxu0 0.0
      %3465 = vmatpush1.msra.mxu0 %v3366
      %3466 = vmatprep.subr.mxu0 0.0
      %3467 = vmatpush1.msra.mxu0 %v3367
      %3468 = vmatprep.subr.mxu0 0.0
      %3469 = vmatpush1.msra.mxu0 0.0
      %3470 = vmatprep.subr.mxu0 0.0
      %3471 = vmatpush1.msra.mxu0 0.0
      %3472 = vmatprep.subr.mxu0 0.0
      %3473 = vmatpush1.msra.mxu0 0.0
      %3474 = vmatprep.subr.mxu0 0.0
      %3475 = vmatpush1.msra.mxu0 0.0
      %3476 = vmatprep.subr.mxu0 0.0
      %3477 = vmatpush1.msra.mxu0 0.0
      %3478 = vmatprep.subr.mxu0 0.0
      %3479 = vmatpush1.msra.mxu0 0.0
      %3480 = vmatprep.subr.mxu0 0.0
      %3481 = vmatpush1.msra.mxu0 0.0
      %3482 = vmatprep.subr.mxu0 0.0
      %3483 = vmatpush1.msra.mxu0 0.0
      %3484 = vmatprep.subr.mxu0 0.0
      %3485 = vmatpush1.msra.mxu0 0.0
      %3486 = vmatprep.subr.mxu0 0.0
      %3487 = vmatpush1.msra.mxu0 0.0
      %3488 = vmatprep.subr.mxu0 0.0
      %3489 = vmatpush1.msra.mxu0 0.0
      %3490 = vmatprep.subr.mxu0 0.0
      %3491 = vmatpush1.msra.mxu0 0.0
      %3492 = vmatprep.subr.mxu0 0.0
      %3493 = vmatpush1.msra.mxu0 0.0
      %3494 = vmatprep.subr.mxu0 0.0
      %3495 = vmatpush1.msra.mxu0 0.0
      %3496 = vmatprep.subr.mxu0 0.0
      %3497 = vmatpush1.msra.mxu0 0.0
      %3498 = vmatprep.subr.mxu0 0.0
      %3499 = vmatpush1.msra.mxu0 0.0
      %3500 = vmatprep.subr.mxu0 0.0
      %3501 = vmatpush1.msra.mxu0 0.0
      %3502 = vmatprep.subr.mxu0 0.0
      %3503 = vmatpush1.msra.mxu0 0.0
      %3504 = vmatprep.subr.mxu0 0.0
      %3505 = vmatpush1.msra.mxu0 0.0
      %3506 = vmatprep.subr.mxu0 0.0
      %3507 = vmatpush1.msra.mxu0 0.0
      %3508 = vmatprep.subr.mxu0 0.0
      %3509 = vmatpush1.msra.mxu0 0.0
      %3510 = vmatprep.subr.mxu0 0.0
      %3511 = vmatpush1.msra.mxu0 0.0
      %3512 = vmatprep.subr.mxu0 0.0
      %3513 = vmatpush1.msra.mxu0 0.0
      %3514 = vmatprep.subr.mxu0 0.0
      %3515 = vmatpush1.msra.mxu0 0.0
      %3516 = vmatprep.subr.mxu0 0.0
      %3517 = vmatpush1.msra.mxu0 0.0
      %3518 = vmatprep.subr.mxu0 0.0
      %3519 = vmatpush1.msra.mxu0 0.0
      %3520 = vmatprep.subr.mxu0 0.0
      %3521 = vmatpush1.msra.mxu0 0.0
      %3522 = vmatprep.subr.mxu0 0.0
      %3523 = vmatpush1.msra.mxu0 0.0
      %3524 = vmatprep.subr.mxu0 0.0
      %3525 = vmatpush1.msra.mxu0 0.0
      %3526 = vmatprep.subr.mxu0 0.0
      %3527 = vmatpush1.msra.mxu0 0.0
      %3528 = vmatprep.mubr.f32.mxu0 0.0
      %3529 = vmatmul.mubr.f32.gmra.mrb[0].mxu0 %v3369
      %v3530 = vpop.f32.mrb[0].mxu0
      %v3531 = vadd.f32 %v202, %v3530
      %v3532 = vpop.f32.mrb[0].mxu0
      %3533 = vmatprep.mubr.f32.mxu0 0.0
      %3534 = vmatmul.mubr.f32.gmra.mrb[0].mxu0 %v3372
      %v3535 = vpop.f32.mrb[0].mxu0
      %v3536 = vadd.f32 %v202, %v3535
      %v3537 = vpop.f32.mrb[0].mxu0
      %3538 = vmatprep.mubr.f32.mxu0 0.0
      %3539 = vmatmul.mubr.f32.gmra.mrb[0].mxu0 %v3375
      %v3540 = vpop.f32.mrb[0].mxu0
      %v3541 = vadd.f32 %v202, %v3540
      %v3542 = vpop.f32.mrb[0].mxu0
      %3543 = vmatprep.mubr.f32.mxu0 0.0
      %3544 = vmatmul.mubr.f32.gmra.mrb[0].mxu0 %v3378
      %v3545 = vpop.f32.mrb[0].mxu0
      %v3546 = vadd.f32 %v202, %v3545
      %v3547 = vpop.f32.mrb[0].mxu0
      %3548 = vmatprep.mubr.f32.mxu0 0.0
      %3549 = vmatmul.mubr.f32.gmra.mrb[0].mxu0 %v3381
      %v3550 = vpop.f32.mrb[0].mxu0
      %v3551 = vadd.f32 %v202, %v3550
      %v3552 = vpop.f32.mrb[0].mxu0
      %3553 = vmatprep.mubr.f32.mxu0 0.0
      %3554 = vmatmul.mubr.f32.gmra.mrb[0].mxu0 %v3384
      %v3555 = vpop.f32.mrb[0].mxu0
      %v3556 = vadd.f32 %v202, %v3555
      %v3557 = vpop.f32.mrb[0].mxu0
      %3558 = vmatprep.mubr.f32.mxu0 0.0
      %3559 = vmatmul.mubr.f32.gmra.mrb[0].mxu0 %v3387
      %v3560 = vpop.f32.mrb[0].mxu0
      %v3561 = vadd.f32 %v202, %v3560
      %v3562 = vpop.f32.mrb[0].mxu0
      %3563 = vmatprep.mubr.f32.mxu0 0.0
      %3564 = vmatmul.mubr.f32.gmra.mrb[0].mxu0 %v3390
      %v3565 = vpop.f32.mrb[0].mxu0
      %v3566 = vadd.f32 %v202, %v3565
      %v3567 = vpop.f32.mrb[0].mxu0
      %3568 = vmatprep.mubr.f32.mxu0 0.0
      %3569 = vmatmul.mubr.f32.gmra.mrb[0].mxu0 %v3393
      %v3570 = vpop.f32.mrb[0].mxu0
      %v3571 = vadd.f32 %v202, %v3570
      %v3572 = vpop.f32.mrb[0].mxu0
      %3573 = vmatprep.mubr.f32.mxu0 0.0
      %3574 = vmatmul.mubr.f32.gmra.mrb[0].mxu0 %v3396
      %v3575 = vpop.f32.mrb[0].mxu0
      %v3576 = vadd.f32 %v202, %v3575
      %v3577 = vpop.f32.mrb[0].mxu0
      %3578 = vmatprep.mubr.f32.mxu0 0.0
      %3579 = vmatmul.mubr.f32.gmra.mrb[0].mxu0 %v3399
      %v3580 = vpop.f32.mrb[0].mxu0
      %v3581 = vadd.f32 %v202, %v3580
      %v3582 = vpop.f32.mrb[0].mxu0
      %3583 = vmatprep.mubr.f32.mxu0 0.0
      %3584 = vmatmul.mubr.f32.gmra.mrb[0].mxu0 %v3402
      %v3585 = vpop.f32.mrb[0].mxu0
      %v3586 = vadd.f32 %v202, %v3585
      %v3587 = vpop.f32.mrb[0].mxu0
      %3588 = vmatprep.mubr.f32.mxu0 0.0
      %3589 = vmatmul.mubr.f32.gmra.mrb[0].mxu0 %v3405
      %v3590 = vpop.f32.mrb[0].mxu0
      %v3591 = vadd.f32 %v202, %v3590
      %v3592 = vpop.f32.mrb[0].mxu0
      %3593 = vmatprep.mubr.f32.mxu0 0.0
      %3594 = vmatmul.mubr.f32.gmra.mrb[0].mxu0 %v3408
      %v3595 = vpop.f32.mrb[0].mxu0
      %v3596 = vadd.f32 %v202, %v3595
      %v3597 = vpop.f32.mrb[0].mxu0
      %3598 = vmatprep.mubr.f32.mxu0 0.0
      %3599 = vmatmul.mubr.f32.gmra.mrb[0].mxu0 %v3411
      %v3600 = vpop.f32.mrb[0].mxu0
      %v3601 = vadd.f32 %v202, %v3600
      %v3602 = vpop.f32.mrb[0].mxu0
      %3603 = vmatprep.mubr.f32.mxu0 0.0
      %3604 = vmatmul.mubr.f32.gmra.mrb[0].mxu0 %v3414
      %v3605 = vpop.f32.mrb[0].mxu0
      %v3606 = vadd.f32 %v202, %v3605
      %v3607 = vpop.f32.mrb[0].mxu0
      %3608 = vmatprep.mubr.f32.mxu0 0.0
      %3609 = vmatmul.mubr.f32.gmra.mrb[0].mxu0 %v3417
      %v3610 = vpop.f32.mrb[0].mxu0
      %v3611 = vadd.f32 %v202, %v3610
      %v3612 = vpop.f32.mrb[0].mxu0
      %3613 = vmatprep.mubr.f32.mxu0 0.0
      %3614 = vmatmul.mubr.f32.gmra.mrb[0].mxu0 %v3420
      %v3615 = vpop.f32.mrb[0].mxu0
      %v3616 = vadd.f32 %v202, %v3615
      %v3617 = vpop.f32.mrb[0].mxu0
      %3618 = vmatprep.mubr.f32.mxu0 0.0
      %3619 = vmatmul.mubr.f32.gmra.mrb[0].mxu0 %v3423
      %v3620 = vpop.f32.mrb[0].mxu0
      %v3621 = vadd.f32 %v202, %v3620
      %v3622 = vpop.f32.mrb[0].mxu0
      %3623 = vmatprep.mubr.f32.mxu0 0.0
      %3624 = vmatmul.mubr.f32.gmra.mrb[0].mxu0 %v3426
      %v3625 = vpop.f32.mrb[0].mxu0
      %v3626 = vadd.f32 %v202, %v3625
      %v3627 = vpop.f32.mrb[0].mxu0
      %3628 = vmatprep.mubr.f32.mxu0 0.0
      %3629 = vmatmul.mubr.f32.gmra.mrb[0].mxu0 %v3429
      %v3630 = vpop.f32.mrb[0].mxu0
      %v3631 = vadd.f32 %v202, %v3630
      %v3632 = vpop.f32.mrb[0].mxu0
      %3633 = vmatprep.mubr.f32.mxu0 0.0
      %3634 = vmatmul.mubr.f32.gmra.mrb[0].mxu0 %v3432
      %v3635 = vpop.f32.mrb[0].mxu0
      %v3636 = vadd.f32 %v202, %v3635
      %v3637 = vpop.f32.mrb[0].mxu0
      %3638 = vmatprep.mubr.f32.mxu0 0.0
      %3639 = vmatmul.mubr.f32.gmra.mrb[0].mxu0 %v3435
      %v3640 = vpop.f32.mrb[0].mxu0
      %v3641 = vadd.f32 %v202, %v3640
      %v3642 = vpop.f32.mrb[0].mxu0
      %3643 = vmatprep.mubr.f32.mxu0 0.0
      %3644 = vmatmul.mubr.f32.gmra.mrb[0].mxu0 %v3438
      %v3645 = vpop.f32.mrb[0].mxu0
      %v3646 = vadd.f32 %v202, %v3645
      %v3647 = vpop.f32.mrb[0].mxu0
      %3648 = vmatprep.mubr.f32.mxu0 0.0
      %3649 = vmatmul.mubr.f32.gmra.mrb[0].mxu0 %v3441
      %v3650 = vpop.f32.mrb[0].mxu0
      %v3651 = vadd.f32 %v202, %v3650
      %v3652 = vpop.f32.mrb[0].mxu0
      %3653 = vmatprep.mubr.f32.mxu0 0.0
      %3654 = vmatmul.mubr.f32.gmra.mrb[0].mxu0 %v3444
      %v3655 = vpop.f32.mrb[0].mxu0
      %v3656 = vadd.f32 %v202, %v3655
      %v3657 = vpop.f32.mrb[0].mxu0
      %3658 = vmatprep.mubr.f32.mxu0 0.0
      %3659 = vmatmul.mubr.f32.gmra.mrb[0].mxu0 %v3447
      %v3660 = vpop.f32.mrb[0].mxu0
      %v3661 = vadd.f32 %v202, %v3660
      %v3662 = vpop.f32.mrb[0].mxu0
      %3663 = vmatprep.mubr.f32.mxu0 0.0
      %3664 = vmatmul.mubr.f32.gmra.mrb[0].mxu0 %v3450
      %v3665 = vpop.f32.mrb[0].mxu0
      %v3666 = vadd.f32 %v202, %v3665
      %v3667 = vpop.f32.mrb[0].mxu0
      %3668 = vmatprep.mubr.f32.mxu0 0.0
      %3669 = vmatmul.mubr.f32.gmra.mrb[0].mxu0 %v3453
      %v3670 = vpop.f32.mrb[0].mxu0
      %v3671 = vadd.f32 %v202, %v3670
      %v3672 = vpop.f32.mrb[0].mxu0
      %3673 = vmatprep.mubr.f32.mxu0 0.0
      %3674 = vmatmul.mubr.f32.gmra.mrb[0].mxu0 %v3456
      %v3675 = vpop.f32.mrb[0].mxu0
      %v3676 = vadd.f32 %v202, %v3675
      %v3677 = vpop.f32.mrb[0].mxu0
      %3678 = vmatprep.mubr.f32.mxu0 0.0
      %3679 = vmatmul.mubr.f32.gmra.mrb[0].mxu0 %v3459
      %v3680 = vpop.f32.mrb[0].mxu0
      %v3681 = vadd.f32 %v202, %v3680
      %v3682 = vpop.f32.mrb[0].mxu0
      %3683 = vmatprep.mubr.f32.mxu0 0.0
      %3684 = vmatmul.mubr.f32.gmra.mrb[0].mxu0 %v3462
      %v3685 = vpop.f32.mrb[0].mxu0
      %v3686 = vadd.f32 %v202, %v3685
      %v3687 = vpop.f32.mrb[0].mxu0
      %3688 = vdwg.mxu0
      %s3689 = scalar_lea.vmem %s194, 768
      %3690 = vst.msk [vmem:[%s3689] sm:$0xff] %vm884, %v3531
      %3691 = vst.msk [vmem:[%s3689 + $0x8] sm:$0xff] %vm884, %v3536
      %3692 = vst.msk [vmem:[%s3689 + $0x10] sm:$0xff] %vm884, %v3541
      %3693 = vst.msk [vmem:[%s3689 + $0x18] sm:$0xff] %vm884, %v3546
      %3694 = vst.msk [vmem:[%s3689 + $0x20] sm:$0xff] %vm884, %v3551
      %3695 = vst.msk [vmem:[%s3689 + $0x28] sm:$0xff] %vm884, %v3556
      %3696 = vst.msk [vmem:[%s3689 + $0x30] sm:$0xff] %vm884, %v3561
      %3697 = vst.msk [vmem:[%s3689 + $0x38] sm:$0xff] %vm884, %v3566
      %3698 = vst.msk [vmem:[%s3689 + $0x40] sm:$0xff] %vm884, %v3571
      %3699 = vst.msk [vmem:[%s3689 + $0x48] sm:$0xff] %vm884, %v3576
      %3700 = vst.msk [vmem:[%s3689 + $0x50] sm:$0xff] %vm884, %v3581
      %3701 = vst.msk [vmem:[%s3689 + $0x58] sm:$0xff] %vm884, %v3586
      %3702 = vst.msk [vmem:[%s3689 + $0x60] sm:$0xff] %vm884, %v3591
      %3703 = vst.msk [vmem:[%s3689 + $0x68] sm:$0xff] %vm884, %v3596
      %3704 = vst.msk [vmem:[%s3689 + $0x70] sm:$0xff] %vm884, %v3601
      %3705 = vst.msk [vmem:[%s3689 + $0x78] sm:$0xff] %vm884, %v3606
      %3706 = vst.msk [vmem:[%s3689 + $0x80] sm:$0xff] %vm884, %v3611
      %3707 = vst.msk [vmem:[%s3689 + $0x88] sm:$0xff] %vm884, %v3616
      %3708 = vst.msk [vmem:[%s3689 + $0x90] sm:$0xff] %vm884, %v3621
      %3709 = vst.msk [vmem:[%s3689 + $0x98] sm:$0xff] %vm884, %v3626
      %3710 = vst.msk [vmem:[%s3689 + $0xa0] sm:$0xff] %vm884, %v3631
      %3711 = vst.msk [vmem:[%s3689 + $0xa8] sm:$0xff] %vm884, %v3636
      %3712 = vst.msk [vmem:[%s3689 + $0xb0] sm:$0xff] %vm884, %v3641
      %3713 = vst.msk [vmem:[%s3689 + $0xb8] sm:$0xff] %vm884, %v3646
      %3714 = vst.msk [vmem:[%s3689 + $0xc0] sm:$0xff] %vm884, %v3651
      %3715 = vst.msk [vmem:[%s3689 + $0xc8] sm:$0xff] %vm884, %v3656
      %3716 = vst.msk [vmem:[%s3689 + $0xd0] sm:$0xff] %vm884, %v3661
      %3717 = vst.msk [vmem:[%s3689 + $0xd8] sm:$0xff] %vm884, %v3666
      %3718 = vst.msk [vmem:[%s3689 + $0xe0] sm:$0xff] %vm884, %v3671
      %3719 = vst.msk [vmem:[%s3689 + $0xe8] sm:$0xff] %vm884, %v3676
      %3720 = vst.msk [vmem:[%s3689 + $0xf0] sm:$0xff] %vm884, %v3681
      %3721 = vst.msk [vmem:[%s3689 + $0xf8] sm:$0xff] %vm884, %v3686
      %s3722 = smul.u32 16, %s19
      %p3723 = scmp.lt.s32.totalorder %s18, 1
      %s3724 = scalar_select %p3723, %s18, 1
      %p3725 = scmp.lt.s32.totalorder %s3722, 15
      %s3726 = scalar_select %p3725, %s3722, 15
      %s3727 = smul.addr %s3726, 2
      %s3728 = smul.addr %s3724, 128
      %s3729 = sadd.s32 %s3727, %s3728
      %s3730 = smul.addr %s3729, 8
      %s3731 = scalar_lea.vmem %s3, %s3730
      // Predicated region
      $region33: #{tpu_custom_call.1} parent=31 // pred_check
        %p3732 = pneg %p114
      $region34: #{tpu_custom_call.1} parent=31 // pred_check_branch
        %3734 = sbr.rel (%p3732) target = $region36
      $region35: #{tpu_custom_call.1} parent=31 // pred_region
        %s3735 = smul.u32 16, %s19
      $region36: #{tpu_custom_call.1} parent=31 // pred_fallthru
        _
    $region32: #{tpu_custom_call.1} parent=5 // pred_fallthru
      _
    %p3736 = scmp.le.s32.totalorder 2, %s9
    // Predicated region
    $region37: #{tpu_custom_call.1} parent=5 // pred_check
      %p3737 = pneg %p3736
    $region38: #{tpu_custom_call.1} parent=5 // pred_check_branch
      %3739 = sbr.rel (%p3737) target = $region40
    $region39: #{tpu_custom_call.1} parent=5 // pred_region
      %s3740 = ssub.s32 %s9, 2
      // Predicated region
      $region41: #{tpu_custom_call.1} parent=39 // pred_check
        %p3741 = pneg %p120
      $region42: #{tpu_custom_call.1} parent=39 // pred_check_branch
        %3743 = sbr.rel (%p3741) target = $region44
      $region43: #{tpu_custom_call.1} parent=39 // pred_region
        %s3744 = smul.u32 16, %s21
        %p3745 = scmp.lt.s32.totalorder %s20, 1
        %s3746 = scalar_select %p3745, %s20, 1
        %p3747 = scmp.lt.s32.totalorder %s3744, 15
        %s3748 = scalar_select %p3747, %s3744, 15
        %s3749 = smul.addr %s3748, 2
        %s3750 = smul.addr %s3746, 128
        %s3751 = sadd.s32 %s3749, %s3750
        %s3752 = smul.addr %s3751, 8
        %s3753 = scalar_lea.vmem %s3, %s3752
      $region44: #{tpu_custom_call.1} parent=39 // pred_fallthru
        _
    $region40: #{tpu_custom_call.1} parent=5 // pred_fallthru
      _
  $region6: #{tpu_custom_call.1} parent=0 // loop_footer
    %s13 = sadd.s32 1, %s9
  $region7: #{tpu_custom_call.1} parent=0 // loop_footer_branch
    %8 = sbr.rel target = $region3
  $region8: #{tpu_custom_call.1} parent=0 // loop_exit
    _

// kernel: tpu_custom_call.1
$region0: #{tpu_custom_call.1}
  #allocation0 [shape = 'u32[]', space=smem, size = 0x4, offset = 0x4, fixed_abs, tag = 'smem constant byte address 0x4 - core index']
  #allocation1 [shape = 'u32[144,128]{1,0:T(1,128)}', space=vmem, size = 0x12000, scoped, tag = 'internal scratch']
  %s0 = inlined_call_operand.vmem [shape: f32[2,18,24,4], index: 0, kind: input, shape index: {}]
  %s1 = inlined_call_operand.vmem [shape: f32[2,2,16,4], index: 1, kind: input, shape index: {}]
  %s2 = inlined_call_operand.vmem [shape: f32[1,4], index: 2, kind: input, shape index: {}]
  %s3 = inlined_call_operand.vmem [shape: f32[2,2,2,16,16,4], index: 3, kind: output, shape index: {}]
  %s4 = sld [smem:[#allocation0]]
  $region45: #{tpu_custom_call.1} parent=0
    _
  %s6 = ssub.s32 1, %s4
  %s7 = scalar_select 0, %s6, %s4
  loop: start=0, step=1, limit=4
  $region2: #{tpu_custom_call.1} parent=0 // loop_pre_header
    _
  $region3: #{tpu_custom_call.1} parent=0 // loop_header
    %s9 = sphi 0, %s13
    %p10 = scmp.ge.s32.totalorder %s9, 4
    %s16 = sphi 0, %s28
    %s17 = sphi 0, %s24
    %s18 = sphi 0, %s16
    %s19 = sphi 0, %s17
    %s20 = sphi 0, %s18
    %s21 = sphi 0, %s19
    %s31 = sphi 0, %s33
    %s34 = sphi 0, %s31
    %s35 = sphi 0, %s34
    %s51 = sphi 0, %s35
    %s55 = sphi 0, %s55
    %s57 = sphi 0, %s55
    %s58 = sphi 0, %s57
    %s72 = sphi 0, %s58
    %s76 = sphi 0, %s76
    %s78 = sphi 0, %s76
    %s79 = sphi 0, %s78
    %s93 = sphi 0, %s79
    %s101 = sphi 0, %s103
    %s104 = sphi 0, %s101
    %s105 = sphi 0, %s104
    %s121 = sphi 0, %s105
  $region4: #{tpu_custom_call.1} parent=0 // loop_header_branch
    %12 = sbr.rel (%p10) target = $region8
  $region5: #{tpu_custom_call.1} parent=0 // loop_body
    %s14 = ssub.s32 %s9, 1
    %s15 = ssub.s32 %s9, 2
    %s22 = sadd.s32 1, %s17
    %p23 = scmp.ge.s32.totalorder %s22, 1
    %s24 = scalar_select %p23, 0, %s22
    %s25 = sadd.s32 1, %s16
    %s26 = scalar_select %p23, %s25, %s16
    %p27 = scmp.ge.s32.totalorder %s26, 2
    %s28 = scalar_select %p27, 0, %s26
    %s29 = ssub.s32 %s16, %s28
    %p30 = scmp.eq.s32.totalorder %s29, 0
    %s32 = sadd.s32 %s31, 1
    %s33 = scalar_select %p30, %s31, %s32
    %p36 = pneg %p30
    %p37 = scmp.eq.s32.totalorder %s9, 1
    %p38 = por %p36, %p37
    %p39 = scmp.ne.s32.totalorder %s31, %s34
    %p40 = scmp.eq.s32.totalorder %s9, 0
    %p41 = por %p39, %p40
    %p42 = scmp.ne.s32.totalorder %s31, %s34
    %p43 = scmp.eq.s32.totalorder %s14, 1
    %p44 = por %p42, %p43
    %p45 = scmp.ne.s32.totalorder %s34, %s35
    %p46 = scmp.eq.s32.totalorder %s14, 0
    %p47 = por %p45, %p46
    %p48 = scmp.ne.s32.totalorder %s34, %s35
    %p49 = scmp.eq.s32.totalorder %s15, 1
    %p50 = por %p48, %p49
    %p52 = scmp.ne.s32.totalorder %s35, %s51
    %p53 = scmp.eq.s32.totalorder %s15, 0
    %p54 = por %p52, %p53
    %s56 = sadd.s32 %s55, 1
    %p59 = scmp.eq.s32.totalorder %s9, 1
    %p60 = scmp.ne.s32.totalorder %s55, %s57
    %p61 = scmp.eq.s32.totalorder %s9, 0
    %p62 = por %p60, %p61
    %p63 = scmp.ne.s32.totalorder %s55, %s57
    %p64 = scmp.eq.s32.totalorder %s14, 1
    %p65 = por %p63, %p64
    %p66 = scmp.ne.s32.totalorder %s57, %s58
    %p67 = scmp.eq.s32.totalorder %s14, 0
    %p68 = por %p66, %p67
    %p69 = scmp.ne.s32.totalorder %s57, %s58
    %p70 = scmp.eq.s32.totalorder %s15, 1
    %p71 = por %p69, %p70
    %p73 = scmp.ne.s32.totalorder %s58, %s72
    %p74 = scmp.eq.s32.totalorder %s15, 0
    %p75 = por %p73, %p74
    %s77 = sadd.s32 %s76, 1
    %p80 = scmp.eq.s32.totalorder %s9, 1
    %p81 = scmp.ne.s32.totalorder %s76, %s78
    %p82 = scmp.eq.s32.totalorder %s9, 0
    %p83 = por %p81, %p82
    %p84 = scmp.ne.s32.totalorder %s76, %s78
    %p85 = scmp.eq.s32.totalorder %s14, 1
    %p86 = por %p84, %p85
    %p87 = scmp.ne.s32.totalorder %s78, %s79
    %p88 = scmp.eq.s32.totalorder %s14, 0
    %p89 = por %p87, %p88
    %p90 = scmp.ne.s32.totalorder %s78, %s79
    %p91 = scmp.eq.s32.totalorder %s15, 1
    %p92 = por %p90, %p91
    %p94 = scmp.ne.s32.totalorder %s79, %s93
    %p95 = scmp.eq.s32.totalorder %s15, 0
    %p96 = por %p94, %p95
    %s97 = ssub.s32 %s16, %s28
    %s98 = ssub.s32 %s17, %s24
    %s99 = sor.u32 %s97, %s98
    %p100 = scmp.eq.s32.totalorder %s99, 0
    %s102 = sadd.s32 %s101, 1
    %s103 = scalar_select %p100, %s101, %s102
    %p106 = pneg %p100
    %p107 = scmp.eq.s32.totalorder %s9, 1
    %p108 = por %p106, %p107
    %p109 = scmp.ne.s32.totalorder %s101, %s104
    %p110 = scmp.eq.s32.totalorder %s9, 0
    %p111 = por %p109, %p110
    %p112 = scmp.ne.s32.totalorder %s101, %s104
    %p113 = scmp.eq.s32.totalorder %s14, 1
    %p114 = por %p112, %p113
    %p115 = scmp.ne.s32.totalorder %s104, %s105
    %p116 = scmp.eq.s32.totalorder %s14, 0
    %p117 = por %p115, %p116
    %p118 = scmp.ne.s32.totalorder %s104, %s105
    %p119 = scmp.eq.s32.totalorder %s15, 1
    %p120 = por %p118, %p119
    %p122 = scmp.ne.s32.totalorder %s105, %s121
    %p123 = scmp.eq.s32.totalorder %s15, 0
    %p124 = por %p122, %p123
    %p125 = scmp.le.s32.totalorder 1, %s9
    %p126 = scmp.lt.s32.totalorder %s9, 3
    %p127 = pnand %p125, %p126
    %p128 = pneg %p127
    // Predicated region
    $region9: #{tpu_custom_call.1} parent=5 // pred_check
      _
    $region10: #{tpu_custom_call.1} parent=5 // pred_check_branch
      %130 = sbr.rel (%p127) target = $region12
    $region11: #{tpu_custom_call.1} parent=5 // pred_region
      %s131 = ssub.s32 %s9, 1
      // Predicated region
      $region13: #{tpu_custom_call.1} parent=11 // pred_check
        %p132 = pneg %p68
      $region14: #{tpu_custom_call.1} parent=11 // pred_check_branch
        %134 = sbr.rel (%p132) target = $region16
      $region15: #{tpu_custom_call.1} parent=11 // pred_region
        _
      $region16: #{tpu_custom_call.1} parent=11 // pred_fallthru
        _
      // Predicated region
      $region17: #{tpu_custom_call.1} parent=11 // pred_check
        %p135 = pneg %p89
      $region18: #{tpu_custom_call.1} parent=11 // pred_check_branch
        %137 = sbr.rel (%p135) target = $region20
      $region19: #{tpu_custom_call.1} parent=11 // pred_region
        _
      $region20: #{tpu_custom_call.1} parent=11 // pred_fallthru
        _
    $region12: #{tpu_custom_call.1} parent=5 // pred_fallthru
      _
    %p138 = scmp.lt.s32.totalorder %s9, 2
    // Predicated region
    $region21: #{tpu_custom_call.1} parent=5 // pred_check
      %p139 = pneg %p138
    $region22: #{tpu_custom_call.1} parent=5 // pred_check_branch
      %141 = sbr.rel (%p139) target = $region24
    $region23: #{tpu_custom_call.1} parent=5 // pred_region
      // Predicated region
      $region25: #{tpu_custom_call.1} parent=23 // pred_check
        %p142 = pneg %p41
      $region26: #{tpu_custom_call.1} parent=23 // pred_check_branch
        %144 = sbr.rel (%p142) target = $region28
      $region27: #{tpu_custom_call.1} parent=23 // pred_region
        %p145 = scmp.lt.s32.totalorder %s16, 1
        %s146 = scalar_select %p145, %s16, 1
        %s147 = smul.addr %s146, 54
        %s148 = smul.addr %s147, 8
        %s149 = scalar_lea.vmem %s0, %s148
      $region28: #{tpu_custom_call.1} parent=23 // pred_fallthru
        _
    $region24: #{tpu_custom_call.1} parent=5 // pred_fallthru
      _
    %p150 = scmp.le.s32.totalorder 1, %s9
    %p151 = scmp.lt.s32.totalorder %s9, 3
    %p152 = pnand %p150, %p151
    %p153 = pneg %p152
    // Predicated region
    $region29: #{tpu_custom_call.1} parent=5 // pred_check
      _
    $region30: #{tpu_custom_call.1} parent=5 // pred_check_branch
      %155 = sbr.rel (%p152) target = $region32
    $region31: #{tpu_custom_call.1} parent=5 // pred_region
      %s156 = ssub.s32 %s9, 1
      %p157 = scmp.lt.s32.totalorder %s18, 1
      %s158 = scalar_select %p157, %s18, 1
      %s159 = smul.addr %s158, 54
      %s160 = smul.addr %s159, 8
      %s161 = scalar_lea.vmem %s0, %s160
      %p162 = pneg %p47
      %p163 = pneg %p44
      %p164 = pneg %p68
      %p165 = pneg %p65
      %p166 = pneg %p89
      %p167 = pneg %p86
      %p168 = pneg %p117
      %p169 = pneg %p114
      %s170 = smul.u32 16, %s19
      %p171 = scmp.lt.s32.totalorder %s18, 1
      %s172 = scalar_select %p171, %s18, 1
      %p173 = scmp.lt.s32.totalorder %s170, 15
      %s174 = scalar_select %p173, %s170, 15
      %s175 = smul.addr %s174, 2
      %s176 = smul.addr %s172, 128
      %s177 = sadd.s32 %s175, %s176
      %s178 = smul.addr %s177, 8
      %s179 = scalar_lea.vmem %s3, %s178
      %p180 = scmp.lt.s32.totalorder %s18, 1
      %s181 = scalar_select %p180, %s18, 1
      %s182 = smul.addr %s181, 54
      %s183 = smul.addr %s182, 8
      %s184 = scalar_lea.vmem %s0, %s183
      %s185 = smul.u32 16, %s19
      %p186 = scmp.lt.s32.totalorder %s18, 1
      %s187 = scalar_select %p186, %s18, 1
      %p188 = scmp.lt.s32.totalorder %s185, 15
      %s189 = scalar_select %p188, %s185, 15
      %s190 = smul.addr %s189, 2
      %s191 = smul.addr %s187, 128
      %s192 = sadd.s32 %s190, %s191
      %s193 = smul.addr %s192, 8
      %s194 = scalar_lea.vmem %s3, %s193
      %s195 = smul.u32 16, %s19
      %s196 = smul.u32 %s19, 16
      %v197 = vld [vmem:[%s2] sm:$0x1]
      %v199 = vlaneseq
      %v200 = vshrl.u32 %v199, 7
      %v201 = vsub.s32 0, %v200
      %v202 = vrot.slane %v197, %v201
      %s204 = smul.u32 %s196, 24
      %s205 = scalar_lea.vmem %s184, %s204
      %v206 = vld [vmem:[%s205] sm:$0xff]
      %v207 = vld [vmem:[%s205 + $0x8] sm:$0xff]
      %v208 = vld [vmem:[%s205 + $0x18] sm:$0xff]
      %v209 = vld [vmem:[%s205 + $0x20] sm:$0xff]
      %v210 = vld [vmem:[%s205 + $0x30] sm:$0xff]
      %v211 = vld [vmem:[%s205 + $0x38] sm:$0xff]
      %v212 = vld [vmem:[%s205 + $0x48] sm:$0xff]
      %v213 = vld [vmem:[%s205 + $0x50] sm:$0xff]
      %v214 = vld [vmem:[%s205 + $0x60] sm:$0xff]
      %v215 = vld [vmem:[%s205 + $0x68] sm:$0xff]
      %v216 = vld [vmem:[%s205 + $0x78] sm:$0xff]
      %v217 = vld [vmem:[%s205 + $0x80] sm:$0xff]
      %v218 = vld [vmem:[%s205 + $0x90] sm:$0xff]
      %v219 = vld [vmem:[%s205 + $0x98] sm:$0xff]
      %v220 = vld [vmem:[%s205 + $0xa8] sm:$0xff]
      %v221 = vld [vmem:[%s205 + $0xb0] sm:$0xff]
      %v222 = vld [vmem:[%s205 + $0xc0] sm:$0xff]
      %v223 = vld [vmem:[%s205 + $0xc8] sm:$0xff]
      %v224 = vld [vmem:[%s205 + $0xd8] sm:$0xff]
      %v225 = vld [vmem:[%s205 + $0xe0] sm:$0xff]
      %v226 = vld [vmem:[%s205 + $0xf0] sm:$0xff]
      %v227 = vld [vmem:[%s205 + $0xf8] sm:$0xff]
      %v228 = vld [vmem:[%s205 + $0x108] sm:$0xff]
      %v229 = vld [vmem:[%s205 + $0x110] sm:$0xff]
      %v230 = vld [vmem:[%s205 + $0x120] sm:$0xff]
      %v231 = vld [vmem:[%s205 + $0x128] sm:$0xff]
      %v232 = vld [vmem:[%s205 + $0x138] sm:$0xff]
      %v233 = vld [vmem:[%s205 + $0x140] sm:$0xff]
      %v234 = vld [vmem:[%s205 + $0x150] sm:$0xff]
      %v235 = vld [vmem:[%s205 + $0x158] sm:$0xff]
      %v236 = vld [vmem:[%s205 + $0x168] sm:$0xff]
      %v237 = vld [vmem:[%s205 + $0x170] sm:$0xff]
      %v238 = vld [vmem:[%s205 + $0x1] sm:$0xff]
      %v239 = vld [vmem:[%s205 + $0x9] sm:$0xff]
      %v240 = vld [vmem:[%s205 + $0x19] sm:$0xff]
      %v241 = vld [vmem:[%s205 + $0x21] sm:$0xff]
      %v242 = vld [vmem:[%s205 + $0x31] sm:$0xff]
      %v243 = vld [vmem:[%s205 + $0x39] sm:$0xff]
      %v244 = vld [vmem:[%s205 + $0x49] sm:$0xff]
      %v245 = vld [vmem:[%s205 + $0x51] sm:$0xff]
      %v246 = vld [vmem:[%s205 + $0x61] sm:$0xff]
      %v247 = vld [vmem:[%s205 + $0x69] sm:$0xff]
      %v248 = vld [vmem:[%s205 + $0x79] sm:$0xff]
      %v249 = vld [vmem:[%s205 + $0x81] sm:$0xff]
      %v250 = vld [vmem:[%s205 + $0x91] sm:$0xff]
      %v251 = vld [vmem:[%s205 + $0x99] sm:$0xff]
      %v252 = vld [vmem:[%s205 + $0xa9] sm:$0xff]
      %v253 = vld [vmem:[%s205 + $0xb1] sm:$0xff]
      %v254 = vld [vmem:[%s205 + $0xc1] sm:$0xff]
      %v255 = vld [vmem:[%s205 + $0xc9] sm:$0xff]
      %v256 = vld [vmem:[%s205 + $0xd9] sm:$0xff]
      %v257 = vld [vmem:[%s205 + $0xe1] sm:$0xff]
      %v258 = vld [vmem:[%s205 + $0xf1] sm:$0xff]
      %v259 = vld [vmem:[%s205 + $0xf9] sm:$0xff]
      %v260 = vld [vmem:[%s205 + $0x109] sm:$0xff]
      %v261 = vld [vmem:[%s205 + $0x111] sm:$0xff]
      %v262 = vld [vmem:[%s205 + $0x121] sm:$0xff]
      %v263 = vld [vmem:[%s205 + $0x129] sm:$0xff]
      %v264 = vld [vmem:[%s205 + $0x139] sm:$0xff]
      %v265 = vld [vmem:[%s205 + $0x141] sm:$0xff]
      %v266 = vld [vmem:[%s205 + $0x151] sm:$0xff]
      %v267 = vld [vmem:[%s205 + $0x159] sm:$0xff]
      %v268 = vld [vmem:[%s205 + $0x169] sm:$0xff]
      %v269 = vld [vmem:[%s205 + $0x171] sm:$0xff]
      %v270 = vld [vmem:[%s205 + $0x2] sm:$0xff]
      %v271 = vld [vmem:[%s205 + $0xa] sm:$0xff]
      %v272 = vld [vmem:[%s205 + $0x1a] sm:$0xff]
      %v273 = vld [vmem:[%s205 + $0x22] sm:$0xff]
      %v274 = vld [vmem:[%s205 + $0x32] sm:$0xff]
      %v275 = vld [vmem:[%s205 + $0x3a] sm:$0xff]
      %v276 = vld [vmem:[%s205 + $0x4a] sm:$0xff]
      %v277 = vld [vmem:[%s205 + $0x52] sm:$0xff]
      %v278 = vld [vmem:[%s205 + $0x62] sm:$0xff]
      %v279 = vld [vmem:[%s205 + $0x6a] sm:$0xff]
      %v280 = vld [vmem:[%s205 + $0x7a] sm:$0xff]
      %v281 = vld [vmem:[%s205 + $0x82] sm:$0xff]
      %v282 = vld [vmem:[%s205 + $0x92] sm:$0xff]
      %v283 = vld [vmem:[%s205 + $0x9a] sm:$0xff]
      %v284 = vld [vmem:[%s205 + $0xaa] sm:$0xff]
      %v285 = vld [vmem:[%s205 + $0xb2] sm:$0xff]
      %v286 = vld [vmem:[%s205 + $0xc2] sm:$0xff]
      %v287 = vld [vmem:[%s205 + $0xca] sm:$0xff]
      %v288 = vld [vmem:[%s205 + $0xda] sm:$0xff]
      %v289 = vld [vmem:[%s205 + $0xe2] sm:$0xff]
      %v290 = vld [vmem:[%s205 + $0xf2] sm:$0xff]
      %v291 = vld [vmem:[%s205 + $0xfa] sm:$0xff]
      %v292 = vld [vmem:[%s205 + $0x10a] sm:$0xff]
      %v293 = vld [vmem:[%s205 + $0x112] sm:$0xff]
      %v294 = vld [vmem:[%s205 + $0x122] sm:$0xff]
      %v295 = vld [vmem:[%s205 + $0x12a] sm:$0xff]
      %v296 = vld [vmem:[%s205 + $0x13a] sm:$0xff]
      %v297 = vld [vmem:[%s205 + $0x142] sm:$0xff]
      %v298 = vld [vmem:[%s205 + $0x152] sm:$0xff]
      %v299 = vld [vmem:[%s205 + $0x15a] sm:$0xff]
      %v300 = vld [vmem:[%s205 + $0x16a] sm:$0xff]
      %v301 = vld [vmem:[%s205 + $0x172] sm:$0xff]
      %s302 = sadd.s32 %s196, 1
      %s303 = smul.u32 %s302, 24
      %s304 = scalar_lea.vmem %s184, %s303
      %v305 = vld [vmem:[%s304] sm:$0xff]
      %v306 = vld [vmem:[%s304 + $0x8] sm:$0xff]
      %v307 = vld [vmem:[%s304 + $0x18] sm:$0xff]
      %v308 = vld [vmem:[%s304 + $0x20] sm:$0xff]
      %v309 = vld [vmem:[%s304 + $0x30] sm:$0xff]
      %v310 = vld [vmem:[%s304 + $0x38] sm:$0xff]
      %v311 = vld [vmem:[%s304 + $0x48] sm:$0xff]
      %v312 = vld [vmem:[%s304 + $0x50] sm:$0xff]
      %v313 = vld [vmem:[%s304 + $0x60] sm:$0xff]
      %v314 = vld [vmem:[%s304 + $0x68] sm:$0xff]
      %v315 = vld [vmem:[%s304 + $0x78] sm:$0xff]
      %v316 = vld [vmem:[%s304 + $0x80] sm:$0xff]
      %v317 = vld [vmem:[%s304 + $0x90] sm:$0xff]
      %v318 = vld [vmem:[%s304 + $0x98] sm:$0xff]
      %v319 = vld [vmem:[%s304 + $0xa8] sm:$0xff]
      %v320 = vld [vmem:[%s304 + $0xb0] sm:$0xff]
      %v321 = vld [vmem:[%s304 + $0xc0] sm:$0xff]
      %v322 = vld [vmem:[%s304 + $0xc8] sm:$0xff]
      %v323 = vld [vmem:[%s304 + $0xd8] sm:$0xff]
      %v324 = vld [vmem:[%s304 + $0xe0] sm:$0xff]
      %v325 = vld [vmem:[%s304 + $0xf0] sm:$0xff]
      %v326 = vld [vmem:[%s304 + $0xf8] sm:$0xff]
      %v327 = vld [vmem:[%s304 + $0x108] sm:$0xff]
      %v328 = vld [vmem:[%s304 + $0x110] sm:$0xff]
      %v329 = vld [vmem:[%s304 + $0x120] sm:$0xff]
      %v330 = vld [vmem:[%s304 + $0x128] sm:$0xff]
      %v331 = vld [vmem:[%s304 + $0x138] sm:$0xff]
      %v332 = vld [vmem:[%s304 + $0x140] sm:$0xff]
      %v333 = vld [vmem:[%s304 + $0x150] sm:$0xff]
      %v334 = vld [vmem:[%s304 + $0x158] sm:$0xff]
      %v335 = vld [vmem:[%s304 + $0x168] sm:$0xff]
      %v336 = vld [vmem:[%s304 + $0x170] sm:$0xff]
      %v337 = vld [vmem:[%s304 + $0x1] sm:$0xff]
      %v338 = vld [vmem:[%s304 + $0x9] sm:$0xff]
      %v339 = vld [vmem:[%s304 + $0x19] sm:$0xff]
      %v340 = vld [vmem:[%s304 + $0x21] sm:$0xff]
      %v341 = vld [vmem:[%s304 + $0x31] sm:$0xff]
      %v342 = vld [vmem:[%s304 + $0x39] sm:$0xff]
      %v343 = vld [vmem:[%s304 + $0x49] sm:$0xff]
      %v344 = vld [vmem:[%s304 + $0x51] sm:$0xff]
      %v345 = vld [vmem:[%s304 + $0x61] sm:$0xff]
      %v346 = vld [vmem:[%s304 + $0x69] sm:$0xff]
      %v347 = vld [vmem:[%s304 + $0x79] sm:$0xff]
      %v348 = vld [vmem:[%s304 + $0x81] sm:$0xff]
      %v349 = vld [vmem:[%s304 + $0x91] sm:$0xff]
      %v350 = vld [vmem:[%s304 + $0x99] sm:$0xff]
      %v351 = vld [vmem:[%s304 + $0xa9] sm:$0xff]
      %v352 = vld [vmem:[%s304 + $0xb1] sm:$0xff]
      %v353 = vld [vmem:[%s304 + $0xc1] sm:$0xff]
      %v354 = vld [vmem:[%s304 + $0xc9] sm:$0xff]
      %v355 = vld [vmem:[%s304 + $0xd9] sm:$0xff]
      %v356 = vld [vmem:[%s304 + $0xe1] sm:$0xff]
      %v357 = vld [vmem:[%s304 + $0xf1] sm:$0xff]
      %v358 = vld [vmem:[%s304 + $0xf9] sm:$0xff]
      %v359 = vld [vmem:[%s304 + $0x109] sm:$0xff]
      %v360 = vld [vmem:[%s304 + $0x111] sm:$0xff]
      %v361 = vld [vmem:[%s304 + $0x121] sm:$0xff]
      %v362 = vld [vmem:[%s304 + $0x129] sm:$0xff]
      %v363 = vld [vmem:[%s304 + $0x139] sm:$0xff]
      %v364 = vld [vmem:[%s304 + $0x141] sm:$0xff]
      %v365 = vld [vmem:[%s304 + $0x151] sm:$0xff]
      %v366 = vld [vmem:[%s304 + $0x159] sm:$0xff]
      %v367 = vld [vmem:[%s304 + $0x169] sm:$0xff]
      %v368 = vld [vmem:[%s304 + $0x171] sm:$0xff]
      %v369 = vld [vmem:[%s304 + $0x2] sm:$0xff]
      %v370 = vld [vmem:[%s304 + $0xa] sm:$0xff]
      %v371 = vld [vmem:[%s304 + $0x1a] sm:$0xff]
      %v372 = vld [vmem:[%s304 + $0x22] sm:$0xff]
      %v373 = vld [vmem:[%s304 + $0x32] sm:$0xff]
      %v374 = vld [vmem:[%s304 + $0x3a] sm:$0xff]
      %v375 = vld [vmem:[%s304 + $0x4a] sm:$0xff]
      %v376 = vld [vmem:[%s304 + $0x52] sm:$0xff]
      %v377 = vld [vmem:[%s304 + $0x62] sm:$0xff]
      %v378 = vld [vmem:[%s304 + $0x6a] sm:$0xff]
      %v379 = vld [vmem:[%s304 + $0x7a] sm:$0xff]
      %v380 = vld [vmem:[%s304 + $0x82] sm:$0xff]
      %v381 = vld [vmem:[%s304 + $0x92] sm:$0xff]
      %v382 = vld [vmem:[%s304 + $0x9a] sm:$0xff]
      %v383 = vld [vmem:[%s304 + $0xaa] sm:$0xff]
      %v384 = vld [vmem:[%s304 + $0xb2] sm:$0xff]
      %v385 = vld [vmem:[%s304 + $0xc2] sm:$0xff]
      %v386 = vld [vmem:[%s304 + $0xca] sm:$0xff]
      %v387 = vld [vmem:[%s304 + $0xda] sm:$0xff]
      %v388 = vld [vmem:[%s304 + $0xe2] sm:$0xff]
      %v389 = vld [vmem:[%s304 + $0xf2] sm:$0xff]
      %v390 = vld [vmem:[%s304 + $0xfa] sm:$0xff]
      %v391 = vld [vmem:[%s304 + $0x10a] sm:$0xff]
      %v392 = vld [vmem:[%s304 + $0x112] sm:$0xff]
      %v393 = vld [vmem:[%s304 + $0x122] sm:$0xff]
      %v394 = vld [vmem:[%s304 + $0x12a] sm:$0xff]
      %v395 = vld [vmem:[%s304 + $0x13a] sm:$0xff]
      %v396 = vld [vmem:[%s304 + $0x142] sm:$0xff]
      %v397 = vld [vmem:[%s304 + $0x152] sm:$0xff]
      %v398 = vld [vmem:[%s304 + $0x15a] sm:$0xff]
      %v399 = vld [vmem:[%s304 + $0x16a] sm:$0xff]
      %v400 = vld [vmem:[%s304 + $0x172] sm:$0xff]
      %s401 = sadd.s32 %s196, 2
      %s402 = smul.u32 %s401, 24
      %s403 = scalar_lea.vmem %s184, %s402
      %v404 = vld [vmem:[%s403] sm:$0xff]
      %v405 = vld [vmem:[%s403 + $0x8] sm:$0xff]
      %v406 = vld [vmem:[%s403 + $0x18] sm:$0xff]
      %v407 = vld [vmem:[%s403 + $0x20] sm:$0xff]
      %v408 = vld [vmem:[%s403 + $0x30] sm:$0xff]
      %v409 = vld [vmem:[%s403 + $0x38] sm:$0xff]
      %v410 = vld [vmem:[%s403 + $0x48] sm:$0xff]
      %v411 = vld [vmem:[%s403 + $0x50] sm:$0xff]
      %v412 = vld [vmem:[%s403 + $0x60] sm:$0xff]
      %v413 = vld [vmem:[%s403 + $0x68] sm:$0xff]
      %v414 = vld [vmem:[%s403 + $0x78] sm:$0xff]
      %v415 = vld [vmem:[%s403 + $0x80] sm:$0xff]
      %v416 = vld [vmem:[%s403 + $0x90] sm:$0xff]
      %v417 = vld [vmem:[%s403 + $0x98] sm:$0xff]
      %v418 = vld [vmem:[%s403 + $0xa8] sm:$0xff]
      %v419 = vld [vmem:[%s403 + $0xb0] sm:$0xff]
      %v420 = vld [vmem:[%s403 + $0xc0] sm:$0xff]
      %v421 = vld [vmem:[%s403 + $0xc8] sm:$0xff]
      %v422 = vld [vmem:[%s403 + $0xd8] sm:$0xff]
      %v423 = vld [vmem:[%s403 + $0xe0] sm:$0xff]
      %v424 = vld [vmem:[%s403 + $0xf0] sm:$0xff]
      %v425 = vld [vmem:[%s403 + $0xf8] sm:$0xff]
      %v426 = vld [vmem:[%s403 + $0x108] sm:$0xff]
      %v427 = vld [vmem:[%s403 + $0x110] sm:$0xff]
      %v428 = vld [vmem:[%s403 + $0x120] sm:$0xff]
      %v429 = vld [vmem:[%s403 + $0x128] sm:$0xff]
      %v430 = vld [vmem:[%s403 + $0x138] sm:$0xff]
      %v431 = vld [vmem:[%s403 + $0x140] sm:$0xff]
      %v432 = vld [vmem:[%s403 + $0x150] sm:$0xff]
      %v433 = vld [vmem:[%s403 + $0x158] sm:$0xff]
      %v434 = vld [vmem:[%s403 + $0x168] sm:$0xff]
      %v435 = vld [vmem:[%s403 + $0x170] sm:$0xff]
      %v436 = vld [vmem:[%s403 + $0x1] sm:$0xff]
      %v437 = vld [vmem:[%s403 + $0x9] sm:$0xff]
      %v438 = vld [vmem:[%s403 + $0x19] sm:$0xff]
      %v439 = vld [vmem:[%s403 + $0x21] sm:$0xff]
      %v440 = vld [vmem:[%s403 + $0x31] sm:$0xff]
      %v441 = vld [vmem:[%s403 + $0x39] sm:$0xff]
      %v442 = vld [vmem:[%s403 + $0x49] sm:$0xff]
      %v443 = vld [vmem:[%s403 + $0x51] sm:$0xff]
      %v444 = vld [vmem:[%s403 + $0x61] sm:$0xff]
      %v445 = vld [vmem:[%s403 + $0x69] sm:$0xff]
      %v446 = vld [vmem:[%s403 + $0x79] sm:$0xff]
      %v447 = vld [vmem:[%s403 + $0x81] sm:$0xff]
      %v448 = vld [vmem:[%s403 + $0x91] sm:$0xff]
      %v449 = vld [vmem:[%s403 + $0x99] sm:$0xff]
      %v450 = vld [vmem:[%s403 + $0xa9] sm:$0xff]
      %v451 = vld [vmem:[%s403 + $0xb1] sm:$0xff]
      %v452 = vld [vmem:[%s403 + $0xc1] sm:$0xff]
      %v453 = vld [vmem:[%s403 + $0xc9] sm:$0xff]
      %v454 = vld [vmem:[%s403 + $0xd9] sm:$0xff]
      %v455 = vld [vmem:[%s403 + $0xe1] sm:$0xff]
      %v456 = vld [vmem:[%s403 + $0xf1] sm:$0xff]
      %v457 = vld [vmem:[%s403 + $0xf9] sm:$0xff]
      %v458 = vld [vmem:[%s403 + $0x109] sm:$0xff]
      %v459 = vld [vmem:[%s403 + $0x111] sm:$0xff]
      %v460 = vld [vmem:[%s403 + $0x121] sm:$0xff]
      %v461 = vld [vmem:[%s403 + $0x129] sm:$0xff]
      %v462 = vld [vmem:[%s403 + $0x139] sm:$0xff]
      %v463 = vld [vmem:[%s403 + $0x141] sm:$0xff]
      %v464 = vld [vmem:[%s403 + $0x151] sm:$0xff]
      %v465 = vld [vmem:[%s403 + $0x159] sm:$0xff]
      %v466 = vld [vmem:[%s403 + $0x169] sm:$0xff]
      %v467 = vld [vmem:[%s403 + $0x171] sm:$0xff]
      %v468 = vld [vmem:[%s403 + $0x2] sm:$0xff]
      %v469 = vld [vmem:[%s403 + $0xa] sm:$0xff]
      %v470 = vld [vmem:[%s403 + $0x1a] sm:$0xff]
      %v471 = vld [vmem:[%s403 + $0x22] sm:$0xff]
      %v472 = vld [vmem:[%s403 + $0x32] sm:$0xff]
      %v473 = vld [vmem:[%s403 + $0x3a] sm:$0xff]
      %v474 = vld [vmem:[%s403 + $0x4a] sm:$0xff]
      %v475 = vld [vmem:[%s403 + $0x52] sm:$0xff]
      %v476 = vld [vmem:[%s403 + $0x62] sm:$0xff]
      %v477 = vld [vmem:[%s403 + $0x6a] sm:$0xff]
      %v478 = vld [vmem:[%s403 + $0x7a] sm:$0xff]
      %v479 = vld [vmem:[%s403 + $0x82] sm:$0xff]
      %v480 = vld [vmem:[%s403 + $0x92] sm:$0xff]
      %v481 = vld [vmem:[%s403 + $0x9a] sm:$0xff]
      %v482 = vld [vmem:[%s403 + $0xaa] sm:$0xff]
      %v483 = vld [vmem:[%s403 + $0xb2] sm:$0xff]
      %v484 = vld [vmem:[%s403 + $0xc2] sm:$0xff]
      %v485 = vld [vmem:[%s403 + $0xca] sm:$0xff]
      %v486 = vld [vmem:[%s403 + $0xda] sm:$0xff]
      %v487 = vld [vmem:[%s403 + $0xe2] sm:$0xff]
      %v488 = vld [vmem:[%s403 + $0xf2] sm:$0xff]
      %v489 = vld [vmem:[%s403 + $0xfa] sm:$0xff]
      %v490 = vld [vmem:[%s403 + $0x10a] sm:$0xff]
      %v491 = vld [vmem:[%s403 + $0x112] sm:$0xff]
      %v492 = vld [vmem:[%s403 + $0x122] sm:$0xff]
      %v493 = vld [vmem:[%s403 + $0x12a] sm:$0xff]
      %v494 = vld [vmem:[%s403 + $0x13a] sm:$0xff]
      %v495 = vld [vmem:[%s403 + $0x142] sm:$0xff]
      %v496 = vld [vmem:[%s403 + $0x152] sm:$0xff]
      %v497 = vld [vmem:[%s403 + $0x15a] sm:$0xff]
      %v498 = vld [vmem:[%s403 + $0x16a] sm:$0xff]
      %v499 = vld [vmem:[%s403 + $0x172] sm:$0xff]
      %532 = vrot.lane.b32.xlu0 %v238, 4
      %v533 = vpop.permute.xlu0 %532
      %534 = vrot.lane.b32.xlu0 %v239, 4
      %v535 = vpop.permute.xlu0 %534
      %536 = vrot.lane.b32.xlu0 %v240, 4
      %v537 = vpop.permute.xlu0 %536
      %538 = vrot.lane.b32.xlu0 %v241, 4
      %v539 = vpop.permute.xlu0 %538
      %540 = vrot.lane.b32.xlu0 %v242, 4
      %v541 = vpop.permute.xlu0 %540
      %542 = vrot.lane.b32.xlu0 %v243, 4
      %v543 = vpop.permute.xlu0 %542
      %544 = vrot.lane.b32.xlu0 %v244, 4
      %v545 = vpop.permute.xlu0 %544
      %546 = vrot.lane.b32.xlu0 %v245, 4
      %v547 = vpop.permute.xlu0 %546
      %548 = vrot.lane.b32.xlu0 %v246, 4
      %v549 = vpop.permute.xlu0 %548
      %550 = vrot.lane.b32.xlu0 %v247, 4
      %v551 = vpop.permute.xlu0 %550
      %552 = vrot.lane.b32.xlu0 %v248, 4
      %v553 = vpop.permute.xlu0 %552
      %554 = vrot.lane.b32.xlu0 %v249, 4
      %v555 = vpop.permute.xlu0 %554
      %556 = vrot.lane.b32.xlu0 %v250, 4
      %v557 = vpop.permute.xlu0 %556
      %558 = vrot.lane.b32.xlu0 %v251, 4
      %v559 = vpop.permute.xlu0 %558
      %560 = vrot.lane.b32.xlu0 %v252, 4
      %v561 = vpop.permute.xlu0 %560
      %562 = vrot.lane.b32.xlu0 %v253, 4
      %v563 = vpop.permute.xlu0 %562
      %564 = vrot.lane.b32.xlu0 %v254, 4
      %v565 = vpop.permute.xlu0 %564
      %566 = vrot.lane.b32.xlu0 %v255, 4
      %v567 = vpop.permute.xlu0 %566
      %568 = vrot.lane.b32.xlu0 %v256, 4
      %v569 = vpop.permute.xlu0 %568
      %570 = vrot.lane.b32.xlu0 %v257, 4
      %v571 = vpop.permute.xlu0 %570
      %572 = vrot.lane.b32.xlu0 %v258, 4
      %v573 = vpop.permute.xlu0 %572
      %574 = vrot.lane.b32.xlu0 %v259, 4
      %v575 = vpop.permute.xlu0 %574
      %576 = vrot.lane.b32.xlu0 %v260, 4
      %v577 = vpop.permute.xlu0 %576
      %578 = vrot.lane.b32.xlu0 %v261, 4
      %v579 = vpop.permute.xlu0 %578
      %580 = vrot.lane.b32.xlu0 %v262, 4
      %v581 = vpop.permute.xlu0 %580
      %582 = vrot.lane.b32.xlu0 %v263, 4
      %v583 = vpop.permute.xlu0 %582
      %584 = vrot.lane.b32.xlu0 %v264, 4
      %v585 = vpop.permute.xlu0 %584
      %586 = vrot.lane.b32.xlu0 %v265, 4
      %v587 = vpop.permute.xlu0 %586
      %588 = vrot.lane.b32.xlu0 %v266, 4
      %v589 = vpop.permute.xlu0 %588
      %590 = vrot.lane.b32.xlu0 %v267, 4
      %v591 = vpop.permute.xlu0 %590
      %592 = vrot.lane.b32.xlu0 %v268, 4
      %v593 = vpop.permute.xlu0 %592
      %594 = vrot.lane.b32.xlu0 %v269, 4
      %v595 = vpop.permute.xlu0 %594
      %660 = vrot.lane.b32.xlu0 %v305, 8
      %v661 = vpop.permute.xlu0 %660
      %662 = vrot.lane.b32.xlu0 %v306, 8
      %v663 = vpop.permute.xlu0 %662
      %664 = vrot.lane.b32.xlu0 %v307, 8
      %v665 = vpop.permute.xlu0 %664
      %666 = vrot.lane.b32.xlu0 %v308, 8
      %v667 = vpop.permute.xlu0 %666
      %668 = vrot.lane.b32.xlu0 %v309, 8
      %v669 = vpop.permute.xlu0 %668
      %670 = vrot.lane.b32.xlu0 %v310, 8
      %v671 = vpop.permute.xlu0 %670
      %672 = vrot.lane.b32.xlu0 %v311, 8
      %v673 = vpop.permute.xlu0 %672
      %674 = vrot.lane.b32.xlu0 %v312, 8
      %v675 = vpop.permute.xlu0 %674
      %676 = vrot.lane.b32.xlu0 %v313, 8
      %v677 = vpop.permute.xlu0 %676
      %678 = vrot.lane.b32.xlu0 %v314, 8
      %v679 = vpop.permute.xlu0 %678
      %680 = vrot.lane.b32.xlu0 %v315, 8
      %v681 = vpop.permute.xlu0 %680
      %682 = vrot.lane.b32.xlu0 %v316, 8
      %v683 = vpop.permute.xlu0 %682
      %684 = vrot.lane.b32.xlu0 %v317, 8
      %v685 = vpop.permute.xlu0 %684
      %686 = vrot.lane.b32.xlu0 %v318, 8
      %v687 = vpop.permute.xlu0 %686
      %688 = vrot.lane.b32.xlu0 %v319, 8
      %v689 = vpop.permute.xlu0 %688
      %690 = vrot.lane.b32.xlu0 %v320, 8
      %v691 = vpop.permute.xlu0 %690
      %692 = vrot.lane.b32.xlu0 %v321, 8
      %v693 = vpop.permute.xlu0 %692
      %694 = vrot.lane.b32.xlu0 %v322, 8
      %v695 = vpop.permute.xlu0 %694
      %696 = vrot.lane.b32.xlu0 %v323, 8
      %v697 = vpop.permute.xlu0 %696
      %698 = vrot.lane.b32.xlu0 %v324, 8
      %v699 = vpop.permute.xlu0 %698
      %700 = vrot.lane.b32.xlu0 %v325, 8
      %v701 = vpop.permute.xlu0 %700
      %702 = vrot.lane.b32.xlu0 %v326, 8
      %v703 = vpop.permute.xlu0 %702
      %704 = vrot.lane.b32.xlu0 %v327, 8
      %v705 = vpop.permute.xlu0 %704
      %706 = vrot.lane.b32.xlu0 %v328, 8
      %v707 = vpop.permute.xlu0 %706
      %708 = vrot.lane.b32.xlu0 %v329, 8
      %v709 = vpop.permute.xlu0 %708
      %710 = vrot.lane.b32.xlu0 %v330, 8
      %v711 = vpop.permute.xlu0 %710
      %712 = vrot.lane.b32.xlu0 %v331, 8
      %v713 = vpop.permute.xlu0 %712
      %714 = vrot.lane.b32.xlu0 %v332, 8
      %v715 = vpop.permute.xlu0 %714
      %716 = vrot.lane.b32.xlu0 %v333, 8
      %v717 = vpop.permute.xlu0 %716
      %718 = vrot.lane.b32.xlu0 %v334, 8
      %v719 = vpop.permute.xlu0 %718
      %720 = vrot.lane.b32.xlu0 %v335, 8
      %v721 = vpop.permute.xlu0 %720
      %722 = vrot.lane.b32.xlu0 %v336, 8
      %v723 = vpop.permute.xlu0 %722
      %788 = vrot.lane.b32.xlu0 %v337, 12
      %v789 = vpop.permute.xlu0 %788
      %790 = vrot.lane.b32.xlu0 %v338, 12
      %v791 = vpop.permute.xlu0 %790
      %792 = vrot.lane.b32.xlu0 %v339, 12
      %v793 = vpop.permute.xlu0 %792
      %794 = vrot.lane.b32.xlu0 %v340, 12
      %v795 = vpop.permute.xlu0 %794
      %796 = vrot.lane.b32.xlu0 %v341, 12
      %v797 = vpop.permute.xlu0 %796
      %798 = vrot.lane.b32.xlu0 %v342, 12
      %v799 = vpop.permute.xlu0 %798
      %800 = vrot.lane.b32.xlu0 %v343, 12
      %v801 = vpop.permute.xlu0 %800
      %802 = vrot.lane.b32.xlu0 %v344, 12
      %v803 = vpop.permute.xlu0 %802
      %804 = vrot.lane.b32.xlu0 %v345, 12
      %v805 = vpop.permute.xlu0 %804
      %806 = vrot.lane.b32.xlu0 %v346, 12
      %v807 = vpop.permute.xlu0 %806
      %808 = vrot.lane.b32.xlu0 %v347, 12
      %v809 = vpop.permute.xlu0 %808
      %810 = vrot.lane.b32.xlu0 %v348, 12
      %v811 = vpop.permute.xlu0 %810
      %812 = vrot.lane.b32.xlu0 %v349, 12
      %v813 = vpop.permute.xlu0 %812
      %814 = vrot.lane.b32.xlu0 %v350, 12
      %v815 = vpop.permute.xlu0 %814
      %816 = vrot.lane.b32.xlu0 %v351, 12
      %v817 = vpop.permute.xlu0 %816
      %818 = vrot.lane.b32.xlu0 %v352, 12
      %v819 = vpop.permute.xlu0 %818
      %820 = vrot.lane.b32.xlu0 %v353, 12
      %v821 = vpop.permute.xlu0 %820
      %822 = vrot.lane.b32.xlu0 %v354, 12
      %v823 = vpop.permute.xlu0 %822
      %824 = vrot.lane.b32.xlu0 %v355, 12
      %v825 = vpop.permute.xlu0 %824
      %826 = vrot.lane.b32.xlu0 %v356, 12
      %v827 = vpop.permute.xlu0 %826
      %828 = vrot.lane.b32.xlu0 %v357, 12
      %v829 = vpop.permute.xlu0 %828
      %830 = vrot.lane.b32.xlu0 %v358, 12
      %v831 = vpop.permute.xlu0 %830
      %832 = vrot.lane.b32.xlu0 %v359, 12
      %v833 = vpop.permute.xlu0 %832
      %834 = vrot.lane.b32.xlu0 %v360, 12
      %v835 = vpop.permute.xlu0 %834
      %836 = vrot.lane.b32.xlu0 %v361, 12
      %v837 = vpop.permute.xlu0 %836
      %838 = vrot.lane.b32.xlu0 %v362, 12
      %v839 = vpop.permute.xlu0 %838
      %840 = vrot.lane.b32.xlu0 %v363, 12
      %v841 = vpop.permute.xlu0 %840
      %842 = vrot.lane.b32.xlu0 %v364, 12
      %v843 = vpop.permute.xlu0 %842
      %844 = vrot.lane.b32.xlu0 %v365, 12
      %v845 = vpop.permute.xlu0 %844
      %846 = vrot.lane.b32.xlu0 %v366, 12
      %v847 = vpop.permute.xlu0 %846
      %848 = vrot.lane.b32.xlu0 %v367, 12
      %v849 = vpop.permute.xlu0 %848
      %850 = vrot.lane.b32.xlu0 %v368, 12
      %v851 = vpop.permute.xlu0 %850
      %vm884 = vcmask 31744
      %v885 = vsel %vm884, %v206, %v533
      %v886 = vsel %vm884, %v207, %v535
      %v887 = vsel %vm884, %v208, %v537
      %v888 = vsel %vm884, %v209, %v539
      %v889 = vsel %vm884, %v210, %v541
      %v890 = vsel %vm884, %v211, %v543
      %v891 = vsel %vm884, %v212, %v545
      %v892 = vsel %vm884, %v213, %v547
      %v893 = vsel %vm884, %v214, %v549
      %v894 = vsel %vm884, %v215, %v551
      %v895 = vsel %vm884, %v216, %v553
      %v896 = vsel %vm884, %v217, %v555
      %v897 = vsel %vm884, %v218, %v557
      %v898 = vsel %vm884, %v219, %v559
      %v899 = vsel %vm884, %v220, %v561
      %v900 = vsel %vm884, %v221, %v563
      %v901 = vsel %vm884, %v222, %v565
      %v902 = vsel %vm884, %v223, %v567
      %v903 = vsel %vm884, %v224, %v569
      %v904 = vsel %vm884, %v225, %v571
      %v905 = vsel %vm884, %v226, %v573
      %v906 = vsel %vm884, %v227, %v575
      %v907 = vsel %vm884, %v228, %v577
      %v908 = vsel %vm884, %v229, %v579
      %v909 = vsel %vm884, %v230, %v581
      %v910 = vsel %vm884, %v231, %v583
      %v911 = vsel %vm884, %v232, %v585
      %v912 = vsel %vm884, %v233, %v587
      %v913 = vsel %vm884, %v234, %v589
      %v914 = vsel %vm884, %v235, %v591
      %v915 = vsel %vm884, %v236, %v593
      %v916 = vsel %vm884, %v237, %v595
      %vm917 = vcmask 64512
      %v918 = vsel %vm917, %v885, %v661
      %v919 = vsel %vm917, %v886, %v663
      %v920 = vsel %vm917, %v887, %v665
      %v921 = vsel %vm917, %v888, %v667
      %v922 = vsel %vm917, %v889, %v669
      %v923 = vsel %vm917, %v890, %v671
      %v924 = vsel %vm917, %v891, %v673
      %v925 = vsel %vm917, %v892, %v675
      %v926 = vsel %vm917, %v893, %v677
      %v927 = vsel %vm917, %v894, %v679
      %v928 = vsel %vm917, %v895, %v681
      %v929 = vsel %vm917, %v896, %v683
      %v930 = vsel %vm917, %v897, %v685
      %v931 = vsel %vm917, %v898, %v687
      %v932 = vsel %vm917, %v899, %v689
      %v933 = vsel %vm917, %v900, %v691
      %v934 = vsel %vm917, %v901, %v693
      %v935 = vsel %vm917, %v902, %v695
      %v936 = vsel %vm917, %v903, %v697
      %v937 = vsel %vm917, %v904, %v699
      %v938 = vsel %vm917, %v905, %v701
      %v939 = vsel %vm917, %v906, %v703
      %v940 = vsel %vm917, %v907, %v705
      %v941 = vsel %vm917, %v908, %v707
      %v942 = vsel %vm917, %v909, %v709
      %v943 = vsel %vm917, %v910, %v711
      %v944 = vsel %vm917, %v911, %v713
      %v945 = vsel %vm917, %v912, %v715
      %v946 = vsel %vm917, %v913, %v717
      %v947 = vsel %vm917, %v914, %v719
      %v948 = vsel %vm917, %v915, %v721
      %v949 = vsel %vm917, %v916, %v723
      %vm950 = vcmask 97280
      %v951 = vsel %vm950, %v918, %v789
      %v952 = vsel %vm950, %v919, %v791
      %v953 = vsel %vm950, %v920, %v793
      %v954 = vsel %vm950, %v921, %v795
      %v955 = vsel %vm950, %v922, %v797
      %v956 = vsel %vm950, %v923, %v799
      %v957 = vsel %vm950, %v924, %v801
      %v958 = vsel %vm950, %v925, %v803
      %v959 = vsel %vm950, %v926, %v805
      %v960 = vsel %vm950, %v927, %v807
      %v961 = vsel %vm950, %v928, %v809
      %v962 = vsel %vm950, %v929, %v811
      %v963 = vsel %vm950, %v930, %v813
      %v964 = vsel %vm950, %v931, %v815
      %v965 = vsel %vm950, %v932, %v817
      %v966 = vsel %vm950, %v933, %v819
      %v967 = vsel %vm950, %v934, %v821
      %v968 = vsel %vm950, %v935, %v823
      %v969 = vsel %vm950, %v936, %v825
      %v970 = vsel %vm950, %v937, %v827
      %v971 = vsel %vm950, %v938, %v829
      %v972 = vsel %vm950, %v939, %v831
      %v973 = vsel %vm950, %v940, %v833
      %v974 = vsel %vm950, %v941, %v835
      %v975 = vsel %vm950, %v942, %v837
      %v976 = vsel %vm950, %v943, %v839
      %v977 = vsel %vm950, %v944, %v841
      %v978 = vsel %vm950, %v945, %v843
      %v979 = vsel %vm950, %v946, %v845
      %v980 = vsel %vm950, %v947, %v847
      %v981 = vsel %vm950, %v948, %v849
      %v982 = vsel %vm950, %v949, %v851
      %v983 = vld [vmem:[%s1] sm:$0xff]
      %v984 = vld [vmem:[%s1 + $0x8] sm:$0xff]
      %vm985 = vcmask 130048
      %v987 = vsel %vm985, %v951, 0
      %v990 = vsel %vm985, %v952, 0
      %v993 = vsel %vm985, %v953, 0
      %v996 = vsel %vm985, %v954, 0
      %v999 = vsel %vm985, %v955, 0
      %v1002 = vsel %vm985, %v956, 0
      %v1005 = vsel %vm985, %v957, 0
      %v1008 = vsel %vm985, %v958, 0
      %v1011 = vsel %vm985, %v959, 0
      %v1014 = vsel %vm985, %v960, 0
      %v1017 = vsel %vm985, %v961, 0
      %v1020 = vsel %vm985, %v962, 0
      %v1023 = vsel %vm985, %v963, 0
      %v1026 = vsel %vm985, %v964, 0
      %v1029 = vsel %vm985, %v965, 0
      %v1032 = vsel %vm985, %v966, 0
      %v1035 = vsel %vm985, %v967, 0
      %v1038 = vsel %vm985, %v968, 0
      %v1041 = vsel %vm985, %v969, 0
      %v1044 = vsel %vm985, %v970, 0
      %v1047 = vsel %vm985, %v971, 0
      %v1050 = vsel %vm985, %v972, 0
      %v1053 = vsel %vm985, %v973, 0
      %v1056 = vsel %vm985, %v974, 0
      %v1059 = vsel %vm985, %v975, 0
      %v1062 = vsel %vm985, %v976, 0
      %v1065 = vsel %vm985, %v977, 0
      %v1068 = vsel %vm985, %v978, 0
      %v1071 = vsel %vm985, %v979, 0
      %v1074 = vsel %vm985, %v980, 0
      %v1077 = vsel %vm985, %v981, 0
      %v1080 = vsel %vm985, %v982, 0
      %1082 = vmatprep.subr.mxu0 0.0
      %1083 = vmatpush1.msra.mxu0 %v983
      %1084 = vmatprep.subr.mxu0 0.0
      %1085 = vmatpush1.msra.mxu0 %v984
      %1086 = vmatprep.subr.mxu0 0.0
      %1087 = vmatpush1.msra.mxu0 0.0
      %1088 = vmatprep.subr.mxu0 0.0
      %1089 = vmatpush1.msra.mxu0 0.0
      %1090 = vmatprep.subr.mxu0 0.0
      %1091 = vmatpush1.msra.mxu0 0.0
      %1092 = vmatprep.subr.mxu0 0.0
      %1093 = vmatpush1.msra.mxu0 0.0
      %1094 = vmatprep.subr.mxu0 0.0
      %1095 = vmatpush1.msra.mxu0 0.0
      %1096 = vmatprep.subr.mxu0 0.0
      %1097 = vmatpush1.msra.mxu0 0.0
      %1098 = vmatprep.subr.mxu0 0.0
      %1099 = vmatpush1.msra.mxu0 0.0
      %1100 = vmatprep.subr.mxu0 0.0
      %1101 = vmatpush1.msra.mxu0 0.0
      %1102 = vmatprep.subr.mxu0 0.0
      %1103 = vmatpush1.msra.mxu0 0.0
      %1104 = vmatprep.subr.mxu0 0.0
      %1105 = vmatpush1.msra.mxu0 0.0
      %1106 = vmatprep.subr.mxu0 0.0
      %1107 = vmatpush1.msra.mxu0 0.0
      %1108 = vmatprep.subr.mxu0 0.0
      %1109 = vmatpush1.msra.mxu0 0.0
      %1110 = vmatprep.subr.mxu0 0.0
      %1111 = vmatpush1.msra.mxu0 0.0
      %1112 = vmatprep.subr.mxu0 0.0
      %1113 = vmatpush1.msra.mxu0 0.0
      %1114 = vmatprep.subr.mxu0 0.0
      %1115 = vmatpush1.msra.mxu0 0.0
      %1116 = vmatprep.subr.mxu0 0.0
      %1117 = vmatpush1.msra.mxu0 0.0
      %1118 = vmatprep.subr.mxu0 0.0
      %1119 = vmatpush1.msra.mxu0 0.0
      %1120 = vmatprep.subr.mxu0 0.0
      %1121 = vmatpush1.msra.mxu0 0.0
      %1122 = vmatprep.subr.mxu0 0.0
      %1123 = vmatpush1.msra.mxu0 0.0
      %1124 = vmatprep.subr.mxu0 0.0
      %1125 = vmatpush1.msra.mxu0 0.0
      %1126 = vmatprep.subr.mxu0 0.0
      %1127 = vmatpush1.msra.mxu0 0.0
      %1128 = vmatprep.subr.mxu0 0.0
      %1129 = vmatpush1.msra.mxu0 0.0
      %1130 = vmatprep.subr.mxu0 0.0
      %1131 = vmatpush1.msra.mxu0 0.0
      %1132 = vmatprep.subr.mxu0 0.0
      %1133 = vmatpush1.msra.mxu0 0.0
      %1134 = vmatprep.subr.mxu0 0.0
      %1135 = vmatpush1.msra.mxu0 0.0
      %1136 = vmatprep.subr.mxu0 0.0
      %1137 = vmatpush1.msra.mxu0 0.0
      %1138 = vmatprep.subr.mxu0 0.0
      %1139 = vmatpush1.msra.mxu0 0.0
      %1140 = vmatprep.subr.mxu0 0.0
      %1141 = vmatpush1.msra.mxu0 0.0
      %1142 = vmatprep.subr.mxu0 0.0
      %1143 = vmatpush1.msra.mxu0 0.0
      %1144 = vmatprep.subr.mxu0 0.0
      %1145 = vmatpush1.msra.mxu0 0.0
      %1146 = vmatprep.mubr.f32.mxu0 0.0
      %1147 = vmatmul.mubr.f32.gmra.mrb[0].mxu0 %v987
      %v1148 = vpop.f32.mrb[0].mxu0
      %v1149 = vadd.f32 %v202, %v1148
      %v1150 = vpop.f32.mrb[0].mxu0
      %1151 = vmatprep.mubr.f32.mxu0 0.0
      %1152 = vmatmul.mubr.f32.gmra.mrb[0].mxu0 %v990
      %v1153 = vpop.f32.mrb[0].mxu0
      %v1154 = vadd.f32 %v202, %v1153
      %v1155 = vpop.f32.mrb[0].mxu0
      %1156 = vmatprep.mubr.f32.mxu0 0.0
      %1157 = vmatmul.mubr.f32.gmra.mrb[0].mxu0 %v993
      %v1158 = vpop.f32.mrb[0].mxu0
      %v1159 = vadd.f32 %v202, %v1158
      %v1160 = vpop.f32.mrb[0].mxu0
      %1161 = vmatprep.mubr.f32.mxu0 0.0
      %1162 = vmatmul.mubr.f32.gmra.mrb[0].mxu0 %v996
      %v1163 = vpop.f32.mrb[0].mxu0
      %v1164 = vadd.f32 %v202, %v1163
      %v1165 = vpop.f32.mrb[0].mxu0
      %1166 = vmatprep.mubr.f32.mxu0 0.0
      %1167 = vmatmul.mubr.f32.gmra.mrb[0].mxu0 %v999
      %v1168 = vpop.f32.mrb[0].mxu0
      %v1169 = vadd.f32 %v202, %v1168
      %v1170 = vpop.f32.mrb[0].mxu0
      %1171 = vmatprep.mubr.f32.mxu0 0.0
      %1172 = vmatmul.mubr.f32.gmra.mrb[0].mxu0 %v1002
      %v1173 = vpop.f32.mrb[0].mxu0
      %v1174 = vadd.f32 %v202, %v1173
      %v1175 = vpop.f32.mrb[0].mxu0
      %1176 = vmatprep.mubr.f32.mxu0 0.0
      %1177 = vmatmul.mubr.f32.gmra.mrb[0].mxu0 %v1005
      %v1178 = vpop.f32.mrb[0].mxu0
      %v1179 = vadd.f32 %v202, %v1178
      %v1180 = vpop.f32.mrb[0].mxu0
      %1181 = vmatprep.mubr.f32.mxu0 0.0
      %1182 = vmatmul.mubr.f32.gmra.mrb[0].mxu0 %v1008
      %v1183 = vpop.f32.mrb[0].mxu0
      %v1184 = vadd.f32 %v202, %v1183
      %v1185 = vpop.f32.mrb[0].mxu0
      %1186 = vmatprep.mubr.f32.mxu0 0.0
      %1187 = vmatmul.mubr.f32.gmra.mrb[0].mxu0 %v1011
      %v1188 = vpop.f32.mrb[0].mxu0
      %v1189 = vadd.f32 %v202, %v1188
      %v1190 = vpop.f32.mrb[0].mxu0
      %1191 = vmatprep.mubr.f32.mxu0 0.0
      %1192 = vmatmul.mubr.f32.gmra.mrb[0].mxu0 %v1014
      %v1193 = vpop.f32.mrb[0].mxu0
      %v1194 = vadd.f32 %v202, %v1193
      %v1195 = vpop.f32.mrb[0].mxu0
      %1196 = vmatprep.mubr.f32.mxu0 0.0
      %1197 = vmatmul.mubr.f32.gmra.mrb[0].mxu0 %v1017
      %v1198 = vpop.f32.mrb[0].mxu0
      %v1199 = vadd.f32 %v202, %v1198
      %v1200 = vpop.f32.mrb[0].mxu0
      %1201 = vmatprep.mubr.f32.mxu0 0.0
      %1202 = vmatmul.mubr.f32.gmra.mrb[0].mxu0 %v1020
      %v1203 = vpop.f32.mrb[0].mxu0
      %v1204 = vadd.f32 %v202, %v1203
      %v1205 = vpop.f32.mrb[0].mxu0
      %1206 = vmatprep.mubr.f32.mxu0 0.0
      %1207 = vmatmul.mubr.f32.gmra.mrb[0].mxu0 %v1023
      %v1208 = vpop.f32.mrb[0].mxu0
      %v1209 = vadd.f32 %v202, %v1208
      %v1210 = vpop.f32.mrb[0].mxu0
      %1211 = vmatprep.mubr.f32.mxu0 0.0
      %1212 = vmatmul.mubr.f32.gmra.mrb[0].mxu0 %v1026
      %v1213 = vpop.f32.mrb[0].mxu0
      %v1214 = vadd.f32 %v202, %v1213
      %v1215 = vpop.f32.mrb[0].mxu0
      %1216 = vmatprep.mubr.f32.mxu0 0.0
      %1217 = vmatmul.mubr.f32.gmra.mrb[0].mxu0 %v1029
      %v1218 = vpop.f32.mrb[0].mxu0
      %v1219 = vadd.f32 %v202, %v1218
      %v1220 = vpop.f32.mrb[0].mxu0
      %1221 = vmatprep.mubr.f32.mxu0 0.0
      %1222 = vmatmul.mubr.f32.gmra.mrb[0].mxu0 %v1032
      %v1223 = vpop.f32.mrb[0].mxu0
      %v1224 = vadd.f32 %v202, %v1223
      %v1225 = vpop.f32.mrb[0].mxu0
      %1226 = vmatprep.mubr.f32.mxu0 0.0
      %1227 = vmatmul.mubr.f32.gmra.mrb[0].mxu0 %v1035
      %v1228 = vpop.f32.mrb[0].mxu0
      %v1229 = vadd.f32 %v202, %v1228
      %v1230 = vpop.f32.mrb[0].mxu0
      %1231 = vmatprep.mubr.f32.mxu0 0.0
      %1232 = vmatmul.mubr.f32.gmra.mrb[0].mxu0 %v1038
      %v1233 = vpop.f32.mrb[0].mxu0
      %v1234 = vadd.f32 %v202, %v1233
      %v1235 = vpop.f32.mrb[0].mxu0
      %1236 = vmatprep.mubr.f32.mxu0 0.0
      %1237 = vmatmul.mubr.f32.gmra.mrb[0].mxu0 %v1041
      %v1238 = vpop.f32.mrb[0].mxu0
      %v1239 = vadd.f32 %v202, %v1238
      %v1240 = vpop.f32.mrb[0].mxu0
      %1241 = vmatprep.mubr.f32.mxu0 0.0
      %1242 = vmatmul.mubr.f32.gmra.mrb[0].mxu0 %v1044
      %v1243 = vpop.f32.mrb[0].mxu0
      %v1244 = vadd.f32 %v202, %v1243
      %v1245 = vpop.f32.mrb[0].mxu0
      %1246 = vmatprep.mubr.f32.mxu0 0.0
      %1247 = vmatmul.mubr.f32.gmra.mrb[0].mxu0 %v1047
      %v1248 = vpop.f32.mrb[0].mxu0
      %v1249 = vadd.f32 %v202, %v1248
      %v1250 = vpop.f32.mrb[0].mxu0
      %1251 = vmatprep.mubr.f32.mxu0 0.0
      %1252 = vmatmul.mubr.f32.gmra.mrb[0].mxu0 %v1050
      %v1253 = vpop.f32.mrb[0].mxu0
      %v1254 = vadd.f32 %v202, %v1253
      %v1255 = vpop.f32.mrb[0].mxu0
      %1256 = vmatprep.mubr.f32.mxu0 0.0
      %1257 = vmatmul.mubr.f32.gmra.mrb[0].mxu0 %v1053
      %v1258 = vpop.f32.mrb[0].mxu0
      %v1259 = vadd.f32 %v202, %v1258
      %v1260 = vpop.f32.mrb[0].mxu0
      %1261 = vmatprep.mubr.f32.mxu0 0.0
      %1262 = vmatmul.mubr.f32.gmra.mrb[0].mxu0 %v1056
      %v1263 = vpop.f32.mrb[0].mxu0
      %v1264 = vadd.f32 %v202, %v1263
      %v1265 = vpop.f32.mrb[0].mxu0
      %1266 = vmatprep.mubr.f32.mxu0 0.0
      %1267 = vmatmul.mubr.f32.gmra.mrb[0].mxu0 %v1059
      %v1268 = vpop.f32.mrb[0].mxu0
      %v1269 = vadd.f32 %v202, %v1268
      %v1270 = vpop.f32.mrb[0].mxu0
      %1271 = vmatprep.mubr.f32.mxu0 0.0
      %1272 = vmatmul.mubr.f32.gmra.mrb[0].mxu0 %v1062
      %v1273 = vpop.f32.mrb[0].mxu0
      %v1274 = vadd.f32 %v202, %v1273
      %v1275 = vpop.f32.mrb[0].mxu0
      %1276 = vmatprep.mubr.f32.mxu0 0.0
      %1277 = vmatmul.mubr.f32.gmra.mrb[0].mxu0 %v1065
      %v1278 = vpop.f32.mrb[0].mxu0
      %v1279 = vadd.f32 %v202, %v1278
      %v1280 = vpop.f32.mrb[0].mxu0
      %1281 = vmatprep.mubr.f32.mxu0 0.0
      %1282 = vmatmul.mubr.f32.gmra.mrb[0].mxu0 %v1068
      %v1283 = vpop.f32.mrb[0].mxu0
      %v1284 = vadd.f32 %v202, %v1283
      %v1285 = vpop.f32.mrb[0].mxu0
      %1286 = vmatprep.mubr.f32.mxu0 0.0
      %1287 = vmatmul.mubr.f32.gmra.mrb[0].mxu0 %v1071
      %v1288 = vpop.f32.mrb[0].mxu0
      %v1289 = vadd.f32 %v202, %v1288
      %v1290 = vpop.f32.mrb[0].mxu0
      %1291 = vmatprep.mubr.f32.mxu0 0.0
      %1292 = vmatmul.mubr.f32.gmra.mrb[0].mxu0 %v1074
      %v1293 = vpop.f32.mrb[0].mxu0
      %v1294 = vadd.f32 %v202, %v1293
      %v1295 = vpop.f32.mrb[0].mxu0
      %1296 = vmatprep.mubr.f32.mxu0 0.0
      %1297 = vmatmul.mubr.f32.gmra.mrb[0].mxu0 %v1077
      %v1298 = vpop.f32.mrb[0].mxu0
      %v1299 = vadd.f32 %v202, %v1298
      %v1300 = vpop.f32.mrb[0].mxu0
      %1301 = vmatprep.mubr.f32.mxu0 0.0
      %1302 = vmatmul.mubr.f32.gmra.mrb[0].mxu0 %v1080
      %v1303 = vpop.f32.mrb[0].mxu0
      %v1304 = vadd.f32 %v202, %v1303
      %v1305 = vpop.f32.mrb[0].mxu0
      %1306 = vdwg.mxu0
      %1307 = vst.msk [vmem:[%s194] sm:$0xff] %vm884, %v1149
      %1308 = vst.msk [vmem:[%s194 + $0x8] sm:$0xff] %vm884, %v1154
      %1309 = vst.msk [vmem:[%s194 + $0x10] sm:$0xff] %vm884, %v1159
      %1310 = vst.msk [vmem:[%s194 + $0x18] sm:$0xff] %vm884, %v1164
      %1311 = vst.msk [vmem:[%s194 + $0x20] sm:$0xff] %vm884, %v1169
      %1312 = vst.msk [vmem:[%s194 + $0x28] sm:$0xff] %vm884, %v1174
      %1313 = vst.msk [vmem:[%s194 + $0x30] sm:$0xff] %vm884, %v1179
      %1314 = vst.msk [vmem:[%s194 + $0x38] sm:$0xff] %vm884, %v1184
      %1315 = vst.msk [vmem:[%s194 + $0x40] sm:$0xff] %vm884, %v1189
      %1316 = vst.msk [vmem:[%s194 + $0x48] sm:$0xff] %vm884, %v1194
      %1317 = vst.msk [vmem:[%s194 + $0x50] sm:$0xff] %vm884, %v1199
      %1318 = vst.msk [vmem:[%s194 + $0x58] sm:$0xff] %vm884, %v1204
      %1319 = vst.msk [vmem:[%s194 + $0x60] sm:$0xff] %vm884, %v1209
      %1320 = vst.msk [vmem:[%s194 + $0x68] sm:$0xff] %vm884, %v1214
      %1321 = vst.msk [vmem:[%s194 + $0x70] sm:$0xff] %vm884, %v1219
      %1322 = vst.msk [vmem:[%s194 + $0x78] sm:$0xff] %vm884, %v1224
      %1323 = vst.msk [vmem:[%s194 + $0x80] sm:$0xff] %vm884, %v1229
      %1324 = vst.msk [vmem:[%s194 + $0x88] sm:$0xff] %vm884, %v1234
      %1325 = vst.msk [vmem:[%s194 + $0x90] sm:$0xff] %vm884, %v1239
      %1326 = vst.msk [vmem:[%s194 + $0x98] sm:$0xff] %vm884, %v1244
      %1327 = vst.msk [vmem:[%s194 + $0xa0] sm:$0xff] %vm884, %v1249
      %1328 = vst.msk [vmem:[%s194 + $0xa8] sm:$0xff] %vm884, %v1254
      %1329 = vst.msk [vmem:[%s194 + $0xb0] sm:$0xff] %vm884, %v1259
      %1330 = vst.msk [vmem:[%s194 + $0xb8] sm:$0xff] %vm884, %v1264
      %1331 = vst.msk [vmem:[%s194 + $0xc0] sm:$0xff] %vm884, %v1269
      %1332 = vst.msk [vmem:[%s194 + $0xc8] sm:$0xff] %vm884, %v1274
      %1333 = vst.msk [vmem:[%s194 + $0xd0] sm:$0xff] %vm884, %v1279
      %1334 = vst.msk [vmem:[%s194 + $0xd8] sm:$0xff] %vm884, %v1284
      %1335 = vst.msk [vmem:[%s194 + $0xe0] sm:$0xff] %vm884, %v1289
      %1336 = vst.msk [vmem:[%s194 + $0xe8] sm:$0xff] %vm884, %v1294
      %1337 = vst.msk [vmem:[%s194 + $0xf0] sm:$0xff] %vm884, %v1299
      %1338 = vst.msk [vmem:[%s194 + $0xf8] sm:$0xff] %vm884, %v1304
      %1371 = vrot.lane.b32.xlu0 %v270, 4
      %v1372 = vpop.permute.xlu0 %1371
      %1373 = vrot.lane.b32.xlu0 %v271, 4
      %v1374 = vpop.permute.xlu0 %1373
      %1375 = vrot.lane.b32.xlu0 %v272, 4
      %v1376 = vpop.permute.xlu0 %1375
      %1377 = vrot.lane.b32.xlu0 %v273, 4
      %v1378 = vpop.permute.xlu0 %1377
      %1379 = vrot.lane.b32.xlu0 %v274, 4
      %v1380 = vpop.permute.xlu0 %1379
      %1381 = vrot.lane.b32.xlu0 %v275, 4
      %v1382 = vpop.permute.xlu0 %1381
      %1383 = vrot.lane.b32.xlu0 %v276, 4
      %v1384 = vpop.permute.xlu0 %1383
      %1385 = vrot.lane.b32.xlu0 %v277, 4
      %v1386 = vpop.permute.xlu0 %1385
      %1387 = vrot.lane.b32.xlu0 %v278, 4
      %v1388 = vpop.permute.xlu0 %1387
      %1389 = vrot.lane.b32.xlu0 %v279, 4
      %v1390 = vpop.permute.xlu0 %1389
      %1391 = vrot.lane.b32.xlu0 %v280, 4
      %v1392 = vpop.permute.xlu0 %1391
      %1393 = vrot.lane.b32.xlu0 %v281, 4
      %v1394 = vpop.permute.xlu0 %1393
      %1395 = vrot.lane.b32.xlu0 %v282, 4
      %v1396 = vpop.permute.xlu0 %1395
      %1397 = vrot.lane.b32.xlu0 %v283, 4
      %v1398 = vpop.permute.xlu0 %1397
      %1399 = vrot.lane.b32.xlu0 %v284, 4
      %v1400 = vpop.permute.xlu0 %1399
      %1401 = vrot.lane.b32.xlu0 %v285, 4
      %v1402 = vpop.permute.xlu0 %1401
      %1403 = vrot.lane.b32.xlu0 %v286, 4
      %v1404 = vpop.permute.xlu0 %1403
      %1405 = vrot.lane.b32.xlu0 %v287, 4
      %v1406 = vpop.permute.xlu0 %1405
      %1407 = vrot.lane.b32.xlu0 %v288, 4
      %v1408 = vpop.permute.xlu0 %1407
      %1409 = vrot.lane.b32.xlu0 %v289, 4
      %v1410 = vpop.permute.xlu0 %1409
      %1411 = vrot.lane.b32.xlu0 %v290, 4
      %v1412 = vpop.permute.xlu0 %1411
      %1413 = vrot.lane.b32.xlu0 %v291, 4
      %v1414 = vpop.permute.xlu0 %1413
      %1415 = vrot.lane.b32.xlu0 %v292, 4
      %v1416 = vpop.permute.xlu0 %1415
      %1417 = vrot.lane.b32.xlu0 %v293, 4
      %v1418 = vpop.permute.xlu0 %1417
      %1419 = vrot.lane.b32.xlu0 %v294, 4
      %v1420 = vpop.permute.xlu0 %1419
      %1421 = vrot.lane.b32.xlu0 %v295, 4
      %v1422 = vpop.permute.xlu0 %1421
      %1423 = vrot.lane.b32.xlu0 %v296, 4
      %v1424 = vpop.permute.xlu0 %1423
      %1425 = vrot.lane.b32.xlu0 %v297, 4
      %v1426 = vpop.permute.xlu0 %1425
      %1427 = vrot.lane.b32.xlu0 %v298, 4
      %v1428 = vpop.permute.xlu0 %1427
      %1429 = vrot.lane.b32.xlu0 %v299, 4
      %v1430 = vpop.permute.xlu0 %1429
      %1431 = vrot.lane.b32.xlu0 %v300, 4
      %v1432 = vpop.permute.xlu0 %1431
      %1433 = vrot.lane.b32.xlu0 %v301, 4
      %v1434 = vpop.permute.xlu0 %1433
      %1467 = vrot.lane.b32.xlu0 %v337, 8
      %v1468 = vpop.permute.xlu0 %1467
      %1469 = vrot.lane.b32.xlu0 %v338, 8
      %v1470 = vpop.permute.xlu0 %1469
      %1471 = vrot.lane.b32.xlu0 %v339, 8
      %v1472 = vpop.permute.xlu0 %1471
      %1473 = vrot.lane.b32.xlu0 %v340, 8
      %v1474 = vpop.permute.xlu0 %1473
      %1475 = vrot.lane.b32.xlu0 %v341, 8
      %v1476 = vpop.permute.xlu0 %1475
      %1477 = vrot.lane.b32.xlu0 %v342, 8
      %v1478 = vpop.permute.xlu0 %1477
      %1479 = vrot.lane.b32.xlu0 %v343, 8
      %v1480 = vpop.permute.xlu0 %1479
      %1481 = vrot.lane.b32.xlu0 %v344, 8
      %v1482 = vpop.permute.xlu0 %1481
      %1483 = vrot.lane.b32.xlu0 %v345, 8
      %v1484 = vpop.permute.xlu0 %1483
      %1485 = vrot.lane.b32.xlu0 %v346, 8
      %v1486 = vpop.permute.xlu0 %1485
      %1487 = vrot.lane.b32.xlu0 %v347, 8
      %v1488 = vpop.permute.xlu0 %1487
      %1489 = vrot.lane.b32.xlu0 %v348, 8
      %v1490 = vpop.permute.xlu0 %1489
      %1491 = vrot.lane.b32.xlu0 %v349, 8
      %v1492 = vpop.permute.xlu0 %1491
      %1493 = vrot.lane.b32.xlu0 %v350, 8
      %v1494 = vpop.permute.xlu0 %1493
      %1495 = vrot.lane.b32.xlu0 %v351, 8
      %v1496 = vpop.permute.xlu0 %1495
      %1497 = vrot.lane.b32.xlu0 %v352, 8
      %v1498 = vpop.permute.xlu0 %1497
      %1499 = vrot.lane.b32.xlu0 %v353, 8
      %v1500 = vpop.permute.xlu0 %1499
      %1501 = vrot.lane.b32.xlu0 %v354, 8
      %v1502 = vpop.permute.xlu0 %1501
      %1503 = vrot.lane.b32.xlu0 %v355, 8
      %v1504 = vpop.permute.xlu0 %1503
      %1505 = vrot.lane.b32.xlu0 %v356, 8
      %v1506 = vpop.permute.xlu0 %1505
      %1507 = vrot.lane.b32.xlu0 %v357, 8
      %v1508 = vpop.permute.xlu0 %1507
      %1509 = vrot.lane.b32.xlu0 %v358, 8
      %v1510 = vpop.permute.xlu0 %1509
      %1511 = vrot.lane.b32.xlu0 %v359, 8
      %v1512 = vpop.permute.xlu0 %1511
      %1513 = vrot.lane.b32.xlu0 %v360, 8
      %v1514 = vpop.permute.xlu0 %1513
      %1515 = vrot.lane.b32.xlu0 %v361, 8
      %v1516 = vpop.permute.xlu0 %1515
      %1517 = vrot.lane.b32.xlu0 %v362, 8
      %v1518 = vpop.permute.xlu0 %1517
      %1519 = vrot.lane.b32.xlu0 %v363, 8
      %v1520 = vpop.permute.xlu0 %1519
      %1521 = vrot.lane.b32.xlu0 %v364, 8
      %v1522 = vpop.permute.xlu0 %1521
      %1523 = vrot.lane.b32.xlu0 %v365, 8
      %v1524 = vpop.permute.xlu0 %1523
      %1525 = vrot.lane.b32.xlu0 %v366, 8
      %v1526 = vpop.permute.xlu0 %1525
      %1527 = vrot.lane.b32.xlu0 %v367, 8
      %v1528 = vpop.permute.xlu0 %1527
      %1529 = vrot.lane.b32.xlu0 %v368, 8
      %v1530 = vpop.permute.xlu0 %1529
      %1595 = vrot.lane.b32.xlu0 %v369, 12
      %v1596 = vpop.permute.xlu0 %1595
      %1597 = vrot.lane.b32.xlu0 %v370, 12
      %v1598 = vpop.permute.xlu0 %1597
      %1599 = vrot.lane.b32.xlu0 %v371, 12
      %v1600 = vpop.permute.xlu0 %1599
      %1601 = vrot.lane.b32.xlu0 %v372, 12
      %v1602 = vpop.permute.xlu0 %1601
      %1603 = vrot.lane.b32.xlu0 %v373, 12
      %v1604 = vpop.permute.xlu0 %1603
      %1605 = vrot.lane.b32.xlu0 %v374, 12
      %v1606 = vpop.permute.xlu0 %1605
      %1607 = vrot.lane.b32.xlu0 %v375, 12
      %v1608 = vpop.permute.xlu0 %1607
      %1609 = vrot.lane.b32.xlu0 %v376, 12
      %v1610 = vpop.permute.xlu0 %1609
      %1611 = vrot.lane.b32.xlu0 %v377, 12
      %v1612 = vpop.permute.xlu0 %1611
      %1613 = vrot.lane.b32.xlu0 %v378, 12
      %v1614 = vpop.permute.xlu0 %1613
      %1615 = vrot.lane.b32.xlu0 %v379, 12
      %v1616 = vpop.permute.xlu0 %1615
      %1617 = vrot.lane.b32.xlu0 %v380, 12
      %v1618 = vpop.permute.xlu0 %1617
      %1619 = vrot.lane.b32.xlu0 %v381, 12
      %v1620 = vpop.permute.xlu0 %1619
      %1621 = vrot.lane.b32.xlu0 %v382, 12
      %v1622 = vpop.permute.xlu0 %1621
      %1623 = vrot.lane.b32.xlu0 %v383, 12
      %v1624 = vpop.permute.xlu0 %1623
      %1625 = vrot.lane.b32.xlu0 %v384, 12
      %v1626 = vpop.permute.xlu0 %1625
      %1627 = vrot.lane.b32.xlu0 %v385, 12
      %v1628 = vpop.permute.xlu0 %1627
      %1629 = vrot.lane.b32.xlu0 %v386, 12
      %v1630 = vpop.permute.xlu0 %1629
      %1631 = vrot.lane.b32.xlu0 %v387, 12
      %v1632 = vpop.permute.xlu0 %1631
      %1633 = vrot.lane.b32.xlu0 %v388, 12
      %v1634 = vpop.permute.xlu0 %1633
      %1635 = vrot.lane.b32.xlu0 %v389, 12
      %v1636 = vpop.permute.xlu0 %1635
      %1637 = vrot.lane.b32.xlu0 %v390, 12
      %v1638 = vpop.permute.xlu0 %1637
      %1639 = vrot.lane.b32.xlu0 %v391, 12
      %v1640 = vpop.permute.xlu0 %1639
      %1641 = vrot.lane.b32.xlu0 %v392, 12
      %v1642 = vpop.permute.xlu0 %1641
      %1643 = vrot.lane.b32.xlu0 %v393, 12
      %v1644 = vpop.permute.xlu0 %1643
      %1645 = vrot.lane.b32.xlu0 %v394, 12
      %v1646 = vpop.permute.xlu0 %1645
      %1647 = vrot.lane.b32.xlu0 %v395, 12
      %v1648 = vpop.permute.xlu0 %1647
      %1649 = vrot.lane.b32.xlu0 %v396, 12
      %v1650 = vpop.permute.xlu0 %1649
      %1651 = vrot.lane.b32.xlu0 %v397, 12
      %v1652 = vpop.permute.xlu0 %1651
      %1653 = vrot.lane.b32.xlu0 %v398, 12
      %v1654 = vpop.permute.xlu0 %1653
      %1655 = vrot.lane.b32.xlu0 %v399, 12
      %v1656 = vpop.permute.xlu0 %1655
      %1657 = vrot.lane.b32.xlu0 %v400, 12
      %v1658 = vpop.permute.xlu0 %1657
      %v1691 = vsel %vm884, %v238, %v1372
      %v1692 = vsel %vm884, %v239, %v1374
      %v1693 = vsel %vm884, %v240, %v1376
      %v1694 = vsel %vm884, %v241, %v1378
      %v1695 = vsel %vm884, %v242, %v1380
      %v1696 = vsel %vm884, %v243, %v1382
      %v1697 = vsel %vm884, %v244, %v1384
      %v1698 = vsel %vm884, %v245, %v1386
      %v1699 = vsel %vm884, %v246, %v1388
      %v1700 = vsel %vm884, %v247, %v1390
      %v1701 = vsel %vm884, %v248, %v1392
      %v1702 = vsel %vm884, %v249, %v1394
      %v1703 = vsel %vm884, %v250, %v1396
      %v1704 = vsel %vm884, %v251, %v1398
      %v1705 = vsel %vm884, %v252, %v1400
      %v1706 = vsel %vm884, %v253, %v1402
      %v1707 = vsel %vm884, %v254, %v1404
      %v1708 = vsel %vm884, %v255, %v1406
      %v1709 = vsel %vm884, %v256, %v1408
      %v1710 = vsel %vm884, %v257, %v1410
      %v1711 = vsel %vm884, %v258, %v1412
      %v1712 = vsel %vm884, %v259, %v1414
      %v1713 = vsel %vm884, %v260, %v1416
      %v1714 = vsel %vm884, %v261, %v1418
      %v1715 = vsel %vm884, %v262, %v1420
      %v1716 = vsel %vm884, %v263, %v1422
      %v1717 = vsel %vm884, %v264, %v1424
      %v1718 = vsel %vm884, %v265, %v1426
      %v1719 = vsel %vm884, %v266, %v1428
      %v1720 = vsel %vm884, %v267, %v1430
      %v1721 = vsel %vm884, %v268, %v1432
      %v1722 = vsel %vm884, %v269, %v1434
      %v1723 = vsel %vm917, %v1691, %v1468
      %v1724 = vsel %vm917, %v1692, %v1470
      %v1725 = vsel %vm917, %v1693, %v1472
      %v1726 = vsel %vm917, %v1694, %v1474
      %v1727 = vsel %vm917, %v1695, %v1476
      %v1728 = vsel %vm917, %v1696, %v1478
      %v1729 = vsel %vm917, %v1697, %v1480
      %v1730 = vsel %vm917, %v1698, %v1482
      %v1731 = vsel %vm917, %v1699, %v1484
      %v1732 = vsel %vm917, %v1700, %v1486
      %v1733 = vsel %vm917, %v1701, %v1488
      %v1734 = vsel %vm917, %v1702, %v1490
      %v1735 = vsel %vm917, %v1703, %v1492
      %v1736 = vsel %vm917, %v1704, %v1494
      %v1737 = vsel %vm917, %v1705, %v1496
      %v1738 = vsel %vm917, %v1706, %v1498
      %v1739 = vsel %vm917, %v1707, %v1500
      %v1740 = vsel %vm917, %v1708, %v1502
      %v1741 = vsel %vm917, %v1709, %v1504
      %v1742 = vsel %vm917, %v1710, %v1506
      %v1743 = vsel %vm917, %v1711, %v1508
      %v1744 = vsel %vm917, %v1712, %v1510
      %v1745 = vsel %vm917, %v1713, %v1512
      %v1746 = vsel %vm917, %v1714, %v1514
      %v1747 = vsel %vm917, %v1715, %v1516
      %v1748 = vsel %vm917, %v1716, %v1518
      %v1749 = vsel %vm917, %v1717, %v1520
      %v1750 = vsel %vm917, %v1718, %v1522
      %v1751 = vsel %vm917, %v1719, %v1524
      %v1752 = vsel %vm917, %v1720, %v1526
      %v1753 = vsel %vm917, %v1721, %v1528
      %v1754 = vsel %vm917, %v1722, %v1530
      %v1755 = vsel %vm950, %v1723, %v1596
      %v1756 = vsel %vm950, %v1724, %v1598
      %v1757 = vsel %vm950, %v1725, %v1600
      %v1758 = vsel %vm950, %v1726, %v1602
      %v1759 = vsel %vm950, %v1727, %v1604
      %v1760 = vsel %vm950, %v1728, %v1606
      %v1761 = vsel %vm950, %v1729, %v1608
      %v1762 = vsel %vm950, %v1730, %v1610
      %v1763 = vsel %vm950, %v1731, %v1612
      %v1764 = vsel %vm950, %v1732, %v1614
      %v1765 = vsel %vm950, %v1733, %v1616
      %v1766 = vsel %vm950, %v1734, %v1618
      %v1767 = vsel %vm950, %v1735, %v1620
      %v1768 = vsel %vm950, %v1736, %v1622
      %v1769 = vsel %vm950, %v1737, %v1624
      %v1770 = vsel %vm950, %v1738, %v1626
      %v1771 = vsel %vm950, %v1739, %v1628
      %v1772 = vsel %vm950, %v1740, %v1630
      %v1773 = vsel %vm950, %v1741, %v1632
      %v1774 = vsel %vm950, %v1742, %v1634
      %v1775 = vsel %vm950, %v1743, %v1636
      %v1776 = vsel %vm950, %v1744, %v1638
      %v1777 = vsel %vm950, %v1745, %v1640
      %v1778 = vsel %vm950, %v1746, %v1642
      %v1779 = vsel %vm950, %v1747, %v1644
      %v1780 = vsel %vm950, %v1748, %v1646
      %v1781 = vsel %vm950, %v1749, %v1648
      %v1782 = vsel %vm950, %v1750, %v1650
      %v1783 = vsel %vm950, %v1751, %v1652
      %v1784 = vsel %vm950, %v1752, %v1654
      %v1785 = vsel %vm950, %v1753, %v1656
      %v1786 = vsel %vm950, %v1754, %v1658
      %s1787 = scalar_lea.vmem %s1, 16
      %v1788 = vld [vmem:[%s1787] sm:$0xff]
      %v1789 = vld [vmem:[%s1787 + $0x8] sm:$0xff]
      %v1791 = vsel %vm985, %v1755, 0
      %v1794 = vsel %vm985, %v1756, 0
      %v1797 = vsel %vm985, %v1757, 0
      %v1800 = vsel %vm985, %v1758, 0
      %v1803 = vsel %vm985, %v1759, 0
      %v1806 = vsel %vm985, %v1760, 0
      %v1809 = vsel %vm985, %v1761, 0
      %v1812 = vsel %vm985, %v1762, 0
      %v1815 = vsel %vm985, %v1763, 0
      %v1818 = vsel %vm985, %v1764, 0
      %v1821 = vsel %vm985, %v1765, 0
      %v1824 = vsel %vm985, %v1766, 0
      %v1827 = vsel %vm985, %v1767, 0
      %v1830 = vsel %vm985, %v1768, 0
      %v1833 = vsel %vm985, %v1769, 0
      %v1836 = vsel %vm985, %v1770, 0
      %v1839 = vsel %vm985, %v1771, 0
      %v1842 = vsel %vm985, %v1772, 0
      %v1845 = vsel %vm985, %v1773, 0
      %v1848 = vsel %vm985, %v1774, 0
      %v1851 = vsel %vm985, %v1775, 0
      %v1854 = vsel %vm985, %v1776, 0
      %v1857 = vsel %vm985, %v1777, 0
      %v1860 = vsel %vm985, %v1778, 0
      %v1863 = vsel %vm985, %v1779, 0
      %v1866 = vsel %vm985, %v1780, 0
      %v1869 = vsel %vm985, %v1781, 0
      %v1872 = vsel %vm985, %v1782, 0
      %v1875 = vsel %vm985, %v1783, 0
      %v1878 = vsel %vm985, %v1784, 0
      %v1881 = vsel %vm985, %v1785, 0
      %v1884 = vsel %vm985, %v1786, 0
      %1886 = vmatprep.subr.mxu0 0.0
      %1887 = vmatpush1.msra.mxu0 %v1788
      %1888 = vmatprep.subr.mxu0 0.0
      %1889 = vmatpush1.msra.mxu0 %v1789
      %1890 = vmatprep.subr.mxu0 0.0
      %1891 = vmatpush1.msra.mxu0 0.0
      %1892 = vmatprep.subr.mxu0 0.0
      %1893 = vmatpush1.msra.mxu0 0.0
      %1894 = vmatprep.subr.mxu0 0.0
      %1895 = vmatpush1.msra.mxu0 0.0
      %1896 = vmatprep.subr.mxu0 0.0
      %1897 = vmatpush1.msra.mxu0 0.0
      %1898 = vmatprep.subr.mxu0 0.0
      %1899 = vmatpush1.msra.mxu0 0.0
      %1900 = vmatprep.subr.mxu0 0.0
      %1901 = vmatpush1.msra.mxu0 0.0
      %1902 = vmatprep.subr.mxu0 0.0
      %1903 = vmatpush1.msra.mxu0 0.0
      %1904 = vmatprep.subr.mxu0 0.0
      %1905 = vmatpush1.msra.mxu0 0.0
      %1906 = vmatprep.subr.mxu0 0.0
      %1907 = vmatpush1.msra.mxu0 0.0
      %1908 = vmatprep.subr.mxu0 0.0
      %1909 = vmatpush1.msra.mxu0 0.0
      %1910 = vmatprep.subr.mxu0 0.0
      %1911 = vmatpush1.msra.mxu0 0.0
      %1912 = vmatprep.subr.mxu0 0.0
      %1913 = vmatpush1.msra.mxu0 0.0
      %1914 = vmatprep.subr.mxu0 0.0
      %1915 = vmatpush1.msra.mxu0 0.0
      %1916 = vmatprep.subr.mxu0 0.0
      %1917 = vmatpush1.msra.mxu0 0.0
      %1918 = vmatprep.subr.mxu0 0.0
      %1919 = vmatpush1.msra.mxu0 0.0
      %1920 = vmatprep.subr.mxu0 0.0
      %1921 = vmatpush1.msra.mxu0 0.0
      %1922 = vmatprep.subr.mxu0 0.0
      %1923 = vmatpush1.msra.mxu0 0.0
      %1924 = vmatprep.subr.mxu0 0.0
      %1925 = vmatpush1.msra.mxu0 0.0
      %1926 = vmatprep.subr.mxu0 0.0
      %1927 = vmatpush1.msra.mxu0 0.0
      %1928 = vmatprep.subr.mxu0 0.0
      %1929 = vmatpush1.msra.mxu0 0.0
      %1930 = vmatprep.subr.mxu0 0.0
      %1931 = vmatpush1.msra.mxu0 0.0
      %1932 = vmatprep.subr.mxu0 0.0
      %1933 = vmatpush1.msra.mxu0 0.0
      %1934 = vmatprep.subr.mxu0 0.0
      %1935 = vmatpush1.msra.mxu0 0.0
      %1936 = vmatprep.subr.mxu0 0.0
      %1937 = vmatpush1.msra.mxu0 0.0
      %1938 = vmatprep.subr.mxu0 0.0
      %1939 = vmatpush1.msra.mxu0 0.0
      %1940 = vmatprep.subr.mxu0 0.0
      %1941 = vmatpush1.msra.mxu0 0.0
      %1942 = vmatprep.subr.mxu0 0.0
      %1943 = vmatpush1.msra.mxu0 0.0
      %1944 = vmatprep.subr.mxu0 0.0
      %1945 = vmatpush1.msra.mxu0 0.0
      %1946 = vmatprep.subr.mxu0 0.0
      %1947 = vmatpush1.msra.mxu0 0.0
      %1948 = vmatprep.subr.mxu0 0.0
      %1949 = vmatpush1.msra.mxu0 0.0
      %1950 = vmatprep.mubr.f32.mxu0 0.0
      %1951 = vmatmul.mubr.f32.gmra.mrb[0].mxu0 %v1791
      %v1952 = vpop.f32.mrb[0].mxu0
      %v1953 = vadd.f32 %v202, %v1952
      %v1954 = vpop.f32.mrb[0].mxu0
      %1955 = vmatprep.mubr.f32.mxu0 0.0
      %1956 = vmatmul.mubr.f32.gmra.mrb[0].mxu0 %v1794
      %v1957 = vpop.f32.mrb[0].mxu0
      %v1958 = vadd.f32 %v202, %v1957
      %v1959 = vpop.f32.mrb[0].mxu0
      %1960 = vmatprep.mubr.f32.mxu0 0.0
      %1961 = vmatmul.mubr.f32.gmra.mrb[0].mxu0 %v1797
      %v1962 = vpop.f32.mrb[0].mxu0
      %v1963 = vadd.f32 %v202, %v1962
      %v1964 = vpop.f32.mrb[0].mxu0
      %1965 = vmatprep.mubr.f32.mxu0 0.0
      %1966 = vmatmul.mubr.f32.gmra.mrb[0].mxu0 %v1800
      %v1967 = vpop.f32.mrb[0].mxu0
      %v1968 = vadd.f32 %v202, %v1967
      %v1969 = vpop.f32.mrb[0].mxu0
      %1970 = vmatprep.mubr.f32.mxu0 0.0
      %1971 = vmatmul.mubr.f32.gmra.mrb[0].mxu0 %v1803
      %v1972 = vpop.f32.mrb[0].mxu0
      %v1973 = vadd.f32 %v202, %v1972
      %v1974 = vpop.f32.mrb[0].mxu0
      %1975 = vmatprep.mubr.f32.mxu0 0.0
      %1976 = vmatmul.mubr.f32.gmra.mrb[0].mxu0 %v1806
      %v1977 = vpop.f32.mrb[0].mxu0
      %v1978 = vadd.f32 %v202, %v1977
      %v1979 = vpop.f32.mrb[0].mxu0
      %1980 = vmatprep.mubr.f32.mxu0 0.0
      %1981 = vmatmul.mubr.f32.gmra.mrb[0].mxu0 %v1809
      %v1982 = vpop.f32.mrb[0].mxu0
      %v1983 = vadd.f32 %v202, %v1982
      %v1984 = vpop.f32.mrb[0].mxu0
      %1985 = vmatprep.mubr.f32.mxu0 0.0
      %1986 = vmatmul.mubr.f32.gmra.mrb[0].mxu0 %v1812
      %v1987 = vpop.f32.mrb[0].mxu0
      %v1988 = vadd.f32 %v202, %v1987
      %v1989 = vpop.f32.mrb[0].mxu0
      %1990 = vmatprep.mubr.f32.mxu0 0.0
      %1991 = vmatmul.mubr.f32.gmra.mrb[0].mxu0 %v1815
      %v1992 = vpop.f32.mrb[0].mxu0
      %v1993 = vadd.f32 %v202, %v1992
      %v1994 = vpop.f32.mrb[0].mxu0
      %1995 = vmatprep.mubr.f32.mxu0 0.0
      %1996 = vmatmul.mubr.f32.gmra.mrb[0].mxu0 %v1818
      %v1997 = vpop.f32.mrb[0].mxu0
      %v1998 = vadd.f32 %v202, %v1997
      %v1999 = vpop.f32.mrb[0].mxu0
      %2000 = vmatprep.mubr.f32.mxu0 0.0
      %2001 = vmatmul.mubr.f32.gmra.mrb[0].mxu0 %v1821
      %v2002 = vpop.f32.mrb[0].mxu0
      %v2003 = vadd.f32 %v202, %v2002
      %v2004 = vpop.f32.mrb[0].mxu0
      %2005 = vmatprep.mubr.f32.mxu0 0.0
      %2006 = vmatmul.mubr.f32.gmra.mrb[0].mxu0 %v1824
      %v2007 = vpop.f32.mrb[0].mxu0
      %v2008 = vadd.f32 %v202, %v2007
      %v2009 = vpop.f32.mrb[0].mxu0
      %2010 = vmatprep.mubr.f32.mxu0 0.0
      %2011 = vmatmul.mubr.f32.gmra.mrb[0].mxu0 %v1827
      %v2012 = vpop.f32.mrb[0].mxu0
      %v2013 = vadd.f32 %v202, %v2012
      %v2014 = vpop.f32.mrb[0].mxu0
      %2015 = vmatprep.mubr.f32.mxu0 0.0
      %2016 = vmatmul.mubr.f32.gmra.mrb[0].mxu0 %v1830
      %v2017 = vpop.f32.mrb[0].mxu0
      %v2018 = vadd.f32 %v202, %v2017
      %v2019 = vpop.f32.mrb[0].mxu0
      %2020 = vmatprep.mubr.f32.mxu0 0.0
      %2021 = vmatmul.mubr.f32.gmra.mrb[0].mxu0 %v1833
      %v2022 = vpop.f32.mrb[0].mxu0
      %v2023 = vadd.f32 %v202, %v2022
      %v2024 = vpop.f32.mrb[0].mxu0
      %2025 = vmatprep.mubr.f32.mxu0 0.0
      %2026 = vmatmul.mubr.f32.gmra.mrb[0].mxu0 %v1836
      %v2027 = vpop.f32.mrb[0].mxu0
      %v2028 = vadd.f32 %v202, %v2027
      %v2029 = vpop.f32.mrb[0].mxu0
      %2030 = vmatprep.mubr.f32.mxu0 0.0
      %2031 = vmatmul.mubr.f32.gmra.mrb[0].mxu0 %v1839
      %v2032 = vpop.f32.mrb[0].mxu0
      %v2033 = vadd.f32 %v202, %v2032
      %v2034 = vpop.f32.mrb[0].mxu0
      %2035 = vmatprep.mubr.f32.mxu0 0.0
      %2036 = vmatmul.mubr.f32.gmra.mrb[0].mxu0 %v1842
      %v2037 = vpop.f32.mrb[0].mxu0
      %v2038 = vadd.f32 %v202, %v2037
      %v2039 = vpop.f32.mrb[0].mxu0
      %2040 = vmatprep.mubr.f32.mxu0 0.0
      %2041 = vmatmul.mubr.f32.gmra.mrb[0].mxu0 %v1845
      %v2042 = vpop.f32.mrb[0].mxu0
      %v2043 = vadd.f32 %v202, %v2042
      %v2044 = vpop.f32.mrb[0].mxu0
      %2045 = vmatprep.mubr.f32.mxu0 0.0
      %2046 = vmatmul.mubr.f32.gmra.mrb[0].mxu0 %v1848
      %v2047 = vpop.f32.mrb[0].mxu0
      %v2048 = vadd.f32 %v202, %v2047
      %v2049 = vpop.f32.mrb[0].mxu0
      %2050 = vmatprep.mubr.f32.mxu0 0.0
      %2051 = vmatmul.mubr.f32.gmra.mrb[0].mxu0 %v1851
      %v2052 = vpop.f32.mrb[0].mxu0
      %v2053 = vadd.f32 %v202, %v2052
      %v2054 = vpop.f32.mrb[0].mxu0
      %2055 = vmatprep.mubr.f32.mxu0 0.0
      %2056 = vmatmul.mubr.f32.gmra.mrb[0].mxu0 %v1854
      %v2057 = vpop.f32.mrb[0].mxu0
      %v2058 = vadd.f32 %v202, %v2057
      %v2059 = vpop.f32.mrb[0].mxu0
      %2060 = vmatprep.mubr.f32.mxu0 0.0
      %2061 = vmatmul.mubr.f32.gmra.mrb[0].mxu0 %v1857
      %v2062 = vpop.f32.mrb[0].mxu0
      %v2063 = vadd.f32 %v202, %v2062
      %v2064 = vpop.f32.mrb[0].mxu0
      %2065 = vmatprep.mubr.f32.mxu0 0.0
      %2066 = vmatmul.mubr.f32.gmra.mrb[0].mxu0 %v1860
      %v2067 = vpop.f32.mrb[0].mxu0
      %v2068 = vadd.f32 %v202, %v2067
      %v2069 = vpop.f32.mrb[0].mxu0
      %2070 = vmatprep.mubr.f32.mxu0 0.0
      %2071 = vmatmul.mubr.f32.gmra.mrb[0].mxu0 %v1863
      %v2072 = vpop.f32.mrb[0].mxu0
      %v2073 = vadd.f32 %v202, %v2072
      %v2074 = vpop.f32.mrb[0].mxu0
      %2075 = vmatprep.mubr.f32.mxu0 0.0
      %2076 = vmatmul.mubr.f32.gmra.mrb[0].mxu0 %v1866
      %v2077 = vpop.f32.mrb[0].mxu0
      %v2078 = vadd.f32 %v202, %v2077
      %v2079 = vpop.f32.mrb[0].mxu0
      %2080 = vmatprep.mubr.f32.mxu0 0.0
      %2081 = vmatmul.mubr.f32.gmra.mrb[0].mxu0 %v1869
      %v2082 = vpop.f32.mrb[0].mxu0
      %v2083 = vadd.f32 %v202, %v2082
      %v2084 = vpop.f32.mrb[0].mxu0
      %2085 = vmatprep.mubr.f32.mxu0 0.0
      %2086 = vmatmul.mubr.f32.gmra.mrb[0].mxu0 %v1872
      %v2087 = vpop.f32.mrb[0].mxu0
      %v2088 = vadd.f32 %v202, %v2087
      %v2089 = vpop.f32.mrb[0].mxu0
      %2090 = vmatprep.mubr.f32.mxu0 0.0
      %2091 = vmatmul.mubr.f32.gmra.mrb[0].mxu0 %v1875
      %v2092 = vpop.f32.mrb[0].mxu0
      %v2093 = vadd.f32 %v202, %v2092
      %v2094 = vpop.f32.mrb[0].mxu0
      %2095 = vmatprep.mubr.f32.mxu0 0.0
      %2096 = vmatmul.mubr.f32.gmra.mrb[0].mxu0 %v1878
      %v2097 = vpop.f32.mrb[0].mxu0
      %v2098 = vadd.f32 %v202, %v2097
      %v2099 = vpop.f32.mrb[0].mxu0
      %2100 = vmatprep.mubr.f32.mxu0 0.0
      %2101 = vmatmul.mubr.f32.gmra.mrb[0].mxu0 %v1881
      %v2102 = vpop.f32.mrb[0].mxu0
      %v2103 = vadd.f32 %v202, %v2102
      %v2104 = vpop.f32.mrb[0].mxu0
      %2105 = vmatprep.mubr.f32.mxu0 0.0
      %2106 = vmatmul.mubr.f32.gmra.mrb[0].mxu0 %v1884
      %v2107 = vpop.f32.mrb[0].mxu0
      %v2108 = vadd.f32 %v202, %v2107
      %v2109 = vpop.f32.mrb[0].mxu0
      %2110 = vdwg.mxu0
      %s2111 = scalar_lea.vmem %s194, 256
      %2112 = vst.msk [vmem:[%s2111] sm:$0xff] %vm884, %v1953
      %2113 = vst.msk [vmem:[%s2111 + $0x8] sm:$0xff] %vm884, %v1958
      %2114 = vst.msk [vmem:[%s2111 + $0x10] sm:$0xff] %vm884, %v1963
      %2115 = vst.msk [vmem:[%s2111 + $0x18] sm:$0xff] %vm884, %v1968
      %2116 = vst.msk [vmem:[%s2111 + $0x20] sm:$0xff] %vm884, %v1973
      %2117 = vst.msk [vmem:[%s2111 + $0x28] sm:$0xff] %vm884, %v1978
      %2118 = vst.msk [vmem:[%s2111 + $0x30] sm:$0xff] %vm884, %v1983
      %2119 = vst.msk [vmem:[%s2111 + $0x38] sm:$0xff] %vm884, %v1988
      %2120 = vst.msk [vmem:[%s2111 + $0x40] sm:$0xff] %vm884, %v1993
      %2121 = vst.msk [vmem:[%s2111 + $0x48] sm:$0xff] %vm884, %v1998
      %2122 = vst.msk [vmem:[%s2111 + $0x50] sm:$0xff] %vm884, %v2003
      %2123 = vst.msk [vmem:[%s2111 + $0x58] sm:$0xff] %vm884, %v2008
      %2124 = vst.msk [vmem:[%s2111 + $0x60] sm:$0xff] %vm884, %v2013
      %2125 = vst.msk [vmem:[%s2111 + $0x68] sm:$0xff] %vm884, %v2018
      %2126 = vst.msk [vmem:[%s2111 + $0x70] sm:$0xff] %vm884, %v2023
      %2127 = vst.msk [vmem:[%s2111 + $0x78] sm:$0xff] %vm884, %v2028
      %2128 = vst.msk [vmem:[%s2111 + $0x80] sm:$0xff] %vm884, %v2033
      %2129 = vst.msk [vmem:[%s2111 + $0x88] sm:$0xff] %vm884, %v2038
      %2130 = vst.msk [vmem:[%s2111 + $0x90] sm:$0xff] %vm884, %v2043
      %2131 = vst.msk [vmem:[%s2111 + $0x98] sm:$0xff] %vm884, %v2048
      %2132 = vst.msk [vmem:[%s2111 + $0xa0] sm:$0xff] %vm884, %v2053
      %2133 = vst.msk [vmem:[%s2111 + $0xa8] sm:$0xff] %vm884, %v2058
      %2134 = vst.msk [vmem:[%s2111 + $0xb0] sm:$0xff] %vm884, %v2063
      %2135 = vst.msk [vmem:[%s2111 + $0xb8] sm:$0xff] %vm884, %v2068
      %2136 = vst.msk [vmem:[%s2111 + $0xc0] sm:$0xff] %vm884, %v2073
      %2137 = vst.msk [vmem:[%s2111 + $0xc8] sm:$0xff] %vm884, %v2078
      %2138 = vst.msk [vmem:[%s2111 + $0xd0] sm:$0xff] %vm884, %v2083
      %2139 = vst.msk [vmem:[%s2111 + $0xd8] sm:$0xff] %vm884, %v2088
      %2140 = vst.msk [vmem:[%s2111 + $0xe0] sm:$0xff] %vm884, %v2093
      %2141 = vst.msk [vmem:[%s2111 + $0xe8] sm:$0xff] %vm884, %v2098
      %2142 = vst.msk [vmem:[%s2111 + $0xf0] sm:$0xff] %vm884, %v2103
      %2143 = vst.msk [vmem:[%s2111 + $0xf8] sm:$0xff] %vm884, %v2108
      %2144 = vrot.lane.b32.xlu0 %v337, 4
      %v2145 = vpop.permute.xlu0 %2144
      %2146 = vrot.lane.b32.xlu0 %v338, 4
      %v2147 = vpop.permute.xlu0 %2146
      %2148 = vrot.lane.b32.xlu0 %v339, 4
      %v2149 = vpop.permute.xlu0 %2148
      %2150 = vrot.lane.b32.xlu0 %v340, 4
      %v2151 = vpop.permute.xlu0 %2150
      %2152 = vrot.lane.b32.xlu0 %v341, 4
      %v2153 = vpop.permute.xlu0 %2152
      %2154 = vrot.lane.b32.xlu0 %v342, 4
      %v2155 = vpop.permute.xlu0 %2154
      %2156 = vrot.lane.b32.xlu0 %v343, 4
      %v2157 = vpop.permute.xlu0 %2156
      %2158 = vrot.lane.b32.xlu0 %v344, 4
      %v2159 = vpop.permute.xlu0 %2158
      %2160 = vrot.lane.b32.xlu0 %v345, 4
      %v2161 = vpop.permute.xlu0 %2160
      %2162 = vrot.lane.b32.xlu0 %v346, 4
      %v2163 = vpop.permute.xlu0 %2162
      %2164 = vrot.lane.b32.xlu0 %v347, 4
      %v2165 = vpop.permute.xlu0 %2164
      %2166 = vrot.lane.b32.xlu0 %v348, 4
      %v2167 = vpop.permute.xlu0 %2166
      %2168 = vrot.lane.b32.xlu0 %v349, 4
      %v2169 = vpop.permute.xlu0 %2168
      %2170 = vrot.lane.b32.xlu0 %v350, 4
      %v2171 = vpop.permute.xlu0 %2170
      %2172 = vrot.lane.b32.xlu0 %v351, 4
      %v2173 = vpop.permute.xlu0 %2172
      %2174 = vrot.lane.b32.xlu0 %v352, 4
      %v2175 = vpop.permute.xlu0 %2174
      %2176 = vrot.lane.b32.xlu0 %v353, 4
      %v2177 = vpop.permute.xlu0 %2176
      %2178 = vrot.lane.b32.xlu0 %v354, 4
      %v2179 = vpop.permute.xlu0 %2178
      %2180 = vrot.lane.b32.xlu0 %v355, 4
      %v2181 = vpop.permute.xlu0 %2180
      %2182 = vrot.lane.b32.xlu0 %v356, 4
      %v2183 = vpop.permute.xlu0 %2182
      %2184 = vrot.lane.b32.xlu0 %v357, 4
      %v2185 = vpop.permute.xlu0 %2184
      %2186 = vrot.lane.b32.xlu0 %v358, 4
      %v2187 = vpop.permute.xlu0 %2186
      %2188 = vrot.lane.b32.xlu0 %v359, 4
      %v2189 = vpop.permute.xlu0 %2188
      %2190 = vrot.lane.b32.xlu0 %v360, 4
      %v2191 = vpop.permute.xlu0 %2190
      %2192 = vrot.lane.b32.xlu0 %v361, 4
      %v2193 = vpop.permute.xlu0 %2192
      %2194 = vrot.lane.b32.xlu0 %v362, 4
      %v2195 = vpop.permute.xlu0 %2194
      %2196 = vrot.lane.b32.xlu0 %v363, 4
      %v2197 = vpop.permute.xlu0 %2196
      %2198 = vrot.lane.b32.xlu0 %v364, 4
      %v2199 = vpop.permute.xlu0 %2198
      %2200 = vrot.lane.b32.xlu0 %v365, 4
      %v2201 = vpop.permute.xlu0 %2200
      %2202 = vrot.lane.b32.xlu0 %v366, 4
      %v2203 = vpop.permute.xlu0 %2202
      %2204 = vrot.lane.b32.xlu0 %v367, 4
      %v2205 = vpop.permute.xlu0 %2204
      %2206 = vrot.lane.b32.xlu0 %v368, 4
      %v2207 = vpop.permute.xlu0 %2206
      %2272 = vrot.lane.b32.xlu0 %v404, 8
      %v2273 = vpop.permute.xlu0 %2272
      %2274 = vrot.lane.b32.xlu0 %v405, 8
      %v2275 = vpop.permute.xlu0 %2274
      %2276 = vrot.lane.b32.xlu0 %v406, 8
      %v2277 = vpop.permute.xlu0 %2276
      %2278 = vrot.lane.b32.xlu0 %v407, 8
      %v2279 = vpop.permute.xlu0 %2278
      %2280 = vrot.lane.b32.xlu0 %v408, 8
      %v2281 = vpop.permute.xlu0 %2280
      %2282 = vrot.lane.b32.xlu0 %v409, 8
      %v2283 = vpop.permute.xlu0 %2282
      %2284 = vrot.lane.b32.xlu0 %v410, 8
      %v2285 = vpop.permute.xlu0 %2284
      %2286 = vrot.lane.b32.xlu0 %v411, 8
      %v2287 = vpop.permute.xlu0 %2286
      %2288 = vrot.lane.b32.xlu0 %v412, 8
      %v2289 = vpop.permute.xlu0 %2288
      %2290 = vrot.lane.b32.xlu0 %v413, 8
      %v2291 = vpop.permute.xlu0 %2290
      %2292 = vrot.lane.b32.xlu0 %v414, 8
      %v2293 = vpop.permute.xlu0 %2292
      %2294 = vrot.lane.b32.xlu0 %v415, 8
      %v2295 = vpop.permute.xlu0 %2294
      %2296 = vrot.lane.b32.xlu0 %v416, 8
      %v2297 = vpop.permute.xlu0 %2296
      %2298 = vrot.lane.b32.xlu0 %v417, 8
      %v2299 = vpop.permute.xlu0 %2298
      %2300 = vrot.lane.b32.xlu0 %v418, 8
      %v2301 = vpop.permute.xlu0 %2300
      %2302 = vrot.lane.b32.xlu0 %v419, 8
      %v2303 = vpop.permute.xlu0 %2302
      %2304 = vrot.lane.b32.xlu0 %v420, 8
      %v2305 = vpop.permute.xlu0 %2304
      %2306 = vrot.lane.b32.xlu0 %v421, 8
      %v2307 = vpop.permute.xlu0 %2306
      %2308 = vrot.lane.b32.xlu0 %v422, 8
      %v2309 = vpop.permute.xlu0 %2308
      %2310 = vrot.lane.b32.xlu0 %v423, 8
      %v2311 = vpop.permute.xlu0 %2310
      %2312 = vrot.lane.b32.xlu0 %v424, 8
      %v2313 = vpop.permute.xlu0 %2312
      %2314 = vrot.lane.b32.xlu0 %v425, 8
      %v2315 = vpop.permute.xlu0 %2314
      %2316 = vrot.lane.b32.xlu0 %v426, 8
      %v2317 = vpop.permute.xlu0 %2316
      %2318 = vrot.lane.b32.xlu0 %v427, 8
      %v2319 = vpop.permute.xlu0 %2318
      %2320 = vrot.lane.b32.xlu0 %v428, 8
      %v2321 = vpop.permute.xlu0 %2320
      %2322 = vrot.lane.b32.xlu0 %v429, 8
      %v2323 = vpop.permute.xlu0 %2322
      %2324 = vrot.lane.b32.xlu0 %v430, 8
      %v2325 = vpop.permute.xlu0 %2324
      %2326 = vrot.lane.b32.xlu0 %v431, 8
      %v2327 = vpop.permute.xlu0 %2326
      %2328 = vrot.lane.b32.xlu0 %v432, 8
      %v2329 = vpop.permute.xlu0 %2328
      %2330 = vrot.lane.b32.xlu0 %v433, 8
      %v2331 = vpop.permute.xlu0 %2330
      %2332 = vrot.lane.b32.xlu0 %v434, 8
      %v2333 = vpop.permute.xlu0 %2332
      %2334 = vrot.lane.b32.xlu0 %v435, 8
      %v2335 = vpop.permute.xlu0 %2334
      %2400 = vrot.lane.b32.xlu0 %v436, 12
      %v2401 = vpop.permute.xlu0 %2400
      %2402 = vrot.lane.b32.xlu0 %v437, 12
      %v2403 = vpop.permute.xlu0 %2402
      %2404 = vrot.lane.b32.xlu0 %v438, 12
      %v2405 = vpop.permute.xlu0 %2404
      %2406 = vrot.lane.b32.xlu0 %v439, 12
      %v2407 = vpop.permute.xlu0 %2406
      %2408 = vrot.lane.b32.xlu0 %v440, 12
      %v2409 = vpop.permute.xlu0 %2408
      %2410 = vrot.lane.b32.xlu0 %v441, 12
      %v2411 = vpop.permute.xlu0 %2410
      %2412 = vrot.lane.b32.xlu0 %v442, 12
      %v2413 = vpop.permute.xlu0 %2412
      %2414 = vrot.lane.b32.xlu0 %v443, 12
      %v2415 = vpop.permute.xlu0 %2414
      %2416 = vrot.lane.b32.xlu0 %v444, 12
      %v2417 = vpop.permute.xlu0 %2416
      %2418 = vrot.lane.b32.xlu0 %v445, 12
      %v2419 = vpop.permute.xlu0 %2418
      %2420 = vrot.lane.b32.xlu0 %v446, 12
      %v2421 = vpop.permute.xlu0 %2420
      %2422 = vrot.lane.b32.xlu0 %v447, 12
      %v2423 = vpop.permute.xlu0 %2422
      %2424 = vrot.lane.b32.xlu0 %v448, 12
      %v2425 = vpop.permute.xlu0 %2424
      %2426 = vrot.lane.b32.xlu0 %v449, 12
      %v2427 = vpop.permute.xlu0 %2426
      %2428 = vrot.lane.b32.xlu0 %v450, 12
      %v2429 = vpop.permute.xlu0 %2428
      %2430 = vrot.lane.b32.xlu0 %v451, 12
      %v2431 = vpop.permute.xlu0 %2430
      %2432 = vrot.lane.b32.xlu0 %v452, 12
      %v2433 = vpop.permute.xlu0 %2432
      %2434 = vrot.lane.b32.xlu0 %v453, 12
      %v2435 = vpop.permute.xlu0 %2434
      %2436 = vrot.lane.b32.xlu0 %v454, 12
      %v2437 = vpop.permute.xlu0 %2436
      %2438 = vrot.lane.b32.xlu0 %v455, 12
      %v2439 = vpop.permute.xlu0 %2438
      %2440 = vrot.lane.b32.xlu0 %v456, 12
      %v2441 = vpop.permute.xlu0 %2440
      %2442 = vrot.lane.b32.xlu0 %v457, 12
      %v2443 = vpop.permute.xlu0 %2442
      %2444 = vrot.lane.b32.xlu0 %v458, 12
      %v2445 = vpop.permute.xlu0 %2444
      %2446 = vrot.lane.b32.xlu0 %v459, 12
      %v2447 = vpop.permute.xlu0 %2446
      %2448 = vrot.lane.b32.xlu0 %v460, 12
      %v2449 = vpop.permute.xlu0 %2448
      %2450 = vrot.lane.b32.xlu0 %v461, 12
      %v2451 = vpop.permute.xlu0 %2450
      %2452 = vrot.lane.b32.xlu0 %v462, 12
      %v2453 = vpop.permute.xlu0 %2452
      %2454 = vrot.lane.b32.xlu0 %v463, 12
      %v2455 = vpop.permute.xlu0 %2454
      %2456 = vrot.lane.b32.xlu0 %v464, 12
      %v2457 = vpop.permute.xlu0 %2456
      %2458 = vrot.lane.b32.xlu0 %v465, 12
      %v2459 = vpop.permute.xlu0 %2458
      %2460 = vrot.lane.b32.xlu0 %v466, 12
      %v2461 = vpop.permute.xlu0 %2460
      %2462 = vrot.lane.b32.xlu0 %v467, 12
      %v2463 = vpop.permute.xlu0 %2462
      %v2496 = vsel %vm884, %v305, %v2145
      %v2497 = vsel %vm884, %v306, %v2147
      %v2498 = vsel %vm884, %v307, %v2149
      %v2499 = vsel %vm884, %v308, %v2151
      %v2500 = vsel %vm884, %v309, %v2153
      %v2501 = vsel %vm884, %v310, %v2155
      %v2502 = vsel %vm884, %v311, %v2157
      %v2503 = vsel %vm884, %v312, %v2159
      %v2504 = vsel %vm884, %v313, %v2161
      %v2505 = vsel %vm884, %v314, %v2163
      %v2506 = vsel %vm884, %v315, %v2165
      %v2507 = vsel %vm884, %v316, %v2167
      %v2508 = vsel %vm884, %v317, %v2169
      %v2509 = vsel %vm884, %v318, %v2171
      %v2510 = vsel %vm884, %v319, %v2173
      %v2511 = vsel %vm884, %v320, %v2175
      %v2512 = vsel %vm884, %v321, %v2177
      %v2513 = vsel %vm884, %v322, %v2179
      %v2514 = vsel %vm884, %v323, %v2181
      %v2515 = vsel %vm884, %v324, %v2183
      %v2516 = vsel %vm884, %v325, %v2185
      %v2517 = vsel %vm884, %v326, %v2187
      %v2518 = vsel %vm884, %v327, %v2189
      %v2519 = vsel %vm884, %v328, %v2191
      %v2520 = vsel %vm884, %v329, %v2193
      %v2521 = vsel %vm884, %v330, %v2195
      %v2522 = vsel %vm884, %v331, %v2197
      %v2523 = vsel %vm884, %v332, %v2199
      %v2524 = vsel %vm884, %v333, %v2201
      %v2525 = vsel %vm884, %v334, %v2203
      %v2526 = vsel %vm884, %v335, %v2205
      %v2527 = vsel %vm884, %v336, %v2207
      %v2528 = vsel %vm917, %v2496, %v2273
      %v2529 = vsel %vm917, %v2497, %v2275
      %v2530 = vsel %vm917, %v2498, %v2277
      %v2531 = vsel %vm917, %v2499, %v2279
      %v2532 = vsel %vm917, %v2500, %v2281
      %v2533 = vsel %vm917, %v2501, %v2283
      %v2534 = vsel %vm917, %v2502, %v2285
      %v2535 = vsel %vm917, %v2503, %v2287
      %v2536 = vsel %vm917, %v2504, %v2289
      %v2537 = vsel %vm917, %v2505, %v2291
      %v2538 = vsel %vm917, %v2506, %v2293
      %v2539 = vsel %vm917, %v2507, %v2295
      %v2540 = vsel %vm917, %v2508, %v2297
      %v2541 = vsel %vm917, %v2509, %v2299
      %v2542 = vsel %vm917, %v2510, %v2301
      %v2543 = vsel %vm917, %v2511, %v2303
      %v2544 = vsel %vm917, %v2512, %v2305
      %v2545 = vsel %vm917, %v2513, %v2307
      %v2546 = vsel %vm917, %v2514, %v2309
      %v2547 = vsel %vm917, %v2515, %v2311
      %v2548 = vsel %vm917, %v2516, %v2313
      %v2549 = vsel %vm917, %v2517, %v2315
      %v2550 = vsel %vm917, %v2518, %v2317
      %v2551 = vsel %vm917, %v2519, %v2319
      %v2552 = vsel %vm917, %v2520, %v2321
      %v2553 = vsel %vm917, %v2521, %v2323
      %v2554 = vsel %vm917, %v2522, %v2325
      %v2555 = vsel %vm917, %v2523, %v2327
      %v2556 = vsel %vm917, %v2524, %v2329
      %v2557 = vsel %vm917, %v2525, %v2331
      %v2558 = vsel %vm917, %v2526, %v2333
      %v2559 = vsel %vm917, %v2527, %v2335
      %v2560 = vsel %vm950, %v2528, %v2401
      %v2561 = vsel %vm950, %v2529, %v2403
      %v2562 = vsel %vm950, %v2530, %v2405
      %v2563 = vsel %vm950, %v2531, %v2407
      %v2564 = vsel %vm950, %v2532, %v2409
      %v2565 = vsel %vm950, %v2533, %v2411
      %v2566 = vsel %vm950, %v2534, %v2413
      %v2567 = vsel %vm950, %v2535, %v2415
      %v2568 = vsel %vm950, %v2536, %v2417
      %v2569 = vsel %vm950, %v2537, %v2419
      %v2570 = vsel %vm950, %v2538, %v2421
      %v2571 = vsel %vm950, %v2539, %v2423
      %v2572 = vsel %vm950, %v2540, %v2425
      %v2573 = vsel %vm950, %v2541, %v2427
      %v2574 = vsel %vm950, %v2542, %v2429
      %v2575 = vsel %vm950, %v2543, %v2431
      %v2576 = vsel %vm950, %v2544, %v2433
      %v2577 = vsel %vm950, %v2545, %v2435
      %v2578 = vsel %vm950, %v2546, %v2437
      %v2579 = vsel %vm950, %v2547, %v2439
      %v2580 = vsel %vm950, %v2548, %v2441
      %v2581 = vsel %vm950, %v2549, %v2443
      %v2582 = vsel %vm950, %v2550, %v2445
      %v2583 = vsel %vm950, %v2551, %v2447
      %v2584 = vsel %vm950, %v2552, %v2449
      %v2585 = vsel %vm950, %v2553, %v2451
      %v2586 = vsel %vm950, %v2554, %v2453
      %v2587 = vsel %vm950, %v2555, %v2455
      %v2588 = vsel %vm950, %v2556, %v2457
      %v2589 = vsel %vm950, %v2557, %v2459
      %v2590 = vsel %vm950, %v2558, %v2461
      %v2591 = vsel %vm950, %v2559, %v2463
      %s2592 = scalar_lea.vmem %s1, 32
      %v2593 = vld [vmem:[%s2592] sm:$0xff]
      %v2594 = vld [vmem:[%s2592 + $0x8] sm:$0xff]
      %v2596 = vsel %vm985, %v2560, 0
      %v2599 = vsel %vm985, %v2561, 0
      %v2602 = vsel %vm985, %v2562, 0
      %v2605 = vsel %vm985, %v2563, 0
      %v2608 = vsel %vm985, %v2564, 0
      %v2611 = vsel %vm985, %v2565, 0
      %v2614 = vsel %vm985, %v2566, 0
      %v2617 = vsel %vm985, %v2567, 0
      %v2620 = vsel %vm985, %v2568, 0
      %v2623 = vsel %vm985, %v2569, 0
      %v2626 = vsel %vm985, %v2570, 0
      %v2629 = vsel %vm985, %v2571, 0
      %v2632 = vsel %vm985, %v2572, 0
      %v2635 = vsel %vm985, %v2573, 0
      %v2638 = vsel %vm985, %v2574, 0
      %v2641 = vsel %vm985, %v2575, 0
      %v2644 = vsel %vm985, %v2576, 0
      %v2647 = vsel %vm985, %v2577, 0
      %v2650 = vsel %vm985, %v2578, 0
      %v2653 = vsel %vm985, %v2579, 0
      %v2656 = vsel %vm985, %v2580, 0
      %v2659 = vsel %vm985, %v2581, 0
      %v2662 = vsel %vm985, %v2582, 0
      %v2665 = vsel %vm985, %v2583, 0
      %v2668 = vsel %vm985, %v2584, 0
      %v2671 = vsel %vm985, %v2585, 0
      %v2674 = vsel %vm985, %v2586, 0
      %v2677 = vsel %vm985, %v2587, 0
      %v2680 = vsel %vm985, %v2588, 0
      %v2683 = vsel %vm985, %v2589, 0
      %v2686 = vsel %vm985, %v2590, 0
      %v2689 = vsel %vm985, %v2591, 0
      %2691 = vmatprep.subr.mxu0 0.0
      %2692 = vmatpush1.msra.mxu0 %v2593
      %2693 = vmatprep.subr.mxu0 0.0
      %2694 = vmatpush1.msra.mxu0 %v2594
      %2695 = vmatprep.subr.mxu0 0.0
      %2696 = vmatpush1.msra.mxu0 0.0
      %2697 = vmatprep.subr.mxu0 0.0
      %2698 = vmatpush1.msra.mxu0 0.0
      %2699 = vmatprep.subr.mxu0 0.0
      %2700 = vmatpush1.msra.mxu0 0.0
      %2701 = vmatprep.subr.mxu0 0.0
      %2702 = vmatpush1.msra.mxu0 0.0
      %2703 = vmatprep.subr.mxu0 0.0
      %2704 = vmatpush1.msra.mxu0 0.0
      %2705 = vmatprep.subr.mxu0 0.0
      %2706 = vmatpush1.msra.mxu0 0.0
      %2707 = vmatprep.subr.mxu0 0.0
      %2708 = vmatpush1.msra.mxu0 0.0
      %2709 = vmatprep.subr.mxu0 0.0
      %2710 = vmatpush1.msra.mxu0 0.0
      %2711 = vmatprep.subr.mxu0 0.0
      %2712 = vmatpush1.msra.mxu0 0.0
      %2713 = vmatprep.subr.mxu0 0.0
      %2714 = vmatpush1.msra.mxu0 0.0
      %2715 = vmatprep.subr.mxu0 0.0
      %2716 = vmatpush1.msra.mxu0 0.0
      %2717 = vmatprep.subr.mxu0 0.0
      %2718 = vmatpush1.msra.mxu0 0.0
      %2719 = vmatprep.subr.mxu0 0.0
      %2720 = vmatpush1.msra.mxu0 0.0
      %2721 = vmatprep.subr.mxu0 0.0
      %2722 = vmatpush1.msra.mxu0 0.0
      %2723 = vmatprep.subr.mxu0 0.0
      %2724 = vmatpush1.msra.mxu0 0.0
      %2725 = vmatprep.subr.mxu0 0.0
      %2726 = vmatpush1.msra.mxu0 0.0
      %2727 = vmatprep.subr.mxu0 0.0
      %2728 = vmatpush1.msra.mxu0 0.0
      %2729 = vmatprep.subr.mxu0 0.0
      %2730 = vmatpush1.msra.mxu0 0.0
      %2731 = vmatprep.subr.mxu0 0.0
      %2732 = vmatpush1.msra.mxu0 0.0
      %2733 = vmatprep.subr.mxu0 0.0
      %2734 = vmatpush1.msra.mxu0 0.0
      %2735 = vmatprep.subr.mxu0 0.0
      %2736 = vmatpush1.msra.mxu0 0.0
      %2737 = vmatprep.subr.mxu0 0.0
      %2738 = vmatpush1.msra.mxu0 0.0
      %2739 = vmatprep.subr.mxu0 0.0
      %2740 = vmatpush1.msra.mxu0 0.0
      %2741 = vmatprep.subr.mxu0 0.0
      %2742 = vmatpush1.msra.mxu0 0.0
      %2743 = vmatprep.subr.mxu0 0.0
      %2744 = vmatpush1.msra.mxu0 0.0
      %2745 = vmatprep.subr.mxu0 0.0
      %2746 = vmatpush1.msra.mxu0 0.0
      %2747 = vmatprep.subr.mxu0 0.0
      %2748 = vmatpush1.msra.mxu0 0.0
      %2749 = vmatprep.subr.mxu0 0.0
      %2750 = vmatpush1.msra.mxu0 0.0
      %2751 = vmatprep.subr.mxu0 0.0
      %2752 = vmatpush1.msra.mxu0 0.0
      %2753 = vmatprep.subr.mxu0 0.0
      %2754 = vmatpush1.msra.mxu0 0.0
      %2755 = vmatprep.mubr.f32.mxu0 0.0
      %2756 = vmatmul.mubr.f32.gmra.mrb[0].mxu0 %v2596
      %v2757 = vpop.f32.mrb[0].mxu0
      %v2758 = vadd.f32 %v202, %v2757
      %v2759 = vpop.f32.mrb[0].mxu0
      %2760 = vmatprep.mubr.f32.mxu0 0.0
      %2761 = vmatmul.mubr.f32.gmra.mrb[0].mxu0 %v2599
      %v2762 = vpop.f32.mrb[0].mxu0
      %v2763 = vadd.f32 %v202, %v2762
      %v2764 = vpop.f32.mrb[0].mxu0
      %2765 = vmatprep.mubr.f32.mxu0 0.0
      %2766 = vmatmul.mubr.f32.gmra.mrb[0].mxu0 %v2602
      %v2767 = vpop.f32.mrb[0].mxu0
      %v2768 = vadd.f32 %v202, %v2767
      %v2769 = vpop.f32.mrb[0].mxu0
      %2770 = vmatprep.mubr.f32.mxu0 0.0
      %2771 = vmatmul.mubr.f32.gmra.mrb[0].mxu0 %v2605
      %v2772 = vpop.f32.mrb[0].mxu0
      %v2773 = vadd.f32 %v202, %v2772
      %v2774 = vpop.f32.mrb[0].mxu0
      %2775 = vmatprep.mubr.f32.mxu0 0.0
      %2776 = vmatmul.mubr.f32.gmra.mrb[0].mxu0 %v2608
      %v2777 = vpop.f32.mrb[0].mxu0
      %v2778 = vadd.f32 %v202, %v2777
      %v2779 = vpop.f32.mrb[0].mxu0
      %2780 = vmatprep.mubr.f32.mxu0 0.0
      %2781 = vmatmul.mubr.f32.gmra.mrb[0].mxu0 %v2611
      %v2782 = vpop.f32.mrb[0].mxu0
      %v2783 = vadd.f32 %v202, %v2782
      %v2784 = vpop.f32.mrb[0].mxu0
      %2785 = vmatprep.mubr.f32.mxu0 0.0
      %2786 = vmatmul.mubr.f32.gmra.mrb[0].mxu0 %v2614
      %v2787 = vpop.f32.mrb[0].mxu0
      %v2788 = vadd.f32 %v202, %v2787
      %v2789 = vpop.f32.mrb[0].mxu0
      %2790 = vmatprep.mubr.f32.mxu0 0.0
      %2791 = vmatmul.mubr.f32.gmra.mrb[0].mxu0 %v2617
      %v2792 = vpop.f32.mrb[0].mxu0
      %v2793 = vadd.f32 %v202, %v2792
      %v2794 = vpop.f32.mrb[0].mxu0
      %2795 = vmatprep.mubr.f32.mxu0 0.0
      %2796 = vmatmul.mubr.f32.gmra.mrb[0].mxu0 %v2620
      %v2797 = vpop.f32.mrb[0].mxu0
      %v2798 = vadd.f32 %v202, %v2797
      %v2799 = vpop.f32.mrb[0].mxu0
      %2800 = vmatprep.mubr.f32.mxu0 0.0
      %2801 = vmatmul.mubr.f32.gmra.mrb[0].mxu0 %v2623
      %v2802 = vpop.f32.mrb[0].mxu0
      %v2803 = vadd.f32 %v202, %v2802
      %v2804 = vpop.f32.mrb[0].mxu0
      %2805 = vmatprep.mubr.f32.mxu0 0.0
      %2806 = vmatmul.mubr.f32.gmra.mrb[0].mxu0 %v2626
      %v2807 = vpop.f32.mrb[0].mxu0
      %v2808 = vadd.f32 %v202, %v2807
      %v2809 = vpop.f32.mrb[0].mxu0
      %2810 = vmatprep.mubr.f32.mxu0 0.0
      %2811 = vmatmul.mubr.f32.gmra.mrb[0].mxu0 %v2629
      %v2812 = vpop.f32.mrb[0].mxu0
      %v2813 = vadd.f32 %v202, %v2812
      %v2814 = vpop.f32.mrb[0].mxu0
      %2815 = vmatprep.mubr.f32.mxu0 0.0
      %2816 = vmatmul.mubr.f32.gmra.mrb[0].mxu0 %v2632
      %v2817 = vpop.f32.mrb[0].mxu0
      %v2818 = vadd.f32 %v202, %v2817
      %v2819 = vpop.f32.mrb[0].mxu0
      %2820 = vmatprep.mubr.f32.mxu0 0.0
      %2821 = vmatmul.mubr.f32.gmra.mrb[0].mxu0 %v2635
      %v2822 = vpop.f32.mrb[0].mxu0
      %v2823 = vadd.f32 %v202, %v2822
      %v2824 = vpop.f32.mrb[0].mxu0
      %2825 = vmatprep.mubr.f32.mxu0 0.0
      %2826 = vmatmul.mubr.f32.gmra.mrb[0].mxu0 %v2638
      %v2827 = vpop.f32.mrb[0].mxu0
      %v2828 = vadd.f32 %v202, %v2827
      %v2829 = vpop.f32.mrb[0].mxu0
      %2830 = vmatprep.mubr.f32.mxu0 0.0
      %2831 = vmatmul.mubr.f32.gmra.mrb[0].mxu0 %v2641
      %v2832 = vpop.f32.mrb[0].mxu0
      %v2833 = vadd.f32 %v202, %v2832
      %v2834 = vpop.f32.mrb[0].mxu0
      %2835 = vmatprep.mubr.f32.mxu0 0.0
      %2836 = vmatmul.mubr.f32.gmra.mrb[0].mxu0 %v2644
      %v2837 = vpop.f32.mrb[0].mxu0
      %v2838 = vadd.f32 %v202, %v2837
      %v2839 = vpop.f32.mrb[0].mxu0
      %2840 = vmatprep.mubr.f32.mxu0 0.0
      %2841 = vmatmul.mubr.f32.gmra.mrb[0].mxu0 %v2647
      %v2842 = vpop.f32.mrb[0].mxu0
      %v2843 = vadd.f32 %v202, %v2842
      %v2844 = vpop.f32.mrb[0].mxu0
      %2845 = vmatprep.mubr.f32.mxu0 0.0
      %2846 = vmatmul.mubr.f32.gmra.mrb[0].mxu0 %v2650
      %v2847 = vpop.f32.mrb[0].mxu0
      %v2848 = vadd.f32 %v202, %v2847
      %v2849 = vpop.f32.mrb[0].mxu0
      %2850 = vmatprep.mubr.f32.mxu0 0.0
      %2851 = vmatmul.mubr.f32.gmra.mrb[0].mxu0 %v2653
      %v2852 = vpop.f32.mrb[0].mxu0
      %v2853 = vadd.f32 %v202, %v2852
      %v2854 = vpop.f32.mrb[0].mxu0
      %2855 = vmatprep.mubr.f32.mxu0 0.0
      %2856 = vmatmul.mubr.f32.gmra.mrb[0].mxu0 %v2656
      %v2857 = vpop.f32.mrb[0].mxu0
      %v2858 = vadd.f32 %v202, %v2857
      %v2859 = vpop.f32.mrb[0].mxu0
      %2860 = vmatprep.mubr.f32.mxu0 0.0
      %2861 = vmatmul.mubr.f32.gmra.mrb[0].mxu0 %v2659
      %v2862 = vpop.f32.mrb[0].mxu0
      %v2863 = vadd.f32 %v202, %v2862
      %v2864 = vpop.f32.mrb[0].mxu0
      %2865 = vmatprep.mubr.f32.mxu0 0.0
      %2866 = vmatmul.mubr.f32.gmra.mrb[0].mxu0 %v2662
      %v2867 = vpop.f32.mrb[0].mxu0
      %v2868 = vadd.f32 %v202, %v2867
      %v2869 = vpop.f32.mrb[0].mxu0
      %2870 = vmatprep.mubr.f32.mxu0 0.0
      %2871 = vmatmul.mubr.f32.gmra.mrb[0].mxu0 %v2665
      %v2872 = vpop.f32.mrb[0].mxu0
      %v2873 = vadd.f32 %v202, %v2872
      %v2874 = vpop.f32.mrb[0].mxu0
      %2875 = vmatprep.mubr.f32.mxu0 0.0
      %2876 = vmatmul.mubr.f32.gmra.mrb[0].mxu0 %v2668
      %v2877 = vpop.f32.mrb[0].mxu0
      %v2878 = vadd.f32 %v202, %v2877
      %v2879 = vpop.f32.mrb[0].mxu0
      %2880 = vmatprep.mubr.f32.mxu0 0.0
      %2881 = vmatmul.mubr.f32.gmra.mrb[0].mxu0 %v2671
      %v2882 = vpop.f32.mrb[0].mxu0
      %v2883 = vadd.f32 %v202, %v2882
      %v2884 = vpop.f32.mrb[0].mxu0
      %2885 = vmatprep.mubr.f32.mxu0 0.0
      %2886 = vmatmul.mubr.f32.gmra.mrb[0].mxu0 %v2674
      %v2887 = vpop.f32.mrb[0].mxu0
      %v2888 = vadd.f32 %v202, %v2887
      %v2889 = vpop.f32.mrb[0].mxu0
      %2890 = vmatprep.mubr.f32.mxu0 0.0
      %2891 = vmatmul.mubr.f32.gmra.mrb[0].mxu0 %v2677
      %v2892 = vpop.f32.mrb[0].mxu0
      %v2893 = vadd.f32 %v202, %v2892
      %v2894 = vpop.f32.mrb[0].mxu0
      %2895 = vmatprep.mubr.f32.mxu0 0.0
      %2896 = vmatmul.mubr.f32.gmra.mrb[0].mxu0 %v2680
      %v2897 = vpop.f32.mrb[0].mxu0
      %v2898 = vadd.f32 %v202, %v2897
      %v2899 = vpop.f32.mrb[0].mxu0
      %2900 = vmatprep.mubr.f32.mxu0 0.0
      %2901 = vmatmul.mubr.f32.gmra.mrb[0].mxu0 %v2683
      %v2902 = vpop.f32.mrb[0].mxu0
      %v2903 = vadd.f32 %v202, %v2902
      %v2904 = vpop.f32.mrb[0].mxu0
      %2905 = vmatprep.mubr.f32.mxu0 0.0
      %2906 = vmatmul.mubr.f32.gmra.mrb[0].mxu0 %v2686
      %v2907 = vpop.f32.mrb[0].mxu0
      %v2908 = vadd.f32 %v202, %v2907
      %v2909 = vpop.f32.mrb[0].mxu0
      %2910 = vmatprep.mubr.f32.mxu0 0.0
      %2911 = vmatmul.mubr.f32.gmra.mrb[0].mxu0 %v2689
      %v2912 = vpop.f32.mrb[0].mxu0
      %v2913 = vadd.f32 %v202, %v2912
      %v2914 = vpop.f32.mrb[0].mxu0
      %2915 = vdwg.mxu0
      %s2916 = scalar_lea.vmem %s194, 512
      %2917 = vst.msk [vmem:[%s2916] sm:$0xff] %vm884, %v2758
      %2918 = vst.msk [vmem:[%s2916 + $0x8] sm:$0xff] %vm884, %v2763
      %2919 = vst.msk [vmem:[%s2916 + $0x10] sm:$0xff] %vm884, %v2768
      %2920 = vst.msk [vmem:[%s2916 + $0x18] sm:$0xff] %vm884, %v2773
      %2921 = vst.msk [vmem:[%s2916 + $0x20] sm:$0xff] %vm884, %v2778
      %2922 = vst.msk [vmem:[%s2916 + $0x28] sm:$0xff] %vm884, %v2783
      %2923 = vst.msk [vmem:[%s2916 + $0x30] sm:$0xff] %vm884, %v2788
      %2924 = vst.msk [vmem:[%s2916 + $0x38] sm:$0xff] %vm884, %v2793
      %2925 = vst.msk [vmem:[%s2916 + $0x40] sm:$0xff] %vm884, %v2798
      %2926 = vst.msk [vmem:[%s2916 + $0x48] sm:$0xff] %vm884, %v2803
      %2927 = vst.msk [vmem:[%s2916 + $0x50] sm:$0xff] %vm884, %v2808
      %2928 = vst.msk [vmem:[%s2916 + $0x58] sm:$0xff] %vm884, %v2813
      %2929 = vst.msk [vmem:[%s2916 + $0x60] sm:$0xff] %vm884, %v2818
      %2930 = vst.msk [vmem:[%s2916 + $0x68] sm:$0xff] %vm884, %v2823
      %2931 = vst.msk [vmem:[%s2916 + $0x70] sm:$0xff] %vm884, %v2828
      %2932 = vst.msk [vmem:[%s2916 + $0x78] sm:$0xff] %vm884, %v2833
      %2933 = vst.msk [vmem:[%s2916 + $0x80] sm:$0xff] %vm884, %v2838
      %2934 = vst.msk [vmem:[%s2916 + $0x88] sm:$0xff] %vm884, %v2843
      %2935 = vst.msk [vmem:[%s2916 + $0x90] sm:$0xff] %vm884, %v2848
      %2936 = vst.msk [vmem:[%s2916 + $0x98] sm:$0xff] %vm884, %v2853
      %2937 = vst.msk [vmem:[%s2916 + $0xa0] sm:$0xff] %vm884, %v2858
      %2938 = vst.msk [vmem:[%s2916 + $0xa8] sm:$0xff] %vm884, %v2863
      %2939 = vst.msk [vmem:[%s2916 + $0xb0] sm:$0xff] %vm884, %v2868
      %2940 = vst.msk [vmem:[%s2916 + $0xb8] sm:$0xff] %vm884, %v2873
      %2941 = vst.msk [vmem:[%s2916 + $0xc0] sm:$0xff] %vm884, %v2878
      %2942 = vst.msk [vmem:[%s2916 + $0xc8] sm:$0xff] %vm884, %v2883
      %2943 = vst.msk [vmem:[%s2916 + $0xd0] sm:$0xff] %vm884, %v2888
      %2944 = vst.msk [vmem:[%s2916 + $0xd8] sm:$0xff] %vm884, %v2893
      %2945 = vst.msk [vmem:[%s2916 + $0xe0] sm:$0xff] %vm884, %v2898
      %2946 = vst.msk [vmem:[%s2916 + $0xe8] sm:$0xff] %vm884, %v2903
      %2947 = vst.msk [vmem:[%s2916 + $0xf0] sm:$0xff] %vm884, %v2908
      %2948 = vst.msk [vmem:[%s2916 + $0xf8] sm:$0xff] %vm884, %v2913
      %2949 = vrot.lane.b32.xlu0 %v369, 4
      %v2950 = vpop.permute.xlu0 %2949
      %2951 = vrot.lane.b32.xlu0 %v370, 4
      %v2952 = vpop.permute.xlu0 %2951
      %2953 = vrot.lane.b32.xlu0 %v371, 4
      %v2954 = vpop.permute.xlu0 %2953
      %2955 = vrot.lane.b32.xlu0 %v372, 4
      %v2956 = vpop.permute.xlu0 %2955
      %2957 = vrot.lane.b32.xlu0 %v373, 4
      %v2958 = vpop.permute.xlu0 %2957
      %2959 = vrot.lane.b32.xlu0 %v374, 4
      %v2960 = vpop.permute.xlu0 %2959
      %2961 = vrot.lane.b32.xlu0 %v375, 4
      %v2962 = vpop.permute.xlu0 %2961
      %2963 = vrot.lane.b32.xlu0 %v376, 4
      %v2964 = vpop.permute.xlu0 %2963
      %2965 = vrot.lane.b32.xlu0 %v377, 4
      %v2966 = vpop.permute.xlu0 %2965
      %2967 = vrot.lane.b32.xlu0 %v378, 4
      %v2968 = vpop.permute.xlu0 %2967
      %2969 = vrot.lane.b32.xlu0 %v379, 4
      %v2970 = vpop.permute.xlu0 %2969
      %2971 = vrot.lane.b32.xlu0 %v380, 4
      %v2972 = vpop.permute.xlu0 %2971
      %2973 = vrot.lane.b32.xlu0 %v381, 4
      %v2974 = vpop.permute.xlu0 %2973
      %2975 = vrot.lane.b32.xlu0 %v382, 4
      %v2976 = vpop.permute.xlu0 %2975
      %2977 = vrot.lane.b32.xlu0 %v383, 4
      %v2978 = vpop.permute.xlu0 %2977
      %2979 = vrot.lane.b32.xlu0 %v384, 4
      %v2980 = vpop.permute.xlu0 %2979
      %2981 = vrot.lane.b32.xlu0 %v385, 4
      %v2982 = vpop.permute.xlu0 %2981
      %2983 = vrot.lane.b32.xlu0 %v386, 4
      %v2984 = vpop.permute.xlu0 %2983
      %2985 = vrot.lane.b32.xlu0 %v387, 4
      %v2986 = vpop.permute.xlu0 %2985
      %2987 = vrot.lane.b32.xlu0 %v388, 4
      %v2988 = vpop.permute.xlu0 %2987
      %2989 = vrot.lane.b32.xlu0 %v389, 4
      %v2990 = vpop.permute.xlu0 %2989
      %2991 = vrot.lane.b32.xlu0 %v390, 4
      %v2992 = vpop.permute.xlu0 %2991
      %2993 = vrot.lane.b32.xlu0 %v391, 4
      %v2994 = vpop.permute.xlu0 %2993
      %2995 = vrot.lane.b32.xlu0 %v392, 4
      %v2996 = vpop.permute.xlu0 %2995
      %2997 = vrot.lane.b32.xlu0 %v393, 4
      %v2998 = vpop.permute.xlu0 %2997
      %2999 = vrot.lane.b32.xlu0 %v394, 4
      %v3000 = vpop.permute.xlu0 %2999
      %3001 = vrot.lane.b32.xlu0 %v395, 4
      %v3002 = vpop.permute.xlu0 %3001
      %3003 = vrot.lane.b32.xlu0 %v396, 4
      %v3004 = vpop.permute.xlu0 %3003
      %3005 = vrot.lane.b32.xlu0 %v397, 4
      %v3006 = vpop.permute.xlu0 %3005
      %3007 = vrot.lane.b32.xlu0 %v398, 4
      %v3008 = vpop.permute.xlu0 %3007
      %3009 = vrot.lane.b32.xlu0 %v399, 4
      %v3010 = vpop.permute.xlu0 %3009
      %3011 = vrot.lane.b32.xlu0 %v400, 4
      %v3012 = vpop.permute.xlu0 %3011
      %3045 = vrot.lane.b32.xlu0 %v436, 8
      %v3046 = vpop.permute.xlu0 %3045
      %3047 = vrot.lane.b32.xlu0 %v437, 8
      %v3048 = vpop.permute.xlu0 %3047
      %3049 = vrot.lane.b32.xlu0 %v438, 8
      %v3050 = vpop.permute.xlu0 %3049
      %3051 = vrot.lane.b32.xlu0 %v439, 8
      %v3052 = vpop.permute.xlu0 %3051
      %3053 = vrot.lane.b32.xlu0 %v440, 8
      %v3054 = vpop.permute.xlu0 %3053
      %3055 = vrot.lane.b32.xlu0 %v441, 8
      %v3056 = vpop.permute.xlu0 %3055
      %3057 = vrot.lane.b32.xlu0 %v442, 8
      %v3058 = vpop.permute.xlu0 %3057
      %3059 = vrot.lane.b32.xlu0 %v443, 8
      %v3060 = vpop.permute.xlu0 %3059
      %3061 = vrot.lane.b32.xlu0 %v444, 8
      %v3062 = vpop.permute.xlu0 %3061
      %3063 = vrot.lane.b32.xlu0 %v445, 8
      %v3064 = vpop.permute.xlu0 %3063
      %3065 = vrot.lane.b32.xlu0 %v446, 8
      %v3066 = vpop.permute.xlu0 %3065
      %3067 = vrot.lane.b32.xlu0 %v447, 8
      %v3068 = vpop.permute.xlu0 %3067
      %3069 = vrot.lane.b32.xlu0 %v448, 8
      %v3070 = vpop.permute.xlu0 %3069
      %3071 = vrot.lane.b32.xlu0 %v449, 8
      %v3072 = vpop.permute.xlu0 %3071
      %3073 = vrot.lane.b32.xlu0 %v450, 8
      %v3074 = vpop.permute.xlu0 %3073
      %3075 = vrot.lane.b32.xlu0 %v451, 8
      %v3076 = vpop.permute.xlu0 %3075
      %3077 = vrot.lane.b32.xlu0 %v452, 8
      %v3078 = vpop.permute.xlu0 %3077
      %3079 = vrot.lane.b32.xlu0 %v453, 8
      %v3080 = vpop.permute.xlu0 %3079
      %3081 = vrot.lane.b32.xlu0 %v454, 8
      %v3082 = vpop.permute.xlu0 %3081
      %3083 = vrot.lane.b32.xlu0 %v455, 8
      %v3084 = vpop.permute.xlu0 %3083
      %3085 = vrot.lane.b32.xlu0 %v456, 8
      %v3086 = vpop.permute.xlu0 %3085
      %3087 = vrot.lane.b32.xlu0 %v457, 8
      %v3088 = vpop.permute.xlu0 %3087
      %3089 = vrot.lane.b32.xlu0 %v458, 8
      %v3090 = vpop.permute.xlu0 %3089
      %3091 = vrot.lane.b32.xlu0 %v459, 8
      %v3092 = vpop.permute.xlu0 %3091
      %3093 = vrot.lane.b32.xlu0 %v460, 8
      %v3094 = vpop.permute.xlu0 %3093
      %3095 = vrot.lane.b32.xlu0 %v461, 8
      %v3096 = vpop.permute.xlu0 %3095
      %3097 = vrot.lane.b32.xlu0 %v462, 8
      %v3098 = vpop.permute.xlu0 %3097
      %3099 = vrot.lane.b32.xlu0 %v463, 8
      %v3100 = vpop.permute.xlu0 %3099
      %3101 = vrot.lane.b32.xlu0 %v464, 8
      %v3102 = vpop.permute.xlu0 %3101
      %3103 = vrot.lane.b32.xlu0 %v465, 8
      %v3104 = vpop.permute.xlu0 %3103
      %3105 = vrot.lane.b32.xlu0 %v466, 8
      %v3106 = vpop.permute.xlu0 %3105
      %3107 = vrot.lane.b32.xlu0 %v467, 8
      %v3108 = vpop.permute.xlu0 %3107
      %3173 = vrot.lane.b32.xlu0 %v468, 12
      %v3174 = vpop.permute.xlu0 %3173
      %3175 = vrot.lane.b32.xlu0 %v469, 12
      %v3176 = vpop.permute.xlu0 %3175
      %3177 = vrot.lane.b32.xlu0 %v470, 12
      %v3178 = vpop.permute.xlu0 %3177
      %3179 = vrot.lane.b32.xlu0 %v471, 12
      %v3180 = vpop.permute.xlu0 %3179
      %3181 = vrot.lane.b32.xlu0 %v472, 12
      %v3182 = vpop.permute.xlu0 %3181
      %3183 = vrot.lane.b32.xlu0 %v473, 12
      %v3184 = vpop.permute.xlu0 %3183
      %3185 = vrot.lane.b32.xlu0 %v474, 12
      %v3186 = vpop.permute.xlu0 %3185
      %3187 = vrot.lane.b32.xlu0 %v475, 12
      %v3188 = vpop.permute.xlu0 %3187
      %3189 = vrot.lane.b32.xlu0 %v476, 12
      %v3190 = vpop.permute.xlu0 %3189
      %3191 = vrot.lane.b32.xlu0 %v477, 12
      %v3192 = vpop.permute.xlu0 %3191
      %3193 = vrot.lane.b32.xlu0 %v478, 12
      %v3194 = vpop.permute.xlu0 %3193
      %3195 = vrot.lane.b32.xlu0 %v479, 12
      %v3196 = vpop.permute.xlu0 %3195
      %3197 = vrot.lane.b32.xlu0 %v480, 12
      %v3198 = vpop.permute.xlu0 %3197
      %3199 = vrot.lane.b32.xlu0 %v481, 12
      %v3200 = vpop.permute.xlu0 %3199
      %3201 = vrot.lane.b32.xlu0 %v482, 12
      %v3202 = vpop.permute.xlu0 %3201
      %3203 = vrot.lane.b32.xlu0 %v483, 12
      %v3204 = vpop.permute.xlu0 %3203
      %3205 = vrot.lane.b32.xlu0 %v484, 12
      %v3206 = vpop.permute.xlu0 %3205
      %3207 = vrot.lane.b32.xlu0 %v485, 12
      %v3208 = vpop.permute.xlu0 %3207
      %3209 = vrot.lane.b32.xlu0 %v486, 12
      %v3210 = vpop.permute.xlu0 %3209
      %3211 = vrot.lane.b32.xlu0 %v487, 12
      %v3212 = vpop.permute.xlu0 %3211
      %3213 = vrot.lane.b32.xlu0 %v488, 12
      %v3214 = vpop.permute.xlu0 %3213
      %3215 = vrot.lane.b32.xlu0 %v489, 12
      %v3216 = vpop.permute.xlu0 %3215
      %3217 = vrot.lane.b32.xlu0 %v490, 12
      %v3218 = vpop.permute.xlu0 %3217
      %3219 = vrot.lane.b32.xlu0 %v491, 12
      %v3220 = vpop.permute.xlu0 %3219
      %3221 = vrot.lane.b32.xlu0 %v492, 12
      %v3222 = vpop.permute.xlu0 %3221
      %3223 = vrot.lane.b32.xlu0 %v493, 12
      %v3224 = vpop.permute.xlu0 %3223
      %3225 = vrot.lane.b32.xlu0 %v494, 12
      %v3226 = vpop.permute.xlu0 %3225
      %3227 = vrot.lane.b32.xlu0 %v495, 12
      %v3228 = vpop.permute.xlu0 %3227
      %3229 = vrot.lane.b32.xlu0 %v496, 12
      %v3230 = vpop.permute.xlu0 %3229
      %3231 = vrot.lane.b32.xlu0 %v497, 12
      %v3232 = vpop.permute.xlu0 %3231
      %3233 = vrot.lane.b32.xlu0 %v498, 12
      %v3234 = vpop.permute.xlu0 %3233
      %3235 = vrot.lane.b32.xlu0 %v499, 12
      %v3236 = vpop.permute.xlu0 %3235
      %v3269 = vsel %vm884, %v337, %v2950
      %v3270 = vsel %vm884, %v338, %v2952
      %v3271 = vsel %vm884, %v339, %v2954
      %v3272 = vsel %vm884, %v340, %v2956
      %v3273 = vsel %vm884, %v341, %v2958
      %v3274 = vsel %vm884, %v342, %v2960
      %v3275 = vsel %vm884, %v343, %v2962
      %v3276 = vsel %vm884, %v344, %v2964
      %v3277 = vsel %vm884, %v345, %v2966
      %v3278 = vsel %vm884, %v346, %v2968
      %v3279 = vsel %vm884, %v347, %v2970
      %v3280 = vsel %vm884, %v348, %v2972
      %v3281 = vsel %vm884, %v349, %v2974
      %v3282 = vsel %vm884, %v350, %v2976
      %v3283 = vsel %vm884, %v351, %v2978
      %v3284 = vsel %vm884, %v352, %v2980
      %v3285 = vsel %vm884, %v353, %v2982
      %v3286 = vsel %vm884, %v354, %v2984
      %v3287 = vsel %vm884, %v355, %v2986
      %v3288 = vsel %vm884, %v356, %v2988
      %v3289 = vsel %vm884, %v357, %v2990
      %v3290 = vsel %vm884, %v358, %v2992
      %v3291 = vsel %vm884, %v359, %v2994
      %v3292 = vsel %vm884, %v360, %v2996
      %v3293 = vsel %vm884, %v361, %v2998
      %v3294 = vsel %vm884, %v362, %v3000
      %v3295 = vsel %vm884, %v363, %v3002
      %v3296 = vsel %vm884, %v364, %v3004
      %v3297 = vsel %vm884, %v365, %v3006
      %v3298 = vsel %vm884, %v366, %v3008
      %v3299 = vsel %vm884, %v367, %v3010
      %v3300 = vsel %vm884, %v368, %v3012
      %v3301 = vsel %vm917, %v3269, %v3046
      %v3302 = vsel %vm917, %v3270, %v3048
      %v3303 = vsel %vm917, %v3271, %v3050
      %v3304 = vsel %vm917, %v3272, %v3052
      %v3305 = vsel %vm917, %v3273, %v3054
      %v3306 = vsel %vm917, %v3274, %v3056
      %v3307 = vsel %vm917, %v3275, %v3058
      %v3308 = vsel %vm917, %v3276, %v3060
      %v3309 = vsel %vm917, %v3277, %v3062
      %v3310 = vsel %vm917, %v3278, %v3064
      %v3311 = vsel %vm917, %v3279, %v3066
      %v3312 = vsel %vm917, %v3280, %v3068
      %v3313 = vsel %vm917, %v3281, %v3070
      %v3314 = vsel %vm917, %v3282, %v3072
      %v3315 = vsel %vm917, %v3283, %v3074
      %v3316 = vsel %vm917, %v3284, %v3076
      %v3317 = vsel %vm917, %v3285, %v3078
      %v3318 = vsel %vm917, %v3286, %v3080
      %v3319 = vsel %vm917, %v3287, %v3082
      %v3320 = vsel %vm917, %v3288, %v3084
      %v3321 = vsel %vm917, %v3289, %v3086
      %v3322 = vsel %vm917, %v3290, %v3088
      %v3323 = vsel %vm917, %v3291, %v3090
      %v3324 = vsel %vm917, %v3292, %v3092
      %v3325 = vsel %vm917, %v3293, %v3094
      %v3326 = vsel %vm917, %v3294, %v3096
      %v3327 = vsel %vm917, %v3295, %v3098
      %v3328 = vsel %vm917, %v3296, %v3100
      %v3329 = vsel %vm917, %v3297, %v3102
      %v3330 = vsel %vm917, %v3298, %v3104
      %v3331 = vsel %vm917, %v3299, %v3106
      %v3332 = vsel %vm917, %v3300, %v3108
      %v3333 = vsel %vm950, %v3301, %v3174
      %v3334 = vsel %vm950, %v3302, %v3176
      %v3335 = vsel %vm950, %v3303, %v3178
      %v3336 = vsel %vm950, %v3304, %v3180
      %v3337 = vsel %vm950, %v3305, %v3182
      %v3338 = vsel %vm950, %v3306, %v3184
      %v3339 = vsel %vm950, %v3307, %v3186
      %v3340 = vsel %vm950, %v3308, %v3188
      %v3341 = vsel %vm950, %v3309, %v3190
      %v3342 = vsel %vm950, %v3310, %v3192
      %v3343 = vsel %vm950, %v3311, %v3194
      %v3344 = vsel %vm950, %v3312, %v3196
      %v3345 = vsel %vm950, %v3313, %v3198
      %v3346 = vsel %vm950, %v3314, %v3200
      %v3347 = vsel %vm950, %v3315, %v3202
      %v3348 = vsel %vm950, %v3316, %v3204
      %v3349 = vsel %vm950, %v3317, %v3206
      %v3350 = vsel %vm950, %v3318, %v3208
      %v3351 = vsel %vm950, %v3319, %v3210
      %v3352 = vsel %vm950, %v3320, %v3212
      %v3353 = vsel %vm950, %v3321, %v3214
      %v3354 = vsel %vm950, %v3322, %v3216
      %v3355 = vsel %vm950, %v3323, %v3218
      %v3356 = vsel %vm950, %v3324, %v3220
      %v3357 = vsel %vm950, %v3325, %v3222
      %v3358 = vsel %vm950, %v3326, %v3224
      %v3359 = vsel %vm950, %v3327, %v3226
      %v3360 = vsel %vm950, %v3328, %v3228
      %v3361 = vsel %vm950, %v3329, %v3230
      %v3362 = vsel %vm950, %v3330, %v3232
      %v3363 = vsel %vm950, %v3331, %v3234
      %v3364 = vsel %vm950, %v3332, %v3236
      %s3365 = scalar_lea.vmem %s1, 48
      %v3366 = vld [vmem:[%s3365] sm:$0xff]
      %v3367 = vld [vmem:[%s3365 + $0x8] sm:$0xff]
      %v3369 = vsel %vm985, %v3333, 0
      %v3372 = vsel %vm985, %v3334, 0
      %v3375 = vsel %vm985, %v3335, 0
      %v3378 = vsel %vm985, %v3336, 0
      %v3381 = vsel %vm985, %v3337, 0
      %v3384 = vsel %vm985, %v3338, 0
      %v3387 = vsel %vm985, %v3339, 0
      %v3390 = vsel %vm985, %v3340, 0
      %v3393 = vsel %vm985, %v3341, 0
      %v3396 = vsel %vm985, %v3342, 0
      %v3399 = vsel %vm985, %v3343, 0
      %v3402 = vsel %vm985, %v3344, 0
      %v3405 = vsel %vm985, %v3345, 0
      %v3408 = vsel %vm985, %v3346, 0
      %v3411 = vsel %vm985, %v3347, 0
      %v3414 = vsel %vm985, %v3348, 0
      %v3417 = vsel %vm985, %v3349, 0
      %v3420 = vsel %vm985, %v3350, 0
      %v3423 = vsel %vm985, %v3351, 0
      %v3426 = vsel %vm985, %v3352, 0
      %v3429 = vsel %vm985, %v3353, 0
      %v3432 = vsel %vm985, %v3354, 0
      %v3435 = vsel %vm985, %v3355, 0
      %v3438 = vsel %vm985, %v3356, 0
      %v3441 = vsel %vm985, %v3357, 0
      %v3444 = vsel %vm985, %v3358, 0
      %v3447 = vsel %vm985, %v3359, 0
      %v3450 = vsel %vm985, %v3360, 0
      %v3453 = vsel %vm985, %v3361, 0
      %v3456 = vsel %vm985, %v3362, 0
      %v3459 = vsel %vm985, %v3363, 0
      %v3462 = vsel %vm985, %v3364, 0
      %3464 = vmatprep.subr.mxu0 0.0
      %3465 = vmatpush1.msra.mxu0 %v3366
      %3466 = vmatprep.subr.mxu0 0.0
      %3467 = vmatpush1.msra.mxu0 %v3367
      %3468 = vmatprep.subr.mxu0 0.0
      %3469 = vmatpush1.msra.mxu0 0.0
      %3470 = vmatprep.subr.mxu0 0.0
      %3471 = vmatpush1.msra.mxu0 0.0
      %3472 = vmatprep.subr.mxu0 0.0
      %3473 = vmatpush1.msra.mxu0 0.0
      %3474 = vmatprep.subr.mxu0 0.0
      %3475 = vmatpush1.msra.mxu0 0.0
      %3476 = vmatprep.subr.mxu0 0.0
      %3477 = vmatpush1.msra.mxu0 0.0
      %3478 = vmatprep.subr.mxu0 0.0
      %3479 = vmatpush1.msra.mxu0 0.0
      %3480 = vmatprep.subr.mxu0 0.0
      %3481 = vmatpush1.msra.mxu0 0.0
      %3482 = vmatprep.subr.mxu0 0.0
      %3483 = vmatpush1.msra.mxu0 0.0
      %3484 = vmatprep.subr.mxu0 0.0
      %3485 = vmatpush1.msra.mxu0 0.0
      %3486 = vmatprep.subr.mxu0 0.0
      %3487 = vmatpush1.msra.mxu0 0.0
      %3488 = vmatprep.subr.mxu0 0.0
      %3489 = vmatpush1.msra.mxu0 0.0
      %3490 = vmatprep.subr.mxu0 0.0
      %3491 = vmatpush1.msra.mxu0 0.0
      %3492 = vmatprep.subr.mxu0 0.0
      %3493 = vmatpush1.msra.mxu0 0.0
      %3494 = vmatprep.subr.mxu0 0.0
      %3495 = vmatpush1.msra.mxu0 0.0
      %3496 = vmatprep.subr.mxu0 0.0
      %3497 = vmatpush1.msra.mxu0 0.0
      %3498 = vmatprep.subr.mxu0 0.0
      %3499 = vmatpush1.msra.mxu0 0.0
      %3500 = vmatprep.subr.mxu0 0.0
      %3501 = vmatpush1.msra.mxu0 0.0
      %3502 = vmatprep.subr.mxu0 0.0
      %3503 = vmatpush1.msra.mxu0 0.0
      %3504 = vmatprep.subr.mxu0 0.0
      %3505 = vmatpush1.msra.mxu0 0.0
      %3506 = vmatprep.subr.mxu0 0.0
      %3507 = vmatpush1.msra.mxu0 0.0
      %3508 = vmatprep.subr.mxu0 0.0
      %3509 = vmatpush1.msra.mxu0 0.0
      %3510 = vmatprep.subr.mxu0 0.0
      %3511 = vmatpush1.msra.mxu0 0.0
      %3512 = vmatprep.subr.mxu0 0.0
      %3513 = vmatpush1.msra.mxu0 0.0
      %3514 = vmatprep.subr.mxu0 0.0
      %3515 = vmatpush1.msra.mxu0 0.0
      %3516 = vmatprep.subr.mxu0 0.0
      %3517 = vmatpush1.msra.mxu0 0.0
      %3518 = vmatprep.subr.mxu0 0.0
      %3519 = vmatpush1.msra.mxu0 0.0
      %3520 = vmatprep.subr.mxu0 0.0
      %3521 = vmatpush1.msra.mxu0 0.0
      %3522 = vmatprep.subr.mxu0 0.0
      %3523 = vmatpush1.msra.mxu0 0.0
      %3524 = vmatprep.subr.mxu0 0.0
      %3525 = vmatpush1.msra.mxu0 0.0
      %3526 = vmatprep.subr.mxu0 0.0
      %3527 = vmatpush1.msra.mxu0 0.0
      %3528 = vmatprep.mubr.f32.mxu0 0.0
      %3529 = vmatmul.mubr.f32.gmra.mrb[0].mxu0 %v3369
      %v3530 = vpop.f32.mrb[0].mxu0
      %v3531 = vadd.f32 %v202, %v3530
      %v3532 = vpop.f32.mrb[0].mxu0
      %3533 = vmatprep.mubr.f32.mxu0 0.0
      %3534 = vmatmul.mubr.f32.gmra.mrb[0].mxu0 %v3372
      %v3535 = vpop.f32.mrb[0].mxu0
      %v3536 = vadd.f32 %v202, %v3535
      %v3537 = vpop.f32.mrb[0].mxu0
      %3538 = vmatprep.mubr.f32.mxu0 0.0
      %3539 = vmatmul.mubr.f32.gmra.mrb[0].mxu0 %v3375
      %v3540 = vpop.f32.mrb[0].mxu0
      %v3541 = vadd.f32 %v202, %v3540
      %v3542 = vpop.f32.mrb[0].mxu0
      %3543 = vmatprep.mubr.f32.mxu0 0.0
      %3544 = vmatmul.mubr.f32.gmra.mrb[0].mxu0 %v3378
      %v3545 = vpop.f32.mrb[0].mxu0
      %v3546 = vadd.f32 %v202, %v3545
      %v3547 = vpop.f32.mrb[0].mxu0
      %3548 = vmatprep.mubr.f32.mxu0 0.0
      %3549 = vmatmul.mubr.f32.gmra.mrb[0].mxu0 %v3381
      %v3550 = vpop.f32.mrb[0].mxu0
      %v3551 = vadd.f32 %v202, %v3550
      %v3552 = vpop.f32.mrb[0].mxu0
      %3553 = vmatprep.mubr.f32.mxu0 0.0
      %3554 = vmatmul.mubr.f32.gmra.mrb[0].mxu0 %v3384
      %v3555 = vpop.f32.mrb[0].mxu0
      %v3556 = vadd.f32 %v202, %v3555
      %v3557 = vpop.f32.mrb[0].mxu0
      %3558 = vmatprep.mubr.f32.mxu0 0.0
      %3559 = vmatmul.mubr.f32.gmra.mrb[0].mxu0 %v3387
      %v3560 = vpop.f32.mrb[0].mxu0
      %v3561 = vadd.f32 %v202, %v3560
      %v3562 = vpop.f32.mrb[0].mxu0
      %3563 = vmatprep.mubr.f32.mxu0 0.0
      %3564 = vmatmul.mubr.f32.gmra.mrb[0].mxu0 %v3390
      %v3565 = vpop.f32.mrb[0].mxu0
      %v3566 = vadd.f32 %v202, %v3565
      %v3567 = vpop.f32.mrb[0].mxu0
      %3568 = vmatprep.mubr.f32.mxu0 0.0
      %3569 = vmatmul.mubr.f32.gmra.mrb[0].mxu0 %v3393
      %v3570 = vpop.f32.mrb[0].mxu0
      %v3571 = vadd.f32 %v202, %v3570
      %v3572 = vpop.f32.mrb[0].mxu0
      %3573 = vmatprep.mubr.f32.mxu0 0.0
      %3574 = vmatmul.mubr.f32.gmra.mrb[0].mxu0 %v3396
      %v3575 = vpop.f32.mrb[0].mxu0
      %v3576 = vadd.f32 %v202, %v3575
      %v3577 = vpop.f32.mrb[0].mxu0
      %3578 = vmatprep.mubr.f32.mxu0 0.0
      %3579 = vmatmul.mubr.f32.gmra.mrb[0].mxu0 %v3399
      %v3580 = vpop.f32.mrb[0].mxu0
      %v3581 = vadd.f32 %v202, %v3580
      %v3582 = vpop.f32.mrb[0].mxu0
      %3583 = vmatprep.mubr.f32.mxu0 0.0
      %3584 = vmatmul.mubr.f32.gmra.mrb[0].mxu0 %v3402
      %v3585 = vpop.f32.mrb[0].mxu0
      %v3586 = vadd.f32 %v202, %v3585
      %v3587 = vpop.f32.mrb[0].mxu0
      %3588 = vmatprep.mubr.f32.mxu0 0.0
      %3589 = vmatmul.mubr.f32.gmra.mrb[0].mxu0 %v3405
      %v3590 = vpop.f32.mrb[0].mxu0
      %v3591 = vadd.f32 %v202, %v3590
      %v3592 = vpop.f32.mrb[0].mxu0
      %3593 = vmatprep.mubr.f32.mxu0 0.0
      %3594 = vmatmul.mubr.f32.gmra.mrb[0].mxu0 %v3408
      %v3595 = vpop.f32.mrb[0].mxu0
      %v3596 = vadd.f32 %v202, %v3595
      %v3597 = vpop.f32.mrb[0].mxu0
      %3598 = vmatprep.mubr.f32.mxu0 0.0
      %3599 = vmatmul.mubr.f32.gmra.mrb[0].mxu0 %v3411
      %v3600 = vpop.f32.mrb[0].mxu0
      %v3601 = vadd.f32 %v202, %v3600
      %v3602 = vpop.f32.mrb[0].mxu0
      %3603 = vmatprep.mubr.f32.mxu0 0.0
      %3604 = vmatmul.mubr.f32.gmra.mrb[0].mxu0 %v3414
      %v3605 = vpop.f32.mrb[0].mxu0
      %v3606 = vadd.f32 %v202, %v3605
      %v3607 = vpop.f32.mrb[0].mxu0
      %3608 = vmatprep.mubr.f32.mxu0 0.0
      %3609 = vmatmul.mubr.f32.gmra.mrb[0].mxu0 %v3417
      %v3610 = vpop.f32.mrb[0].mxu0
      %v3611 = vadd.f32 %v202, %v3610
      %v3612 = vpop.f32.mrb[0].mxu0
      %3613 = vmatprep.mubr.f32.mxu0 0.0
      %3614 = vmatmul.mubr.f32.gmra.mrb[0].mxu0 %v3420
      %v3615 = vpop.f32.mrb[0].mxu0
      %v3616 = vadd.f32 %v202, %v3615
      %v3617 = vpop.f32.mrb[0].mxu0
      %3618 = vmatprep.mubr.f32.mxu0 0.0
      %3619 = vmatmul.mubr.f32.gmra.mrb[0].mxu0 %v3423
      %v3620 = vpop.f32.mrb[0].mxu0
      %v3621 = vadd.f32 %v202, %v3620
      %v3622 = vpop.f32.mrb[0].mxu0
      %3623 = vmatprep.mubr.f32.mxu0 0.0
      %3624 = vmatmul.mubr.f32.gmra.mrb[0].mxu0 %v3426
      %v3625 = vpop.f32.mrb[0].mxu0
      %v3626 = vadd.f32 %v202, %v3625
      %v3627 = vpop.f32.mrb[0].mxu0
      %3628 = vmatprep.mubr.f32.mxu0 0.0
      %3629 = vmatmul.mubr.f32.gmra.mrb[0].mxu0 %v3429
      %v3630 = vpop.f32.mrb[0].mxu0
      %v3631 = vadd.f32 %v202, %v3630
      %v3632 = vpop.f32.mrb[0].mxu0
      %3633 = vmatprep.mubr.f32.mxu0 0.0
      %3634 = vmatmul.mubr.f32.gmra.mrb[0].mxu0 %v3432
      %v3635 = vpop.f32.mrb[0].mxu0
      %v3636 = vadd.f32 %v202, %v3635
      %v3637 = vpop.f32.mrb[0].mxu0
      %3638 = vmatprep.mubr.f32.mxu0 0.0
      %3639 = vmatmul.mubr.f32.gmra.mrb[0].mxu0 %v3435
      %v3640 = vpop.f32.mrb[0].mxu0
      %v3641 = vadd.f32 %v202, %v3640
      %v3642 = vpop.f32.mrb[0].mxu0
      %3643 = vmatprep.mubr.f32.mxu0 0.0
      %3644 = vmatmul.mubr.f32.gmra.mrb[0].mxu0 %v3438
      %v3645 = vpop.f32.mrb[0].mxu0
      %v3646 = vadd.f32 %v202, %v3645
      %v3647 = vpop.f32.mrb[0].mxu0
      %3648 = vmatprep.mubr.f32.mxu0 0.0
      %3649 = vmatmul.mubr.f32.gmra.mrb[0].mxu0 %v3441
      %v3650 = vpop.f32.mrb[0].mxu0
      %v3651 = vadd.f32 %v202, %v3650
      %v3652 = vpop.f32.mrb[0].mxu0
      %3653 = vmatprep.mubr.f32.mxu0 0.0
      %3654 = vmatmul.mubr.f32.gmra.mrb[0].mxu0 %v3444
      %v3655 = vpop.f32.mrb[0].mxu0
      %v3656 = vadd.f32 %v202, %v3655
      %v3657 = vpop.f32.mrb[0].mxu0
      %3658 = vmatprep.mubr.f32.mxu0 0.0
      %3659 = vmatmul.mubr.f32.gmra.mrb[0].mxu0 %v3447
      %v3660 = vpop.f32.mrb[0].mxu0
      %v3661 = vadd.f32 %v202, %v3660
      %v3662 = vpop.f32.mrb[0].mxu0
      %3663 = vmatprep.mubr.f32.mxu0 0.0
      %3664 = vmatmul.mubr.f32.gmra.mrb[0].mxu0 %v3450
      %v3665 = vpop.f32.mrb[0].mxu0
      %v3666 = vadd.f32 %v202, %v3665
      %v3667 = vpop.f32.mrb[0].mxu0
      %3668 = vmatprep.mubr.f32.mxu0 0.0
      %3669 = vmatmul.mubr.f32.gmra.mrb[0].mxu0 %v3453
      %v3670 = vpop.f32.mrb[0].mxu0
      %v3671 = vadd.f32 %v202, %v3670
      %v3672 = vpop.f32.mrb[0].mxu0
      %3673 = vmatprep.mubr.f32.mxu0 0.0
      %3674 = vmatmul.mubr.f32.gmra.mrb[0].mxu0 %v3456
      %v3675 = vpop.f32.mrb[0].mxu0
      %v3676 = vadd.f32 %v202, %v3675
      %v3677 = vpop.f32.mrb[0].mxu0
      %3678 = vmatprep.mubr.f32.mxu0 0.0
      %3679 = vmatmul.mubr.f32.gmra.mrb[0].mxu0 %v3459
      %v3680 = vpop.f32.mrb[0].mxu0
      %v3681 = vadd.f32 %v202, %v3680
      %v3682 = vpop.f32.mrb[0].mxu0
      %3683 = vmatprep.mubr.f32.mxu0 0.0
      %3684 = vmatmul.mubr.f32.gmra.mrb[0].mxu0 %v3462
      %v3685 = vpop.f32.mrb[0].mxu0
      %v3686 = vadd.f32 %v202, %v3685
      %v3687 = vpop.f32.mrb[0].mxu0
      %3688 = vdwg.mxu0
      %s3689 = scalar_lea.vmem %s194, 768
      %3690 = vst.msk [vmem:[%s3689] sm:$0xff] %vm884, %v3531
      %3691 = vst.msk [vmem:[%s3689 + $0x8] sm:$0xff] %vm884, %v3536
      %3692 = vst.msk [vmem:[%s3689 + $0x10] sm:$0xff] %vm884, %v3541
      %3693 = vst.msk [vmem:[%s3689 + $0x18] sm:$0xff] %vm884, %v3546
      %3694 = vst.msk [vmem:[%s3689 + $0x20] sm:$0xff] %vm884, %v3551
      %3695 = vst.msk [vmem:[%s3689 + $0x28] sm:$0xff] %vm884, %v3556
      %3696 = vst.msk [vmem:[%s3689 + $0x30] sm:$0xff] %vm884, %v3561
      %3697 = vst.msk [vmem:[%s3689 + $0x38] sm:$0xff] %vm884, %v3566
      %3698 = vst.msk [vmem:[%s3689 + $0x40] sm:$0xff] %vm884, %v3571
      %3699 = vst.msk [vmem:[%s3689 + $0x48] sm:$0xff] %vm884, %v3576
      %3700 = vst.msk [vmem:[%s3689 + $0x50] sm:$0xff] %vm884, %v3581
      %3701 = vst.msk [vmem:[%s3689 + $0x58] sm:$0xff] %vm884, %v3586
      %3702 = vst.msk [vmem:[%s3689 + $0x60] sm:$0xff] %vm884, %v3591
      %3703 = vst.msk [vmem:[%s3689 + $0x68] sm:$0xff] %vm884, %v3596
      %3704 = vst.msk [vmem:[%s3689 + $0x70] sm:$0xff] %vm884, %v3601
      %3705 = vst.msk [vmem:[%s3689 + $0x78] sm:$0xff] %vm884, %v3606
      %3706 = vst.msk [vmem:[%s3689 + $0x80] sm:$0xff] %vm884, %v3611
      %3707 = vst.msk [vmem:[%s3689 + $0x88] sm:$0xff] %vm884, %v3616
      %3708 = vst.msk [vmem:[%s3689 + $0x90] sm:$0xff] %vm884, %v3621
      %3709 = vst.msk [vmem:[%s3689 + $0x98] sm:$0xff] %vm884, %v3626
      %3710 = vst.msk [vmem:[%s3689 + $0xa0] sm:$0xff] %vm884, %v3631
      %3711 = vst.msk [vmem:[%s3689 + $0xa8] sm:$0xff] %vm884, %v3636
      %3712 = vst.msk [vmem:[%s3689 + $0xb0] sm:$0xff] %vm884, %v3641
      %3713 = vst.msk [vmem:[%s3689 + $0xb8] sm:$0xff] %vm884, %v3646
      %3714 = vst.msk [vmem:[%s3689 + $0xc0] sm:$0xff] %vm884, %v3651
      %3715 = vst.msk [vmem:[%s3689 + $0xc8] sm:$0xff] %vm884, %v3656
      %3716 = vst.msk [vmem:[%s3689 + $0xd0] sm:$0xff] %vm884, %v3661
      %3717 = vst.msk [vmem:[%s3689 + $0xd8] sm:$0xff] %vm884, %v3666
      %3718 = vst.msk [vmem:[%s3689 + $0xe0] sm:$0xff] %vm884, %v3671
      %3719 = vst.msk [vmem:[%s3689 + $0xe8] sm:$0xff] %vm884, %v3676
      %3720 = vst.msk [vmem:[%s3689 + $0xf0] sm:$0xff] %vm884, %v3681
      %3721 = vst.msk [vmem:[%s3689 + $0xf8] sm:$0xff] %vm884, %v3686
      %s3722 = smul.u32 16, %s19
      %p3723 = scmp.lt.s32.totalorder %s18, 1
      %s3724 = scalar_select %p3723, %s18, 1
      %p3725 = scmp.lt.s32.totalorder %s3722, 15
      %s3726 = scalar_select %p3725, %s3722, 15
      %s3727 = smul.addr %s3726, 2
      %s3728 = smul.addr %s3724, 128
      %s3729 = sadd.s32 %s3727, %s3728
      %s3730 = smul.addr %s3729, 8
      %s3731 = scalar_lea.vmem %s3, %s3730
      // Predicated region
      $region33: #{tpu_custom_call.1} parent=31 // pred_check
        %p3732 = pneg %p114
      $region34: #{tpu_custom_call.1} parent=31 // pred_check_branch
        %3734 = sbr.rel (%p3732) target = $region36
      $region35: #{tpu_custom_call.1} parent=31 // pred_region
        %s3735 = smul.u32 16, %s19
      $region36: #{tpu_custom_call.1} parent=31 // pred_fallthru
        _
    $region32: #{tpu_custom_call.1} parent=5 // pred_fallthru
      _
    %p3736 = scmp.le.s32.totalorder 2, %s9
    // Predicated region
    $region37: #{tpu_custom_call.1} parent=5 // pred_check
      %p3737 = pneg %p3736
    $region38: #{tpu_custom_call.1} parent=5 // pred_check_branch
      %3739 = sbr.rel (%p3737) target = $region40
    $region39: #{tpu_custom_call.1} parent=5 // pred_region
      %s3740 = ssub.s32 %s9, 2
      // Predicated region
      $region41: #{tpu_custom_call.1} parent=39 // pred_check
        %p3741 = pneg %p120
      $region42: #{tpu_custom_call.1} parent=39 // pred_check_branch
        %3743 = sbr.rel (%p3741) target = $region44
      $region43: #{tpu_custom_call.1} parent=39 // pred_region
        %s3744 = smul.u32 16, %s21
        %p3745 = scmp.lt.s32.totalorder %s20, 1
        %s3746 = scalar_select %p3745, %s20, 1
        %p3747 = scmp.lt.s32.totalorder %s3744, 15
        %s3748 = scalar_select %p3747, %s3744, 15
        %s3749 = smul.addr %s3748, 2
        %s3750 = smul.addr %s3746, 128
        %s3751 = sadd.s32 %s3749, %s3750
        %s3752 = smul.addr %s3751, 8
        %s3753 = scalar_lea.vmem %s3, %s3752
      $region44: #{tpu_custom_call.1} parent=39 // pred_fallthru
        _
    $region40: #{tpu_custom_call.1} parent=5 // pred_fallthru
      _
  $region6: #{tpu_custom_call.1} parent=0 // loop_footer
    %s13 = sadd.s32 1, %s9
  $region7: #{tpu_custom_call.1} parent=0 // loop_footer_branch
    %8 = sbr.rel target = $region3
  $region8: #{tpu_custom_call.1} parent=0 // loop_exit
    _

</llo_original>
